<compile_context>
chip_gen: v6e
topology: v6e:2x2x1
jax: 0.10.0
libtpu: 0.0.40
codegen_flags: <defaults>
</compile_context>

<pallas_src>
import functools

import jax
import jax.numpy as jnp
from jax import lax
from jax.experimental import pallas as pl
from jax.experimental.pallas import tpu as pltpu

EPS = 1e-5


def _vmem_limit_bytes():
    # Derive from the actual part (64 MiB on v7x, 128 MiB on v5e/v6e). The kernels
    # here only need ~2 MiB, so cap well below physical capacity.
    cap = 128 * 1024 * 1024
    try:
        cap = int(pltpu.get_tpu_info().vmem_capacity_bytes)
    except Exception:
        pass
    return int(min(cap // 2, 64 * 1024 * 1024))


def _pick_td(D, H):
    """Largest divisor of D with TD*H <= 1024 matmul rows (targets >=256 rows)."""
    best = 1
    for cand in range(1, D + 1):
        if D % cand == 0 and cand * H <= 1024:
            best = cand
    return best


def _band_weights(w_dhwio, W):
    """Fold the kw taps + W zero-padding of a 3x3x3 conv into 9 block-banded
    (W*Cin, W*Cout) bf16 matrices, one per (kd, kh).

    Output column wo*Cout+co receives input rows wi*Cin+ci with kw = wi - wo + 1
    in [0, 3); out-of-range taps are zeroed, which implements the W-direction
    'same' padding implicitly (activations need no W halo and stay lane-dense).
    """
    kD, kH, kW, Cin, Cout = w_dhwio.shape
    w9 = w_dhwio.astype(jnp.float32).reshape(kD * kH, kW, Cin, Cout)
    wi = jnp.arange(W)[:, None]
    wo = jnp.arange(W)[None, :]
    kw = wi - wo + 1                                              # (W, W)
    valid = ((kw >= 0) & (kw < kW)).astype(jnp.float32)
    kwc = jnp.clip(kw, 0, kW - 1)
    band = w9[:, kwc] * valid[None, :, :, None, None]             # (9, W, W, Cin, Cout)
    band = band.transpose(0, 1, 3, 2, 4).reshape(kD * kH, W * Cin, W * Cout)
    return band.astype(jnp.bfloat16)


# --------------------- conv (+ optional fused BN+ReLU on input, + BN stats) ---------------------
def _conv_impl(x_ref, sc_ref, sh_ref, w_ref, y_ref, st_ref,
               xp_ref, acc_ref, s_ref, q_ref, *, TD, D, H, WC):
    # x_ref : (1, D, H, WC)   unpadded per-n input, resident across d tiles (bf16)
    # w_ref : (9, WC, WC)     block-banded bf16 weights (kw taps + W-pad folded in)
    # y_ref : (1, TD, H, WC)  conv output tile (bf16; bias omitted: cancels in BN)
    # st_ref: (1, 2, WC)      per-n [sum, sum-of-squares] BN statistics (f32)
    # xp_ref: (D+2, H+2, WC)  zero-halo padded input scratch (f32)
    # acc_ref: (TD*H, WC)     f32 matmul accumulator scratch
    d = pl.program_id(1)
    n_d = pl.num_programs(1)

    # Once per batch element: build the zero-halo padded input in VMEM. This fuses
    # the D/H 'same' padding and, for conv2, the BN1+ReLU of the previous stage.
    @pl.when(d == 0)
    def _init():
        # TODO(synk): zero only the 6 halo faces instead of the whole scratch.
        xp_ref[...] = jnp.zeros_like(xp_ref)
        xin = x_ref[0].astype(jnp.float32)
        if sc_ref is not None:                       # conv2: x1 = relu(y1*sc1 + sh1)
            xin = jnp.maximum(xin * sc_ref[0] + sh_ref[0], 0.0)
        xp_ref[1:D + 1, 1:H + 1, :] = xin
        s_ref[...] = jnp.zeros_like(s_ref)
        q_ref[...] = jnp.zeros_like(q_ref)

    # 9 bf16 MXU matmuls with K = W*C against the banded weights; f32 accumulation.
    m = TD * H
    for t in range(9):
        kd, kh = divmod(t, 3)
        xs = xp_ref[pl.ds(d * TD + kd, TD), kh:kh + H, :].reshape(m, WC)
        contrib = jnp.dot(xs.astype(jnp.bfloat16), w_ref[t],
                          preferred_element_type=jnp.float32)
        if t == 0:
            acc_ref[...] = contrib
        else:
            acc_ref[...] += contrib

    acc = acc_ref[...]
    y_ref[0] = acc.reshape(TD, H, WC).astype(y_ref.dtype)
    # fused training-mode BatchNorm statistics (per-lane sum / sum of squares).
    s_ref[...] += jnp.sum(acc, axis=0, keepdims=True)
    q_ref[...] += jnp.sum(acc * acc, axis=0, keepdims=True)

    @pl.when(d == n_d - 1)
    def _fin():
        st_ref[0, 0:1, :] = s_ref[...]
        st_ref[0, 1:2, :] = q_ref[...]


def _conv_plain_kernel(x_ref, w_ref, y_ref, st_ref,
                       xp_ref, acc_ref, s_ref, q_ref, **kw):
    _conv_impl(x_ref, None, None, w_ref, y_ref, st_ref,
               xp_ref, acc_ref, s_ref, q_ref, **kw)


def _conv_bnrelu_kernel(x_ref, sc_ref, sh_ref, w_ref, y_ref, st_ref,
                        xp_ref, acc_ref, s_ref, q_ref, **kw):
    _conv_impl(x_ref, sc_ref, sh_ref, w_ref, y_ref, st_ref,
               xp_ref, acc_ref, s_ref, q_ref, **kw)


def _conv_call(x, wband, TD, sc=None, sh=None):
    N, D, H, WC = x.shape
    nD = D // TD
    fuse_bn = sc is not None
    kern = _conv_bnrelu_kernel if fuse_bn else _conv_plain_kernel
    kernel = functools.partial(kern, TD=TD, D=D, H=H, WC=WC)

    in_specs = [pl.BlockSpec((1, D, H, WC), lambda n, d: (n, 0, 0, 0))]
    args = [x]
    if fuse_bn:
        in_specs += [pl.BlockSpec((1, WC), lambda n, d: (0, 0)),
                     pl.BlockSpec((1, WC), lambda n, d: (0, 0))]
        args += [sc, sh]
    in_specs += [pl.BlockSpec((9, WC, WC), lambda n, d: (0, 0, 0))]
    args += [wband]

    flops = 2 * N * D * H * WC * WC * 9
    bytes_accessed = (N * D * H * WC * 2          # x (bf16)
                      + 9 * WC * WC * 2           # weights (bf16)
                      + N * D * H * WC * 2        # y (bf16)
                      + N * 2 * WC * 4)           # stats (f32)
    if fuse_bn:
        bytes_accessed += 2 * WC * 4

    return pl.pallas_call(
        kernel,
        out_shape=(jax.ShapeDtypeStruct((N, D, H, WC), jnp.bfloat16),
                   jax.ShapeDtypeStruct((N, 2, WC), jnp.float32)),
        grid=(N, nD),
        in_specs=in_specs,
        out_specs=(
            pl.BlockSpec((1, TD, H, WC), lambda n, d: (n, d, 0, 0)),
            pl.BlockSpec((1, 2, WC), lambda n, d: (n, 0, 0)),
        ),
        scratch_shapes=[
            pltpu.VMEM((D + 2, H + 2, WC), jnp.float32),   # zero-halo padded input
            pltpu.VMEM((TD * H, WC), jnp.float32),         # matmul accumulator
            pltpu.VMEM((1, WC), jnp.float32),              # per-n sum
            pltpu.VMEM((1, WC), jnp.float32),              # per-n sum of squares
        ],
        compiler_params=pltpu.CompilerParams(
            dimension_semantics=("parallel", "arbitrary"),
            vmem_limit_bytes=_vmem_limit_bytes()),
        cost_estimate=pl.CostEstimate(flops=flops, transcendentals=0,
                                      bytes_accessed=bytes_accessed),
    )(*args)


# -------------------- finalize: x1 + relu(bn2(y2)), x1 recomputed from y1 --------------------
def _finalize_kernel(y1_ref, y2_ref, sc1_ref, sh1_ref, sc2_ref, sh2_ref, o_ref):
    x1 = jnp.maximum(y1_ref[0].astype(jnp.float32) * sc1_ref[0] + sh1_ref[0], 0.0)
    x2 = jnp.maximum(y2_ref[0].astype(jnp.float32) * sc2_ref[0] + sh2_ref[0], 0.0)
    o_ref[0] = (x1 + x2).astype(o_ref.dtype)


def _finalize_call(y1, y2, sc1, sh1, sc2, sh2, TD):
    N, D, H, WC = y1.shape
    nD = D // TD
    tile = pl.BlockSpec((1, TD, H, WC), lambda n, d: (n, d, 0, 0))
    vec = pl.BlockSpec((1, WC), lambda n, d: (0, 0))
    return pl.pallas_call(
        _finalize_kernel,
        out_shape=jax.ShapeDtypeStruct((N, D, H, WC), jnp.float32),
        grid=(N, nD),
        in_specs=[tile, tile, vec, vec, vec, vec],
        out_specs=tile,
        compiler_params=pltpu.CompilerParams(
            dimension_semantics=("parallel", "parallel"),
            vmem_limit_bytes=_vmem_limit_bytes()),
    )(y1, y2, sc1, sh1, sc2, sh2)


# ------------------------------- tiny JAX glue -------------------------------
def _bn_affine(st, gamma, beta, W, C, M):
    """Finalize per-channel scale/shift from the fused sum / sum-of-squares stats."""
    s = st[:, 0, :].sum(axis=0).reshape(W, C).sum(axis=0)   # (C,)
    q = st[:, 1, :].sum(axis=0).reshape(W, C).sum(axis=0)
    mean = s / M
    var = q / M - mean * mean          # biased variance, like torch BN (training)
    scale = gamma * lax.rsqrt(var + EPS)
    shift = beta - mean * scale
    return (jnp.tile(scale, W).reshape(1, W * C).astype(jnp.float32),
            jnp.tile(shift, W).reshape(1, W * C).astype(jnp.float32))


def conv_block_forward(x_ncdhw, params):
    """x_ncdhw: (N, C, D, H, W) float32, PyTorch layout. Returns same layout, f32."""
    w1, b1, g1, bt1, w2, b2, g2, bt2 = params
    del b1, b2  # conv bias cancels exactly under training-mode BatchNorm

    x = jnp.transpose(x_ncdhw, (0, 2, 3, 4, 1))                  # -> NDHWC
    N, D, H, W, C = x.shape
    assert C == w1.shape[-1], "residual add in conv_block requires in_ch == out_ch"
    WC = W * C
    assert WC % 128 == 0, "lane-dense layout requires W*C to be a multiple of 128"
    TD = _pick_td(D, H)
    M = N * D * H * W

    # lane-dense bf16 activations: minor dim = W*C; D/H halo is built inside the
    # conv kernels (padded VMEM scratch), W halo is folded into the banded weights.
    xf = x.reshape(N, D, H, WC).astype(jnp.bfloat16)

    # ---- branch 1: conv1 (+ fused BN stats) ----
    y1, st1 = _conv_call(xf, _band_weights(w1, W), TD)
    sc1, sh1 = _bn_affine(st1, g1, bt1, W, C, M)

    # ---- branch 2: conv2 with BN1+ReLU fused into its input path (+ fused BN stats) ----
    y2, st2 = _conv_call(y1, _band_weights(w2, W), TD, sc=sc1, sh=sh1)
    sc2, sh2 = _bn_affine(st2, g2, bt2, W, C, M)

    # ---- finalize: out = relu(bn1(y1)) + relu(bn2(y2)) ----
    outf = _finalize_call(y1, y2, sc1, sh1, sc2, sh2, TD)

    out = outf.reshape(N, D, H, W, C)
    return jnp.transpose(out, (0, 4, 1, 2, 3))  # back to NCDHW


# ----------------------------- pure-JAX reference -----------------------------
def _ref_forward(x_ncdhw, params):
    w1, b1, g1, bt1, w2, b2, g2, bt2 = params
    x = jnp.transpose(x_ncdhw, (0, 2, 3, 4, 1)).astype(jnp.float32)

    def conv_bn_relu(h, w, b, g, bt):
        y = lax.conv_general_dilated(
            h, w, window_strides=(1, 1, 1),
            padding=((1, 1), (1, 1), (1, 1)),
            dimension_numbers=('NDHWC', 'DHWIO', 'NDHWC')) + b
        mean = jnp.mean(y, axis=(0, 1, 2, 3), keepdims=True)
        var = jnp.mean((y - mean) ** 2, axis=(0, 1, 2, 3), keepdims=True)
        y = (y - mean) * (g * lax.rsqrt(var + EPS)) + bt
        return jnp.maximum(y, 0.0)

    x1 = conv_bn_relu(x, w1, b1, g1, bt1)
    x2 = x1 + conv_bn_relu(x1, w2, b2, g2, bt2)
    return jnp.transpose(x2, (0, 4, 1, 2, 3))


if __name__ == "__main__":
    # small shapes; in_ch == out_ch (required by the module's residual add);
    # W * C = 128 so the minor dim is exactly lane-dense.
    N, C, D, H, W = 2, 8, 16, 16, 16
    key = jax.random.PRNGKey(0)
    ks = jax.random.split(key, 9)

    x = jax.random.normal(ks[0], (N, C, D, H, W), jnp.float32)
    # weights in DHWIO layout (3,3,3,Cin,Cout); deterministic synthetic init
    w1 = 0.1 * jax.random.normal(ks[1], (3, 3, 3, C, C), jnp.float32)
    b1 = 0.1 * jax.random.normal(ks[2], (C,), jnp.float32)
    g1 = 1.0 + 0.1 * jax.random.normal(ks[3], (C,), jnp.float32)
    bt1 = 0.1 * jax.random.normal(ks[4], (C,), jnp.float32)
    w2 = 0.1 * jax.random.normal(ks[5], (3, 3, 3, C, C), jnp.float32)
    b2 = 0.1 * jax.random.normal(ks[6], (C,), jnp.float32)
    g2 = 1.0 + 0.1 * jax.random.normal(ks[7], (C,), jnp.float32)
    bt2 = 0.1 * jax.random.normal(ks[8], (C,), jnp.float32)
    params = (w1, b1, g1, bt1, w2, b2, g2, bt2)

    fwd = jax.jit(conv_block_forward)
    out = jax.block_until_ready(fwd(x, params))
    ref = jax.block_until_ready(jax.jit(_ref_forward)(x, params))

    assert out.shape == (N, C, D, H, W)
    err_max = float(jnp.max(jnp.abs(out - ref)))
    err_mean = float(jnp.mean(jnp.abs(out - ref)))
    # bf16 matmul operands + bf16 inter-stage activations vs a pure-f32 reference:
    # expected max-abs error is a few 1e-2 at these activation magnitudes (a real
    # indexing / BN / halo bug produces O(1) errors and still trips this check).
    assert err_max < 1.5e-1 and err_mean < 2.5e-2, (err_max, err_mean)
    print("KERNEL_OK")
</pallas_src>

<mosaic_0001>
module attributes {stable_mosaic.version = 11 : i64} {
  func.func @_conv_plain_kernel(%arg0: i32, %arg1: i32, %arg2: memref<1x16x16x128xbf16, #tpu.memory_space<vmem>>, %arg3: memref<9x128x128xbf16, #tpu.memory_space<vmem>>, %arg4: memref<1x16x16x128xbf16, #tpu.memory_space<vmem>>, %arg5: memref<1x2x128xf32, #tpu.memory_space<vmem>>, %arg6: memref<18x18x128xf32, #tpu.memory_space<vmem>>, %arg7: memref<256x128xf32, #tpu.memory_space<vmem>>, %arg8: memref<1x128xf32, #tpu.memory_space<vmem>>, %arg9: memref<1x128xf32, #tpu.memory_space<vmem>>) attributes {dimension_semantics = [#tpu.dimension_semantics<parallel>, #tpu.dimension_semantics<arbitrary>], iteration_bounds = array<i64: 2, 1>, scalar_prefetch = 0 : i64, scratch_operands = 4 : i64, tpu.core_type = #tpu.core_type<tc>, window_params = [{transform_indices = @transform_0, window_bounds = array<i64: 1, 16, 16, 128>}, {pipeline_mode = #tpu.pipeline_mode<synchronous>, transform_indices = @transform_1, window_bounds = array<i64: 9, 128, 128>}, {transform_indices = @transform_2, window_bounds = array<i64: 1, 16, 16, 128>}, {transform_indices = @transform_3, window_bounds = array<i64: 1, 2, 128>}]} {
    %c0_i32 = arith.constant 0 : i32
    %0 = arith.cmpi eq, %arg1, %c0_i32 : i32
    %1 = arith.extui %0 : i1 to i32
    %c0_i32_0 = arith.constant 0 : i32
    %2 = arith.cmpi ne, %1, %c0_i32_0 : i32
    scf.if %2 {
      %cst_112 = arith.constant 0.000000e+00 : f32
      %129 = vector.broadcast %cst_112 : f32 to vector<18x18x128xf32>
      %c0_113 = arith.constant 0 : index
      %c0_114 = arith.constant 0 : index
      %c0_115 = arith.constant 0 : index
      %130 = vector.load %arg6[%c0_113, %c0_114, %c0_115] : memref<18x18x128xf32, #tpu.memory_space<vmem>>, vector<18x18x128xf32>
      tpu.vector_store %arg6[%c0_113, %c0_114, %c0_115], %129 {strides = array<i32>} : memref<18x18x128xf32, #tpu.memory_space<vmem>>, vector<18x18x128xf32>,
      %c0_116 = arith.constant 0 : index
      %c0_117 = arith.constant 0 : index
      %c0_118 = arith.constant 0 : index
      %c0_119 = arith.constant 0 : index
      %131 = vector.load %arg2[%c0_116, %c0_117, %c0_118, %c0_119] : memref<1x16x16x128xbf16, #tpu.memory_space<vmem>>, vector<1x16x16x128xbf16>
      %132 = vector.shape_cast %131 : vector<1x16x16x128xbf16> to vector<16x16x128xbf16>
      %133 = arith.extf %132 : vector<16x16x128xbf16> to vector<16x16x128xf32>
      %c1_120 = arith.constant 1 : index
      %c1_121 = arith.constant 1 : index
      %c0_122 = arith.constant 0 : index
      %134 = vector.load %arg6[%c1_120, %c1_121, %c0_122] : memref<18x18x128xf32, #tpu.memory_space<vmem>>, vector<16x16x128xf32>
      tpu.vector_store %arg6[%c1_120, %c1_121, %c0_122], %133 {strides = array<i32>} : memref<18x18x128xf32, #tpu.memory_space<vmem>>, vector<16x16x128xf32>,
      %cst_123 = arith.constant 0.000000e+00 : f32
      %135 = vector.broadcast %cst_123 : f32 to vector<1x128xf32>
      %c0_124 = arith.constant 0 : index
      %c0_125 = arith.constant 0 : index
      %136 = vector.load %arg8[%c0_124, %c0_125] : memref<1x128xf32, #tpu.memory_space<vmem>>, vector<1x128xf32>
      tpu.vector_store %arg8[%c0_124, %c0_125], %135 {strides = array<i32>} : memref<1x128xf32, #tpu.memory_space<vmem>>, vector<1x128xf32>,
      %cst_126 = arith.constant 0.000000e+00 : f32
      %137 = vector.broadcast %cst_126 : f32 to vector<1x128xf32>
      %c0_127 = arith.constant 0 : index
      %c0_128 = arith.constant 0 : index
      %138 = vector.load %arg9[%c0_127, %c0_128] : memref<1x128xf32, #tpu.memory_space<vmem>>, vector<1x128xf32>
      tpu.vector_store %arg9[%c0_127, %c0_128], %137 {strides = array<i32>} : memref<1x128xf32, #tpu.memory_space<vmem>>, vector<1x128xf32>,
    } else {
    }
    %c16_i32 = arith.constant 16 : i32
    %3 = arith.muli %arg1, %c16_i32 : i32
    %c0_i32_1 = arith.constant 0 : i32
    %4 = arith.addi %3, %c0_i32_1 : i32
    %5 = arith.index_cast %4 : i32 to index
    %c0 = arith.constant 0 : index
    %c0_2 = arith.constant 0 : index
    %6 = vector.load %arg6[%5, %c0, %c0_2] : memref<18x18x128xf32, #tpu.memory_space<vmem>>, vector<16x16x128xf32>
    %7 = vector.shape_cast %6 : vector<16x16x128xf32> to vector<256x128xf32>
    %8 = arith.truncf %7 : vector<256x128xf32> to vector<256x128xbf16>
    %c0_3 = arith.constant 0 : index
    %c0_4 = arith.constant 0 : index
    %c0_5 = arith.constant 0 : index
    %9 = vector.load %arg3[%c0_3, %c0_4, %c0_5] : memref<9x128x128xbf16, #tpu.memory_space<vmem>>, vector<1x128x128xbf16>
    %10 = vector.shape_cast %9 : vector<1x128x128xbf16> to vector<128x128xbf16>
    %cst = arith.constant dense<0.000000e+00> : vector<256x128xf32>
    %11 = tpu.matmul %8, %10, %cst {dimension_numbers = #tpu.dot_dimension_numbers<[1], [0], [0], [1], [0, 0, 1, 1], [], []>} : vector<256x128xbf16>, vector<128x128xbf16>, vector<256x128xf32> -> vector<256x128xf32>
    %c0_6 = arith.constant 0 : index
    %c0_7 = arith.constant 0 : index
    %12 = vector.load %arg7[%c0_6, %c0_7] : memref<256x128xf32, #tpu.memory_space<vmem>>, vector<256x128xf32>
    tpu.vector_store %arg7[%c0_6, %c0_7], %11 {strides = array<i32>} : memref<256x128xf32, #tpu.memory_space<vmem>>, vector<256x128xf32>,
    %c16_i32_8 = arith.constant 16 : i32
    %13 = arith.muli %arg1, %c16_i32_8 : i32
    %c0_i32_9 = arith.constant 0 : i32
    %14 = arith.addi %13, %c0_i32_9 : i32
    %15 = arith.index_cast %14 : i32 to index
    %c1 = arith.constant 1 : index
    %c0_10 = arith.constant 0 : index
    %16 = vector.load %arg6[%15, %c1, %c0_10] : memref<18x18x128xf32, #tpu.memory_space<vmem>>, vector<16x16x128xf32>
    %17 = vector.shape_cast %16 : vector<16x16x128xf32> to vector<256x128xf32>
    %18 = arith.truncf %17 : vector<256x128xf32> to vector<256x128xbf16>
    %c1_11 = arith.constant 1 : index
    %c0_12 = arith.constant 0 : index
    %c0_13 = arith.constant 0 : index
    %19 = vector.load %arg3[%c1_11, %c0_12, %c0_13] : memref<9x128x128xbf16, #tpu.memory_space<vmem>>, vector<1x128x128xbf16>
    %20 = vector.shape_cast %19 : vector<1x128x128xbf16> to vector<128x128xbf16>
    %cst_14 = arith.constant dense<0.000000e+00> : vector<256x128xf32>
    %21 = tpu.matmul %18, %20, %cst_14 {dimension_numbers = #tpu.dot_dimension_numbers<[1], [0], [0], [1], [0, 0, 1, 1], [], []>} : vector<256x128xbf16>, vector<128x128xbf16>, vector<256x128xf32> -> vector<256x128xf32>
    %c0_15 = arith.constant 0 : index
    %c0_16 = arith.constant 0 : index
    %22 = vector.load %arg7[%c0_15, %c0_16] : memref<256x128xf32, #tpu.memory_space<vmem>>, vector<256x128xf32>
    %23 = arith.addf %22, %21 : vector<256x128xf32>
    %c0_17 = arith.constant 0 : index
    %c0_18 = arith.constant 0 : index
    %24 = vector.load %arg7[%c0_17, %c0_18] : memref<256x128xf32, #tpu.memory_space<vmem>>, vector<256x128xf32>
    tpu.vector_store %arg7[%c0_17, %c0_18], %23 {strides = array<i32>} : memref<256x128xf32, #tpu.memory_space<vmem>>, vector<256x128xf32>,
    %c16_i32_19 = arith.constant 16 : i32
    %25 = arith.muli %arg1, %c16_i32_19 : i32
    %c0_i32_20 = arith.constant 0 : i32
    %26 = arith.addi %25, %c0_i32_20 : i32
    %27 = arith.index_cast %26 : i32 to index
    %c2 = arith.constant 2 : index
    %c0_21 = arith.constant 0 : index
    %28 = vector.load %arg6[%27, %c2, %c0_21] : memref<18x18x128xf32, #tpu.memory_space<vmem>>, vector<16x16x128xf32>
    %29 = vector.shape_cast %28 : vector<16x16x128xf32> to vector<256x128xf32>
    %30 = arith.truncf %29 : vector<256x128xf32> to vector<256x128xbf16>
    %c2_22 = arith.constant 2 : index
    %c0_23 = arith.constant 0 : index
    %c0_24 = arith.constant 0 : index
    %31 = vector.load %arg3[%c2_22, %c0_23, %c0_24] : memref<9x128x128xbf16, #tpu.memory_space<vmem>>, vector<1x128x128xbf16>
    %32 = vector.shape_cast %31 : vector<1x128x128xbf16> to vector<128x128xbf16>
    %cst_25 = arith.constant dense<0.000000e+00> : vector<256x128xf32>
    %33 = tpu.matmul %30, %32, %cst_25 {dimension_numbers = #tpu.dot_dimension_numbers<[1], [0], [0], [1], [0, 0, 1, 1], [], []>} : vector<256x128xbf16>, vector<128x128xbf16>, vector<256x128xf32> -> vector<256x128xf32>
    %c0_26 = arith.constant 0 : index
    %c0_27 = arith.constant 0 : index
    %34 = vector.load %arg7[%c0_26, %c0_27] : memref<256x128xf32, #tpu.memory_space<vmem>>, vector<256x128xf32>
    %35 = arith.addf %34, %33 : vector<256x128xf32>
    %c0_28 = arith.constant 0 : index
    %c0_29 = arith.constant 0 : index
    %36 = vector.load %arg7[%c0_28, %c0_29] : memref<256x128xf32, #tpu.memory_space<vmem>>, vector<256x128xf32>
    tpu.vector_store %arg7[%c0_28, %c0_29], %35 {strides = array<i32>} : memref<256x128xf32, #tpu.memory_space<vmem>>, vector<256x128xf32>,
    %c16_i32_30 = arith.constant 16 : i32
    %37 = arith.muli %arg1, %c16_i32_30 : i32
    %c1_i32 = arith.constant 1 : i32
    %38 = arith.addi %37, %c1_i32 : i32
    %39 = arith.index_cast %38 : i32 to index
    %c0_31 = arith.constant 0 : index
    %c0_32 = arith.constant 0 : index
    %40 = vector.load %arg6[%39, %c0_31, %c0_32] : memref<18x18x128xf32, #tpu.memory_space<vmem>>, vector<16x16x128xf32>
    %41 = vector.shape_cast %40 : vector<16x16x128xf32> to vector<256x128xf32>
    %42 = arith.truncf %41 : vector<256x128xf32> to vector<256x128xbf16>
    %c3 = arith.constant 3 : index
    %c0_33 = arith.constant 0 : index
    %c0_34 = arith.constant 0 : index
    %43 = vector.load %arg3[%c3, %c0_33, %c0_34] : memref<9x128x128xbf16, #tpu.memory_space<vmem>>, vector<1x128x128xbf16>
    %44 = vector.shape_cast %43 : vector<1x128x128xbf16> to vector<128x128xbf16>
    %cst_35 = arith.constant dense<0.000000e+00> : vector<256x128xf32>
    %45 = tpu.matmul %42, %44, %cst_35 {dimension_numbers = #tpu.dot_dimension_numbers<[1], [0], [0], [1], [0, 0, 1, 1], [], []>} : vector<256x128xbf16>, vector<128x128xbf16>, vector<256x128xf32> -> vector<256x128xf32>
    %c0_36 = arith.constant 0 : index
    %c0_37 = arith.constant 0 : index
    %46 = vector.load %arg7[%c0_36, %c0_37] : memref<256x128xf32, #tpu.memory_space<vmem>>, vector<256x128xf32>
    %47 = arith.addf %46, %45 : vector<256x128xf32>
    %c0_38 = arith.constant 0 : index
    %c0_39 = arith.constant 0 : index
    %48 = vector.load %arg7[%c0_38, %c0_39] : memref<256x128xf32, #tpu.memory_space<vmem>>, vector<256x128xf32>
    tpu.vector_store %arg7[%c0_38, %c0_39], %47 {strides = array<i32>} : memref<256x128xf32, #tpu.memory_space<vmem>>, vector<256x128xf32>,
    %c16_i32_40 = arith.constant 16 : i32
    %49 = arith.muli %arg1, %c16_i32_40 : i32
    %c1_i32_41 = arith.constant 1 : i32
    %50 = arith.addi %49, %c1_i32_41 : i32
    %51 = arith.index_cast %50 : i32 to index
    %c1_42 = arith.constant 1 : index
    %c0_43 = arith.constant 0 : index
    %52 = vector.load %arg6[%51, %c1_42, %c0_43] : memref<18x18x128xf32, #tpu.memory_space<vmem>>, vector<16x16x128xf32>
    %53 = vector.shape_cast %52 : vector<16x16x128xf32> to vector<256x128xf32>
    %54 = arith.truncf %53 : vector<256x128xf32> to vector<256x128xbf16>
    %c4 = arith.constant 4 : index
    %c0_44 = arith.constant 0 : index
    %c0_45 = arith.constant 0 : index
    %55 = vector.load %arg3[%c4, %c0_44, %c0_45] : memref<9x128x128xbf16, #tpu.memory_space<vmem>>, vector<1x128x128xbf16>
    %56 = vector.shape_cast %55 : vector<1x128x128xbf16> to vector<128x128xbf16>
    %cst_46 = arith.constant dense<0.000000e+00> : vector<256x128xf32>
    %57 = tpu.matmul %54, %56, %cst_46 {dimension_numbers = #tpu.dot_dimension_numbers<[1], [0], [0], [1], [0, 0, 1, 1], [], []>} : vector<256x128xbf16>, vector<128x128xbf16>, vector<256x128xf32> -> vector<256x128xf32>
    %c0_47 = arith.constant 0 : index
    %c0_48 = arith.constant 0 : index
    %58 = vector.load %arg7[%c0_47, %c0_48] : memref<256x128xf32, #tpu.memory_space<vmem>>, vector<256x128xf32>
    %59 = arith.addf %58, %57 : vector<256x128xf32>
    %c0_49 = arith.constant 0 : index
    %c0_50 = arith.constant 0 : index
    %60 = vector.load %arg7[%c0_49, %c0_50] : memref<256x128xf32, #tpu.memory_space<vmem>>, vector<256x128xf32>
    tpu.vector_store %arg7[%c0_49, %c0_50], %59 {strides = array<i32>} : memref<256x128xf32, #tpu.memory_space<vmem>>, vector<256x128xf32>,
    %c16_i32_51 = arith.constant 16 : i32
    %61 = arith.muli %arg1, %c16_i32_51 : i32
    %c1_i32_52 = arith.constant 1 : i32
    %62 = arith.addi %61, %c1_i32_52 : i32
    %63 = arith.index_cast %62 : i32 to index
    %c2_53 = arith.constant 2 : index
    %c0_54 = arith.constant 0 : index
    %64 = vector.load %arg6[%63, %c2_53, %c0_54] : memref<18x18x128xf32, #tpu.memory_space<vmem>>, vector<16x16x128xf32>
    %65 = vector.shape_cast %64 : vector<16x16x128xf32> to vector<256x128xf32>
    %66 = arith.truncf %65 : vector<256x128xf32> to vector<256x128xbf16>
    %c5 = arith.constant 5 : index
    %c0_55 = arith.constant 0 : index
    %c0_56 = arith.constant 0 : index
    %67 = vector.load %arg3[%c5, %c0_55, %c0_56] : memref<9x128x128xbf16, #tpu.memory_space<vmem>>, vector<1x128x128xbf16>
    %68 = vector.shape_cast %67 : vector<1x128x128xbf16> to vector<128x128xbf16>
    %cst_57 = arith.constant dense<0.000000e+00> : vector<256x128xf32>
    %69 = tpu.matmul %66, %68, %cst_57 {dimension_numbers = #tpu.dot_dimension_numbers<[1], [0], [0], [1], [0, 0, 1, 1], [], []>} : vector<256x128xbf16>, vector<128x128xbf16>, vector<256x128xf32> -> vector<256x128xf32>
    %c0_58 = arith.constant 0 : index
    %c0_59 = arith.constant 0 : index
    %70 = vector.load %arg7[%c0_58, %c0_59] : memref<256x128xf32, #tpu.memory_space<vmem>>, vector<256x128xf32>
    %71 = arith.addf %70, %69 : vector<256x128xf32>
    %c0_60 = arith.constant 0 : index
    %c0_61 = arith.constant 0 : index
    %72 = vector.load %arg7[%c0_60, %c0_61] : memref<256x128xf32, #tpu.memory_space<vmem>>, vector<256x128xf32>
    tpu.vector_store %arg7[%c0_60, %c0_61], %71 {strides = array<i32>} : memref<256x128xf32, #tpu.memory_space<vmem>>, vector<256x128xf32>,
    %c16_i32_62 = arith.constant 16 : i32
    %73 = arith.muli %arg1, %c16_i32_62 : i32
    %c2_i32 = arith.constant 2 : i32
    %74 = arith.addi %73, %c2_i32 : i32
    %75 = arith.index_cast %74 : i32 to index
    %c0_63 = arith.constant 0 : index
    %c0_64 = arith.constant 0 : index
    %76 = vector.load %arg6[%75, %c0_63, %c0_64] : memref<18x18x128xf32, #tpu.memory_space<vmem>>, vector<16x16x128xf32>
    %77 = vector.shape_cast %76 : vector<16x16x128xf32> to vector<256x128xf32>
    %78 = arith.truncf %77 : vector<256x128xf32> to vector<256x128xbf16>
    %c6 = arith.constant 6 : index
    %c0_65 = arith.constant 0 : index
    %c0_66 = arith.constant 0 : index
    %79 = vector.load %arg3[%c6, %c0_65, %c0_66] : memref<9x128x128xbf16, #tpu.memory_space<vmem>>, vector<1x128x128xbf16>
    %80 = vector.shape_cast %79 : vector<1x128x128xbf16> to vector<128x128xbf16>
    %cst_67 = arith.constant dense<0.000000e+00> : vector<256x128xf32>
    %81 = tpu.matmul %78, %80, %cst_67 {dimension_numbers = #tpu.dot_dimension_numbers<[1], [0], [0], [1], [0, 0, 1, 1], [], []>} : vector<256x128xbf16>, vector<128x128xbf16>, vector<256x128xf32> -> vector<256x128xf32>
    %c0_68 = arith.constant 0 : index
    %c0_69 = arith.constant 0 : index
    %82 = vector.load %arg7[%c0_68, %c0_69] : memref<256x128xf32, #tpu.memory_space<vmem>>, vector<256x128xf32>
    %83 = arith.addf %82, %81 : vector<256x128xf32>
    %c0_70 = arith.constant 0 : index
    %c0_71 = arith.constant 0 : index
    %84 = vector.load %arg7[%c0_70, %c0_71] : memref<256x128xf32, #tpu.memory_space<vmem>>, vector<256x128xf32>
    tpu.vector_store %arg7[%c0_70, %c0_71], %83 {strides = array<i32>} : memref<256x128xf32, #tpu.memory_space<vmem>>, vector<256x128xf32>,
    %c16_i32_72 = arith.constant 16 : i32
    %85 = arith.muli %arg1, %c16_i32_72 : i32
    %c2_i32_73 = arith.constant 2 : i32
    %86 = arith.addi %85, %c2_i32_73 : i32
    %87 = arith.index_cast %86 : i32 to index
    %c1_74 = arith.constant 1 : index
    %c0_75 = arith.constant 0 : index
    %88 = vector.load %arg6[%87, %c1_74, %c0_75] : memref<18x18x128xf32, #tpu.memory_space<vmem>>, vector<16x16x128xf32>
    %89 = vector.shape_cast %88 : vector<16x16x128xf32> to vector<256x128xf32>
    %90 = arith.truncf %89 : vector<256x128xf32> to vector<256x128xbf16>
    %c7 = arith.constant 7 : index
    %c0_76 = arith.constant 0 : index
    %c0_77 = arith.constant 0 : index
    %91 = vector.load %arg3[%c7, %c0_76, %c0_77] : memref<9x128x128xbf16, #tpu.memory_space<vmem>>, vector<1x128x128xbf16>
    %92 = vector.shape_cast %91 : vector<1x128x128xbf16> to vector<128x128xbf16>
    %cst_78 = arith.constant dense<0.000000e+00> : vector<256x128xf32>
    %93 = tpu.matmul %90, %92, %cst_78 {dimension_numbers = #tpu.dot_dimension_numbers<[1], [0], [0], [1], [0, 0, 1, 1], [], []>} : vector<256x128xbf16>, vector<128x128xbf16>, vector<256x128xf32> -> vector<256x128xf32>
    %c0_79 = arith.constant 0 : index
    %c0_80 = arith.constant 0 : index
    %94 = vector.load %arg7[%c0_79, %c0_80] : memref<256x128xf32, #tpu.memory_space<vmem>>, vector<256x128xf32>
    %95 = arith.addf %94, %93 : vector<256x128xf32>
    %c0_81 = arith.constant 0 : index
    %c0_82 = arith.constant 0 : index
    %96 = vector.load %arg7[%c0_81, %c0_82] : memref<256x128xf32, #tpu.memory_space<vmem>>, vector<256x128xf32>
    tpu.vector_store %arg7[%c0_81, %c0_82], %95 {strides = array<i32>} : memref<256x128xf32, #tpu.memory_space<vmem>>, vector<256x128xf32>,
    %c16_i32_83 = arith.constant 16 : i32
    %97 = arith.muli %arg1, %c16_i32_83 : i32
    %c2_i32_84 = arith.constant 2 : i32
    %98 = arith.addi %97, %c2_i32_84 : i32
    %99 = arith.index_cast %98 : i32 to index
    %c2_85 = arith.constant 2 : index
    %c0_86 = arith.constant 0 : index
    %100 = vector.load %arg6[%99, %c2_85, %c0_86] : memref<18x18x128xf32, #tpu.memory_space<vmem>>, vector<16x16x128xf32>
    %101 = vector.shape_cast %100 : vector<16x16x128xf32> to vector<256x128xf32>
    %102 = arith.truncf %101 : vector<256x128xf32> to vector<256x128xbf16>
    %c8 = arith.constant 8 : index
    %c0_87 = arith.constant 0 : index
    %c0_88 = arith.constant 0 : index
    %103 = vector.load %arg3[%c8, %c0_87, %c0_88] : memref<9x128x128xbf16, #tpu.memory_space<vmem>>, vector<1x128x128xbf16>
    %104 = vector.shape_cast %103 : vector<1x128x128xbf16> to vector<128x128xbf16>
    %cst_89 = arith.constant dense<0.000000e+00> : vector<256x128xf32>
    %105 = tpu.matmul %102, %104, %cst_89 {dimension_numbers = #tpu.dot_dimension_numbers<[1], [0], [0], [1], [0, 0, 1, 1], [], []>} : vector<256x128xbf16>, vector<128x128xbf16>, vector<256x128xf32> -> vector<256x128xf32>
    %c0_90 = arith.constant 0 : index
    %c0_91 = arith.constant 0 : index
    %106 = vector.load %arg7[%c0_90, %c0_91] : memref<256x128xf32, #tpu.memory_space<vmem>>, vector<256x128xf32>
    %107 = arith.addf %106, %105 : vector<256x128xf32>
    %c0_92 = arith.constant 0 : index
    %c0_93 = arith.constant 0 : index
    %108 = vector.load %arg7[%c0_92, %c0_93] : memref<256x128xf32, #tpu.memory_space<vmem>>, vector<256x128xf32>
    tpu.vector_store %arg7[%c0_92, %c0_93], %107 {strides = array<i32>} : memref<256x128xf32, #tpu.memory_space<vmem>>, vector<256x128xf32>,
    %c0_94 = arith.constant 0 : index
    %c0_95 = arith.constant 0 : index
    %109 = vector.load %arg7[%c0_94, %c0_95] : memref<256x128xf32, #tpu.memory_space<vmem>>, vector<256x128xf32>
    %110 = vector.shape_cast %109 : vector<256x128xf32> to vector<16x16x128xf32>
    %111 = arith.truncf %110 : vector<16x16x128xf32> to vector<16x16x128xbf16>
    %c0_96 = arith.constant 0 : index
    %c0_97 = arith.constant 0 : index
    %c0_98 = arith.constant 0 : index
    %c0_99 = arith.constant 0 : index
    %112 = vector.load %arg4[%c0_96, %c0_97, %c0_98, %c0_99] : memref<1x16x16x128xbf16, #tpu.memory_space<vmem>>, vector<1x16x16x128xbf16>
    %113 = vector.shape_cast %112 : vector<1x16x16x128xbf16> to vector<16x16x128xbf16>
    %114 = vector.shape_cast %111 : vector<16x16x128xbf16> to vector<1x16x16x128xbf16>
    tpu.vector_store %arg4[%c0_96, %c0_97, %c0_98, %c0_99], %114 {strides = array<i32>} : memref<1x16x16x128xbf16, #tpu.memory_space<vmem>>, vector<1x16x16x128xbf16>,
    %c0_100 = arith.constant 0 : index
    %c0_101 = arith.constant 0 : index
    %115 = vector.load %arg8[%c0_100, %c0_101] : memref<1x128xf32, #tpu.memory_space<vmem>>, vector<1x128xf32>
    %cst_102 = arith.constant dense<0.000000e+00> : vector<128xf32>
    %116 = vector.multi_reduction <add>, %109, %cst_102 [0] : vector<256x128xf32> to vector<128xf32>
    %117 = vector.shape_cast %116 : vector<128xf32> to vector<1x128xf32>
    %118 = arith.addf %115, %117 : vector<1x128xf32>
    %c0_103 = arith.constant 0 : index
    %c0_104 = arith.constant 0 : index
    %119 = vector.load %arg8[%c0_103, %c0_104] : memref<1x128xf32, #tpu.memory_space<vmem>>, vector<1x128xf32>
    tpu.vector_store %arg8[%c0_103, %c0_104], %118 {strides = array<i32>} : memref<1x128xf32, #tpu.memory_space<vmem>>, vector<1x128xf32>,
    %c0_105 = arith.constant 0 : index
    %c0_106 = arith.constant 0 : index
    %120 = vector.load %arg9[%c0_105, %c0_106] : memref<1x128xf32, #tpu.memory_space<vmem>>, vector<1x128xf32>
    %121 = arith.mulf %109, %109 : vector<256x128xf32>
    %cst_107 = arith.constant dense<0.000000e+00> : vector<128xf32>
    %122 = vector.multi_reduction <add>, %121, %cst_107 [0] : vector<256x128xf32> to vector<128xf32>
    %123 = vector.shape_cast %122 : vector<128xf32> to vector<1x128xf32>
    %124 = arith.addf %120, %123 : vector<1x128xf32>
    %c0_108 = arith.constant 0 : index
    %c0_109 = arith.constant 0 : index
    %125 = vector.load %arg9[%c0_108, %c0_109] : memref<1x128xf32, #tpu.memory_space<vmem>>, vector<1x128xf32>
    tpu.vector_store %arg9[%c0_108, %c0_109], %124 {strides = array<i32>} : memref<1x128xf32, #tpu.memory_space<vmem>>, vector<1x128xf32>,
    %c0_i32_110 = arith.constant 0 : i32
    %126 = arith.cmpi eq, %arg1, %c0_i32_110 : i32
    %127 = arith.extui %126 : i1 to i32
    %c0_i32_111 = arith.constant 0 : i32
    %128 = arith.cmpi ne, %127, %c0_i32_111 : i32
    scf.if %128 {
      %c0_112 = arith.constant 0 : index
      %c0_113 = arith.constant 0 : index
      %129 = vector.load %arg8[%c0_112, %c0_113] : memref<1x128xf32, #tpu.memory_space<vmem>>, vector<1x128xf32>
      %c0_114 = arith.constant 0 : index
      %c0_115 = arith.constant 0 : index
      %c0_116 = arith.constant 0 : index
      %130 = vector.load %arg5[%c0_114, %c0_115, %c0_116] : memref<1x2x128xf32, #tpu.memory_space<vmem>>, vector<1x1x128xf32>
      %131 = vector.shape_cast %130 : vector<1x1x128xf32> to vector<1x128xf32>
      %132 = vector.shape_cast %129 : vector<1x128xf32> to vector<1x1x128xf32>
      tpu.vector_store %arg5[%c0_114, %c0_115, %c0_116], %132 {strides = array<i32>} : memref<1x2x128xf32, #tpu.memory_space<vmem>>, vector<1x1x128xf32>,
      %c0_117 = arith.constant 0 : index
      %c0_118 = arith.constant 0 : index
      %133 = vector.load %arg9[%c0_117, %c0_118] : memref<1x128xf32, #tpu.memory_space<vmem>>, vector<1x128xf32>
      %c0_119 = arith.constant 0 : index
      %c1_120 = arith.constant 1 : index
      %c0_121 = arith.constant 0 : index
      %134 = vector.load %arg5[%c0_119, %c1_120, %c0_121] : memref<1x2x128xf32, #tpu.memory_space<vmem>>, vector<1x1x128xf32>
      %135 = vector.shape_cast %134 : vector<1x1x128xf32> to vector<1x128xf32>
      %136 = vector.shape_cast %133 : vector<1x128xf32> to vector<1x1x128xf32>
      tpu.vector_store %arg5[%c0_119, %c1_120, %c0_121], %136 {strides = array<i32>} : memref<1x2x128xf32, #tpu.memory_space<vmem>>, vector<1x1x128xf32>,
    } else {
    }
    return
  }
  func.func @transform_0(%arg0: i32, %arg1: i32) -> (i32, i32, i32, i32) {
    %c0_i32 = arith.constant 0 : i32
    %c0_i32_0 = arith.constant 0 : i32
    %c0_i32_1 = arith.constant 0 : i32
    %c0_i32_2 = arith.constant 0 : i32
    return %arg0, %c0_i32, %c0_i32_0, %c0_i32_1 : i32, i32, i32, i32
  }
  func.func @transform_1(%arg0: i32, %arg1: i32) -> (i32, i32, i32) {
    %c0_i32 = arith.constant 0 : i32
    %c0_i32_0 = arith.constant 0 : i32
    %c0_i32_1 = arith.constant 0 : i32
    %c0_i32_2 = arith.constant 0 : i32
    return %c0_i32, %c0_i32_0, %c0_i32_1 : i32, i32, i32
  }
  func.func @transform_2(%arg0: i32, %arg1: i32) -> (i32, i32, i32, i32) {
    %c0_i32 = arith.constant 0 : i32
    %c0_i32_0 = arith.constant 0 : i32
    %c0_i32_1 = arith.constant 0 : i32
    return %arg0, %arg1, %c0_i32, %c0_i32_0 : i32, i32, i32, i32
  }
  func.func @transform_3(%arg0: i32, %arg1: i32) -> (i32, i32, i32) {
    %c0_i32 = arith.constant 0 : i32
    %c0_i32_0 = arith.constant 0 : i32
    %c0_i32_1 = arith.constant 0 : i32
    return %arg0, %c0_i32, %c0_i32_0 : i32, i32, i32
  }
}

module attributes {stable_mosaic.version = 11 : i64} {
  func.func @_conv_bnrelu_kernel(%arg0: i32, %arg1: i32, %arg2: memref<1x16x16x128xbf16, #tpu.memory_space<vmem>>, %arg3: memref<1x128xf32, #tpu.memory_space<vmem>>, %arg4: memref<1x128xf32, #tpu.memory_space<vmem>>, %arg5: memref<9x128x128xbf16, #tpu.memory_space<vmem>>, %arg6: memref<1x16x16x128xbf16, #tpu.memory_space<vmem>>, %arg7: memref<1x2x128xf32, #tpu.memory_space<vmem>>, %arg8: memref<18x18x128xf32, #tpu.memory_space<vmem>>, %arg9: memref<256x128xf32, #tpu.memory_space<vmem>>, %arg10: memref<1x128xf32, #tpu.memory_space<vmem>>, %arg11: memref<1x128xf32, #tpu.memory_space<vmem>>) attributes {dimension_semantics = [#tpu.dimension_semantics<parallel>, #tpu.dimension_semantics<arbitrary>], iteration_bounds = array<i64: 2, 1>, scalar_prefetch = 0 : i64, scratch_operands = 4 : i64, tpu.core_type = #tpu.core_type<tc>, window_params = [{transform_indices = @transform_0, window_bounds = array<i64: 1, 16, 16, 128>}, {pipeline_mode = #tpu.pipeline_mode<synchronous>, transform_indices = @transform_1, window_bounds = array<i64: 1, 128>}, {pipeline_mode = #tpu.pipeline_mode<synchronous>, transform_indices = @transform_2, window_bounds = array<i64: 1, 128>}, {pipeline_mode = #tpu.pipeline_mode<synchronous>, transform_indices = @transform_3, window_bounds = array<i64: 9, 128, 128>}, {transform_indices = @transform_4, window_bounds = array<i64: 1, 16, 16, 128>}, {transform_indices = @transform_5, window_bounds = array<i64: 1, 2, 128>}]} {
    %c0_i32 = arith.constant 0 : i32
    %0 = arith.cmpi eq, %arg1, %c0_i32 : i32
    %1 = arith.extui %0 : i1 to i32
    %c0_i32_0 = arith.constant 0 : i32
    %2 = arith.cmpi ne, %1, %c0_i32_0 : i32
    scf.if %2 {
      %cst_112 = arith.constant 0.000000e+00 : f32
      %129 = vector.broadcast %cst_112 : f32 to vector<18x18x128xf32>
      %c0_113 = arith.constant 0 : index
      %c0_114 = arith.constant 0 : index
      %c0_115 = arith.constant 0 : index
      %130 = vector.load %arg8[%c0_113, %c0_114, %c0_115] : memref<18x18x128xf32, #tpu.memory_space<vmem>>, vector<18x18x128xf32>
      tpu.vector_store %arg8[%c0_113, %c0_114, %c0_115], %129 {strides = array<i32>} : memref<18x18x128xf32, #tpu.memory_space<vmem>>, vector<18x18x128xf32>,
      %c0_116 = arith.constant 0 : index
      %c0_117 = arith.constant 0 : index
      %c0_118 = arith.constant 0 : index
      %c0_119 = arith.constant 0 : index
      %131 = vector.load %arg2[%c0_116, %c0_117, %c0_118, %c0_119] : memref<1x16x16x128xbf16, #tpu.memory_space<vmem>>, vector<1x16x16x128xbf16>
      %132 = vector.shape_cast %131 : vector<1x16x16x128xbf16> to vector<16x16x128xbf16>
      %133 = arith.extf %132 : vector<16x16x128xbf16> to vector<16x16x128xf32>
      %c0_120 = arith.constant 0 : index
      %c0_121 = arith.constant 0 : index
      %134 = vector.load %arg3[%c0_120, %c0_121] : memref<1x128xf32, #tpu.memory_space<vmem>>, vector<1x128xf32>
      %135 = vector.shape_cast %134 : vector<1x128xf32> to vector<128xf32>
      %136 = vector.shape_cast %135 : vector<128xf32> to vector<1x1x128xf32>
      %137 = vector.broadcast %136 : vector<1x1x128xf32> to vector<16x16x128xf32>
      %138 = arith.mulf %133, %137 : vector<16x16x128xf32>
      %c0_122 = arith.constant 0 : index
      %c0_123 = arith.constant 0 : index
      %139 = vector.load %arg4[%c0_122, %c0_123] : memref<1x128xf32, #tpu.memory_space<vmem>>, vector<1x128xf32>
      %140 = vector.shape_cast %139 : vector<1x128xf32> to vector<128xf32>
      %141 = vector.shape_cast %140 : vector<128xf32> to vector<1x1x128xf32>
      %142 = vector.broadcast %141 : vector<1x1x128xf32> to vector<16x16x128xf32>
      %143 = arith.addf %138, %142 : vector<16x16x128xf32>
      %cst_124 = arith.constant 0.000000e+00 : f32
      %144 = vector.broadcast %cst_124 : f32 to vector<16x16x128xf32>
      %145 = arith.maximumf %143, %144 : vector<16x16x128xf32>
      %c1_125 = arith.constant 1 : index
      %c1_126 = arith.constant 1 : index
      %c0_127 = arith.constant 0 : index
      %146 = vector.load %arg8[%c1_125, %c1_126, %c0_127] : memref<18x18x128xf32, #tpu.memory_space<vmem>>, vector<16x16x128xf32>
      tpu.vector_store %arg8[%c1_125, %c1_126, %c0_127], %145 {strides = array<i32>} : memref<18x18x128xf32, #tpu.memory_space<vmem>>, vector<16x16x128xf32>,
      %cst_128 = arith.constant 0.000000e+00 : f32
      %147 = vector.broadcast %cst_128 : f32 to vector<1x128xf32>
      %c0_129 = arith.constant 0 : index
      %c0_130 = arith.constant 0 : index
      %148 = vector.load %arg10[%c0_129, %c0_130] : memref<1x128xf32, #tpu.memory_space<vmem>>, vector<1x128xf32>
      tpu.vector_store %arg10[%c0_129, %c0_130], %147 {strides = array<i32>} : memref<1x128xf32, #tpu.memory_space<vmem>>, vector<1x128xf32>,
      %cst_131 = arith.constant 0.000000e+00 : f32
      %149 = vector.broadcast %cst_131 : f32 to vector<1x128xf32>
      %c0_132 = arith.constant 0 : index
      %c0_133 = arith.constant 0 : index
      %150 = vector.load %arg11[%c0_132, %c0_133] : memref<1x128xf32, #tpu.memory_space<vmem>>, vector<1x128xf32>
      tpu.vector_store %arg11[%c0_132, %c0_133], %149 {strides = array<i32>} : memref<1x128xf32, #tpu.memory_space<vmem>>, vector<1x128xf32>,
    } else {
    }
    %c16_i32 = arith.constant 16 : i32
    %3 = arith.muli %arg1, %c16_i32 : i32
    %c0_i32_1 = arith.constant 0 : i32
    %4 = arith.addi %3, %c0_i32_1 : i32
    %5 = arith.index_cast %4 : i32 to index
    %c0 = arith.constant 0 : index
    %c0_2 = arith.constant 0 : index
    %6 = vector.load %arg8[%5, %c0, %c0_2] : memref<18x18x128xf32, #tpu.memory_space<vmem>>, vector<16x16x128xf32>
    %7 = vector.shape_cast %6 : vector<16x16x128xf32> to vector<256x128xf32>
    %8 = arith.truncf %7 : vector<256x128xf32> to vector<256x128xbf16>
    %c0_3 = arith.constant 0 : index
    %c0_4 = arith.constant 0 : index
    %c0_5 = arith.constant 0 : index
    %9 = vector.load %arg5[%c0_3, %c0_4, %c0_5] : memref<9x128x128xbf16, #tpu.memory_space<vmem>>, vector<1x128x128xbf16>
    %10 = vector.shape_cast %9 : vector<1x128x128xbf16> to vector<128x128xbf16>
    %cst = arith.constant dense<0.000000e+00> : vector<256x128xf32>
    %11 = tpu.matmul %8, %10, %cst {dimension_numbers = #tpu.dot_dimension_numbers<[1], [0], [0], [1], [0, 0, 1, 1], [], []>} : vector<256x128xbf16>, vector<128x128xbf16>, vector<256x128xf32> -> vector<256x128xf32>
    %c0_6 = arith.constant 0 : index
    %c0_7 = arith.constant 0 : index
    %12 = vector.load %arg9[%c0_6, %c0_7] : memref<256x128xf32, #tpu.memory_space<vmem>>, vector<256x128xf32>
    tpu.vector_store %arg9[%c0_6, %c0_7], %11 {strides = array<i32>} : memref<256x128xf32, #tpu.memory_space<vmem>>, vector<256x128xf32>,
    %c16_i32_8 = arith.constant 16 : i32
    %13 = arith.muli %arg1, %c16_i32_8 : i32
    %c0_i32_9 = arith.constant 0 : i32
    %14 = arith.addi %13, %c0_i32_9 : i32
    %15 = arith.index_cast %14 : i32 to index
    %c1 = arith.constant 1 : index
    %c0_10 = arith.constant 0 : index
    %16 = vector.load %arg8[%15, %c1, %c0_10] : memref<18x18x128xf32, #tpu.memory_space<vmem>>, vector<16x16x128xf32>
    %17 = vector.shape_cast %16 : vector<16x16x128xf32> to vector<256x128xf32>
    %18 = arith.truncf %17 : vector<256x128xf32> to vector<256x128xbf16>
    %c1_11 = arith.constant 1 : index
    %c0_12 = arith.constant 0 : index
    %c0_13 = arith.constant 0 : index
    %19 = vector.load %arg5[%c1_11, %c0_12, %c0_13] : memref<9x128x128xbf16, #tpu.memory_space<vmem>>, vector<1x128x128xbf16>
    %20 = vector.shape_cast %19 : vector<1x128x128xbf16> to vector<128x128xbf16>
    %cst_14 = arith.constant dense<0.000000e+00> : vector<256x128xf32>
    %21 = tpu.matmul %18, %20, %cst_14 {dimension_numbers = #tpu.dot_dimension_numbers<[1], [0], [0], [1], [0, 0, 1, 1], [], []>} : vector<256x128xbf16>, vector<128x128xbf16>, vector<256x128xf32> -> vector<256x128xf32>
    %c0_15 = arith.constant 0 : index
    %c0_16 = arith.constant 0 : index
    %22 = vector.load %arg9[%c0_15, %c0_16] : memref<256x128xf32, #tpu.memory_space<vmem>>, vector<256x128xf32>
    %23 = arith.addf %22, %21 : vector<256x128xf32>
    %c0_17 = arith.constant 0 : index
    %c0_18 = arith.constant 0 : index
    %24 = vector.load %arg9[%c0_17, %c0_18] : memref<256x128xf32, #tpu.memory_space<vmem>>, vector<256x128xf32>
    tpu.vector_store %arg9[%c0_17, %c0_18], %23 {strides = array<i32>} : memref<256x128xf32, #tpu.memory_space<vmem>>, vector<256x128xf32>,
    %c16_i32_19 = arith.constant 16 : i32
    %25 = arith.muli %arg1, %c16_i32_19 : i32
    %c0_i32_20 = arith.constant 0 : i32
    %26 = arith.addi %25, %c0_i32_20 : i32
    %27 = arith.index_cast %26 : i32 to index
    %c2 = arith.constant 2 : index
    %c0_21 = arith.constant 0 : index
    %28 = vector.load %arg8[%27, %c2, %c0_21] : memref<18x18x128xf32, #tpu.memory_space<vmem>>, vector<16x16x128xf32>
    %29 = vector.shape_cast %28 : vector<16x16x128xf32> to vector<256x128xf32>
    %30 = arith.truncf %29 : vector<256x128xf32> to vector<256x128xbf16>
    %c2_22 = arith.constant 2 : index
    %c0_23 = arith.constant 0 : index
    %c0_24 = arith.constant 0 : index
    %31 = vector.load %arg5[%c2_22, %c0_23, %c0_24] : memref<9x128x128xbf16, #tpu.memory_space<vmem>>, vector<1x128x128xbf16>
    %32 = vector.shape_cast %31 : vector<1x128x128xbf16> to vector<128x128xbf16>
    %cst_25 = arith.constant dense<0.000000e+00> : vector<256x128xf32>
    %33 = tpu.matmul %30, %32, %cst_25 {dimension_numbers = #tpu.dot_dimension_numbers<[1], [0], [0], [1], [0, 0, 1, 1], [], []>} : vector<256x128xbf16>, vector<128x128xbf16>, vector<256x128xf32> -> vector<256x128xf32>
    %c0_26 = arith.constant 0 : index
    %c0_27 = arith.constant 0 : index
    %34 = vector.load %arg9[%c0_26, %c0_27] : memref<256x128xf32, #tpu.memory_space<vmem>>, vector<256x128xf32>
    %35 = arith.addf %34, %33 : vector<256x128xf32>
    %c0_28 = arith.constant 0 : index
    %c0_29 = arith.constant 0 : index
    %36 = vector.load %arg9[%c0_28, %c0_29] : memref<256x128xf32, #tpu.memory_space<vmem>>, vector<256x128xf32>
    tpu.vector_store %arg9[%c0_28, %c0_29], %35 {strides = array<i32>} : memref<256x128xf32, #tpu.memory_space<vmem>>, vector<256x128xf32>,
    %c16_i32_30 = arith.constant 16 : i32
    %37 = arith.muli %arg1, %c16_i32_30 : i32
    %c1_i32 = arith.constant 1 : i32
    %38 = arith.addi %37, %c1_i32 : i32
    %39 = arith.index_cast %38 : i32 to index
    %c0_31 = arith.constant 0 : index
    %c0_32 = arith.constant 0 : index
    %40 = vector.load %arg8[%39, %c0_31, %c0_32] : memref<18x18x128xf32, #tpu.memory_space<vmem>>, vector<16x16x128xf32>
    %41 = vector.shape_cast %40 : vector<16x16x128xf32> to vector<256x128xf32>
    %42 = arith.truncf %41 : vector<256x128xf32> to vector<256x128xbf16>
    %c3 = arith.constant 3 : index
    %c0_33 = arith.constant 0 : index
    %c0_34 = arith.constant 0 : index
    %43 = vector.load %arg5[%c3, %c0_33, %c0_34] : memref<9x128x128xbf16, #tpu.memory_space<vmem>>, vector<1x128x128xbf16>
    %44 = vector.shape_cast %43 : vector<1x128x128xbf16> to vector<128x128xbf16>
    %cst_35 = arith.constant dense<0.000000e+00> : vector<256x128xf32>
    %45 = tpu.matmul %42, %44, %cst_35 {dimension_numbers = #tpu.dot_dimension_numbers<[1], [0], [0], [1], [0, 0, 1, 1], [], []>} : vector<256x128xbf16>, vector<128x128xbf16>, vector<256x128xf32> -> vector<256x128xf32>
    %c0_36 = arith.constant 0 : index
    %c0_37 = arith.constant 0 : index
    %46 = vector.load %arg9[%c0_36, %c0_37] : memref<256x128xf32, #tpu.memory_space<vmem>>, vector<256x128xf32>
    %47 = arith.addf %46, %45 : vector<256x128xf32>
    %c0_38 = arith.constant 0 : index
    %c0_39 = arith.constant 0 : index
    %48 = vector.load %arg9[%c0_38, %c0_39] : memref<256x128xf32, #tpu.memory_space<vmem>>, vector<256x128xf32>
    tpu.vector_store %arg9[%c0_38, %c0_39], %47 {strides = array<i32>} : memref<256x128xf32, #tpu.memory_space<vmem>>, vector<256x128xf32>,
    %c16_i32_40 = arith.constant 16 : i32
    %49 = arith.muli %arg1, %c16_i32_40 : i32
    %c1_i32_41 = arith.constant 1 : i32
    %50 = arith.addi %49, %c1_i32_41 : i32
    %51 = arith.index_cast %50 : i32 to index
    %c1_42 = arith.constant 1 : index
    %c0_43 = arith.constant 0 : index
    %52 = vector.load %arg8[%51, %c1_42, %c0_43] : memref<18x18x128xf32, #tpu.memory_space<vmem>>, vector<16x16x128xf32>
    %53 = vector.shape_cast %52 : vector<16x16x128xf32> to vector<256x128xf32>
    %54 = arith.truncf %53 : vector<256x128xf32> to vector<256x128xbf16>
    %c4 = arith.constant 4 : index
    %c0_44 = arith.constant 0 : index
    %c0_45 = arith.constant 0 : index
    %55 = vector.load %arg5[%c4, %c0_44, %c0_45] : memref<9x128x128xbf16, #tpu.memory_space<vmem>>, vector<1x128x128xbf16>
    %56 = vector.shape_cast %55 : vector<1x128x128xbf16> to vector<128x128xbf16>
    %cst_46 = arith.constant dense<0.000000e+00> : vector<256x128xf32>
    %57 = tpu.matmul %54, %56, %cst_46 {dimension_numbers = #tpu.dot_dimension_numbers<[1], [0], [0], [1], [0, 0, 1, 1], [], []>} : vector<256x128xbf16>, vector<128x128xbf16>, vector<256x128xf32> -> vector<256x128xf32>
    %c0_47 = arith.constant 0 : index
    %c0_48 = arith.constant 0 : index
    %58 = vector.load %arg9[%c0_47, %c0_48] : memref<256x128xf32, #tpu.memory_space<vmem>>, vector<256x128xf32>
    %59 = arith.addf %58, %57 : vector<256x128xf32>
    %c0_49 = arith.constant 0 : index
    %c0_50 = arith.constant 0 : index
    %60 = vector.load %arg9[%c0_49, %c0_50] : memref<256x128xf32, #tpu.memory_space<vmem>>, vector<256x128xf32>
    tpu.vector_store %arg9[%c0_49, %c0_50], %59 {strides = array<i32>} : memref<256x128xf32, #tpu.memory_space<vmem>>, vector<256x128xf32>,
    %c16_i32_51 = arith.constant 16 : i32
    %61 = arith.muli %arg1, %c16_i32_51 : i32
    %c1_i32_52 = arith.constant 1 : i32
    %62 = arith.addi %61, %c1_i32_52 : i32
    %63 = arith.index_cast %62 : i32 to index
    %c2_53 = arith.constant 2 : index
    %c0_54 = arith.constant 0 : index
    %64 = vector.load %arg8[%63, %c2_53, %c0_54] : memref<18x18x128xf32, #tpu.memory_space<vmem>>, vector<16x16x128xf32>
    %65 = vector.shape_cast %64 : vector<16x16x128xf32> to vector<256x128xf32>
    %66 = arith.truncf %65 : vector<256x128xf32> to vector<256x128xbf16>
    %c5 = arith.constant 5 : index
    %c0_55 = arith.constant 0 : index
    %c0_56 = arith.constant 0 : index
    %67 = vector.load %arg5[%c5, %c0_55, %c0_56] : memref<9x128x128xbf16, #tpu.memory_space<vmem>>, vector<1x128x128xbf16>
    %68 = vector.shape_cast %67 : vector<1x128x128xbf16> to vector<128x128xbf16>
    %cst_57 = arith.constant dense<0.000000e+00> : vector<256x128xf32>
    %69 = tpu.matmul %66, %68, %cst_57 {dimension_numbers = #tpu.dot_dimension_numbers<[1], [0], [0], [1], [0, 0, 1, 1], [], []>} : vector<256x128xbf16>, vector<128x128xbf16>, vector<256x128xf32> -> vector<256x128xf32>
    %c0_58 = arith.constant 0 : index
    %c0_59 = arith.constant 0 : index
    %70 = vector.load %arg9[%c0_58, %c0_59] : memref<256x128xf32, #tpu.memory_space<vmem>>, vector<256x128xf32>
    %71 = arith.addf %70, %69 : vector<256x128xf32>
    %c0_60 = arith.constant 0 : index
    %c0_61 = arith.constant 0 : index
    %72 = vector.load %arg9[%c0_60, %c0_61] : memref<256x128xf32, #tpu.memory_space<vmem>>, vector<256x128xf32>
    tpu.vector_store %arg9[%c0_60, %c0_61], %71 {strides = array<i32>} : memref<256x128xf32, #tpu.memory_space<vmem>>, vector<256x128xf32>,
    %c16_i32_62 = arith.constant 16 : i32
    %73 = arith.muli %arg1, %c16_i32_62 : i32
    %c2_i32 = arith.constant 2 : i32
    %74 = arith.addi %73, %c2_i32 : i32
    %75 = arith.index_cast %74 : i32 to index
    %c0_63 = arith.constant 0 : index
    %c0_64 = arith.constant 0 : index
    %76 = vector.load %arg8[%75, %c0_63, %c0_64] : memref<18x18x128xf32, #tpu.memory_space<vmem>>, vector<16x16x128xf32>
    %77 = vector.shape_cast %76 : vector<16x16x128xf32> to vector<256x128xf32>
    %78 = arith.truncf %77 : vector<256x128xf32> to vector<256x128xbf16>
    %c6 = arith.constant 6 : index
    %c0_65 = arith.constant 0 : index
    %c0_66 = arith.constant 0 : index
    %79 = vector.load %arg5[%c6, %c0_65, %c0_66] : memref<9x128x128xbf16, #tpu.memory_space<vmem>>, vector<1x128x128xbf16>
    %80 = vector.shape_cast %79 : vector<1x128x128xbf16> to vector<128x128xbf16>
    %cst_67 = arith.constant dense<0.000000e+00> : vector<256x128xf32>
    %81 = tpu.matmul %78, %80, %cst_67 {dimension_numbers = #tpu.dot_dimension_numbers<[1], [0], [0], [1], [0, 0, 1, 1], [], []>} : vector<256x128xbf16>, vector<128x128xbf16>, vector<256x128xf32> -> vector<256x128xf32>
    %c0_68 = arith.constant 0 : index
    %c0_69 = arith.constant 0 : index
    %82 = vector.load %arg9[%c0_68, %c0_69] : memref<256x128xf32, #tpu.memory_space<vmem>>, vector<256x128xf32>
    %83 = arith.addf %82, %81 : vector<256x128xf32>
    %c0_70 = arith.constant 0 : index
    %c0_71 = arith.constant 0 : index
    %84 = vector.load %arg9[%c0_70, %c0_71] : memref<256x128xf32, #tpu.memory_space<vmem>>, vector<256x128xf32>
    tpu.vector_store %arg9[%c0_70, %c0_71], %83 {strides = array<i32>} : memref<256x128xf32, #tpu.memory_space<vmem>>, vector<256x128xf32>,
    %c16_i32_72 = arith.constant 16 : i32
    %85 = arith.muli %arg1, %c16_i32_72 : i32
    %c2_i32_73 = arith.constant 2 : i32
    %86 = arith.addi %85, %c2_i32_73 : i32
    %87 = arith.index_cast %86 : i32 to index
    %c1_74 = arith.constant 1 : index
    %c0_75 = arith.constant 0 : index
    %88 = vector.load %arg8[%87, %c1_74, %c0_75] : memref<18x18x128xf32, #tpu.memory_space<vmem>>, vector<16x16x128xf32>
    %89 = vector.shape_cast %88 : vector<16x16x128xf32> to vector<256x128xf32>
    %90 = arith.truncf %89 : vector<256x128xf32> to vector<256x128xbf16>
    %c7 = arith.constant 7 : index
    %c0_76 = arith.constant 0 : index
    %c0_77 = arith.constant 0 : index
    %91 = vector.load %arg5[%c7, %c0_76, %c0_77] : memref<9x128x128xbf16, #tpu.memory_space<vmem>>, vector<1x128x128xbf16>
    %92 = vector.shape_cast %91 : vector<1x128x128xbf16> to vector<128x128xbf16>
    %cst_78 = arith.constant dense<0.000000e+00> : vector<256x128xf32>
    %93 = tpu.matmul %90, %92, %cst_78 {dimension_numbers = #tpu.dot_dimension_numbers<[1], [0], [0], [1], [0, 0, 1, 1], [], []>} : vector<256x128xbf16>, vector<128x128xbf16>, vector<256x128xf32> -> vector<256x128xf32>
    %c0_79 = arith.constant 0 : index
    %c0_80 = arith.constant 0 : index
    %94 = vector.load %arg9[%c0_79, %c0_80] : memref<256x128xf32, #tpu.memory_space<vmem>>, vector<256x128xf32>
    %95 = arith.addf %94, %93 : vector<256x128xf32>
    %c0_81 = arith.constant 0 : index
    %c0_82 = arith.constant 0 : index
    %96 = vector.load %arg9[%c0_81, %c0_82] : memref<256x128xf32, #tpu.memory_space<vmem>>, vector<256x128xf32>
    tpu.vector_store %arg9[%c0_81, %c0_82], %95 {strides = array<i32>} : memref<256x128xf32, #tpu.memory_space<vmem>>, vector<256x128xf32>,
    %c16_i32_83 = arith.constant 16 : i32
    %97 = arith.muli %arg1, %c16_i32_83 : i32
    %c2_i32_84 = arith.constant 2 : i32
    %98 = arith.addi %97, %c2_i32_84 : i32
    %99 = arith.index_cast %98 : i32 to index
    %c2_85 = arith.constant 2 : index
    %c0_86 = arith.constant 0 : index
    %100 = vector.load %arg8[%99, %c2_85, %c0_86] : memref<18x18x128xf32, #tpu.memory_space<vmem>>, vector<16x16x128xf32>
    %101 = vector.shape_cast %100 : vector<16x16x128xf32> to vector<256x128xf32>
    %102 = arith.truncf %101 : vector<256x128xf32> to vector<256x128xbf16>
    %c8 = arith.constant 8 : index
    %c0_87 = arith.constant 0 : index
    %c0_88 = arith.constant 0 : index
    %103 = vector.load %arg5[%c8, %c0_87, %c0_88] : memref<9x128x128xbf16, #tpu.memory_space<vmem>>, vector<1x128x128xbf16>
    %104 = vector.shape_cast %103 : vector<1x128x128xbf16> to vector<128x128xbf16>
    %cst_89 = arith.constant dense<0.000000e+00> : vector<256x128xf32>
    %105 = tpu.matmul %102, %104, %cst_89 {dimension_numbers = #tpu.dot_dimension_numbers<[1], [0], [0], [1], [0, 0, 1, 1], [], []>} : vector<256x128xbf16>, vector<128x128xbf16>, vector<256x128xf32> -> vector<256x128xf32>
    %c0_90 = arith.constant 0 : index
    %c0_91 = arith.constant 0 : index
    %106 = vector.load %arg9[%c0_90, %c0_91] : memref<256x128xf32, #tpu.memory_space<vmem>>, vector<256x128xf32>
    %107 = arith.addf %106, %105 : vector<256x128xf32>
    %c0_92 = arith.constant 0 : index
    %c0_93 = arith.constant 0 : index
    %108 = vector.load %arg9[%c0_92, %c0_93] : memref<256x128xf32, #tpu.memory_space<vmem>>, vector<256x128xf32>
    tpu.vector_store %arg9[%c0_92, %c0_93], %107 {strides = array<i32>} : memref<256x128xf32, #tpu.memory_space<vmem>>, vector<256x128xf32>,
    %c0_94 = arith.constant 0 : index
    %c0_95 = arith.constant 0 : index
    %109 = vector.load %arg9[%c0_94, %c0_95] : memref<256x128xf32, #tpu.memory_space<vmem>>, vector<256x128xf32>
    %110 = vector.shape_cast %109 : vector<256x128xf32> to vector<16x16x128xf32>
    %111 = arith.truncf %110 : vector<16x16x128xf32> to vector<16x16x128xbf16>
    %c0_96 = arith.constant 0 : index
    %c0_97 = arith.constant 0 : index
    %c0_98 = arith.constant 0 : index
    %c0_99 = arith.constant 0 : index
    %112 = vector.load %arg6[%c0_96, %c0_97, %c0_98, %c0_99] : memref<1x16x16x128xbf16, #tpu.memory_space<vmem>>, vector<1x16x16x128xbf16>
    %113 = vector.shape_cast %112 : vector<1x16x16x128xbf16> to vector<16x16x128xbf16>
    %114 = vector.shape_cast %111 : vector<16x16x128xbf16> to vector<1x16x16x128xbf16>
    tpu.vector_store %arg6[%c0_96, %c0_97, %c0_98, %c0_99], %114 {strides = array<i32>} : memref<1x16x16x128xbf16, #tpu.memory_space<vmem>>, vector<1x16x16x128xbf16>,
    %c0_100 = arith.constant 0 : index
    %c0_101 = arith.constant 0 : index
    %115 = vector.load %arg10[%c0_100, %c0_101] : memref<1x128xf32, #tpu.memory_space<vmem>>, vector<1x128xf32>
    %cst_102 = arith.constant dense<0.000000e+00> : vector<128xf32>
    %116 = vector.multi_reduction <add>, %109, %cst_102 [0] : vector<256x128xf32> to vector<128xf32>
    %117 = vector.shape_cast %116 : vector<128xf32> to vector<1x128xf32>
    %118 = arith.addf %115, %117 : vector<1x128xf32>
    %c0_103 = arith.constant 0 : index
    %c0_104 = arith.constant 0 : index
    %119 = vector.load %arg10[%c0_103, %c0_104] : memref<1x128xf32, #tpu.memory_space<vmem>>, vector<1x128xf32>
    tpu.vector_store %arg10[%c0_103, %c0_104], %118 {strides = array<i32>} : memref<1x128xf32, #tpu.memory_space<vmem>>, vector<1x128xf32>,
    %c0_105 = arith.constant 0 : index
    %c0_106 = arith.constant 0 : index
    %120 = vector.load %arg11[%c0_105, %c0_106] : memref<1x128xf32, #tpu.memory_space<vmem>>, vector<1x128xf32>
    %121 = arith.mulf %109, %109 : vector<256x128xf32>
    %cst_107 = arith.constant dense<0.000000e+00> : vector<128xf32>
    %122 = vector.multi_reduction <add>, %121, %cst_107 [0] : vector<256x128xf32> to vector<128xf32>
    %123 = vector.shape_cast %122 : vector<128xf32> to vector<1x128xf32>
    %124 = arith.addf %120, %123 : vector<1x128xf32>
    %c0_108 = arith.constant 0 : index
    %c0_109 = arith.constant 0 : index
    %125 = vector.load %arg11[%c0_108, %c0_109] : memref<1x128xf32, #tpu.memory_space<vmem>>, vector<1x128xf32>
    tpu.vector_store %arg11[%c0_108, %c0_109], %124 {strides = array<i32>} : memref<1x128xf32, #tpu.memory_space<vmem>>, vector<1x128xf32>,
    %c0_i32_110 = arith.constant 0 : i32
    %126 = arith.cmpi eq, %arg1, %c0_i32_110 : i32
    %127 = arith.extui %126 : i1 to i32
    %c0_i32_111 = arith.constant 0 : i32
    %128 = arith.cmpi ne, %127, %c0_i32_111 : i32
    scf.if %128 {
      %c0_112 = arith.constant 0 : index
      %c0_113 = arith.constant 0 : index
      %129 = vector.load %arg10[%c0_112, %c0_113] : memref<1x128xf32, #tpu.memory_space<vmem>>, vector<1x128xf32>
      %c0_114 = arith.constant 0 : index
      %c0_115 = arith.constant 0 : index
      %c0_116 = arith.constant 0 : index
      %130 = vector.load %arg7[%c0_114, %c0_115, %c0_116] : memref<1x2x128xf32, #tpu.memory_space<vmem>>, vector<1x1x128xf32>
      %131 = vector.shape_cast %130 : vector<1x1x128xf32> to vector<1x128xf32>
      %132 = vector.shape_cast %129 : vector<1x128xf32> to vector<1x1x128xf32>
      tpu.vector_store %arg7[%c0_114, %c0_115, %c0_116], %132 {strides = array<i32>} : memref<1x2x128xf32, #tpu.memory_space<vmem>>, vector<1x1x128xf32>,
      %c0_117 = arith.constant 0 : index
      %c0_118 = arith.constant 0 : index
      %133 = vector.load %arg11[%c0_117, %c0_118] : memref<1x128xf32, #tpu.memory_space<vmem>>, vector<1x128xf32>
      %c0_119 = arith.constant 0 : index
      %c1_120 = arith.constant 1 : index
      %c0_121 = arith.constant 0 : index
      %134 = vector.load %arg7[%c0_119, %c1_120, %c0_121] : memref<1x2x128xf32, #tpu.memory_space<vmem>>, vector<1x1x128xf32>
      %135 = vector.shape_cast %134 : vector<1x1x128xf32> to vector<1x128xf32>
      %136 = vector.shape_cast %133 : vector<1x128xf32> to vector<1x1x128xf32>
      tpu.vector_store %arg7[%c0_119, %c1_120, %c0_121], %136 {strides = array<i32>} : memref<1x2x128xf32, #tpu.memory_space<vmem>>, vector<1x1x128xf32>,
    } else {
    }
    return
  }
  func.func @transform_0(%arg0: i32, %arg1: i32) -> (i32, i32, i32, i32) {
    %c0_i32 = arith.constant 0 : i32
    %c0_i32_0 = arith.constant 0 : i32
    %c0_i32_1 = arith.constant 0 : i32
    %c0_i32_2 = arith.constant 0 : i32
    return %arg0, %c0_i32, %c0_i32_0, %c0_i32_1 : i32, i32, i32, i32
  }
  func.func @transform_1(%arg0: i32, %arg1: i32) -> (i32, i32) {
    %c0_i32 = arith.constant 0 : i32
    %c0_i32_0 = arith.constant 0 : i32
    %c0_i32_1 = arith.constant 0 : i32
    return %c0_i32, %c0_i32_0 : i32, i32
  }
  func.func @transform_2(%arg0: i32, %arg1: i32) -> (i32, i32) {
    %c0_i32 = arith.constant 0 : i32
    %c0_i32_0 = arith.constant 0 : i32
    %c0_i32_1 = arith.constant 0 : i32
    return %c0_i32, %c0_i32_0 : i32, i32
  }
  func.func @transform_3(%arg0: i32, %arg1: i32) -> (i32, i32, i32) {
    %c0_i32 = arith.constant 0 : i32
    %c0_i32_0 = arith.constant 0 : i32
    %c0_i32_1 = arith.constant 0 : i32
    %c0_i32_2 = arith.constant 0 : i32
    return %c0_i32, %c0_i32_0, %c0_i32_1 : i32, i32, i32
  }
  func.func @transform_4(%arg0: i32, %arg1: i32) -> (i32, i32, i32, i32) {
    %c0_i32 = arith.constant 0 : i32
    %c0_i32_0 = arith.constant 0 : i32
    %c0_i32_1 = arith.constant 0 : i32
    return %arg0, %arg1, %c0_i32, %c0_i32_0 : i32, i32, i32, i32
  }
  func.func @transform_5(%arg0: i32, %arg1: i32) -> (i32, i32, i32) {
    %c0_i32 = arith.constant 0 : i32
    %c0_i32_0 = arith.constant 0 : i32
    %c0_i32_1 = arith.constant 0 : i32
    return %arg0, %c0_i32, %c0_i32_0 : i32, i32, i32
  }
}

module attributes {stable_mosaic.version = 11 : i64} {
  func.func @_finalize_kernel(%arg0: i32, %arg1: i32, %arg2: memref<1x16x16x128xbf16, #tpu.memory_space<vmem>>, %arg3: memref<1x16x16x128xbf16, #tpu.memory_space<vmem>>, %arg4: memref<1x128xf32, #tpu.memory_space<vmem>>, %arg5: memref<1x128xf32, #tpu.memory_space<vmem>>, %arg6: memref<1x128xf32, #tpu.memory_space<vmem>>, %arg7: memref<1x128xf32, #tpu.memory_space<vmem>>, %arg8: memref<1x16x16x128xf32, #tpu.memory_space<vmem>>) attributes {dimension_semantics = [#tpu.dimension_semantics<parallel>, #tpu.dimension_semantics<parallel>], iteration_bounds = array<i64: 2, 1>, scalar_prefetch = 0 : i64, scratch_operands = 0 : i64, tpu.core_type = #tpu.core_type<tc>, window_params = [{transform_indices = @transform_0, window_bounds = array<i64: 1, 16, 16, 128>}, {transform_indices = @transform_1, window_bounds = array<i64: 1, 16, 16, 128>}, {pipeline_mode = #tpu.pipeline_mode<synchronous>, transform_indices = @transform_2, window_bounds = array<i64: 1, 128>}, {pipeline_mode = #tpu.pipeline_mode<synchronous>, transform_indices = @transform_3, window_bounds = array<i64: 1, 128>}, {pipeline_mode = #tpu.pipeline_mode<synchronous>, transform_indices = @transform_4, window_bounds = array<i64: 1, 128>}, {pipeline_mode = #tpu.pipeline_mode<synchronous>, transform_indices = @transform_5, window_bounds = array<i64: 1, 128>}, {transform_indices = @transform_6, window_bounds = array<i64: 1, 16, 16, 128>}]} {
    %c0 = arith.constant 0 : index
    %c0_0 = arith.constant 0 : index
    %c0_1 = arith.constant 0 : index
    %c0_2 = arith.constant 0 : index
    %0 = vector.load %arg2[%c0, %c0_0, %c0_1, %c0_2] : memref<1x16x16x128xbf16, #tpu.memory_space<vmem>>, vector<1x16x16x128xbf16>
    %1 = vector.shape_cast %0 : vector<1x16x16x128xbf16> to vector<16x16x128xbf16>
    %2 = arith.extf %1 : vector<16x16x128xbf16> to vector<16x16x128xf32>
    %c0_3 = arith.constant 0 : index
    %c0_4 = arith.constant 0 : index
    %3 = vector.load %arg4[%c0_3, %c0_4] : memref<1x128xf32, #tpu.memory_space<vmem>>, vector<1x128xf32>
    %4 = vector.shape_cast %3 : vector<1x128xf32> to vector<128xf32>
    %5 = vector.shape_cast %4 : vector<128xf32> to vector<1x1x128xf32>
    %6 = vector.broadcast %5 : vector<1x1x128xf32> to vector<16x16x128xf32>
    %7 = arith.mulf %2, %6 : vector<16x16x128xf32>
    %c0_5 = arith.constant 0 : index
    %c0_6 = arith.constant 0 : index
    %8 = vector.load %arg5[%c0_5, %c0_6] : memref<1x128xf32, #tpu.memory_space<vmem>>, vector<1x128xf32>
    %9 = vector.shape_cast %8 : vector<1x128xf32> to vector<128xf32>
    %10 = vector.shape_cast %9 : vector<128xf32> to vector<1x1x128xf32>
    %11 = vector.broadcast %10 : vector<1x1x128xf32> to vector<16x16x128xf32>
    %12 = arith.addf %7, %11 : vector<16x16x128xf32>
    %cst = arith.constant 0.000000e+00 : f32
    %13 = vector.broadcast %cst : f32 to vector<16x16x128xf32>
    %14 = arith.maximumf %12, %13 : vector<16x16x128xf32>
    %c0_7 = arith.constant 0 : index
    %c0_8 = arith.constant 0 : index
    %c0_9 = arith.constant 0 : index
    %c0_10 = arith.constant 0 : index
    %15 = vector.load %arg3[%c0_7, %c0_8, %c0_9, %c0_10] : memref<1x16x16x128xbf16, #tpu.memory_space<vmem>>, vector<1x16x16x128xbf16>
    %16 = vector.shape_cast %15 : vector<1x16x16x128xbf16> to vector<16x16x128xbf16>
    %17 = arith.extf %16 : vector<16x16x128xbf16> to vector<16x16x128xf32>
    %c0_11 = arith.constant 0 : index
    %c0_12 = arith.constant 0 : index
    %18 = vector.load %arg6[%c0_11, %c0_12] : memref<1x128xf32, #tpu.memory_space<vmem>>, vector<1x128xf32>
    %19 = vector.shape_cast %18 : vector<1x128xf32> to vector<128xf32>
    %20 = vector.shape_cast %19 : vector<128xf32> to vector<1x1x128xf32>
    %21 = vector.broadcast %20 : vector<1x1x128xf32> to vector<16x16x128xf32>
    %22 = arith.mulf %17, %21 : vector<16x16x128xf32>
    %c0_13 = arith.constant 0 : index
    %c0_14 = arith.constant 0 : index
    %23 = vector.load %arg7[%c0_13, %c0_14] : memref<1x128xf32, #tpu.memory_space<vmem>>, vector<1x128xf32>
    %24 = vector.shape_cast %23 : vector<1x128xf32> to vector<128xf32>
    %25 = vector.shape_cast %24 : vector<128xf32> to vector<1x1x128xf32>
    %26 = vector.broadcast %25 : vector<1x1x128xf32> to vector<16x16x128xf32>
    %27 = arith.addf %22, %26 : vector<16x16x128xf32>
    %cst_15 = arith.constant 0.000000e+00 : f32
    %28 = vector.broadcast %cst_15 : f32 to vector<16x16x128xf32>
    %29 = arith.maximumf %27, %28 : vector<16x16x128xf32>
    %30 = arith.addf %14, %29 : vector<16x16x128xf32>
    %c0_16 = arith.constant 0 : index
    %c0_17 = arith.constant 0 : index
    %c0_18 = arith.constant 0 : index
    %c0_19 = arith.constant 0 : index
    %31 = vector.load %arg8[%c0_16, %c0_17, %c0_18, %c0_19] : memref<1x16x16x128xf32, #tpu.memory_space<vmem>>, vector<1x16x16x128xf32>
    %32 = vector.shape_cast %31 : vector<1x16x16x128xf32> to vector<16x16x128xf32>
    %33 = vector.shape_cast %30 : vector<16x16x128xf32> to vector<1x16x16x128xf32>
    tpu.vector_store %arg8[%c0_16, %c0_17, %c0_18, %c0_19], %33 {strides = array<i32>} : memref<1x16x16x128xf32, #tpu.memory_space<vmem>>, vector<1x16x16x128xf32>,
    return
  }
  func.func @transform_0(%arg0: i32, %arg1: i32) -> (i32, i32, i32, i32) {
    %c0_i32 = arith.constant 0 : i32
    %c0_i32_0 = arith.constant 0 : i32
    %c0_i32_1 = arith.constant 0 : i32
    return %arg0, %arg1, %c0_i32, %c0_i32_0 : i32, i32, i32, i32
  }
  func.func @transform_1(%arg0: i32, %arg1: i32) -> (i32, i32, i32, i32) {
    %c0_i32 = arith.constant 0 : i32
    %c0_i32_0 = arith.constant 0 : i32
    %c0_i32_1 = arith.constant 0 : i32
    return %arg0, %arg1, %c0_i32, %c0_i32_0 : i32, i32, i32, i32
  }
  func.func @transform_2(%arg0: i32, %arg1: i32) -> (i32, i32) {
    %c0_i32 = arith.constant 0 : i32
    %c0_i32_0 = arith.constant 0 : i32
    %c0_i32_1 = arith.constant 0 : i32
    return %c0_i32, %c0_i32_0 : i32, i32
  }
  func.func @transform_3(%arg0: i32, %arg1: i32) -> (i32, i32) {
    %c0_i32 = arith.constant 0 : i32
    %c0_i32_0 = arith.constant 0 : i32
    %c0_i32_1 = arith.constant 0 : i32
    return %c0_i32, %c0_i32_0 : i32, i32
  }
  func.func @transform_4(%arg0: i32, %arg1: i32) -> (i32, i32) {
    %c0_i32 = arith.constant 0 : i32
    %c0_i32_0 = arith.constant 0 : i32
    %c0_i32_1 = arith.constant 0 : i32
    return %c0_i32, %c0_i32_0 : i32, i32
  }
  func.func @transform_5(%arg0: i32, %arg1: i32) -> (i32, i32) {
    %c0_i32 = arith.constant 0 : i32
    %c0_i32_0 = arith.constant 0 : i32
    %c0_i32_1 = arith.constant 0 : i32
    return %c0_i32, %c0_i32_0 : i32, i32
  }
  func.func @transform_6(%arg0: i32, %arg1: i32) -> (i32, i32, i32, i32) {
    %c0_i32 = arith.constant 0 : i32
    %c0_i32_0 = arith.constant 0 : i32
    %c0_i32_1 = arith.constant 0 : i32
    return %arg0, %arg1, %c0_i32, %c0_i32_0 : i32, i32, i32, i32
  }
}

</mosaic_0001>

<llo_original>
// kernel: tile.23
$region0: #{tile.23}
  #allocation0 [shape = 's32[1]{0}', space=sflag, size = 0x4, scoped, tag = 'scoped memory for tile.23']
  %s0 = inlined_call_operand.vmem [shape: f32[8], index: 0, kind: input, shape index: {}]
  %s1 = inlined_call_operand.vmem [shape: f32[16,8], index: 1, kind: output, shape index: {}]
  // Predicated region
  $region2: #{tile.23} parent=0 // pred_check
    _
  $region3: #{tile.23} parent=0 // pred_check_branch
    %3 = sbr.rel (0) target = $region5
  $region4: #{tile.23} parent=0 // pred_region
    _
  $region5: #{tile.23} parent=0 // pred_fallthru
    _
  %v4 = vld [vmem:[%s0] ss:$0 sm:$0xff]
  %5 = vst [vmem:[%s1] sm:$0xff] %v4
  %s6 = scalar_lea.vmem %s1, 8
  %7 = vst [vmem:[%s6] sm:$0xff] %v4

// kernel: tile.24
$region0: #{tile.24}
  %s0 = inlined_call_operand.vmem [shape: f32[16,8], index: 0, kind: input, shape index: {}]
  %s1 = inlined_call_operand.vmem [shape: f32[1,128], index: 1, kind: output, shape index: {}]
  $region1: #{tile.24} parent=0
    #allocation0 [shape = 'u8[4096]{0}', space=vmem, size = 0x1000, scoped, tag = 'scoped mem for output reshape']
    %v2 = vld [vmem:[%s0] sm:$0x1]
    %vm3 = vcmask 64512
    %4 = vst.msk [vmem:[#allocation0] sm:$0x1] %vm3, %v2
    %s5 = scalar_lea.vmem %s0, 15
    %v6 = vld [vmem:[%s5] sm:$0x1]
    %7 = vrot.lane.b32.xlu0 %v6, 120
    %v8 = vpop.permute.xlu0 %7
    %vm9 = vcmask 1048512
    %10 = vst.msk [vmem:[#allocation0] sm:$0x1] %vm9, %v8
    %s11 = scalar_lea.vmem %s0, 14
    %v12 = vld [vmem:[%s11] sm:$0x1]
    %13 = vrot.lane.b32.xlu0 %v12, 112
    %v14 = vpop.permute.xlu0 %13
    %vm15 = vcmask 982912
    %16 = vst.msk [vmem:[#allocation0] sm:$0x1] %vm15, %v14
    %s17 = scalar_lea.vmem %s0, 13
    %v18 = vld [vmem:[%s17] sm:$0x1]
    %19 = vrot.lane.b32.xlu0 %v18, 104
    %v20 = vpop.permute.xlu0 %19
    %vm21 = vcmask 917312
    %22 = vst.msk [vmem:[#allocation0] sm:$0x1] %vm21, %v20
    %s23 = scalar_lea.vmem %s0, 12
    %v24 = vld [vmem:[%s23] sm:$0x1]
    %25 = vrot.lane.b32.xlu0 %v24, 96
    %v26 = vpop.permute.xlu0 %25
    %vm27 = vcmask 851712
    %28 = vst.msk [vmem:[#allocation0] sm:$0x1] %vm27, %v26
    %s29 = scalar_lea.vmem %s0, 11
    %v30 = vld [vmem:[%s29] sm:$0x1]
    %31 = vrot.lane.b32.xlu0 %v30, 88
    %v32 = vpop.permute.xlu0 %31
    %vm33 = vcmask 786112
    %34 = vst.msk [vmem:[#allocation0] sm:$0x1] %vm33, %v32
    %s35 = scalar_lea.vmem %s0, 10
    %v36 = vld [vmem:[%s35] sm:$0x1]
    %37 = vrot.lane.b32.xlu0 %v36, 80
    %v38 = vpop.permute.xlu0 %37
    %vm39 = vcmask 720512
    %40 = vst.msk [vmem:[#allocation0] sm:$0x1] %vm39, %v38
    %s41 = scalar_lea.vmem %s0, 9
    %v42 = vld [vmem:[%s41] sm:$0x1]
    %43 = vrot.lane.b32.xlu0 %v42, 72
    %v44 = vpop.permute.xlu0 %43
    %vm45 = vcmask 654912
    %46 = vst.msk [vmem:[#allocation0] sm:$0x1] %vm45, %v44
    %s47 = scalar_lea.vmem %s0, 8
    %v48 = vld [vmem:[%s47] sm:$0x1]
    %49 = vrot.lane.b32.xlu0 %v48, 64
    %v50 = vpop.permute.xlu0 %49
    %vm51 = vcmask 589312
    %52 = vst.msk [vmem:[#allocation0] sm:$0x1] %vm51, %v50
    %s53 = scalar_lea.vmem %s0, 7
    %v54 = vld [vmem:[%s53] sm:$0x1]
    %55 = vrot.lane.b32.xlu0 %v54, 56
    %v56 = vpop.permute.xlu0 %55
    %vm57 = vcmask 523712
    %58 = vst.msk [vmem:[#allocation0] sm:$0x1] %vm57, %v56
    %s59 = scalar_lea.vmem %s0, 6
    %v60 = vld [vmem:[%s59] sm:$0x1]
    %61 = vrot.lane.b32.xlu0 %v60, 48
    %v62 = vpop.permute.xlu0 %61
    %vm63 = vcmask 458112
    %64 = vst.msk [vmem:[#allocation0] sm:$0x1] %vm63, %v62
    %s65 = scalar_lea.vmem %s0, 5
    %v66 = vld [vmem:[%s65] sm:$0x1]
    %67 = vrot.lane.b32.xlu0 %v66, 40
    %v68 = vpop.permute.xlu0 %67
    %vm69 = vcmask 392512
    %70 = vst.msk [vmem:[#allocation0] sm:$0x1] %vm69, %v68
    %s71 = scalar_lea.vmem %s0, 4
    %v72 = vld [vmem:[%s71] sm:$0x1]
    %73 = vrot.lane.b32.xlu0 %v72, 32
    %v74 = vpop.permute.xlu0 %73
    %vm75 = vcmask 326912
    %76 = vst.msk [vmem:[#allocation0] sm:$0x1] %vm75, %v74
    %s77 = scalar_lea.vmem %s0, 3
    %v78 = vld [vmem:[%s77] sm:$0x1]
    %79 = vrot.lane.b32.xlu0 %v78, 24
    %v80 = vpop.permute.xlu0 %79
    %vm81 = vcmask 261312
    %82 = vst.msk [vmem:[#allocation0] sm:$0x1] %vm81, %v80
    %s83 = scalar_lea.vmem %s0, 2
    %v84 = vld [vmem:[%s83] sm:$0x1]
    %85 = vrot.lane.b32.xlu0 %v84, 16
    %v86 = vpop.permute.xlu0 %85
    %vm87 = vcmask 195712
    %88 = vst.msk [vmem:[#allocation0] sm:$0x1] %vm87, %v86
    %s89 = scalar_lea.vmem %s0, 1
    %v90 = vld [vmem:[%s89] sm:$0x1]
    %91 = vrot.lane.b32.xlu0 %v90, 8
    %v92 = vpop.permute.xlu0 %91
    %vm93 = vcmask 130112
    %94 = vst.msk [vmem:[#allocation0] sm:$0x1] %vm93, %v92
    %s96 = sshll.u32 1, 1
    %s97 = ssub.s32 %s96, 1
    %v99 = vld [vmem:[#allocation0] sm:%s97]
    %s100 = sshll.u32 1, 1
    %s101 = ssub.s32 %s100, 1
    %102 = vst [vmem:[%s1] sm:%s101] %v99

// kernel: conv_block_forward.3
$region0: #{conv_block_forward.3}
  #allocation0 [shape = 'u32[]', space=smem, size = 0x4, offset = 0x4, fixed_abs, tag = 'smem constant byte address 0x4 - core index']
  #allocation1 [shape = 'u32[144,128]{1,0:T(1,128)}', space=vmem, size = 0x12000, scoped, tag = 'internal scratch']
  #allocation2 [shape = 'f32[18,18,128]{2,1,0:T(8,128)}', space=vmem, size = 0x36000, scoped, tag = 'scratch operand']
  #allocation3 [shape = 'f32[256,128]{1,0:T(8,128)}', space=vmem, size = 0x20000, scoped, tag = 'scratch operand']
  #allocation4 [shape = 'f32[1,128]{1,0:T(1,128)}', space=vmem, size = 0x200, scoped, tag = 'scratch operand']
  #allocation5 [shape = 'f32[1,128]{1,0:T(1,128)}', space=vmem, size = 0x200, scoped, tag = 'scratch operand']
  %s0 = inlined_call_operand.vmem [shape: bf16[2,16,16,128], index: 0, kind: input, shape index: {}]
  %s1 = inlined_call_operand.vmem [shape: bf16[9,128,128], index: 1, kind: input, shape index: {}]
  %s2 = inlined_call_operand.vmem [shape: bf16[2,16,16,128], index: 2, kind: output, shape index: {0}]
  %s3 = inlined_call_operand.vmem [shape: f32[2,2,128], index: 3, kind: output, shape index: {1}]
  %4 = xla_tuple %s2, %s3
  %s5 = sld [smem:[#allocation0]]
  $region57: #{conv_block_forward.3} parent=0
    _
  %s7 = ssub.s32 1, %s5
  %s8 = scalar_select 0, %s7, %s5
  loop: start=0, step=1, limit=4
  $region2: #{conv_block_forward.3} parent=0 // loop_pre_header
    _
  $region3: #{conv_block_forward.3} parent=0 // loop_header
    %s10 = sphi 0, %s14
    %p11 = scmp.ge.s32.totalorder %s10, 4
    %s17 = sphi 0, %s29
    %s18 = sphi 0, %s25
    %s19 = sphi 0, %s17
    %s20 = sphi 0, %s18
    %s21 = sphi 0, %s19
    %s22 = sphi 0, %s20
    %s32 = sphi 0, %s34
    %s35 = sphi 0, %s32
    %s36 = sphi 0, %s35
    %s52 = sphi 0, %s36
    %s56 = sphi 0, %s56
    %s58 = sphi 0, %s56
    %s59 = sphi 0, %s58
    %s73 = sphi 0, %s59
    %s81 = sphi 0, %s83
    %s84 = sphi 0, %s81
    %s85 = sphi 0, %s84
    %s101 = sphi 0, %s85
    %s107 = sphi 0, %s109
    %s110 = sphi 0, %s107
    %s111 = sphi 0, %s110
    %s127 = sphi 0, %s111
  $region4: #{conv_block_forward.3} parent=0 // loop_header_branch
    %13 = sbr.rel (%p11) target = $region8
  $region5: #{conv_block_forward.3} parent=0 // loop_body
    %s15 = ssub.s32 %s10, 1
    %s16 = ssub.s32 %s10, 2
    %s23 = sadd.s32 1, %s18
    %p24 = scmp.ge.s32.totalorder %s23, 1
    %s25 = scalar_select %p24, 0, %s23
    %s26 = sadd.s32 1, %s17
    %s27 = scalar_select %p24, %s26, %s17
    %p28 = scmp.ge.s32.totalorder %s27, 2
    %s29 = scalar_select %p28, 0, %s27
    %s30 = ssub.s32 %s17, %s29
    %p31 = scmp.eq.s32.totalorder %s30, 0
    %s33 = sadd.s32 %s32, 1
    %s34 = scalar_select %p31, %s32, %s33
    %p37 = pneg %p31
    %p38 = scmp.eq.s32.totalorder %s10, 1
    %p39 = por %p37, %p38
    %p40 = scmp.ne.s32.totalorder %s32, %s35
    %p41 = scmp.eq.s32.totalorder %s10, 0
    %p42 = por %p40, %p41
    %p43 = scmp.ne.s32.totalorder %s32, %s35
    %p44 = scmp.eq.s32.totalorder %s15, 1
    %p45 = por %p43, %p44
    %p46 = scmp.ne.s32.totalorder %s35, %s36
    %p47 = scmp.eq.s32.totalorder %s15, 0
    %p48 = por %p46, %p47
    %p49 = scmp.ne.s32.totalorder %s35, %s36
    %p50 = scmp.eq.s32.totalorder %s16, 1
    %p51 = por %p49, %p50
    %p53 = scmp.ne.s32.totalorder %s36, %s52
    %p54 = scmp.eq.s32.totalorder %s16, 0
    %p55 = por %p53, %p54
    %s57 = sadd.s32 %s56, 1
    %p60 = scmp.eq.s32.totalorder %s10, 1
    %p61 = scmp.ne.s32.totalorder %s56, %s58
    %p62 = scmp.eq.s32.totalorder %s10, 0
    %p63 = por %p61, %p62
    %p64 = scmp.ne.s32.totalorder %s56, %s58
    %p65 = scmp.eq.s32.totalorder %s15, 1
    %p66 = por %p64, %p65
    %p67 = scmp.ne.s32.totalorder %s58, %s59
    %p68 = scmp.eq.s32.totalorder %s15, 0
    %p69 = por %p67, %p68
    %p70 = scmp.ne.s32.totalorder %s58, %s59
    %p71 = scmp.eq.s32.totalorder %s16, 1
    %p72 = por %p70, %p71
    %p74 = scmp.ne.s32.totalorder %s59, %s73
    %p75 = scmp.eq.s32.totalorder %s16, 0
    %p76 = por %p74, %p75
    %s77 = ssub.s32 %s17, %s29
    %s78 = ssub.s32 %s18, %s25
    %s79 = sor.u32 %s77, %s78
    %p80 = scmp.eq.s32.totalorder %s79, 0
    %s82 = sadd.s32 %s81, 1
    %s83 = scalar_select %p80, %s81, %s82
    %p86 = pneg %p80
    %p87 = scmp.eq.s32.totalorder %s10, 1
    %p88 = por %p86, %p87
    %p89 = scmp.ne.s32.totalorder %s81, %s84
    %p90 = scmp.eq.s32.totalorder %s10, 0
    %p91 = por %p89, %p90
    %p92 = scmp.ne.s32.totalorder %s81, %s84
    %p93 = scmp.eq.s32.totalorder %s15, 1
    %p94 = por %p92, %p93
    %p95 = scmp.ne.s32.totalorder %s84, %s85
    %p96 = scmp.eq.s32.totalorder %s15, 0
    %p97 = por %p95, %p96
    %p98 = scmp.ne.s32.totalorder %s84, %s85
    %p99 = scmp.eq.s32.totalorder %s16, 1
    %p100 = por %p98, %p99
    %p102 = scmp.ne.s32.totalorder %s85, %s101
    %p103 = scmp.eq.s32.totalorder %s16, 0
    %p104 = por %p102, %p103
    %s105 = ssub.s32 %s17, %s29
    %p106 = scmp.eq.s32.totalorder %s105, 0
    %s108 = sadd.s32 %s107, 1
    %s109 = scalar_select %p106, %s107, %s108
    %p112 = pneg %p106
    %p113 = scmp.eq.s32.totalorder %s10, 1
    %p114 = por %p112, %p113
    %p115 = scmp.ne.s32.totalorder %s107, %s110
    %p116 = scmp.eq.s32.totalorder %s10, 0
    %p117 = por %p115, %p116
    %p118 = scmp.ne.s32.totalorder %s107, %s110
    %p119 = scmp.eq.s32.totalorder %s15, 1
    %p120 = por %p118, %p119
    %p121 = scmp.ne.s32.totalorder %s110, %s111
    %p122 = scmp.eq.s32.totalorder %s15, 0
    %p123 = por %p121, %p122
    %p124 = scmp.ne.s32.totalorder %s110, %s111
    %p125 = scmp.eq.s32.totalorder %s16, 1
    %p126 = por %p124, %p125
    %p128 = scmp.ne.s32.totalorder %s111, %s127
    %p129 = scmp.eq.s32.totalorder %s16, 0
    %p130 = por %p128, %p129
    %p131 = scmp.le.s32.totalorder 1, %s10
    %p132 = scmp.lt.s32.totalorder %s10, 3
    %p133 = pnand %p131, %p132
    %p134 = pneg %p133
    // Predicated region
    $region9: #{conv_block_forward.3} parent=5 // pred_check
      _
    $region10: #{conv_block_forward.3} parent=5 // pred_check_branch
      %136 = sbr.rel (%p133) target = $region12
    $region11: #{conv_block_forward.3} parent=5 // pred_region
      %s137 = ssub.s32 %s10, 1
      // Predicated region
      $region13: #{conv_block_forward.3} parent=11 // pred_check
        %p138 = pneg %p69
      $region14: #{conv_block_forward.3} parent=11 // pred_check_branch
        %140 = sbr.rel (%p138) target = $region16
      $region15: #{conv_block_forward.3} parent=11 // pred_region
        _
      $region16: #{conv_block_forward.3} parent=11 // pred_fallthru
        _
    $region12: #{conv_block_forward.3} parent=5 // pred_fallthru
      _
    %p141 = scmp.lt.s32.totalorder %s10, 2
    // Predicated region
    $region17: #{conv_block_forward.3} parent=5 // pred_check
      %p142 = pneg %p141
    $region18: #{conv_block_forward.3} parent=5 // pred_check_branch
      %144 = sbr.rel (%p142) target = $region20
    $region19: #{conv_block_forward.3} parent=5 // pred_region
      // Predicated region
      $region21: #{conv_block_forward.3} parent=19 // pred_check
        %p145 = pneg %p42
      $region22: #{conv_block_forward.3} parent=19 // pred_check_branch
        %147 = sbr.rel (%p145) target = $region24
      $region23: #{conv_block_forward.3} parent=19 // pred_region
        %p148 = scmp.lt.s32.totalorder %s17, 1
        %s149 = scalar_select %p148, %s17, 1
        %s150 = smul.addr %s149, 32
        %s151 = smul.addr %s150, 4
        %s152 = scalar_lea.vmem %s0, %s151
      $region24: #{conv_block_forward.3} parent=19 // pred_fallthru
        _
    $region20: #{conv_block_forward.3} parent=5 // pred_fallthru
      _
    %p153 = scmp.le.s32.totalorder 1, %s10
    %p154 = scmp.lt.s32.totalorder %s10, 3
    %p155 = pnand %p153, %p154
    %p156 = pneg %p155
    // Predicated region
    $region25: #{conv_block_forward.3} parent=5 // pred_check
      _
    $region26: #{conv_block_forward.3} parent=5 // pred_check_branch
      %158 = sbr.rel (%p155) target = $region28
    $region27: #{conv_block_forward.3} parent=5 // pred_region
      %s159 = ssub.s32 %s10, 1
      %p160 = scmp.lt.s32.totalorder %s19, 1
      %s161 = scalar_select %p160, %s19, 1
      %s162 = smul.addr %s161, 32
      %s163 = smul.addr %s162, 4
      %s164 = scalar_lea.vmem %s0, %s163
      %p165 = pneg %p48
      %p166 = pneg %p45
      %p167 = pneg %p69
      %p168 = pneg %p66
      %p169 = pneg %p97
      %p170 = pneg %p94
      %s171 = smul.u32 16, %s20
      %p172 = scmp.lt.s32.totalorder %s19, 1
      %s173 = scalar_select %p172, %s19, 1
      %p174 = scmp.lt.s32.totalorder %s171, 15
      %s175 = scalar_select %p174, %s171, 15
      %s176 = smul.addr %s175, 2
      %s177 = smul.addr %s173, 32
      %s178 = sadd.s32 %s176, %s177
      %s179 = smul.addr %s178, 4
      %s180 = scalar_lea.vmem %s2, %s179
      %p181 = pneg %p123
      %p182 = pneg %p120
      %p183 = scmp.lt.s32.totalorder %s19, 1
      %s184 = scalar_select %p183, %s19, 1
      %s185 = smul.addr %s184, 2
      %s186 = scalar_lea.vmem %s3, %s185
      %p187 = scmp.lt.s32.totalorder %s19, 1
      %s188 = scalar_select %p187, %s19, 1
      %s189 = smul.addr %s188, 32
      %s190 = smul.addr %s189, 4
      %s191 = scalar_lea.vmem %s0, %s190
      %s192 = smul.u32 16, %s20
      %p193 = scmp.lt.s32.totalorder %s19, 1
      %s194 = scalar_select %p193, %s19, 1
      %p195 = scmp.lt.s32.totalorder %s192, 15
      %s196 = scalar_select %p195, %s192, 15
      %s197 = smul.addr %s196, 2
      %s198 = smul.addr %s194, 32
      %s199 = sadd.s32 %s197, %s198
      %s200 = smul.addr %s199, 4
      %s201 = scalar_lea.vmem %s2, %s200
      %s202 = smul.u32 16, %s20
      %p203 = scmp.lt.s32.totalorder %s19, 1
      %s204 = scalar_select %p203, %s19, 1
      %s205 = smul.addr %s204, 2
      %s206 = scalar_lea.vmem %s3, %s205
      %p208 = scmp.eq.s32.totalorder %s20, 0
      // Predicated region
      $region29: #{conv_block_forward.3} parent=27 // pred_check
        %p209 = pneg %p208
      $region30: #{conv_block_forward.3} parent=27 // pred_check_branch
        %211 = sbr.rel (%p209) target = $region32
      $region31: #{conv_block_forward.3} parent=27 // pred_region
        %212 = vst [vmem:[#allocation2] sm:$0xff] 0.0
        %213 = vst [vmem:[#allocation2 + $0x8] sm:$0xff] 0.0
        %214 = vst [vmem:[#allocation2 + $0x10] sm:$0x3] 0.0
        %215 = vst [vmem:[#allocation2 + $0x18] sm:$0xff] 0.0
        %216 = vst [vmem:[#allocation2 + $0x20] sm:$0xff] 0.0
        %217 = vst [vmem:[#allocation2 + $0x28] sm:$0x3] 0.0
        %218 = vst [vmem:[#allocation2 + $0x30] sm:$0xff] 0.0
        %219 = vst [vmem:[#allocation2 + $0x38] sm:$0xff] 0.0
        %220 = vst [vmem:[#allocation2 + $0x40] sm:$0x3] 0.0
        %221 = vst [vmem:[#allocation2 + $0x48] sm:$0xff] 0.0
        %222 = vst [vmem:[#allocation2 + $0x50] sm:$0xff] 0.0
        %223 = vst [vmem:[#allocation2 + $0x58] sm:$0x3] 0.0
        %224 = vst [vmem:[#allocation2 + $0x60] sm:$0xff] 0.0
        %225 = vst [vmem:[#allocation2 + $0x68] sm:$0xff] 0.0
        %226 = vst [vmem:[#allocation2 + $0x70] sm:$0x3] 0.0
        %227 = vst [vmem:[#allocation2 + $0x78] sm:$0xff] 0.0
        %228 = vst [vmem:[#allocation2 + $0x80] sm:$0xff] 0.0
        %229 = vst [vmem:[#allocation2 + $0x88] sm:$0x3] 0.0
        %230 = vst [vmem:[#allocation2 + $0x90] sm:$0xff] 0.0
        %231 = vst [vmem:[#allocation2 + $0x98] sm:$0xff] 0.0
        %232 = vst [vmem:[#allocation2 + $0xa0] sm:$0x3] 0.0
        %233 = vst [vmem:[#allocation2 + $0xa8] sm:$0xff] 0.0
        %234 = vst [vmem:[#allocation2 + $0xb0] sm:$0xff] 0.0
        %235 = vst [vmem:[#allocation2 + $0xb8] sm:$0x3] 0.0
        %236 = vst [vmem:[#allocation2 + $0xc0] sm:$0xff] 0.0
        %237 = vst [vmem:[#allocation2 + $0xc8] sm:$0xff] 0.0
        %238 = vst [vmem:[#allocation2 + $0xd0] sm:$0x3] 0.0
        %239 = vst [vmem:[#allocation2 + $0xd8] sm:$0xff] 0.0
        %240 = vst [vmem:[#allocation2 + $0xe0] sm:$0xff] 0.0
        %241 = vst [vmem:[#allocation2 + $0xe8] sm:$0x3] 0.0
        %242 = vst [vmem:[#allocation2 + $0xf0] sm:$0xff] 0.0
        %243 = vst [vmem:[#allocation2 + $0xf8] sm:$0xff] 0.0
        %244 = vst [vmem:[#allocation2 + $0x100] sm:$0x3] 0.0
        %245 = vst [vmem:[#allocation2 + $0x108] sm:$0xff] 0.0
        %246 = vst [vmem:[#allocation2 + $0x110] sm:$0xff] 0.0
        %247 = vst [vmem:[#allocation2 + $0x118] sm:$0x3] 0.0
        %248 = vst [vmem:[#allocation2 + $0x120] sm:$0xff] 0.0
        %249 = vst [vmem:[#allocation2 + $0x128] sm:$0xff] 0.0
        %250 = vst [vmem:[#allocation2 + $0x130] sm:$0x3] 0.0
        %251 = vst [vmem:[#allocation2 + $0x138] sm:$0xff] 0.0
        %252 = vst [vmem:[#allocation2 + $0x140] sm:$0xff] 0.0
        %253 = vst [vmem:[#allocation2 + $0x148] sm:$0x3] 0.0
        %254 = vst [vmem:[#allocation2 + $0x150] sm:$0xff] 0.0
        %255 = vst [vmem:[#allocation2 + $0x158] sm:$0xff] 0.0
        %256 = vst [vmem:[#allocation2 + $0x160] sm:$0x3] 0.0
        %257 = vst [vmem:[#allocation2 + $0x168] sm:$0xff] 0.0
        %258 = vst [vmem:[#allocation2 + $0x170] sm:$0xff] 0.0
        %259 = vst [vmem:[#allocation2 + $0x178] sm:$0x3] 0.0
        %260 = vst [vmem:[#allocation2 + $0x180] sm:$0xff] 0.0
        %261 = vst [vmem:[#allocation2 + $0x188] sm:$0xff] 0.0
        %262 = vst [vmem:[#allocation2 + $0x190] sm:$0x3] 0.0
        %263 = vst [vmem:[#allocation2 + $0x198] sm:$0xff] 0.0
        %264 = vst [vmem:[#allocation2 + $0x1a0] sm:$0xff] 0.0
        %265 = vst [vmem:[#allocation2 + $0x1a8] sm:$0x3] 0.0
        %v266 = vld [vmem:[%s191] sm:$0xf]
        %v267 = vld [vmem:[%s191 + $0x4] sm:$0xf]
        %v268 = vld [vmem:[%s191 + $0x8] sm:$0xf]
        %v269 = vld [vmem:[%s191 + $0xc] sm:$0xf]
        %v270 = vld [vmem:[%s191 + $0x10] sm:$0xf]
        %v271 = vld [vmem:[%s191 + $0x14] sm:$0xf]
        %v272 = vld [vmem:[%s191 + $0x18] sm:$0xf]
        %v273 = vld [vmem:[%s191 + $0x1c] sm:$0xf]
        %v274 = vld [vmem:[%s191 + $0x20] sm:$0xf]
        %v275 = vld [vmem:[%s191 + $0x24] sm:$0xf]
        %v276 = vld [vmem:[%s191 + $0x28] sm:$0xf]
        %v277 = vld [vmem:[%s191 + $0x2c] sm:$0xf]
        %v278 = vld [vmem:[%s191 + $0x30] sm:$0xf]
        %v279 = vld [vmem:[%s191 + $0x34] sm:$0xf]
        %v280 = vld [vmem:[%s191 + $0x38] sm:$0xf]
        %v281 = vld [vmem:[%s191 + $0x3c] sm:$0xf]
        %v282 = vld [vmem:[%s191 + $0x40] sm:$0xf]
        %v283 = vld [vmem:[%s191 + $0x44] sm:$0xf]
        %v284 = vld [vmem:[%s191 + $0x48] sm:$0xf]
        %v285 = vld [vmem:[%s191 + $0x4c] sm:$0xf]
        %v286 = vld [vmem:[%s191 + $0x50] sm:$0xf]
        %v287 = vld [vmem:[%s191 + $0x54] sm:$0xf]
        %v288 = vld [vmem:[%s191 + $0x58] sm:$0xf]
        %v289 = vld [vmem:[%s191 + $0x5c] sm:$0xf]
        %v290 = vld [vmem:[%s191 + $0x60] sm:$0xf]
        %v291 = vld [vmem:[%s191 + $0x64] sm:$0xf]
        %v292 = vld [vmem:[%s191 + $0x68] sm:$0xf]
        %v293 = vld [vmem:[%s191 + $0x6c] sm:$0xf]
        %v294 = vld [vmem:[%s191 + $0x70] sm:$0xf]
        %v295 = vld [vmem:[%s191 + $0x74] sm:$0xf]
        %v296 = vld [vmem:[%s191 + $0x78] sm:$0xf]
        %v297 = vld [vmem:[%s191 + $0x7c] sm:$0xf]
        %v298 = vunpack.c.l.bf16 %v266
        %v299 = vunpack.c.l.bf16 %v267
        %v300 = vunpack.c.l.bf16 %v268
        %v301 = vunpack.c.l.bf16 %v269
        %v302 = vunpack.c.l.bf16 %v270
        %v303 = vunpack.c.l.bf16 %v271
        %v304 = vunpack.c.l.bf16 %v272
        %v305 = vunpack.c.l.bf16 %v273
        %v306 = vunpack.c.l.bf16 %v274
        %v307 = vunpack.c.l.bf16 %v275
        %v308 = vunpack.c.l.bf16 %v276
        %v309 = vunpack.c.l.bf16 %v277
        %v310 = vunpack.c.l.bf16 %v278
        %v311 = vunpack.c.l.bf16 %v279
        %v312 = vunpack.c.l.bf16 %v280
        %v313 = vunpack.c.l.bf16 %v281
        %v314 = vunpack.c.l.bf16 %v282
        %v315 = vunpack.c.l.bf16 %v283
        %v316 = vunpack.c.l.bf16 %v284
        %v317 = vunpack.c.l.bf16 %v285
        %v318 = vunpack.c.l.bf16 %v286
        %v319 = vunpack.c.l.bf16 %v287
        %v320 = vunpack.c.l.bf16 %v288
        %v321 = vunpack.c.l.bf16 %v289
        %v322 = vunpack.c.l.bf16 %v290
        %v323 = vunpack.c.l.bf16 %v291
        %v324 = vunpack.c.l.bf16 %v292
        %v325 = vunpack.c.l.bf16 %v293
        %v326 = vunpack.c.l.bf16 %v294
        %v327 = vunpack.c.l.bf16 %v295
        %v328 = vunpack.c.l.bf16 %v296
        %v329 = vunpack.c.l.bf16 %v297
        %s330 = scalar_lea.vmem [#allocation2], 24
        %331 = vst [vmem:[%s330 + $0x1] sm:$0xff] %v298
        %332 = vst [vmem:[%s330 + $0x9] sm:$0xff] %v299
        %333 = vst [vmem:[%s330 + $0x19] sm:$0xff] %v300
        %334 = vst [vmem:[%s330 + $0x21] sm:$0xff] %v301
        %335 = vst [vmem:[%s330 + $0x31] sm:$0xff] %v302
        %336 = vst [vmem:[%s330 + $0x39] sm:$0xff] %v303
        %337 = vst [vmem:[%s330 + $0x49] sm:$0xff] %v304
        %338 = vst [vmem:[%s330 + $0x51] sm:$0xff] %v305
        %339 = vst [vmem:[%s330 + $0x61] sm:$0xff] %v306
        %340 = vst [vmem:[%s330 + $0x69] sm:$0xff] %v307
        %341 = vst [vmem:[%s330 + $0x79] sm:$0xff] %v308
        %342 = vst [vmem:[%s330 + $0x81] sm:$0xff] %v309
        %343 = vst [vmem:[%s330 + $0x91] sm:$0xff] %v310
        %344 = vst [vmem:[%s330 + $0x99] sm:$0xff] %v311
        %345 = vst [vmem:[%s330 + $0xa9] sm:$0xff] %v312
        %346 = vst [vmem:[%s330 + $0xb1] sm:$0xff] %v313
        %347 = vst [vmem:[%s330 + $0xc1] sm:$0xff] %v314
        %348 = vst [vmem:[%s330 + $0xc9] sm:$0xff] %v315
        %349 = vst [vmem:[%s330 + $0xd9] sm:$0xff] %v316
        %350 = vst [vmem:[%s330 + $0xe1] sm:$0xff] %v317
        %351 = vst [vmem:[%s330 + $0xf1] sm:$0xff] %v318
        %352 = vst [vmem:[%s330 + $0xf9] sm:$0xff] %v319
        %353 = vst [vmem:[%s330 + $0x109] sm:$0xff] %v320
        %354 = vst [vmem:[%s330 + $0x111] sm:$0xff] %v321
        %355 = vst [vmem:[%s330 + $0x121] sm:$0xff] %v322
        %356 = vst [vmem:[%s330 + $0x129] sm:$0xff] %v323
        %357 = vst [vmem:[%s330 + $0x139] sm:$0xff] %v324
        %358 = vst [vmem:[%s330 + $0x141] sm:$0xff] %v325
        %359 = vst [vmem:[%s330 + $0x151] sm:$0xff] %v326
        %360 = vst [vmem:[%s330 + $0x159] sm:$0xff] %v327
        %361 = vst [vmem:[%s330 + $0x169] sm:$0xff] %v328
        %362 = vst [vmem:[%s330 + $0x171] sm:$0xff] %v329
        %363 = vst [vmem:[#allocation4] sm:$0x1] 0.0
        %364 = vst [vmem:[#allocation5] sm:$0x1] 0.0
      $region32: #{conv_block_forward.3} parent=27 // pred_fallthru
        _
      %s365 = smul.u32 %s20, 16
      %s366 = smul.u32 %s365, 24
      %s367 = scalar_lea.vmem [#allocation2], %s366
      %v368 = vld [vmem:[%s367] sm:$0xff]
      %v369 = vld [vmem:[%s367 + $0x8] sm:$0xff]
      %v370 = vld [vmem:[%s367 + $0x18] sm:$0xff]
      %v371 = vld [vmem:[%s367 + $0x20] sm:$0xff]
      %v372 = vld [vmem:[%s367 + $0x30] sm:$0xff]
      %v373 = vld [vmem:[%s367 + $0x38] sm:$0xff]
      %v374 = vld [vmem:[%s367 + $0x48] sm:$0xff]
      %v375 = vld [vmem:[%s367 + $0x50] sm:$0xff]
      %v376 = vld [vmem:[%s367 + $0x60] sm:$0xff]
      %v377 = vld [vmem:[%s367 + $0x68] sm:$0xff]
      %v378 = vld [vmem:[%s367 + $0x78] sm:$0xff]
      %v379 = vld [vmem:[%s367 + $0x80] sm:$0xff]
      %v380 = vld [vmem:[%s367 + $0x90] sm:$0xff]
      %v381 = vld [vmem:[%s367 + $0x98] sm:$0xff]
      %v382 = vld [vmem:[%s367 + $0xa8] sm:$0xff]
      %v383 = vld [vmem:[%s367 + $0xb0] sm:$0xff]
      %v384 = vld [vmem:[%s367 + $0xc0] sm:$0xff]
      %v385 = vld [vmem:[%s367 + $0xc8] sm:$0xff]
      %v386 = vld [vmem:[%s367 + $0xd8] sm:$0xff]
      %v387 = vld [vmem:[%s367 + $0xe0] sm:$0xff]
      %v388 = vld [vmem:[%s367 + $0xf0] sm:$0xff]
      %v389 = vld [vmem:[%s367 + $0xf8] sm:$0xff]
      %v390 = vld [vmem:[%s367 + $0x108] sm:$0xff]
      %v391 = vld [vmem:[%s367 + $0x110] sm:$0xff]
      %v392 = vld [vmem:[%s367 + $0x120] sm:$0xff]
      %v393 = vld [vmem:[%s367 + $0x128] sm:$0xff]
      %v394 = vld [vmem:[%s367 + $0x138] sm:$0xff]
      %v395 = vld [vmem:[%s367 + $0x140] sm:$0xff]
      %v396 = vld [vmem:[%s367 + $0x150] sm:$0xff]
      %v397 = vld [vmem:[%s367 + $0x158] sm:$0xff]
      %v398 = vld [vmem:[%s367 + $0x168] sm:$0xff]
      %v399 = vld [vmem:[%s367 + $0x170] sm:$0xff]
      %v400 = vpack.c.bf16 %v369, %v368
      %v401 = vpack.c.bf16 %v371, %v370
      %v402 = vpack.c.bf16 %v373, %v372
      %v403 = vpack.c.bf16 %v375, %v374
      %v404 = vpack.c.bf16 %v377, %v376
      %v405 = vpack.c.bf16 %v379, %v378
      %v406 = vpack.c.bf16 %v381, %v380
      %v407 = vpack.c.bf16 %v383, %v382
      %v408 = vpack.c.bf16 %v385, %v384
      %v409 = vpack.c.bf16 %v387, %v386
      %v410 = vpack.c.bf16 %v389, %v388
      %v411 = vpack.c.bf16 %v391, %v390
      %v412 = vpack.c.bf16 %v393, %v392
      %v413 = vpack.c.bf16 %v395, %v394
      %v414 = vpack.c.bf16 %v397, %v396
      %v415 = vpack.c.bf16 %v399, %v398
      %v416 = vld [vmem:[%s1] sm:$0xf]
      %v417 = vld [vmem:[%s1 + $0x4] sm:$0xf]
      %v418 = vld [vmem:[%s1 + $0x8] sm:$0xf]
      %v419 = vld [vmem:[%s1 + $0xc] sm:$0xf]
      %v420 = vld [vmem:[%s1 + $0x10] sm:$0xf]
      %v421 = vld [vmem:[%s1 + $0x14] sm:$0xf]
      %v422 = vld [vmem:[%s1 + $0x18] sm:$0xf]
      %v423 = vld [vmem:[%s1 + $0x1c] sm:$0xf]
      %v424 = vld [vmem:[%s1 + $0x20] sm:$0xf]
      %v425 = vld [vmem:[%s1 + $0x24] sm:$0xf]
      %v426 = vld [vmem:[%s1 + $0x28] sm:$0xf]
      %v427 = vld [vmem:[%s1 + $0x2c] sm:$0xf]
      %v428 = vld [vmem:[%s1 + $0x30] sm:$0xf]
      %v429 = vld [vmem:[%s1 + $0x34] sm:$0xf]
      %v430 = vld [vmem:[%s1 + $0x38] sm:$0xf]
      %v431 = vld [vmem:[%s1 + $0x3c] sm:$0xf]
      %v448 = vunpack.c.l.b16 %v416
      %v449 = vunpack.c.l.b16 %v417
      %v450 = vunpack.c.l.b16 %v418
      %v451 = vunpack.c.l.b16 %v419
      %v452 = vunpack.c.l.b16 %v420
      %v453 = vunpack.c.l.b16 %v421
      %v454 = vunpack.c.l.b16 %v422
      %v455 = vunpack.c.l.b16 %v423
      %v456 = vunpack.c.l.b16 %v424
      %v457 = vunpack.c.l.b16 %v425
      %v458 = vunpack.c.l.b16 %v426
      %v459 = vunpack.c.l.b16 %v427
      %v460 = vunpack.c.l.b16 %v428
      %v461 = vunpack.c.l.b16 %v429
      %v462 = vunpack.c.l.b16 %v430
      %v463 = vunpack.c.l.b16 %v431
      %v464 = vpack.c.b16 %v449, %v448
      %v465 = vpack.c.b16 %v451, %v450
      %v466 = vpack.c.b16 %v453, %v452
      %v467 = vpack.c.b16 %v455, %v454
      %v468 = vpack.c.b16 %v457, %v456
      %v469 = vpack.c.b16 %v459, %v458
      %v470 = vpack.c.b16 %v461, %v460
      %v471 = vpack.c.b16 %v463, %v462
      %480 = vmatprep.subr.bf16.mxu0 0
      %481 = vmatpush1.bf16.msra.mxu0 %v471
      %482 = vmatprep.subr.bf16.mxu0 0
      %483 = vmatpush1.bf16.msra.mxu0 %v470
      %484 = vmatprep.subr.bf16.mxu0 0
      %485 = vmatpush1.bf16.msra.mxu0 %v469
      %486 = vmatprep.subr.bf16.mxu0 0
      %487 = vmatpush1.bf16.msra.mxu0 %v468
      %488 = vmatprep.subr.bf16.mxu0 0
      %489 = vmatpush1.bf16.msra.mxu0 %v467
      %490 = vmatprep.subr.bf16.mxu0 0
      %491 = vmatpush1.bf16.msra.mxu0 %v466
      %492 = vmatprep.subr.bf16.mxu0 0
      %493 = vmatpush1.bf16.msra.mxu0 %v465
      %494 = vmatprep.subr.bf16.mxu0 0
      %495 = vmatpush1.bf16.msra.mxu0 %v464
      %496 = vmatprep.subr.bf16.mxu0 0
      %497 = vmatpush2.bf16.msra.mxu0 0
      %498 = vmatprep.subr.bf16.mxu0 0
      %499 = vmatpush2.bf16.msra.mxu0 0
      %500 = vmatprep.subr.bf16.mxu0 0
      %501 = vmatpush2.bf16.msra.mxu0 0
      %502 = vmatprep.subr.bf16.mxu0 0
      %503 = vmatpush2.bf16.msra.mxu0 0
      %504 = vmatprep.subr.bf16.mxu0 0
      %505 = vmatpush2.bf16.msra.mxu0 0
      %506 = vmatprep.subr.bf16.mxu0 0
      %507 = vmatpush2.bf16.msra.mxu0 0
      %508 = vmatprep.subr.bf16.mxu0 0
      %509 = vmatpush2.bf16.msra.mxu0 0
      %510 = vmatprep.subr.bf16.mxu0 0
      %511 = vmatpush2.bf16.msra.mxu0 0
      %512 = vmatprep.mubr.bf16.mxu0 0
      %513 = vmatmul.mubr.bf16.gmra.mxu0 %v400
      %v514 = vpop.f32.mrf.mxu0
      %v515 = vadd.f32 0.0, %v514
      %v516 = vpop.f32.mrf.mxu0
      %v517 = vpop.f32.mrf.mxu0
      %v518 = vadd.f32 0.0, %v517
      %v519 = vpop.f32.mrf.mxu0
      %520 = vmatprep.mubr.bf16.mxu0 0
      %521 = vmatmul.mubr.bf16.gmra.mxu0 %v401
      %v522 = vpop.f32.mrf.mxu0
      %v523 = vadd.f32 0.0, %v522
      %v524 = vpop.f32.mrf.mxu0
      %v525 = vpop.f32.mrf.mxu0
      %v526 = vadd.f32 0.0, %v525
      %v527 = vpop.f32.mrf.mxu0
      %528 = vmatprep.mubr.bf16.mxu0 0
      %529 = vmatmul.mubr.bf16.gmra.mxu0 %v402
      %v530 = vpop.f32.mrf.mxu0
      %v531 = vadd.f32 0.0, %v530
      %v532 = vpop.f32.mrf.mxu0
      %v533 = vpop.f32.mrf.mxu0
      %v534 = vadd.f32 0.0, %v533
      %v535 = vpop.f32.mrf.mxu0
      %536 = vmatprep.mubr.bf16.mxu0 0
      %537 = vmatmul.mubr.bf16.gmra.mxu0 %v403
      %v538 = vpop.f32.mrf.mxu0
      %v539 = vadd.f32 0.0, %v538
      %v540 = vpop.f32.mrf.mxu0
      %v541 = vpop.f32.mrf.mxu0
      %v542 = vadd.f32 0.0, %v541
      %v543 = vpop.f32.mrf.mxu0
      %544 = vmatprep.mubr.bf16.mxu0 0
      %545 = vmatmul.mubr.bf16.gmra.mxu0 %v404
      %v546 = vpop.f32.mrf.mxu0
      %v547 = vadd.f32 0.0, %v546
      %v548 = vpop.f32.mrf.mxu0
      %v549 = vpop.f32.mrf.mxu0
      %v550 = vadd.f32 0.0, %v549
      %v551 = vpop.f32.mrf.mxu0
      %552 = vmatprep.mubr.bf16.mxu0 0
      %553 = vmatmul.mubr.bf16.gmra.mxu0 %v405
      %v554 = vpop.f32.mrf.mxu0
      %v555 = vadd.f32 0.0, %v554
      %v556 = vpop.f32.mrf.mxu0
      %v557 = vpop.f32.mrf.mxu0
      %v558 = vadd.f32 0.0, %v557
      %v559 = vpop.f32.mrf.mxu0
      %560 = vmatprep.mubr.bf16.mxu0 0
      %561 = vmatmul.mubr.bf16.gmra.mxu0 %v406
      %v562 = vpop.f32.mrf.mxu0
      %v563 = vadd.f32 0.0, %v562
      %v564 = vpop.f32.mrf.mxu0
      %v565 = vpop.f32.mrf.mxu0
      %v566 = vadd.f32 0.0, %v565
      %v567 = vpop.f32.mrf.mxu0
      %568 = vmatprep.mubr.bf16.mxu0 0
      %569 = vmatmul.mubr.bf16.gmra.mxu0 %v407
      %v570 = vpop.f32.mrf.mxu0
      %v571 = vadd.f32 0.0, %v570
      %v572 = vpop.f32.mrf.mxu0
      %v573 = vpop.f32.mrf.mxu0
      %v574 = vadd.f32 0.0, %v573
      %v575 = vpop.f32.mrf.mxu0
      %576 = vmatprep.mubr.bf16.mxu0 0
      %577 = vmatmul.mubr.bf16.gmra.mxu0 %v408
      %v578 = vpop.f32.mrf.mxu0
      %v579 = vadd.f32 0.0, %v578
      %v580 = vpop.f32.mrf.mxu0
      %v581 = vpop.f32.mrf.mxu0
      %v582 = vadd.f32 0.0, %v581
      %v583 = vpop.f32.mrf.mxu0
      %584 = vmatprep.mubr.bf16.mxu0 0
      %585 = vmatmul.mubr.bf16.gmra.mxu0 %v409
      %v586 = vpop.f32.mrf.mxu0
      %v587 = vadd.f32 0.0, %v586
      %v588 = vpop.f32.mrf.mxu0
      %v589 = vpop.f32.mrf.mxu0
      %v590 = vadd.f32 0.0, %v589
      %v591 = vpop.f32.mrf.mxu0
      %592 = vmatprep.mubr.bf16.mxu0 0
      %593 = vmatmul.mubr.bf16.gmra.mxu0 %v410
      %v594 = vpop.f32.mrf.mxu0
      %v595 = vadd.f32 0.0, %v594
      %v596 = vpop.f32.mrf.mxu0
      %v597 = vpop.f32.mrf.mxu0
      %v598 = vadd.f32 0.0, %v597
      %v599 = vpop.f32.mrf.mxu0
      %600 = vmatprep.mubr.bf16.mxu0 0
      %601 = vmatmul.mubr.bf16.gmra.mxu0 %v411
      %v602 = vpop.f32.mrf.mxu0
      %v603 = vadd.f32 0.0, %v602
      %v604 = vpop.f32.mrf.mxu0
      %v605 = vpop.f32.mrf.mxu0
      %v606 = vadd.f32 0.0, %v605
      %v607 = vpop.f32.mrf.mxu0
      %608 = vmatprep.mubr.bf16.mxu0 0
      %609 = vmatmul.mubr.bf16.gmra.mxu0 %v412
      %v610 = vpop.f32.mrf.mxu0
      %v611 = vadd.f32 0.0, %v610
      %v612 = vpop.f32.mrf.mxu0
      %v613 = vpop.f32.mrf.mxu0
      %v614 = vadd.f32 0.0, %v613
      %v615 = vpop.f32.mrf.mxu0
      %616 = vmatprep.mubr.bf16.mxu0 0
      %617 = vmatmul.mubr.bf16.gmra.mxu0 %v413
      %v618 = vpop.f32.mrf.mxu0
      %v619 = vadd.f32 0.0, %v618
      %v620 = vpop.f32.mrf.mxu0
      %v621 = vpop.f32.mrf.mxu0
      %v622 = vadd.f32 0.0, %v621
      %v623 = vpop.f32.mrf.mxu0
      %624 = vmatprep.mubr.bf16.mxu0 0
      %625 = vmatmul.mubr.bf16.gmra.mxu0 %v414
      %v626 = vpop.f32.mrf.mxu0
      %v627 = vadd.f32 0.0, %v626
      %v628 = vpop.f32.mrf.mxu0
      %v629 = vpop.f32.mrf.mxu0
      %v630 = vadd.f32 0.0, %v629
      %v631 = vpop.f32.mrf.mxu0
      %632 = vmatprep.mubr.bf16.mxu0 0
      %633 = vmatmul.mubr.bf16.gmra.mxu0 %v415
      %v634 = vpop.f32.mrf.mxu0
      %v635 = vadd.f32 0.0, %v634
      %v636 = vpop.f32.mrf.mxu0
      %v637 = vpop.f32.mrf.mxu0
      %v638 = vadd.f32 0.0, %v637
      %v639 = vpop.f32.mrf.mxu0
      %640 = vdwg.mxu0
      %641 = vst [vmem:[#allocation3] sm:$0xff] %v515
      %642 = vst [vmem:[#allocation3 + $0x8] sm:$0xff] %v518
      %643 = vst [vmem:[#allocation3 + $0x10] sm:$0xff] %v523
      %644 = vst [vmem:[#allocation3 + $0x18] sm:$0xff] %v526
      %645 = vst [vmem:[#allocation3 + $0x20] sm:$0xff] %v531
      %646 = vst [vmem:[#allocation3 + $0x28] sm:$0xff] %v534
      %647 = vst [vmem:[#allocation3 + $0x30] sm:$0xff] %v539
      %648 = vst [vmem:[#allocation3 + $0x38] sm:$0xff] %v542
      %649 = vst [vmem:[#allocation3 + $0x40] sm:$0xff] %v547
      %650 = vst [vmem:[#allocation3 + $0x48] sm:$0xff] %v550
      %651 = vst [vmem:[#allocation3 + $0x50] sm:$0xff] %v555
      %652 = vst [vmem:[#allocation3 + $0x58] sm:$0xff] %v558
      %653 = vst [vmem:[#allocation3 + $0x60] sm:$0xff] %v563
      %654 = vst [vmem:[#allocation3 + $0x68] sm:$0xff] %v566
      %655 = vst [vmem:[#allocation3 + $0x70] sm:$0xff] %v571
      %656 = vst [vmem:[#allocation3 + $0x78] sm:$0xff] %v574
      %657 = vst [vmem:[#allocation3 + $0x80] sm:$0xff] %v579
      %658 = vst [vmem:[#allocation3 + $0x88] sm:$0xff] %v582
      %659 = vst [vmem:[#allocation3 + $0x90] sm:$0xff] %v587
      %660 = vst [vmem:[#allocation3 + $0x98] sm:$0xff] %v590
      %661 = vst [vmem:[#allocation3 + $0xa0] sm:$0xff] %v595
      %662 = vst [vmem:[#allocation3 + $0xa8] sm:$0xff] %v598
      %663 = vst [vmem:[#allocation3 + $0xb0] sm:$0xff] %v603
      %664 = vst [vmem:[#allocation3 + $0xb8] sm:$0xff] %v606
      %665 = vst [vmem:[#allocation3 + $0xc0] sm:$0xff] %v611
      %666 = vst [vmem:[#allocation3 + $0xc8] sm:$0xff] %v614
      %667 = vst [vmem:[#allocation3 + $0xd0] sm:$0xff] %v619
      %668 = vst [vmem:[#allocation3 + $0xd8] sm:$0xff] %v622
      %669 = vst [vmem:[#allocation3 + $0xe0] sm:$0xff] %v627
      %670 = vst [vmem:[#allocation3 + $0xe8] sm:$0xff] %v630
      %671 = vst [vmem:[#allocation3 + $0xf0] sm:$0xff] %v635
      %672 = vst [vmem:[#allocation3 + $0xf8] sm:$0xff] %v638
      %v673 = vld [vmem:[%s367 + $0x1] sm:$0xff]
      %v674 = vld [vmem:[%s367 + $0x9] sm:$0xff]
      %v675 = vld [vmem:[%s367 + $0x19] sm:$0xff]
      %v676 = vld [vmem:[%s367 + $0x21] sm:$0xff]
      %v677 = vld [vmem:[%s367 + $0x31] sm:$0xff]
      %v678 = vld [vmem:[%s367 + $0x39] sm:$0xff]
      %v679 = vld [vmem:[%s367 + $0x49] sm:$0xff]
      %v680 = vld [vmem:[%s367 + $0x51] sm:$0xff]
      %v681 = vld [vmem:[%s367 + $0x61] sm:$0xff]
      %v682 = vld [vmem:[%s367 + $0x69] sm:$0xff]
      %v683 = vld [vmem:[%s367 + $0x79] sm:$0xff]
      %v684 = vld [vmem:[%s367 + $0x81] sm:$0xff]
      %v685 = vld [vmem:[%s367 + $0x91] sm:$0xff]
      %v686 = vld [vmem:[%s367 + $0x99] sm:$0xff]
      %v687 = vld [vmem:[%s367 + $0xa9] sm:$0xff]
      %v688 = vld [vmem:[%s367 + $0xb1] sm:$0xff]
      %v689 = vld [vmem:[%s367 + $0xc1] sm:$0xff]
      %v690 = vld [vmem:[%s367 + $0xc9] sm:$0xff]
      %v691 = vld [vmem:[%s367 + $0xd9] sm:$0xff]
      %v692 = vld [vmem:[%s367 + $0xe1] sm:$0xff]
      %v693 = vld [vmem:[%s367 + $0xf1] sm:$0xff]
      %v694 = vld [vmem:[%s367 + $0xf9] sm:$0xff]
      %v695 = vld [vmem:[%s367 + $0x109] sm:$0xff]
      %v696 = vld [vmem:[%s367 + $0x111] sm:$0xff]
      %v697 = vld [vmem:[%s367 + $0x121] sm:$0xff]
      %v698 = vld [vmem:[%s367 + $0x129] sm:$0xff]
      %v699 = vld [vmem:[%s367 + $0x139] sm:$0xff]
      %v700 = vld [vmem:[%s367 + $0x141] sm:$0xff]
      %v701 = vld [vmem:[%s367 + $0x151] sm:$0xff]
      %v702 = vld [vmem:[%s367 + $0x159] sm:$0xff]
      %v703 = vld [vmem:[%s367 + $0x169] sm:$0xff]
      %v704 = vld [vmem:[%s367 + $0x171] sm:$0xff]
      %v705 = vpack.c.bf16 %v674, %v673
      %v706 = vpack.c.bf16 %v676, %v675
      %v707 = vpack.c.bf16 %v678, %v677
      %v708 = vpack.c.bf16 %v680, %v679
      %v709 = vpack.c.bf16 %v682, %v681
      %v710 = vpack.c.bf16 %v684, %v683
      %v711 = vpack.c.bf16 %v686, %v685
      %v712 = vpack.c.bf16 %v688, %v687
      %v713 = vpack.c.bf16 %v690, %v689
      %v714 = vpack.c.bf16 %v692, %v691
      %v715 = vpack.c.bf16 %v694, %v693
      %v716 = vpack.c.bf16 %v696, %v695
      %v717 = vpack.c.bf16 %v698, %v697
      %v718 = vpack.c.bf16 %v700, %v699
      %v719 = vpack.c.bf16 %v702, %v701
      %v720 = vpack.c.bf16 %v704, %v703
      %s721 = scalar_lea.vmem %s1, 64
      %v722 = vld [vmem:[%s721] sm:$0xf]
      %v723 = vld [vmem:[%s721 + $0x4] sm:$0xf]
      %v724 = vld [vmem:[%s721 + $0x8] sm:$0xf]
      %v725 = vld [vmem:[%s721 + $0xc] sm:$0xf]
      %v726 = vld [vmem:[%s721 + $0x10] sm:$0xf]
      %v727 = vld [vmem:[%s721 + $0x14] sm:$0xf]
      %v728 = vld [vmem:[%s721 + $0x18] sm:$0xf]
      %v729 = vld [vmem:[%s721 + $0x1c] sm:$0xf]
      %v730 = vld [vmem:[%s721 + $0x20] sm:$0xf]
      %v731 = vld [vmem:[%s721 + $0x24] sm:$0xf]
      %v732 = vld [vmem:[%s721 + $0x28] sm:$0xf]
      %v733 = vld [vmem:[%s721 + $0x2c] sm:$0xf]
      %v734 = vld [vmem:[%s721 + $0x30] sm:$0xf]
      %v735 = vld [vmem:[%s721 + $0x34] sm:$0xf]
      %v736 = vld [vmem:[%s721 + $0x38] sm:$0xf]
      %v737 = vld [vmem:[%s721 + $0x3c] sm:$0xf]
      %v754 = vunpack.c.l.b16 %v722
      %v755 = vunpack.c.l.b16 %v723
      %v756 = vunpack.c.l.b16 %v724
      %v757 = vunpack.c.l.b16 %v725
      %v758 = vunpack.c.l.b16 %v726
      %v759 = vunpack.c.l.b16 %v727
      %v760 = vunpack.c.l.b16 %v728
      %v761 = vunpack.c.l.b16 %v729
      %v762 = vunpack.c.l.b16 %v730
      %v763 = vunpack.c.l.b16 %v731
      %v764 = vunpack.c.l.b16 %v732
      %v765 = vunpack.c.l.b16 %v733
      %v766 = vunpack.c.l.b16 %v734
      %v767 = vunpack.c.l.b16 %v735
      %v768 = vunpack.c.l.b16 %v736
      %v769 = vunpack.c.l.b16 %v737
      %v770 = vpack.c.b16 %v755, %v754
      %v771 = vpack.c.b16 %v757, %v756
      %v772 = vpack.c.b16 %v759, %v758
      %v773 = vpack.c.b16 %v761, %v760
      %v774 = vpack.c.b16 %v763, %v762
      %v775 = vpack.c.b16 %v765, %v764
      %v776 = vpack.c.b16 %v767, %v766
      %v777 = vpack.c.b16 %v769, %v768
      %786 = vmatprep.subr.bf16.mxu0 0
      %787 = vmatpush1.bf16.msra.mxu0 %v777
      %788 = vmatprep.subr.bf16.mxu0 0
      %789 = vmatpush1.bf16.msra.mxu0 %v776
      %790 = vmatprep.subr.bf16.mxu0 0
      %791 = vmatpush1.bf16.msra.mxu0 %v775
      %792 = vmatprep.subr.bf16.mxu0 0
      %793 = vmatpush1.bf16.msra.mxu0 %v774
      %794 = vmatprep.subr.bf16.mxu0 0
      %795 = vmatpush1.bf16.msra.mxu0 %v773
      %796 = vmatprep.subr.bf16.mxu0 0
      %797 = vmatpush1.bf16.msra.mxu0 %v772
      %798 = vmatprep.subr.bf16.mxu0 0
      %799 = vmatpush1.bf16.msra.mxu0 %v771
      %800 = vmatprep.subr.bf16.mxu0 0
      %801 = vmatpush1.bf16.msra.mxu0 %v770
      %802 = vmatprep.subr.bf16.mxu0 0
      %803 = vmatpush2.bf16.msra.mxu0 0
      %804 = vmatprep.subr.bf16.mxu0 0
      %805 = vmatpush2.bf16.msra.mxu0 0
      %806 = vmatprep.subr.bf16.mxu0 0
      %807 = vmatpush2.bf16.msra.mxu0 0
      %808 = vmatprep.subr.bf16.mxu0 0
      %809 = vmatpush2.bf16.msra.mxu0 0
      %810 = vmatprep.subr.bf16.mxu0 0
      %811 = vmatpush2.bf16.msra.mxu0 0
      %812 = vmatprep.subr.bf16.mxu0 0
      %813 = vmatpush2.bf16.msra.mxu0 0
      %814 = vmatprep.subr.bf16.mxu0 0
      %815 = vmatpush2.bf16.msra.mxu0 0
      %816 = vmatprep.subr.bf16.mxu0 0
      %817 = vmatpush2.bf16.msra.mxu0 0
      %818 = vmatprep.mubr.bf16.mxu0 0
      %819 = vmatmul.mubr.bf16.gmra.mxu0 %v705
      %v820 = vpop.f32.mrf.mxu0
      %v821 = vadd.f32 0.0, %v820
      %v822 = vpop.f32.mrf.mxu0
      %v823 = vpop.f32.mrf.mxu0
      %v824 = vadd.f32 0.0, %v823
      %v825 = vpop.f32.mrf.mxu0
      %826 = vmatprep.mubr.bf16.mxu0 0
      %827 = vmatmul.mubr.bf16.gmra.mxu0 %v706
      %v828 = vpop.f32.mrf.mxu0
      %v829 = vadd.f32 0.0, %v828
      %v830 = vpop.f32.mrf.mxu0
      %v831 = vpop.f32.mrf.mxu0
      %v832 = vadd.f32 0.0, %v831
      %v833 = vpop.f32.mrf.mxu0
      %834 = vmatprep.mubr.bf16.mxu0 0
      %835 = vmatmul.mubr.bf16.gmra.mxu0 %v707
      %v836 = vpop.f32.mrf.mxu0
      %v837 = vadd.f32 0.0, %v836
      %v838 = vpop.f32.mrf.mxu0
      %v839 = vpop.f32.mrf.mxu0
      %v840 = vadd.f32 0.0, %v839
      %v841 = vpop.f32.mrf.mxu0
      %842 = vmatprep.mubr.bf16.mxu0 0
      %843 = vmatmul.mubr.bf16.gmra.mxu0 %v708
      %v844 = vpop.f32.mrf.mxu0
      %v845 = vadd.f32 0.0, %v844
      %v846 = vpop.f32.mrf.mxu0
      %v847 = vpop.f32.mrf.mxu0
      %v848 = vadd.f32 0.0, %v847
      %v849 = vpop.f32.mrf.mxu0
      %850 = vmatprep.mubr.bf16.mxu0 0
      %851 = vmatmul.mubr.bf16.gmra.mxu0 %v709
      %v852 = vpop.f32.mrf.mxu0
      %v853 = vadd.f32 0.0, %v852
      %v854 = vpop.f32.mrf.mxu0
      %v855 = vpop.f32.mrf.mxu0
      %v856 = vadd.f32 0.0, %v855
      %v857 = vpop.f32.mrf.mxu0
      %858 = vmatprep.mubr.bf16.mxu0 0
      %859 = vmatmul.mubr.bf16.gmra.mxu0 %v710
      %v860 = vpop.f32.mrf.mxu0
      %v861 = vadd.f32 0.0, %v860
      %v862 = vpop.f32.mrf.mxu0
      %v863 = vpop.f32.mrf.mxu0
      %v864 = vadd.f32 0.0, %v863
      %v865 = vpop.f32.mrf.mxu0
      %866 = vmatprep.mubr.bf16.mxu0 0
      %867 = vmatmul.mubr.bf16.gmra.mxu0 %v711
      %v868 = vpop.f32.mrf.mxu0
      %v869 = vadd.f32 0.0, %v868
      %v870 = vpop.f32.mrf.mxu0
      %v871 = vpop.f32.mrf.mxu0
      %v872 = vadd.f32 0.0, %v871
      %v873 = vpop.f32.mrf.mxu0
      %874 = vmatprep.mubr.bf16.mxu0 0
      %875 = vmatmul.mubr.bf16.gmra.mxu0 %v712
      %v876 = vpop.f32.mrf.mxu0
      %v877 = vadd.f32 0.0, %v876
      %v878 = vpop.f32.mrf.mxu0
      %v879 = vpop.f32.mrf.mxu0
      %v880 = vadd.f32 0.0, %v879
      %v881 = vpop.f32.mrf.mxu0
      %882 = vmatprep.mubr.bf16.mxu0 0
      %883 = vmatmul.mubr.bf16.gmra.mxu0 %v713
      %v884 = vpop.f32.mrf.mxu0
      %v885 = vadd.f32 0.0, %v884
      %v886 = vpop.f32.mrf.mxu0
      %v887 = vpop.f32.mrf.mxu0
      %v888 = vadd.f32 0.0, %v887
      %v889 = vpop.f32.mrf.mxu0
      %890 = vmatprep.mubr.bf16.mxu0 0
      %891 = vmatmul.mubr.bf16.gmra.mxu0 %v714
      %v892 = vpop.f32.mrf.mxu0
      %v893 = vadd.f32 0.0, %v892
      %v894 = vpop.f32.mrf.mxu0
      %v895 = vpop.f32.mrf.mxu0
      %v896 = vadd.f32 0.0, %v895
      %v897 = vpop.f32.mrf.mxu0
      %898 = vmatprep.mubr.bf16.mxu0 0
      %899 = vmatmul.mubr.bf16.gmra.mxu0 %v715
      %v900 = vpop.f32.mrf.mxu0
      %v901 = vadd.f32 0.0, %v900
      %v902 = vpop.f32.mrf.mxu0
      %v903 = vpop.f32.mrf.mxu0
      %v904 = vadd.f32 0.0, %v903
      %v905 = vpop.f32.mrf.mxu0
      %906 = vmatprep.mubr.bf16.mxu0 0
      %907 = vmatmul.mubr.bf16.gmra.mxu0 %v716
      %v908 = vpop.f32.mrf.mxu0
      %v909 = vadd.f32 0.0, %v908
      %v910 = vpop.f32.mrf.mxu0
      %v911 = vpop.f32.mrf.mxu0
      %v912 = vadd.f32 0.0, %v911
      %v913 = vpop.f32.mrf.mxu0
      %914 = vmatprep.mubr.bf16.mxu0 0
      %915 = vmatmul.mubr.bf16.gmra.mxu0 %v717
      %v916 = vpop.f32.mrf.mxu0
      %v917 = vadd.f32 0.0, %v916
      %v918 = vpop.f32.mrf.mxu0
      %v919 = vpop.f32.mrf.mxu0
      %v920 = vadd.f32 0.0, %v919
      %v921 = vpop.f32.mrf.mxu0
      %922 = vmatprep.mubr.bf16.mxu0 0
      %923 = vmatmul.mubr.bf16.gmra.mxu0 %v718
      %v924 = vpop.f32.mrf.mxu0
      %v925 = vadd.f32 0.0, %v924
      %v926 = vpop.f32.mrf.mxu0
      %v927 = vpop.f32.mrf.mxu0
      %v928 = vadd.f32 0.0, %v927
      %v929 = vpop.f32.mrf.mxu0
      %930 = vmatprep.mubr.bf16.mxu0 0
      %931 = vmatmul.mubr.bf16.gmra.mxu0 %v719
      %v932 = vpop.f32.mrf.mxu0
      %v933 = vadd.f32 0.0, %v932
      %v934 = vpop.f32.mrf.mxu0
      %v935 = vpop.f32.mrf.mxu0
      %v936 = vadd.f32 0.0, %v935
      %v937 = vpop.f32.mrf.mxu0
      %938 = vmatprep.mubr.bf16.mxu0 0
      %939 = vmatmul.mubr.bf16.gmra.mxu0 %v720
      %v940 = vpop.f32.mrf.mxu0
      %v941 = vadd.f32 0.0, %v940
      %v942 = vpop.f32.mrf.mxu0
      %v943 = vpop.f32.mrf.mxu0
      %v944 = vadd.f32 0.0, %v943
      %v945 = vpop.f32.mrf.mxu0
      %946 = vdwg.mxu0
      %v947 = vld [vmem:[#allocation3] sm:$0xff]
      %v948 = vld [vmem:[#allocation3 + $0x8] sm:$0xff]
      %v949 = vld [vmem:[#allocation3 + $0x10] sm:$0xff]
      %v950 = vld [vmem:[#allocation3 + $0x18] sm:$0xff]
      %v951 = vld [vmem:[#allocation3 + $0x20] sm:$0xff]
      %v952 = vld [vmem:[#allocation3 + $0x28] sm:$0xff]
      %v953 = vld [vmem:[#allocation3 + $0x30] sm:$0xff]
      %v954 = vld [vmem:[#allocation3 + $0x38] sm:$0xff]
      %v955 = vld [vmem:[#allocation3 + $0x40] sm:$0xff]
      %v956 = vld [vmem:[#allocation3 + $0x48] sm:$0xff]
      %v957 = vld [vmem:[#allocation3 + $0x50] sm:$0xff]
      %v958 = vld [vmem:[#allocation3 + $0x58] sm:$0xff]
      %v959 = vld [vmem:[#allocation3 + $0x60] sm:$0xff]
      %v960 = vld [vmem:[#allocation3 + $0x68] sm:$0xff]
      %v961 = vld [vmem:[#allocation3 + $0x70] sm:$0xff]
      %v962 = vld [vmem:[#allocation3 + $0x78] sm:$0xff]
      %v963 = vld [vmem:[#allocation3 + $0x80] sm:$0xff]
      %v964 = vld [vmem:[#allocation3 + $0x88] sm:$0xff]
      %v965 = vld [vmem:[#allocation3 + $0x90] sm:$0xff]
      %v966 = vld [vmem:[#allocation3 + $0x98] sm:$0xff]
      %v967 = vld [vmem:[#allocation3 + $0xa0] sm:$0xff]
      %v968 = vld [vmem:[#allocation3 + $0xa8] sm:$0xff]
      %v969 = vld [vmem:[#allocation3 + $0xb0] sm:$0xff]
      %v970 = vld [vmem:[#allocation3 + $0xb8] sm:$0xff]
      %v971 = vld [vmem:[#allocation3 + $0xc0] sm:$0xff]
      %v972 = vld [vmem:[#allocation3 + $0xc8] sm:$0xff]
      %v973 = vld [vmem:[#allocation3 + $0xd0] sm:$0xff]
      %v974 = vld [vmem:[#allocation3 + $0xd8] sm:$0xff]
      %v975 = vld [vmem:[#allocation3 + $0xe0] sm:$0xff]
      %v976 = vld [vmem:[#allocation3 + $0xe8] sm:$0xff]
      %v977 = vld [vmem:[#allocation3 + $0xf0] sm:$0xff]
      %v978 = vld [vmem:[#allocation3 + $0xf8] sm:$0xff]
      %v979 = vadd.f32 %v947, %v821
      %v980 = vadd.f32 %v948, %v824
      %v981 = vadd.f32 %v949, %v829
      %v982 = vadd.f32 %v950, %v832
      %v983 = vadd.f32 %v951, %v837
      %v984 = vadd.f32 %v952, %v840
      %v985 = vadd.f32 %v953, %v845
      %v986 = vadd.f32 %v954, %v848
      %v987 = vadd.f32 %v955, %v853
      %v988 = vadd.f32 %v956, %v856
      %v989 = vadd.f32 %v957, %v861
      %v990 = vadd.f32 %v958, %v864
      %v991 = vadd.f32 %v959, %v869
      %v992 = vadd.f32 %v960, %v872
      %v993 = vadd.f32 %v961, %v877
      %v994 = vadd.f32 %v962, %v880
      %v995 = vadd.f32 %v963, %v885
      %v996 = vadd.f32 %v964, %v888
      %v997 = vadd.f32 %v965, %v893
      %v998 = vadd.f32 %v966, %v896
      %v999 = vadd.f32 %v967, %v901
      %v1000 = vadd.f32 %v968, %v904
      %v1001 = vadd.f32 %v969, %v909
      %v1002 = vadd.f32 %v970, %v912
      %v1003 = vadd.f32 %v971, %v917
      %v1004 = vadd.f32 %v972, %v920
      %v1005 = vadd.f32 %v973, %v925
      %v1006 = vadd.f32 %v974, %v928
      %v1007 = vadd.f32 %v975, %v933
      %v1008 = vadd.f32 %v976, %v936
      %v1009 = vadd.f32 %v977, %v941
      %v1010 = vadd.f32 %v978, %v944
      %1011 = vst [vmem:[#allocation3] sm:$0xff] %v979
      %1012 = vst [vmem:[#allocation3 + $0x8] sm:$0xff] %v980
      %1013 = vst [vmem:[#allocation3 + $0x10] sm:$0xff] %v981
      %1014 = vst [vmem:[#allocation3 + $0x18] sm:$0xff] %v982
      %1015 = vst [vmem:[#allocation3 + $0x20] sm:$0xff] %v983
      %1016 = vst [vmem:[#allocation3 + $0x28] sm:$0xff] %v984
      %1017 = vst [vmem:[#allocation3 + $0x30] sm:$0xff] %v985
      %1018 = vst [vmem:[#allocation3 + $0x38] sm:$0xff] %v986
      %1019 = vst [vmem:[#allocation3 + $0x40] sm:$0xff] %v987
      %1020 = vst [vmem:[#allocation3 + $0x48] sm:$0xff] %v988
      %1021 = vst [vmem:[#allocation3 + $0x50] sm:$0xff] %v989
      %1022 = vst [vmem:[#allocation3 + $0x58] sm:$0xff] %v990
      %1023 = vst [vmem:[#allocation3 + $0x60] sm:$0xff] %v991
      %1024 = vst [vmem:[#allocation3 + $0x68] sm:$0xff] %v992
      %1025 = vst [vmem:[#allocation3 + $0x70] sm:$0xff] %v993
      %1026 = vst [vmem:[#allocation3 + $0x78] sm:$0xff] %v994
      %1027 = vst [vmem:[#allocation3 + $0x80] sm:$0xff] %v995
      %1028 = vst [vmem:[#allocation3 + $0x88] sm:$0xff] %v996
      %1029 = vst [vmem:[#allocation3 + $0x90] sm:$0xff] %v997
      %1030 = vst [vmem:[#allocation3 + $0x98] sm:$0xff] %v998
      %1031 = vst [vmem:[#allocation3 + $0xa0] sm:$0xff] %v999
      %1032 = vst [vmem:[#allocation3 + $0xa8] sm:$0xff] %v1000
      %1033 = vst [vmem:[#allocation3 + $0xb0] sm:$0xff] %v1001
      %1034 = vst [vmem:[#allocation3 + $0xb8] sm:$0xff] %v1002
      %1035 = vst [vmem:[#allocation3 + $0xc0] sm:$0xff] %v1003
      %1036 = vst [vmem:[#allocation3 + $0xc8] sm:$0xff] %v1004
      %1037 = vst [vmem:[#allocation3 + $0xd0] sm:$0xff] %v1005
      %1038 = vst [vmem:[#allocation3 + $0xd8] sm:$0xff] %v1006
      %1039 = vst [vmem:[#allocation3 + $0xe0] sm:$0xff] %v1007
      %1040 = vst [vmem:[#allocation3 + $0xe8] sm:$0xff] %v1008
      %1041 = vst [vmem:[#allocation3 + $0xf0] sm:$0xff] %v1009
      %1042 = vst [vmem:[#allocation3 + $0xf8] sm:$0xff] %v1010
      %v1043 = vld [vmem:[%s367 + $0x2] sm:$0xff]
      %v1044 = vld [vmem:[%s367 + $0xa] sm:$0xff]
      %v1045 = vld [vmem:[%s367 + $0x1a] sm:$0xff]
      %v1046 = vld [vmem:[%s367 + $0x22] sm:$0xff]
      %v1047 = vld [vmem:[%s367 + $0x32] sm:$0xff]
      %v1048 = vld [vmem:[%s367 + $0x3a] sm:$0xff]
      %v1049 = vld [vmem:[%s367 + $0x4a] sm:$0xff]
      %v1050 = vld [vmem:[%s367 + $0x52] sm:$0xff]
      %v1051 = vld [vmem:[%s367 + $0x62] sm:$0xff]
      %v1052 = vld [vmem:[%s367 + $0x6a] sm:$0xff]
      %v1053 = vld [vmem:[%s367 + $0x7a] sm:$0xff]
      %v1054 = vld [vmem:[%s367 + $0x82] sm:$0xff]
      %v1055 = vld [vmem:[%s367 + $0x92] sm:$0xff]
      %v1056 = vld [vmem:[%s367 + $0x9a] sm:$0xff]
      %v1057 = vld [vmem:[%s367 + $0xaa] sm:$0xff]
      %v1058 = vld [vmem:[%s367 + $0xb2] sm:$0xff]
      %v1059 = vld [vmem:[%s367 + $0xc2] sm:$0xff]
      %v1060 = vld [vmem:[%s367 + $0xca] sm:$0xff]
      %v1061 = vld [vmem:[%s367 + $0xda] sm:$0xff]
      %v1062 = vld [vmem:[%s367 + $0xe2] sm:$0xff]
      %v1063 = vld [vmem:[%s367 + $0xf2] sm:$0xff]
      %v1064 = vld [vmem:[%s367 + $0xfa] sm:$0xff]
      %v1065 = vld [vmem:[%s367 + $0x10a] sm:$0xff]
      %v1066 = vld [vmem:[%s367 + $0x112] sm:$0xff]
      %v1067 = vld [vmem:[%s367 + $0x122] sm:$0xff]
      %v1068 = vld [vmem:[%s367 + $0x12a] sm:$0xff]
      %v1069 = vld [vmem:[%s367 + $0x13a] sm:$0xff]
      %v1070 = vld [vmem:[%s367 + $0x142] sm:$0xff]
      %v1071 = vld [vmem:[%s367 + $0x152] sm:$0xff]
      %v1072 = vld [vmem:[%s367 + $0x15a] sm:$0xff]
      %v1073 = vld [vmem:[%s367 + $0x16a] sm:$0xff]
      %v1074 = vld [vmem:[%s367 + $0x172] sm:$0xff]
      %v1075 = vpack.c.bf16 %v1044, %v1043
      %v1076 = vpack.c.bf16 %v1046, %v1045
      %v1077 = vpack.c.bf16 %v1048, %v1047
      %v1078 = vpack.c.bf16 %v1050, %v1049
      %v1079 = vpack.c.bf16 %v1052, %v1051
      %v1080 = vpack.c.bf16 %v1054, %v1053
      %v1081 = vpack.c.bf16 %v1056, %v1055
      %v1082 = vpack.c.bf16 %v1058, %v1057
      %v1083 = vpack.c.bf16 %v1060, %v1059
      %v1084 = vpack.c.bf16 %v1062, %v1061
      %v1085 = vpack.c.bf16 %v1064, %v1063
      %v1086 = vpack.c.bf16 %v1066, %v1065
      %v1087 = vpack.c.bf16 %v1068, %v1067
      %v1088 = vpack.c.bf16 %v1070, %v1069
      %v1089 = vpack.c.bf16 %v1072, %v1071
      %v1090 = vpack.c.bf16 %v1074, %v1073
      %s1091 = scalar_lea.vmem %s1, 128
      %v1092 = vld [vmem:[%s1091] sm:$0xf]
      %v1093 = vld [vmem:[%s1091 + $0x4] sm:$0xf]
      %v1094 = vld [vmem:[%s1091 + $0x8] sm:$0xf]
      %v1095 = vld [vmem:[%s1091 + $0xc] sm:$0xf]
      %v1096 = vld [vmem:[%s1091 + $0x10] sm:$0xf]
      %v1097 = vld [vmem:[%s1091 + $0x14] sm:$0xf]
      %v1098 = vld [vmem:[%s1091 + $0x18] sm:$0xf]
      %v1099 = vld [vmem:[%s1091 + $0x1c] sm:$0xf]
      %v1100 = vld [vmem:[%s1091 + $0x20] sm:$0xf]
      %v1101 = vld [vmem:[%s1091 + $0x24] sm:$0xf]
      %v1102 = vld [vmem:[%s1091 + $0x28] sm:$0xf]
      %v1103 = vld [vmem:[%s1091 + $0x2c] sm:$0xf]
      %v1104 = vld [vmem:[%s1091 + $0x30] sm:$0xf]
      %v1105 = vld [vmem:[%s1091 + $0x34] sm:$0xf]
      %v1106 = vld [vmem:[%s1091 + $0x38] sm:$0xf]
      %v1107 = vld [vmem:[%s1091 + $0x3c] sm:$0xf]
      %v1124 = vunpack.c.l.b16 %v1092
      %v1125 = vunpack.c.l.b16 %v1093
      %v1126 = vunpack.c.l.b16 %v1094
      %v1127 = vunpack.c.l.b16 %v1095
      %v1128 = vunpack.c.l.b16 %v1096
      %v1129 = vunpack.c.l.b16 %v1097
      %v1130 = vunpack.c.l.b16 %v1098
      %v1131 = vunpack.c.l.b16 %v1099
      %v1132 = vunpack.c.l.b16 %v1100
      %v1133 = vunpack.c.l.b16 %v1101
      %v1134 = vunpack.c.l.b16 %v1102
      %v1135 = vunpack.c.l.b16 %v1103
      %v1136 = vunpack.c.l.b16 %v1104
      %v1137 = vunpack.c.l.b16 %v1105
      %v1138 = vunpack.c.l.b16 %v1106
      %v1139 = vunpack.c.l.b16 %v1107
      %v1140 = vpack.c.b16 %v1125, %v1124
      %v1141 = vpack.c.b16 %v1127, %v1126
      %v1142 = vpack.c.b16 %v1129, %v1128
      %v1143 = vpack.c.b16 %v1131, %v1130
      %v1144 = vpack.c.b16 %v1133, %v1132
      %v1145 = vpack.c.b16 %v1135, %v1134
      %v1146 = vpack.c.b16 %v1137, %v1136
      %v1147 = vpack.c.b16 %v1139, %v1138
      %1156 = vmatprep.subr.bf16.mxu0 0
      %1157 = vmatpush1.bf16.msra.mxu0 %v1147
      %1158 = vmatprep.subr.bf16.mxu0 0
      %1159 = vmatpush1.bf16.msra.mxu0 %v1146
      %1160 = vmatprep.subr.bf16.mxu0 0
      %1161 = vmatpush1.bf16.msra.mxu0 %v1145
      %1162 = vmatprep.subr.bf16.mxu0 0
      %1163 = vmatpush1.bf16.msra.mxu0 %v1144
      %1164 = vmatprep.subr.bf16.mxu0 0
      %1165 = vmatpush1.bf16.msra.mxu0 %v1143
      %1166 = vmatprep.subr.bf16.mxu0 0
      %1167 = vmatpush1.bf16.msra.mxu0 %v1142
      %1168 = vmatprep.subr.bf16.mxu0 0
      %1169 = vmatpush1.bf16.msra.mxu0 %v1141
      %1170 = vmatprep.subr.bf16.mxu0 0
      %1171 = vmatpush1.bf16.msra.mxu0 %v1140
      %1172 = vmatprep.subr.bf16.mxu0 0
      %1173 = vmatpush2.bf16.msra.mxu0 0
      %1174 = vmatprep.subr.bf16.mxu0 0
      %1175 = vmatpush2.bf16.msra.mxu0 0
      %1176 = vmatprep.subr.bf16.mxu0 0
      %1177 = vmatpush2.bf16.msra.mxu0 0
      %1178 = vmatprep.subr.bf16.mxu0 0
      %1179 = vmatpush2.bf16.msra.mxu0 0
      %1180 = vmatprep.subr.bf16.mxu0 0
      %1181 = vmatpush2.bf16.msra.mxu0 0
      %1182 = vmatprep.subr.bf16.mxu0 0
      %1183 = vmatpush2.bf16.msra.mxu0 0
      %1184 = vmatprep.subr.bf16.mxu0 0
      %1185 = vmatpush2.bf16.msra.mxu0 0
      %1186 = vmatprep.subr.bf16.mxu0 0
      %1187 = vmatpush2.bf16.msra.mxu0 0
      %1188 = vmatprep.mubr.bf16.mxu0 0
      %1189 = vmatmul.mubr.bf16.gmra.mxu0 %v1075
      %v1190 = vpop.f32.mrf.mxu0
      %v1191 = vadd.f32 0.0, %v1190
      %v1192 = vpop.f32.mrf.mxu0
      %v1193 = vpop.f32.mrf.mxu0
      %v1194 = vadd.f32 0.0, %v1193
      %v1195 = vpop.f32.mrf.mxu0
      %1196 = vmatprep.mubr.bf16.mxu0 0
      %1197 = vmatmul.mubr.bf16.gmra.mxu0 %v1076
      %v1198 = vpop.f32.mrf.mxu0
      %v1199 = vadd.f32 0.0, %v1198
      %v1200 = vpop.f32.mrf.mxu0
      %v1201 = vpop.f32.mrf.mxu0
      %v1202 = vadd.f32 0.0, %v1201
      %v1203 = vpop.f32.mrf.mxu0
      %1204 = vmatprep.mubr.bf16.mxu0 0
      %1205 = vmatmul.mubr.bf16.gmra.mxu0 %v1077
      %v1206 = vpop.f32.mrf.mxu0
      %v1207 = vadd.f32 0.0, %v1206
      %v1208 = vpop.f32.mrf.mxu0
      %v1209 = vpop.f32.mrf.mxu0
      %v1210 = vadd.f32 0.0, %v1209
      %v1211 = vpop.f32.mrf.mxu0
      %1212 = vmatprep.mubr.bf16.mxu0 0
      %1213 = vmatmul.mubr.bf16.gmra.mxu0 %v1078
      %v1214 = vpop.f32.mrf.mxu0
      %v1215 = vadd.f32 0.0, %v1214
      %v1216 = vpop.f32.mrf.mxu0
      %v1217 = vpop.f32.mrf.mxu0
      %v1218 = vadd.f32 0.0, %v1217
      %v1219 = vpop.f32.mrf.mxu0
      %1220 = vmatprep.mubr.bf16.mxu0 0
      %1221 = vmatmul.mubr.bf16.gmra.mxu0 %v1079
      %v1222 = vpop.f32.mrf.mxu0
      %v1223 = vadd.f32 0.0, %v1222
      %v1224 = vpop.f32.mrf.mxu0
      %v1225 = vpop.f32.mrf.mxu0
      %v1226 = vadd.f32 0.0, %v1225
      %v1227 = vpop.f32.mrf.mxu0
      %1228 = vmatprep.mubr.bf16.mxu0 0
      %1229 = vmatmul.mubr.bf16.gmra.mxu0 %v1080
      %v1230 = vpop.f32.mrf.mxu0
      %v1231 = vadd.f32 0.0, %v1230
      %v1232 = vpop.f32.mrf.mxu0
      %v1233 = vpop.f32.mrf.mxu0
      %v1234 = vadd.f32 0.0, %v1233
      %v1235 = vpop.f32.mrf.mxu0
      %1236 = vmatprep.mubr.bf16.mxu0 0
      %1237 = vmatmul.mubr.bf16.gmra.mxu0 %v1081
      %v1238 = vpop.f32.mrf.mxu0
      %v1239 = vadd.f32 0.0, %v1238
      %v1240 = vpop.f32.mrf.mxu0
      %v1241 = vpop.f32.mrf.mxu0
      %v1242 = vadd.f32 0.0, %v1241
      %v1243 = vpop.f32.mrf.mxu0
      %1244 = vmatprep.mubr.bf16.mxu0 0
      %1245 = vmatmul.mubr.bf16.gmra.mxu0 %v1082
      %v1246 = vpop.f32.mrf.mxu0
      %v1247 = vadd.f32 0.0, %v1246
      %v1248 = vpop.f32.mrf.mxu0
      %v1249 = vpop.f32.mrf.mxu0
      %v1250 = vadd.f32 0.0, %v1249
      %v1251 = vpop.f32.mrf.mxu0
      %1252 = vmatprep.mubr.bf16.mxu0 0
      %1253 = vmatmul.mubr.bf16.gmra.mxu0 %v1083
      %v1254 = vpop.f32.mrf.mxu0
      %v1255 = vadd.f32 0.0, %v1254
      %v1256 = vpop.f32.mrf.mxu0
      %v1257 = vpop.f32.mrf.mxu0
      %v1258 = vadd.f32 0.0, %v1257
      %v1259 = vpop.f32.mrf.mxu0
      %1260 = vmatprep.mubr.bf16.mxu0 0
      %1261 = vmatmul.mubr.bf16.gmra.mxu0 %v1084
      %v1262 = vpop.f32.mrf.mxu0
      %v1263 = vadd.f32 0.0, %v1262
      %v1264 = vpop.f32.mrf.mxu0
      %v1265 = vpop.f32.mrf.mxu0
      %v1266 = vadd.f32 0.0, %v1265
      %v1267 = vpop.f32.mrf.mxu0
      %1268 = vmatprep.mubr.bf16.mxu0 0
      %1269 = vmatmul.mubr.bf16.gmra.mxu0 %v1085
      %v1270 = vpop.f32.mrf.mxu0
      %v1271 = vadd.f32 0.0, %v1270
      %v1272 = vpop.f32.mrf.mxu0
      %v1273 = vpop.f32.mrf.mxu0
      %v1274 = vadd.f32 0.0, %v1273
      %v1275 = vpop.f32.mrf.mxu0
      %1276 = vmatprep.mubr.bf16.mxu0 0
      %1277 = vmatmul.mubr.bf16.gmra.mxu0 %v1086
      %v1278 = vpop.f32.mrf.mxu0
      %v1279 = vadd.f32 0.0, %v1278
      %v1280 = vpop.f32.mrf.mxu0
      %v1281 = vpop.f32.mrf.mxu0
      %v1282 = vadd.f32 0.0, %v1281
      %v1283 = vpop.f32.mrf.mxu0
      %1284 = vmatprep.mubr.bf16.mxu0 0
      %1285 = vmatmul.mubr.bf16.gmra.mxu0 %v1087
      %v1286 = vpop.f32.mrf.mxu0
      %v1287 = vadd.f32 0.0, %v1286
      %v1288 = vpop.f32.mrf.mxu0
      %v1289 = vpop.f32.mrf.mxu0
      %v1290 = vadd.f32 0.0, %v1289
      %v1291 = vpop.f32.mrf.mxu0
      %1292 = vmatprep.mubr.bf16.mxu0 0
      %1293 = vmatmul.mubr.bf16.gmra.mxu0 %v1088
      %v1294 = vpop.f32.mrf.mxu0
      %v1295 = vadd.f32 0.0, %v1294
      %v1296 = vpop.f32.mrf.mxu0
      %v1297 = vpop.f32.mrf.mxu0
      %v1298 = vadd.f32 0.0, %v1297
      %v1299 = vpop.f32.mrf.mxu0
      %1300 = vmatprep.mubr.bf16.mxu0 0
      %1301 = vmatmul.mubr.bf16.gmra.mxu0 %v1089
      %v1302 = vpop.f32.mrf.mxu0
      %v1303 = vadd.f32 0.0, %v1302
      %v1304 = vpop.f32.mrf.mxu0
      %v1305 = vpop.f32.mrf.mxu0
      %v1306 = vadd.f32 0.0, %v1305
      %v1307 = vpop.f32.mrf.mxu0
      %1308 = vmatprep.mubr.bf16.mxu0 0
      %1309 = vmatmul.mubr.bf16.gmra.mxu0 %v1090
      %v1310 = vpop.f32.mrf.mxu0
      %v1311 = vadd.f32 0.0, %v1310
      %v1312 = vpop.f32.mrf.mxu0
      %v1313 = vpop.f32.mrf.mxu0
      %v1314 = vadd.f32 0.0, %v1313
      %v1315 = vpop.f32.mrf.mxu0
      %1316 = vdwg.mxu0
      %v1317 = vld [vmem:[#allocation3] sm:$0xff]
      %v1318 = vld [vmem:[#allocation3 + $0x8] sm:$0xff]
      %v1319 = vld [vmem:[#allocation3 + $0x10] sm:$0xff]
      %v1320 = vld [vmem:[#allocation3 + $0x18] sm:$0xff]
      %v1321 = vld [vmem:[#allocation3 + $0x20] sm:$0xff]
      %v1322 = vld [vmem:[#allocation3 + $0x28] sm:$0xff]
      %v1323 = vld [vmem:[#allocation3 + $0x30] sm:$0xff]
      %v1324 = vld [vmem:[#allocation3 + $0x38] sm:$0xff]
      %v1325 = vld [vmem:[#allocation3 + $0x40] sm:$0xff]
      %v1326 = vld [vmem:[#allocation3 + $0x48] sm:$0xff]
      %v1327 = vld [vmem:[#allocation3 + $0x50] sm:$0xff]
      %v1328 = vld [vmem:[#allocation3 + $0x58] sm:$0xff]
      %v1329 = vld [vmem:[#allocation3 + $0x60] sm:$0xff]
      %v1330 = vld [vmem:[#allocation3 + $0x68] sm:$0xff]
      %v1331 = vld [vmem:[#allocation3 + $0x70] sm:$0xff]
      %v1332 = vld [vmem:[#allocation3 + $0x78] sm:$0xff]
      %v1333 = vld [vmem:[#allocation3 + $0x80] sm:$0xff]
      %v1334 = vld [vmem:[#allocation3 + $0x88] sm:$0xff]
      %v1335 = vld [vmem:[#allocation3 + $0x90] sm:$0xff]
      %v1336 = vld [vmem:[#allocation3 + $0x98] sm:$0xff]
      %v1337 = vld [vmem:[#allocation3 + $0xa0] sm:$0xff]
      %v1338 = vld [vmem:[#allocation3 + $0xa8] sm:$0xff]
      %v1339 = vld [vmem:[#allocation3 + $0xb0] sm:$0xff]
      %v1340 = vld [vmem:[#allocation3 + $0xb8] sm:$0xff]
      %v1341 = vld [vmem:[#allocation3 + $0xc0] sm:$0xff]
      %v1342 = vld [vmem:[#allocation3 + $0xc8] sm:$0xff]
      %v1343 = vld [vmem:[#allocation3 + $0xd0] sm:$0xff]
      %v1344 = vld [vmem:[#allocation3 + $0xd8] sm:$0xff]
      %v1345 = vld [vmem:[#allocation3 + $0xe0] sm:$0xff]
      %v1346 = vld [vmem:[#allocation3 + $0xe8] sm:$0xff]
      %v1347 = vld [vmem:[#allocation3 + $0xf0] sm:$0xff]
      %v1348 = vld [vmem:[#allocation3 + $0xf8] sm:$0xff]
      %v1349 = vadd.f32 %v1317, %v1191
      %v1350 = vadd.f32 %v1318, %v1194
      %v1351 = vadd.f32 %v1319, %v1199
      %v1352 = vadd.f32 %v1320, %v1202
      %v1353 = vadd.f32 %v1321, %v1207
      %v1354 = vadd.f32 %v1322, %v1210
      %v1355 = vadd.f32 %v1323, %v1215
      %v1356 = vadd.f32 %v1324, %v1218
      %v1357 = vadd.f32 %v1325, %v1223
      %v1358 = vadd.f32 %v1326, %v1226
      %v1359 = vadd.f32 %v1327, %v1231
      %v1360 = vadd.f32 %v1328, %v1234
      %v1361 = vadd.f32 %v1329, %v1239
      %v1362 = vadd.f32 %v1330, %v1242
      %v1363 = vadd.f32 %v1331, %v1247
      %v1364 = vadd.f32 %v1332, %v1250
      %v1365 = vadd.f32 %v1333, %v1255
      %v1366 = vadd.f32 %v1334, %v1258
      %v1367 = vadd.f32 %v1335, %v1263
      %v1368 = vadd.f32 %v1336, %v1266
      %v1369 = vadd.f32 %v1337, %v1271
      %v1370 = vadd.f32 %v1338, %v1274
      %v1371 = vadd.f32 %v1339, %v1279
      %v1372 = vadd.f32 %v1340, %v1282
      %v1373 = vadd.f32 %v1341, %v1287
      %v1374 = vadd.f32 %v1342, %v1290
      %v1375 = vadd.f32 %v1343, %v1295
      %v1376 = vadd.f32 %v1344, %v1298
      %v1377 = vadd.f32 %v1345, %v1303
      %v1378 = vadd.f32 %v1346, %v1306
      %v1379 = vadd.f32 %v1347, %v1311
      %v1380 = vadd.f32 %v1348, %v1314
      %1381 = vst [vmem:[#allocation3] sm:$0xff] %v1349
      %1382 = vst [vmem:[#allocation3 + $0x8] sm:$0xff] %v1350
      %1383 = vst [vmem:[#allocation3 + $0x10] sm:$0xff] %v1351
      %1384 = vst [vmem:[#allocation3 + $0x18] sm:$0xff] %v1352
      %1385 = vst [vmem:[#allocation3 + $0x20] sm:$0xff] %v1353
      %1386 = vst [vmem:[#allocation3 + $0x28] sm:$0xff] %v1354
      %1387 = vst [vmem:[#allocation3 + $0x30] sm:$0xff] %v1355
      %1388 = vst [vmem:[#allocation3 + $0x38] sm:$0xff] %v1356
      %1389 = vst [vmem:[#allocation3 + $0x40] sm:$0xff] %v1357
      %1390 = vst [vmem:[#allocation3 + $0x48] sm:$0xff] %v1358
      %1391 = vst [vmem:[#allocation3 + $0x50] sm:$0xff] %v1359
      %1392 = vst [vmem:[#allocation3 + $0x58] sm:$0xff] %v1360
      %1393 = vst [vmem:[#allocation3 + $0x60] sm:$0xff] %v1361
      %1394 = vst [vmem:[#allocation3 + $0x68] sm:$0xff] %v1362
      %1395 = vst [vmem:[#allocation3 + $0x70] sm:$0xff] %v1363
      %1396 = vst [vmem:[#allocation3 + $0x78] sm:$0xff] %v1364
      %1397 = vst [vmem:[#allocation3 + $0x80] sm:$0xff] %v1365
      %1398 = vst [vmem:[#allocation3 + $0x88] sm:$0xff] %v1366
      %1399 = vst [vmem:[#allocation3 + $0x90] sm:$0xff] %v1367
      %1400 = vst [vmem:[#allocation3 + $0x98] sm:$0xff] %v1368
      %1401 = vst [vmem:[#allocation3 + $0xa0] sm:$0xff] %v1369
      %1402 = vst [vmem:[#allocation3 + $0xa8] sm:$0xff] %v1370
      %1403 = vst [vmem:[#allocation3 + $0xb0] sm:$0xff] %v1371
      %1404 = vst [vmem:[#allocation3 + $0xb8] sm:$0xff] %v1372
      %1405 = vst [vmem:[#allocation3 + $0xc0] sm:$0xff] %v1373
      %1406 = vst [vmem:[#allocation3 + $0xc8] sm:$0xff] %v1374
      %1407 = vst [vmem:[#allocation3 + $0xd0] sm:$0xff] %v1375
      %1408 = vst [vmem:[#allocation3 + $0xd8] sm:$0xff] %v1376
      %1409 = vst [vmem:[#allocation3 + $0xe0] sm:$0xff] %v1377
      %1410 = vst [vmem:[#allocation3 + $0xe8] sm:$0xff] %v1378
      %1411 = vst [vmem:[#allocation3 + $0xf0] sm:$0xff] %v1379
      %1412 = vst [vmem:[#allocation3 + $0xf8] sm:$0xff] %v1380
      %s1413 = sadd.s32 %s365, 1
      %s1414 = smul.u32 %s1413, 24
      %s1415 = scalar_lea.vmem [#allocation2], %s1414
      %v1416 = vld [vmem:[%s1415] sm:$0xff]
      %v1417 = vld [vmem:[%s1415 + $0x8] sm:$0xff]
      %v1418 = vld [vmem:[%s1415 + $0x18] sm:$0xff]
      %v1419 = vld [vmem:[%s1415 + $0x20] sm:$0xff]
      %v1420 = vld [vmem:[%s1415 + $0x30] sm:$0xff]
      %v1421 = vld [vmem:[%s1415 + $0x38] sm:$0xff]
      %v1422 = vld [vmem:[%s1415 + $0x48] sm:$0xff]
      %v1423 = vld [vmem:[%s1415 + $0x50] sm:$0xff]
      %v1424 = vld [vmem:[%s1415 + $0x60] sm:$0xff]
      %v1425 = vld [vmem:[%s1415 + $0x68] sm:$0xff]
      %v1426 = vld [vmem:[%s1415 + $0x78] sm:$0xff]
      %v1427 = vld [vmem:[%s1415 + $0x80] sm:$0xff]
      %v1428 = vld [vmem:[%s1415 + $0x90] sm:$0xff]
      %v1429 = vld [vmem:[%s1415 + $0x98] sm:$0xff]
      %v1430 = vld [vmem:[%s1415 + $0xa8] sm:$0xff]
      %v1431 = vld [vmem:[%s1415 + $0xb0] sm:$0xff]
      %v1432 = vld [vmem:[%s1415 + $0xc0] sm:$0xff]
      %v1433 = vld [vmem:[%s1415 + $0xc8] sm:$0xff]
      %v1434 = vld [vmem:[%s1415 + $0xd8] sm:$0xff]
      %v1435 = vld [vmem:[%s1415 + $0xe0] sm:$0xff]
      %v1436 = vld [vmem:[%s1415 + $0xf0] sm:$0xff]
      %v1437 = vld [vmem:[%s1415 + $0xf8] sm:$0xff]
      %v1438 = vld [vmem:[%s1415 + $0x108] sm:$0xff]
      %v1439 = vld [vmem:[%s1415 + $0x110] sm:$0xff]
      %v1440 = vld [vmem:[%s1415 + $0x120] sm:$0xff]
      %v1441 = vld [vmem:[%s1415 + $0x128] sm:$0xff]
      %v1442 = vld [vmem:[%s1415 + $0x138] sm:$0xff]
      %v1443 = vld [vmem:[%s1415 + $0x140] sm:$0xff]
      %v1444 = vld [vmem:[%s1415 + $0x150] sm:$0xff]
      %v1445 = vld [vmem:[%s1415 + $0x158] sm:$0xff]
      %v1446 = vld [vmem:[%s1415 + $0x168] sm:$0xff]
      %v1447 = vld [vmem:[%s1415 + $0x170] sm:$0xff]
      %v1448 = vpack.c.bf16 %v1417, %v1416
      %v1449 = vpack.c.bf16 %v1419, %v1418
      %v1450 = vpack.c.bf16 %v1421, %v1420
      %v1451 = vpack.c.bf16 %v1423, %v1422
      %v1452 = vpack.c.bf16 %v1425, %v1424
      %v1453 = vpack.c.bf16 %v1427, %v1426
      %v1454 = vpack.c.bf16 %v1429, %v1428
      %v1455 = vpack.c.bf16 %v1431, %v1430
      %v1456 = vpack.c.bf16 %v1433, %v1432
      %v1457 = vpack.c.bf16 %v1435, %v1434
      %v1458 = vpack.c.bf16 %v1437, %v1436
      %v1459 = vpack.c.bf16 %v1439, %v1438
      %v1460 = vpack.c.bf16 %v1441, %v1440
      %v1461 = vpack.c.bf16 %v1443, %v1442
      %v1462 = vpack.c.bf16 %v1445, %v1444
      %v1463 = vpack.c.bf16 %v1447, %v1446
      %s1464 = scalar_lea.vmem %s1, 192
      %v1465 = vld [vmem:[%s1464] sm:$0xf]
      %v1466 = vld [vmem:[%s1464 + $0x4] sm:$0xf]
      %v1467 = vld [vmem:[%s1464 + $0x8] sm:$0xf]
      %v1468 = vld [vmem:[%s1464 + $0xc] sm:$0xf]
      %v1469 = vld [vmem:[%s1464 + $0x10] sm:$0xf]
      %v1470 = vld [vmem:[%s1464 + $0x14] sm:$0xf]
      %v1471 = vld [vmem:[%s1464 + $0x18] sm:$0xf]
      %v1472 = vld [vmem:[%s1464 + $0x1c] sm:$0xf]
      %v1473 = vld [vmem:[%s1464 + $0x20] sm:$0xf]
      %v1474 = vld [vmem:[%s1464 + $0x24] sm:$0xf]
      %v1475 = vld [vmem:[%s1464 + $0x28] sm:$0xf]
      %v1476 = vld [vmem:[%s1464 + $0x2c] sm:$0xf]
      %v1477 = vld [vmem:[%s1464 + $0x30] sm:$0xf]
      %v1478 = vld [vmem:[%s1464 + $0x34] sm:$0xf]
      %v1479 = vld [vmem:[%s1464 + $0x38] sm:$0xf]
      %v1480 = vld [vmem:[%s1464 + $0x3c] sm:$0xf]
      %v1497 = vunpack.c.l.b16 %v1465
      %v1498 = vunpack.c.l.b16 %v1466
      %v1499 = vunpack.c.l.b16 %v1467
      %v1500 = vunpack.c.l.b16 %v1468
      %v1501 = vunpack.c.l.b16 %v1469
      %v1502 = vunpack.c.l.b16 %v1470
      %v1503 = vunpack.c.l.b16 %v1471
      %v1504 = vunpack.c.l.b16 %v1472
      %v1505 = vunpack.c.l.b16 %v1473
      %v1506 = vunpack.c.l.b16 %v1474
      %v1507 = vunpack.c.l.b16 %v1475
      %v1508 = vunpack.c.l.b16 %v1476
      %v1509 = vunpack.c.l.b16 %v1477
      %v1510 = vunpack.c.l.b16 %v1478
      %v1511 = vunpack.c.l.b16 %v1479
      %v1512 = vunpack.c.l.b16 %v1480
      %v1513 = vpack.c.b16 %v1498, %v1497
      %v1514 = vpack.c.b16 %v1500, %v1499
      %v1515 = vpack.c.b16 %v1502, %v1501
      %v1516 = vpack.c.b16 %v1504, %v1503
      %v1517 = vpack.c.b16 %v1506, %v1505
      %v1518 = vpack.c.b16 %v1508, %v1507
      %v1519 = vpack.c.b16 %v1510, %v1509
      %v1520 = vpack.c.b16 %v1512, %v1511
      %1529 = vmatprep.subr.bf16.mxu0 0
      %1530 = vmatpush1.bf16.msra.mxu0 %v1520
      %1531 = vmatprep.subr.bf16.mxu0 0
      %1532 = vmatpush1.bf16.msra.mxu0 %v1519
      %1533 = vmatprep.subr.bf16.mxu0 0
      %1534 = vmatpush1.bf16.msra.mxu0 %v1518
      %1535 = vmatprep.subr.bf16.mxu0 0
      %1536 = vmatpush1.bf16.msra.mxu0 %v1517
      %1537 = vmatprep.subr.bf16.mxu0 0
      %1538 = vmatpush1.bf16.msra.mxu0 %v1516
      %1539 = vmatprep.subr.bf16.mxu0 0
      %1540 = vmatpush1.bf16.msra.mxu0 %v1515
      %1541 = vmatprep.subr.bf16.mxu0 0
      %1542 = vmatpush1.bf16.msra.mxu0 %v1514
      %1543 = vmatprep.subr.bf16.mxu0 0
      %1544 = vmatpush1.bf16.msra.mxu0 %v1513
      %1545 = vmatprep.subr.bf16.mxu0 0
      %1546 = vmatpush2.bf16.msra.mxu0 0
      %1547 = vmatprep.subr.bf16.mxu0 0
      %1548 = vmatpush2.bf16.msra.mxu0 0
      %1549 = vmatprep.subr.bf16.mxu0 0
      %1550 = vmatpush2.bf16.msra.mxu0 0
      %1551 = vmatprep.subr.bf16.mxu0 0
      %1552 = vmatpush2.bf16.msra.mxu0 0
      %1553 = vmatprep.subr.bf16.mxu0 0
      %1554 = vmatpush2.bf16.msra.mxu0 0
      %1555 = vmatprep.subr.bf16.mxu0 0
      %1556 = vmatpush2.bf16.msra.mxu0 0
      %1557 = vmatprep.subr.bf16.mxu0 0
      %1558 = vmatpush2.bf16.msra.mxu0 0
      %1559 = vmatprep.subr.bf16.mxu0 0
      %1560 = vmatpush2.bf16.msra.mxu0 0
      %1561 = vmatprep.mubr.bf16.mxu0 0
      %1562 = vmatmul.mubr.bf16.gmra.mxu0 %v1448
      %v1563 = vpop.f32.mrf.mxu0
      %v1564 = vadd.f32 0.0, %v1563
      %v1565 = vpop.f32.mrf.mxu0
      %v1566 = vpop.f32.mrf.mxu0
      %v1567 = vadd.f32 0.0, %v1566
      %v1568 = vpop.f32.mrf.mxu0
      %1569 = vmatprep.mubr.bf16.mxu0 0
      %1570 = vmatmul.mubr.bf16.gmra.mxu0 %v1449
      %v1571 = vpop.f32.mrf.mxu0
      %v1572 = vadd.f32 0.0, %v1571
      %v1573 = vpop.f32.mrf.mxu0
      %v1574 = vpop.f32.mrf.mxu0
      %v1575 = vadd.f32 0.0, %v1574
      %v1576 = vpop.f32.mrf.mxu0
      %1577 = vmatprep.mubr.bf16.mxu0 0
      %1578 = vmatmul.mubr.bf16.gmra.mxu0 %v1450
      %v1579 = vpop.f32.mrf.mxu0
      %v1580 = vadd.f32 0.0, %v1579
      %v1581 = vpop.f32.mrf.mxu0
      %v1582 = vpop.f32.mrf.mxu0
      %v1583 = vadd.f32 0.0, %v1582
      %v1584 = vpop.f32.mrf.mxu0
      %1585 = vmatprep.mubr.bf16.mxu0 0
      %1586 = vmatmul.mubr.bf16.gmra.mxu0 %v1451
      %v1587 = vpop.f32.mrf.mxu0
      %v1588 = vadd.f32 0.0, %v1587
      %v1589 = vpop.f32.mrf.mxu0
      %v1590 = vpop.f32.mrf.mxu0
      %v1591 = vadd.f32 0.0, %v1590
      %v1592 = vpop.f32.mrf.mxu0
      %1593 = vmatprep.mubr.bf16.mxu0 0
      %1594 = vmatmul.mubr.bf16.gmra.mxu0 %v1452
      %v1595 = vpop.f32.mrf.mxu0
      %v1596 = vadd.f32 0.0, %v1595
      %v1597 = vpop.f32.mrf.mxu0
      %v1598 = vpop.f32.mrf.mxu0
      %v1599 = vadd.f32 0.0, %v1598
      %v1600 = vpop.f32.mrf.mxu0
      %1601 = vmatprep.mubr.bf16.mxu0 0
      %1602 = vmatmul.mubr.bf16.gmra.mxu0 %v1453
      %v1603 = vpop.f32.mrf.mxu0
      %v1604 = vadd.f32 0.0, %v1603
      %v1605 = vpop.f32.mrf.mxu0
      %v1606 = vpop.f32.mrf.mxu0
      %v1607 = vadd.f32 0.0, %v1606
      %v1608 = vpop.f32.mrf.mxu0
      %1609 = vmatprep.mubr.bf16.mxu0 0
      %1610 = vmatmul.mubr.bf16.gmra.mxu0 %v1454
      %v1611 = vpop.f32.mrf.mxu0
      %v1612 = vadd.f32 0.0, %v1611
      %v1613 = vpop.f32.mrf.mxu0
      %v1614 = vpop.f32.mrf.mxu0
      %v1615 = vadd.f32 0.0, %v1614
      %v1616 = vpop.f32.mrf.mxu0
      %1617 = vmatprep.mubr.bf16.mxu0 0
      %1618 = vmatmul.mubr.bf16.gmra.mxu0 %v1455
      %v1619 = vpop.f32.mrf.mxu0
      %v1620 = vadd.f32 0.0, %v1619
      %v1621 = vpop.f32.mrf.mxu0
      %v1622 = vpop.f32.mrf.mxu0
      %v1623 = vadd.f32 0.0, %v1622
      %v1624 = vpop.f32.mrf.mxu0
      %1625 = vmatprep.mubr.bf16.mxu0 0
      %1626 = vmatmul.mubr.bf16.gmra.mxu0 %v1456
      %v1627 = vpop.f32.mrf.mxu0
      %v1628 = vadd.f32 0.0, %v1627
      %v1629 = vpop.f32.mrf.mxu0
      %v1630 = vpop.f32.mrf.mxu0
      %v1631 = vadd.f32 0.0, %v1630
      %v1632 = vpop.f32.mrf.mxu0
      %1633 = vmatprep.mubr.bf16.mxu0 0
      %1634 = vmatmul.mubr.bf16.gmra.mxu0 %v1457
      %v1635 = vpop.f32.mrf.mxu0
      %v1636 = vadd.f32 0.0, %v1635
      %v1637 = vpop.f32.mrf.mxu0
      %v1638 = vpop.f32.mrf.mxu0
      %v1639 = vadd.f32 0.0, %v1638
      %v1640 = vpop.f32.mrf.mxu0
      %1641 = vmatprep.mubr.bf16.mxu0 0
      %1642 = vmatmul.mubr.bf16.gmra.mxu0 %v1458
      %v1643 = vpop.f32.mrf.mxu0
      %v1644 = vadd.f32 0.0, %v1643
      %v1645 = vpop.f32.mrf.mxu0
      %v1646 = vpop.f32.mrf.mxu0
      %v1647 = vadd.f32 0.0, %v1646
      %v1648 = vpop.f32.mrf.mxu0
      %1649 = vmatprep.mubr.bf16.mxu0 0
      %1650 = vmatmul.mubr.bf16.gmra.mxu0 %v1459
      %v1651 = vpop.f32.mrf.mxu0
      %v1652 = vadd.f32 0.0, %v1651
      %v1653 = vpop.f32.mrf.mxu0
      %v1654 = vpop.f32.mrf.mxu0
      %v1655 = vadd.f32 0.0, %v1654
      %v1656 = vpop.f32.mrf.mxu0
      %1657 = vmatprep.mubr.bf16.mxu0 0
      %1658 = vmatmul.mubr.bf16.gmra.mxu0 %v1460
      %v1659 = vpop.f32.mrf.mxu0
      %v1660 = vadd.f32 0.0, %v1659
      %v1661 = vpop.f32.mrf.mxu0
      %v1662 = vpop.f32.mrf.mxu0
      %v1663 = vadd.f32 0.0, %v1662
      %v1664 = vpop.f32.mrf.mxu0
      %1665 = vmatprep.mubr.bf16.mxu0 0
      %1666 = vmatmul.mubr.bf16.gmra.mxu0 %v1461
      %v1667 = vpop.f32.mrf.mxu0
      %v1668 = vadd.f32 0.0, %v1667
      %v1669 = vpop.f32.mrf.mxu0
      %v1670 = vpop.f32.mrf.mxu0
      %v1671 = vadd.f32 0.0, %v1670
      %v1672 = vpop.f32.mrf.mxu0
      %1673 = vmatprep.mubr.bf16.mxu0 0
      %1674 = vmatmul.mubr.bf16.gmra.mxu0 %v1462
      %v1675 = vpop.f32.mrf.mxu0
      %v1676 = vadd.f32 0.0, %v1675
      %v1677 = vpop.f32.mrf.mxu0
      %v1678 = vpop.f32.mrf.mxu0
      %v1679 = vadd.f32 0.0, %v1678
      %v1680 = vpop.f32.mrf.mxu0
      %1681 = vmatprep.mubr.bf16.mxu0 0
      %1682 = vmatmul.mubr.bf16.gmra.mxu0 %v1463
      %v1683 = vpop.f32.mrf.mxu0
      %v1684 = vadd.f32 0.0, %v1683
      %v1685 = vpop.f32.mrf.mxu0
      %v1686 = vpop.f32.mrf.mxu0
      %v1687 = vadd.f32 0.0, %v1686
      %v1688 = vpop.f32.mrf.mxu0
      %1689 = vdwg.mxu0
      %v1690 = vld [vmem:[#allocation3] sm:$0xff]
      %v1691 = vld [vmem:[#allocation3 + $0x8] sm:$0xff]
      %v1692 = vld [vmem:[#allocation3 + $0x10] sm:$0xff]
      %v1693 = vld [vmem:[#allocation3 + $0x18] sm:$0xff]
      %v1694 = vld [vmem:[#allocation3 + $0x20] sm:$0xff]
      %v1695 = vld [vmem:[#allocation3 + $0x28] sm:$0xff]
      %v1696 = vld [vmem:[#allocation3 + $0x30] sm:$0xff]
      %v1697 = vld [vmem:[#allocation3 + $0x38] sm:$0xff]
      %v1698 = vld [vmem:[#allocation3 + $0x40] sm:$0xff]
      %v1699 = vld [vmem:[#allocation3 + $0x48] sm:$0xff]
      %v1700 = vld [vmem:[#allocation3 + $0x50] sm:$0xff]
      %v1701 = vld [vmem:[#allocation3 + $0x58] sm:$0xff]
      %v1702 = vld [vmem:[#allocation3 + $0x60] sm:$0xff]
      %v1703 = vld [vmem:[#allocation3 + $0x68] sm:$0xff]
      %v1704 = vld [vmem:[#allocation3 + $0x70] sm:$0xff]
      %v1705 = vld [vmem:[#allocation3 + $0x78] sm:$0xff]
      %v1706 = vld [vmem:[#allocation3 + $0x80] sm:$0xff]
      %v1707 = vld [vmem:[#allocation3 + $0x88] sm:$0xff]
      %v1708 = vld [vmem:[#allocation3 + $0x90] sm:$0xff]
      %v1709 = vld [vmem:[#allocation3 + $0x98] sm:$0xff]
      %v1710 = vld [vmem:[#allocation3 + $0xa0] sm:$0xff]
      %v1711 = vld [vmem:[#allocation3 + $0xa8] sm:$0xff]
      %v1712 = vld [vmem:[#allocation3 + $0xb0] sm:$0xff]
      %v1713 = vld [vmem:[#allocation3 + $0xb8] sm:$0xff]
      %v1714 = vld [vmem:[#allocation3 + $0xc0] sm:$0xff]
      %v1715 = vld [vmem:[#allocation3 + $0xc8] sm:$0xff]
      %v1716 = vld [vmem:[#allocation3 + $0xd0] sm:$0xff]
      %v1717 = vld [vmem:[#allocation3 + $0xd8] sm:$0xff]
      %v1718 = vld [vmem:[#allocation3 + $0xe0] sm:$0xff]
      %v1719 = vld [vmem:[#allocation3 + $0xe8] sm:$0xff]
      %v1720 = vld [vmem:[#allocation3 + $0xf0] sm:$0xff]
      %v1721 = vld [vmem:[#allocation3 + $0xf8] sm:$0xff]
      %v1722 = vadd.f32 %v1690, %v1564
      %v1723 = vadd.f32 %v1691, %v1567
      %v1724 = vadd.f32 %v1692, %v1572
      %v1725 = vadd.f32 %v1693, %v1575
      %v1726 = vadd.f32 %v1694, %v1580
      %v1727 = vadd.f32 %v1695, %v1583
      %v1728 = vadd.f32 %v1696, %v1588
      %v1729 = vadd.f32 %v1697, %v1591
      %v1730 = vadd.f32 %v1698, %v1596
      %v1731 = vadd.f32 %v1699, %v1599
      %v1732 = vadd.f32 %v1700, %v1604
      %v1733 = vadd.f32 %v1701, %v1607
      %v1734 = vadd.f32 %v1702, %v1612
      %v1735 = vadd.f32 %v1703, %v1615
      %v1736 = vadd.f32 %v1704, %v1620
      %v1737 = vadd.f32 %v1705, %v1623
      %v1738 = vadd.f32 %v1706, %v1628
      %v1739 = vadd.f32 %v1707, %v1631
      %v1740 = vadd.f32 %v1708, %v1636
      %v1741 = vadd.f32 %v1709, %v1639
      %v1742 = vadd.f32 %v1710, %v1644
      %v1743 = vadd.f32 %v1711, %v1647
      %v1744 = vadd.f32 %v1712, %v1652
      %v1745 = vadd.f32 %v1713, %v1655
      %v1746 = vadd.f32 %v1714, %v1660
      %v1747 = vadd.f32 %v1715, %v1663
      %v1748 = vadd.f32 %v1716, %v1668
      %v1749 = vadd.f32 %v1717, %v1671
      %v1750 = vadd.f32 %v1718, %v1676
      %v1751 = vadd.f32 %v1719, %v1679
      %v1752 = vadd.f32 %v1720, %v1684
      %v1753 = vadd.f32 %v1721, %v1687
      %1754 = vst [vmem:[#allocation3] sm:$0xff] %v1722
      %1755 = vst [vmem:[#allocation3 + $0x8] sm:$0xff] %v1723
      %1756 = vst [vmem:[#allocation3 + $0x10] sm:$0xff] %v1724
      %1757 = vst [vmem:[#allocation3 + $0x18] sm:$0xff] %v1725
      %1758 = vst [vmem:[#allocation3 + $0x20] sm:$0xff] %v1726
      %1759 = vst [vmem:[#allocation3 + $0x28] sm:$0xff] %v1727
      %1760 = vst [vmem:[#allocation3 + $0x30] sm:$0xff] %v1728
      %1761 = vst [vmem:[#allocation3 + $0x38] sm:$0xff] %v1729
      %1762 = vst [vmem:[#allocation3 + $0x40] sm:$0xff] %v1730
      %1763 = vst [vmem:[#allocation3 + $0x48] sm:$0xff] %v1731
      %1764 = vst [vmem:[#allocation3 + $0x50] sm:$0xff] %v1732
      %1765 = vst [vmem:[#allocation3 + $0x58] sm:$0xff] %v1733
      %1766 = vst [vmem:[#allocation3 + $0x60] sm:$0xff] %v1734
      %1767 = vst [vmem:[#allocation3 + $0x68] sm:$0xff] %v1735
      %1768 = vst [vmem:[#allocation3 + $0x70] sm:$0xff] %v1736
      %1769 = vst [vmem:[#allocation3 + $0x78] sm:$0xff] %v1737
      %1770 = vst [vmem:[#allocation3 + $0x80] sm:$0xff] %v1738
      %1771 = vst [vmem:[#allocation3 + $0x88] sm:$0xff] %v1739
      %1772 = vst [vmem:[#allocation3 + $0x90] sm:$0xff] %v1740
      %1773 = vst [vmem:[#allocation3 + $0x98] sm:$0xff] %v1741
      %1774 = vst [vmem:[#allocation3 + $0xa0] sm:$0xff] %v1742
      %1775 = vst [vmem:[#allocation3 + $0xa8] sm:$0xff] %v1743
      %1776 = vst [vmem:[#allocation3 + $0xb0] sm:$0xff] %v1744
      %1777 = vst [vmem:[#allocation3 + $0xb8] sm:$0xff] %v1745
      %1778 = vst [vmem:[#allocation3 + $0xc0] sm:$0xff] %v1746
      %1779 = vst [vmem:[#allocation3 + $0xc8] sm:$0xff] %v1747
      %1780 = vst [vmem:[#allocation3 + $0xd0] sm:$0xff] %v1748
      %1781 = vst [vmem:[#allocation3 + $0xd8] sm:$0xff] %v1749
      %1782 = vst [vmem:[#allocation3 + $0xe0] sm:$0xff] %v1750
      %1783 = vst [vmem:[#allocation3 + $0xe8] sm:$0xff] %v1751
      %1784 = vst [vmem:[#allocation3 + $0xf0] sm:$0xff] %v1752
      %1785 = vst [vmem:[#allocation3 + $0xf8] sm:$0xff] %v1753
      %v1786 = vld [vmem:[%s1415 + $0x1] sm:$0xff]
      %v1787 = vld [vmem:[%s1415 + $0x9] sm:$0xff]
      %v1788 = vld [vmem:[%s1415 + $0x19] sm:$0xff]
      %v1789 = vld [vmem:[%s1415 + $0x21] sm:$0xff]
      %v1790 = vld [vmem:[%s1415 + $0x31] sm:$0xff]
      %v1791 = vld [vmem:[%s1415 + $0x39] sm:$0xff]
      %v1792 = vld [vmem:[%s1415 + $0x49] sm:$0xff]
      %v1793 = vld [vmem:[%s1415 + $0x51] sm:$0xff]
      %v1794 = vld [vmem:[%s1415 + $0x61] sm:$0xff]
      %v1795 = vld [vmem:[%s1415 + $0x69] sm:$0xff]
      %v1796 = vld [vmem:[%s1415 + $0x79] sm:$0xff]
      %v1797 = vld [vmem:[%s1415 + $0x81] sm:$0xff]
      %v1798 = vld [vmem:[%s1415 + $0x91] sm:$0xff]
      %v1799 = vld [vmem:[%s1415 + $0x99] sm:$0xff]
      %v1800 = vld [vmem:[%s1415 + $0xa9] sm:$0xff]
      %v1801 = vld [vmem:[%s1415 + $0xb1] sm:$0xff]
      %v1802 = vld [vmem:[%s1415 + $0xc1] sm:$0xff]
      %v1803 = vld [vmem:[%s1415 + $0xc9] sm:$0xff]
      %v1804 = vld [vmem:[%s1415 + $0xd9] sm:$0xff]
      %v1805 = vld [vmem:[%s1415 + $0xe1] sm:$0xff]
      %v1806 = vld [vmem:[%s1415 + $0xf1] sm:$0xff]
      %v1807 = vld [vmem:[%s1415 + $0xf9] sm:$0xff]
      %v1808 = vld [vmem:[%s1415 + $0x109] sm:$0xff]
      %v1809 = vld [vmem:[%s1415 + $0x111] sm:$0xff]
      %v1810 = vld [vmem:[%s1415 + $0x121] sm:$0xff]
      %v1811 = vld [vmem:[%s1415 + $0x129] sm:$0xff]
      %v1812 = vld [vmem:[%s1415 + $0x139] sm:$0xff]
      %v1813 = vld [vmem:[%s1415 + $0x141] sm:$0xff]
      %v1814 = vld [vmem:[%s1415 + $0x151] sm:$0xff]
      %v1815 = vld [vmem:[%s1415 + $0x159] sm:$0xff]
      %v1816 = vld [vmem:[%s1415 + $0x169] sm:$0xff]
      %v1817 = vld [vmem:[%s1415 + $0x171] sm:$0xff]
      %v1818 = vpack.c.bf16 %v1787, %v1786
      %v1819 = vpack.c.bf16 %v1789, %v1788
      %v1820 = vpack.c.bf16 %v1791, %v1790
      %v1821 = vpack.c.bf16 %v1793, %v1792
      %v1822 = vpack.c.bf16 %v1795, %v1794
      %v1823 = vpack.c.bf16 %v1797, %v1796
      %v1824 = vpack.c.bf16 %v1799, %v1798
      %v1825 = vpack.c.bf16 %v1801, %v1800
      %v1826 = vpack.c.bf16 %v1803, %v1802
      %v1827 = vpack.c.bf16 %v1805, %v1804
      %v1828 = vpack.c.bf16 %v1807, %v1806
      %v1829 = vpack.c.bf16 %v1809, %v1808
      %v1830 = vpack.c.bf16 %v1811, %v1810
      %v1831 = vpack.c.bf16 %v1813, %v1812
      %v1832 = vpack.c.bf16 %v1815, %v1814
      %v1833 = vpack.c.bf16 %v1817, %v1816
      %s1834 = scalar_lea.vmem %s1, 256
      %v1835 = vld [vmem:[%s1834] sm:$0xf]
      %v1836 = vld [vmem:[%s1834 + $0x4] sm:$0xf]
      %v1837 = vld [vmem:[%s1834 + $0x8] sm:$0xf]
      %v1838 = vld [vmem:[%s1834 + $0xc] sm:$0xf]
      %v1839 = vld [vmem:[%s1834 + $0x10] sm:$0xf]
      %v1840 = vld [vmem:[%s1834 + $0x14] sm:$0xf]
      %v1841 = vld [vmem:[%s1834 + $0x18] sm:$0xf]
      %v1842 = vld [vmem:[%s1834 + $0x1c] sm:$0xf]
      %v1843 = vld [vmem:[%s1834 + $0x20] sm:$0xf]
      %v1844 = vld [vmem:[%s1834 + $0x24] sm:$0xf]
      %v1845 = vld [vmem:[%s1834 + $0x28] sm:$0xf]
      %v1846 = vld [vmem:[%s1834 + $0x2c] sm:$0xf]
      %v1847 = vld [vmem:[%s1834 + $0x30] sm:$0xf]
      %v1848 = vld [vmem:[%s1834 + $0x34] sm:$0xf]
      %v1849 = vld [vmem:[%s1834 + $0x38] sm:$0xf]
      %v1850 = vld [vmem:[%s1834 + $0x3c] sm:$0xf]
      %v1867 = vunpack.c.l.b16 %v1835
      %v1868 = vunpack.c.l.b16 %v1836
      %v1869 = vunpack.c.l.b16 %v1837
      %v1870 = vunpack.c.l.b16 %v1838
      %v1871 = vunpack.c.l.b16 %v1839
      %v1872 = vunpack.c.l.b16 %v1840
      %v1873 = vunpack.c.l.b16 %v1841
      %v1874 = vunpack.c.l.b16 %v1842
      %v1875 = vunpack.c.l.b16 %v1843
      %v1876 = vunpack.c.l.b16 %v1844
      %v1877 = vunpack.c.l.b16 %v1845
      %v1878 = vunpack.c.l.b16 %v1846
      %v1879 = vunpack.c.l.b16 %v1847
      %v1880 = vunpack.c.l.b16 %v1848
      %v1881 = vunpack.c.l.b16 %v1849
      %v1882 = vunpack.c.l.b16 %v1850
      %v1883 = vpack.c.b16 %v1868, %v1867
      %v1884 = vpack.c.b16 %v1870, %v1869
      %v1885 = vpack.c.b16 %v1872, %v1871
      %v1886 = vpack.c.b16 %v1874, %v1873
      %v1887 = vpack.c.b16 %v1876, %v1875
      %v1888 = vpack.c.b16 %v1878, %v1877
      %v1889 = vpack.c.b16 %v1880, %v1879
      %v1890 = vpack.c.b16 %v1882, %v1881
      %1899 = vmatprep.subr.bf16.mxu0 0
      %1900 = vmatpush1.bf16.msra.mxu0 %v1890
      %1901 = vmatprep.subr.bf16.mxu0 0
      %1902 = vmatpush1.bf16.msra.mxu0 %v1889
      %1903 = vmatprep.subr.bf16.mxu0 0
      %1904 = vmatpush1.bf16.msra.mxu0 %v1888
      %1905 = vmatprep.subr.bf16.mxu0 0
      %1906 = vmatpush1.bf16.msra.mxu0 %v1887
      %1907 = vmatprep.subr.bf16.mxu0 0
      %1908 = vmatpush1.bf16.msra.mxu0 %v1886
      %1909 = vmatprep.subr.bf16.mxu0 0
      %1910 = vmatpush1.bf16.msra.mxu0 %v1885
      %1911 = vmatprep.subr.bf16.mxu0 0
      %1912 = vmatpush1.bf16.msra.mxu0 %v1884
      %1913 = vmatprep.subr.bf16.mxu0 0
      %1914 = vmatpush1.bf16.msra.mxu0 %v1883
      %1915 = vmatprep.subr.bf16.mxu0 0
      %1916 = vmatpush2.bf16.msra.mxu0 0
      %1917 = vmatprep.subr.bf16.mxu0 0
      %1918 = vmatpush2.bf16.msra.mxu0 0
      %1919 = vmatprep.subr.bf16.mxu0 0
      %1920 = vmatpush2.bf16.msra.mxu0 0
      %1921 = vmatprep.subr.bf16.mxu0 0
      %1922 = vmatpush2.bf16.msra.mxu0 0
      %1923 = vmatprep.subr.bf16.mxu0 0
      %1924 = vmatpush2.bf16.msra.mxu0 0
      %1925 = vmatprep.subr.bf16.mxu0 0
      %1926 = vmatpush2.bf16.msra.mxu0 0
      %1927 = vmatprep.subr.bf16.mxu0 0
      %1928 = vmatpush2.bf16.msra.mxu0 0
      %1929 = vmatprep.subr.bf16.mxu0 0
      %1930 = vmatpush2.bf16.msra.mxu0 0
      %1931 = vmatprep.mubr.bf16.mxu0 0
      %1932 = vmatmul.mubr.bf16.gmra.mxu0 %v1818
      %v1933 = vpop.f32.mrf.mxu0
      %v1934 = vadd.f32 0.0, %v1933
      %v1935 = vpop.f32.mrf.mxu0
      %v1936 = vpop.f32.mrf.mxu0
      %v1937 = vadd.f32 0.0, %v1936
      %v1938 = vpop.f32.mrf.mxu0
      %1939 = vmatprep.mubr.bf16.mxu0 0
      %1940 = vmatmul.mubr.bf16.gmra.mxu0 %v1819
      %v1941 = vpop.f32.mrf.mxu0
      %v1942 = vadd.f32 0.0, %v1941
      %v1943 = vpop.f32.mrf.mxu0
      %v1944 = vpop.f32.mrf.mxu0
      %v1945 = vadd.f32 0.0, %v1944
      %v1946 = vpop.f32.mrf.mxu0
      %1947 = vmatprep.mubr.bf16.mxu0 0
      %1948 = vmatmul.mubr.bf16.gmra.mxu0 %v1820
      %v1949 = vpop.f32.mrf.mxu0
      %v1950 = vadd.f32 0.0, %v1949
      %v1951 = vpop.f32.mrf.mxu0
      %v1952 = vpop.f32.mrf.mxu0
      %v1953 = vadd.f32 0.0, %v1952
      %v1954 = vpop.f32.mrf.mxu0
      %1955 = vmatprep.mubr.bf16.mxu0 0
      %1956 = vmatmul.mubr.bf16.gmra.mxu0 %v1821
      %v1957 = vpop.f32.mrf.mxu0
      %v1958 = vadd.f32 0.0, %v1957
      %v1959 = vpop.f32.mrf.mxu0
      %v1960 = vpop.f32.mrf.mxu0
      %v1961 = vadd.f32 0.0, %v1960
      %v1962 = vpop.f32.mrf.mxu0
      %1963 = vmatprep.mubr.bf16.mxu0 0
      %1964 = vmatmul.mubr.bf16.gmra.mxu0 %v1822
      %v1965 = vpop.f32.mrf.mxu0
      %v1966 = vadd.f32 0.0, %v1965
      %v1967 = vpop.f32.mrf.mxu0
      %v1968 = vpop.f32.mrf.mxu0
      %v1969 = vadd.f32 0.0, %v1968
      %v1970 = vpop.f32.mrf.mxu0
      %1971 = vmatprep.mubr.bf16.mxu0 0
      %1972 = vmatmul.mubr.bf16.gmra.mxu0 %v1823
      %v1973 = vpop.f32.mrf.mxu0
      %v1974 = vadd.f32 0.0, %v1973
      %v1975 = vpop.f32.mrf.mxu0
      %v1976 = vpop.f32.mrf.mxu0
      %v1977 = vadd.f32 0.0, %v1976
      %v1978 = vpop.f32.mrf.mxu0
      %1979 = vmatprep.mubr.bf16.mxu0 0
      %1980 = vmatmul.mubr.bf16.gmra.mxu0 %v1824
      %v1981 = vpop.f32.mrf.mxu0
      %v1982 = vadd.f32 0.0, %v1981
      %v1983 = vpop.f32.mrf.mxu0
      %v1984 = vpop.f32.mrf.mxu0
      %v1985 = vadd.f32 0.0, %v1984
      %v1986 = vpop.f32.mrf.mxu0
      %1987 = vmatprep.mubr.bf16.mxu0 0
      %1988 = vmatmul.mubr.bf16.gmra.mxu0 %v1825
      %v1989 = vpop.f32.mrf.mxu0
      %v1990 = vadd.f32 0.0, %v1989
      %v1991 = vpop.f32.mrf.mxu0
      %v1992 = vpop.f32.mrf.mxu0
      %v1993 = vadd.f32 0.0, %v1992
      %v1994 = vpop.f32.mrf.mxu0
      %1995 = vmatprep.mubr.bf16.mxu0 0
      %1996 = vmatmul.mubr.bf16.gmra.mxu0 %v1826
      %v1997 = vpop.f32.mrf.mxu0
      %v1998 = vadd.f32 0.0, %v1997
      %v1999 = vpop.f32.mrf.mxu0
      %v2000 = vpop.f32.mrf.mxu0
      %v2001 = vadd.f32 0.0, %v2000
      %v2002 = vpop.f32.mrf.mxu0
      %2003 = vmatprep.mubr.bf16.mxu0 0
      %2004 = vmatmul.mubr.bf16.gmra.mxu0 %v1827
      %v2005 = vpop.f32.mrf.mxu0
      %v2006 = vadd.f32 0.0, %v2005
      %v2007 = vpop.f32.mrf.mxu0
      %v2008 = vpop.f32.mrf.mxu0
      %v2009 = vadd.f32 0.0, %v2008
      %v2010 = vpop.f32.mrf.mxu0
      %2011 = vmatprep.mubr.bf16.mxu0 0
      %2012 = vmatmul.mubr.bf16.gmra.mxu0 %v1828
      %v2013 = vpop.f32.mrf.mxu0
      %v2014 = vadd.f32 0.0, %v2013
      %v2015 = vpop.f32.mrf.mxu0
      %v2016 = vpop.f32.mrf.mxu0
      %v2017 = vadd.f32 0.0, %v2016
      %v2018 = vpop.f32.mrf.mxu0
      %2019 = vmatprep.mubr.bf16.mxu0 0
      %2020 = vmatmul.mubr.bf16.gmra.mxu0 %v1829
      %v2021 = vpop.f32.mrf.mxu0
      %v2022 = vadd.f32 0.0, %v2021
      %v2023 = vpop.f32.mrf.mxu0
      %v2024 = vpop.f32.mrf.mxu0
      %v2025 = vadd.f32 0.0, %v2024
      %v2026 = vpop.f32.mrf.mxu0
      %2027 = vmatprep.mubr.bf16.mxu0 0
      %2028 = vmatmul.mubr.bf16.gmra.mxu0 %v1830
      %v2029 = vpop.f32.mrf.mxu0
      %v2030 = vadd.f32 0.0, %v2029
      %v2031 = vpop.f32.mrf.mxu0
      %v2032 = vpop.f32.mrf.mxu0
      %v2033 = vadd.f32 0.0, %v2032
      %v2034 = vpop.f32.mrf.mxu0
      %2035 = vmatprep.mubr.bf16.mxu0 0
      %2036 = vmatmul.mubr.bf16.gmra.mxu0 %v1831
      %v2037 = vpop.f32.mrf.mxu0
      %v2038 = vadd.f32 0.0, %v2037
      %v2039 = vpop.f32.mrf.mxu0
      %v2040 = vpop.f32.mrf.mxu0
      %v2041 = vadd.f32 0.0, %v2040
      %v2042 = vpop.f32.mrf.mxu0
      %2043 = vmatprep.mubr.bf16.mxu0 0
      %2044 = vmatmul.mubr.bf16.gmra.mxu0 %v1832
      %v2045 = vpop.f32.mrf.mxu0
      %v2046 = vadd.f32 0.0, %v2045
      %v2047 = vpop.f32.mrf.mxu0
      %v2048 = vpop.f32.mrf.mxu0
      %v2049 = vadd.f32 0.0, %v2048
      %v2050 = vpop.f32.mrf.mxu0
      %2051 = vmatprep.mubr.bf16.mxu0 0
      %2052 = vmatmul.mubr.bf16.gmra.mxu0 %v1833
      %v2053 = vpop.f32.mrf.mxu0
      %v2054 = vadd.f32 0.0, %v2053
      %v2055 = vpop.f32.mrf.mxu0
      %v2056 = vpop.f32.mrf.mxu0
      %v2057 = vadd.f32 0.0, %v2056
      %v2058 = vpop.f32.mrf.mxu0
      %2059 = vdwg.mxu0
      %v2060 = vld [vmem:[#allocation3] sm:$0xff]
      %v2061 = vld [vmem:[#allocation3 + $0x8] sm:$0xff]
      %v2062 = vld [vmem:[#allocation3 + $0x10] sm:$0xff]
      %v2063 = vld [vmem:[#allocation3 + $0x18] sm:$0xff]
      %v2064 = vld [vmem:[#allocation3 + $0x20] sm:$0xff]
      %v2065 = vld [vmem:[#allocation3 + $0x28] sm:$0xff]
      %v2066 = vld [vmem:[#allocation3 + $0x30] sm:$0xff]
      %v2067 = vld [vmem:[#allocation3 + $0x38] sm:$0xff]
      %v2068 = vld [vmem:[#allocation3 + $0x40] sm:$0xff]
      %v2069 = vld [vmem:[#allocation3 + $0x48] sm:$0xff]
      %v2070 = vld [vmem:[#allocation3 + $0x50] sm:$0xff]
      %v2071 = vld [vmem:[#allocation3 + $0x58] sm:$0xff]
      %v2072 = vld [vmem:[#allocation3 + $0x60] sm:$0xff]
      %v2073 = vld [vmem:[#allocation3 + $0x68] sm:$0xff]
      %v2074 = vld [vmem:[#allocation3 + $0x70] sm:$0xff]
      %v2075 = vld [vmem:[#allocation3 + $0x78] sm:$0xff]
      %v2076 = vld [vmem:[#allocation3 + $0x80] sm:$0xff]
      %v2077 = vld [vmem:[#allocation3 + $0x88] sm:$0xff]
      %v2078 = vld [vmem:[#allocation3 + $0x90] sm:$0xff]
      %v2079 = vld [vmem:[#allocation3 + $0x98] sm:$0xff]
      %v2080 = vld [vmem:[#allocation3 + $0xa0] sm:$0xff]
      %v2081 = vld [vmem:[#allocation3 + $0xa8] sm:$0xff]
      %v2082 = vld [vmem:[#allocation3 + $0xb0] sm:$0xff]
      %v2083 = vld [vmem:[#allocation3 + $0xb8] sm:$0xff]
      %v2084 = vld [vmem:[#allocation3 + $0xc0] sm:$0xff]
      %v2085 = vld [vmem:[#allocation3 + $0xc8] sm:$0xff]
      %v2086 = vld [vmem:[#allocation3 + $0xd0] sm:$0xff]
      %v2087 = vld [vmem:[#allocation3 + $0xd8] sm:$0xff]
      %v2088 = vld [vmem:[#allocation3 + $0xe0] sm:$0xff]
      %v2089 = vld [vmem:[#allocation3 + $0xe8] sm:$0xff]
      %v2090 = vld [vmem:[#allocation3 + $0xf0] sm:$0xff]
      %v2091 = vld [vmem:[#allocation3 + $0xf8] sm:$0xff]
      %v2092 = vadd.f32 %v2060, %v1934
      %v2093 = vadd.f32 %v2061, %v1937
      %v2094 = vadd.f32 %v2062, %v1942
      %v2095 = vadd.f32 %v2063, %v1945
      %v2096 = vadd.f32 %v2064, %v1950
      %v2097 = vadd.f32 %v2065, %v1953
      %v2098 = vadd.f32 %v2066, %v1958
      %v2099 = vadd.f32 %v2067, %v1961
      %v2100 = vadd.f32 %v2068, %v1966
      %v2101 = vadd.f32 %v2069, %v1969
      %v2102 = vadd.f32 %v2070, %v1974
      %v2103 = vadd.f32 %v2071, %v1977
      %v2104 = vadd.f32 %v2072, %v1982
      %v2105 = vadd.f32 %v2073, %v1985
      %v2106 = vadd.f32 %v2074, %v1990
      %v2107 = vadd.f32 %v2075, %v1993
      %v2108 = vadd.f32 %v2076, %v1998
      %v2109 = vadd.f32 %v2077, %v2001
      %v2110 = vadd.f32 %v2078, %v2006
      %v2111 = vadd.f32 %v2079, %v2009
      %v2112 = vadd.f32 %v2080, %v2014
      %v2113 = vadd.f32 %v2081, %v2017
      %v2114 = vadd.f32 %v2082, %v2022
      %v2115 = vadd.f32 %v2083, %v2025
      %v2116 = vadd.f32 %v2084, %v2030
      %v2117 = vadd.f32 %v2085, %v2033
      %v2118 = vadd.f32 %v2086, %v2038
      %v2119 = vadd.f32 %v2087, %v2041
      %v2120 = vadd.f32 %v2088, %v2046
      %v2121 = vadd.f32 %v2089, %v2049
      %v2122 = vadd.f32 %v2090, %v2054
      %v2123 = vadd.f32 %v2091, %v2057
      %2124 = vst [vmem:[#allocation3] sm:$0xff] %v2092
      %2125 = vst [vmem:[#allocation3 + $0x8] sm:$0xff] %v2093
      %2126 = vst [vmem:[#allocation3 + $0x10] sm:$0xff] %v2094
      %2127 = vst [vmem:[#allocation3 + $0x18] sm:$0xff] %v2095
      %2128 = vst [vmem:[#allocation3 + $0x20] sm:$0xff] %v2096
      %2129 = vst [vmem:[#allocation3 + $0x28] sm:$0xff] %v2097
      %2130 = vst [vmem:[#allocation3 + $0x30] sm:$0xff] %v2098
      %2131 = vst [vmem:[#allocation3 + $0x38] sm:$0xff] %v2099
      %2132 = vst [vmem:[#allocation3 + $0x40] sm:$0xff] %v2100
      %2133 = vst [vmem:[#allocation3 + $0x48] sm:$0xff] %v2101
      %2134 = vst [vmem:[#allocation3 + $0x50] sm:$0xff] %v2102
      %2135 = vst [vmem:[#allocation3 + $0x58] sm:$0xff] %v2103
      %2136 = vst [vmem:[#allocation3 + $0x60] sm:$0xff] %v2104
      %2137 = vst [vmem:[#allocation3 + $0x68] sm:$0xff] %v2105
      %2138 = vst [vmem:[#allocation3 + $0x70] sm:$0xff] %v2106
      %2139 = vst [vmem:[#allocation3 + $0x78] sm:$0xff] %v2107
      %2140 = vst [vmem:[#allocation3 + $0x80] sm:$0xff] %v2108
      %2141 = vst [vmem:[#allocation3 + $0x88] sm:$0xff] %v2109
      %2142 = vst [vmem:[#allocation3 + $0x90] sm:$0xff] %v2110
      %2143 = vst [vmem:[#allocation3 + $0x98] sm:$0xff] %v2111
      %2144 = vst [vmem:[#allocation3 + $0xa0] sm:$0xff] %v2112
      %2145 = vst [vmem:[#allocation3 + $0xa8] sm:$0xff] %v2113
      %2146 = vst [vmem:[#allocation3 + $0xb0] sm:$0xff] %v2114
      %2147 = vst [vmem:[#allocation3 + $0xb8] sm:$0xff] %v2115
      %2148 = vst [vmem:[#allocation3 + $0xc0] sm:$0xff] %v2116
      %2149 = vst [vmem:[#allocation3 + $0xc8] sm:$0xff] %v2117
      %2150 = vst [vmem:[#allocation3 + $0xd0] sm:$0xff] %v2118
      %2151 = vst [vmem:[#allocation3 + $0xd8] sm:$0xff] %v2119
      %2152 = vst [vmem:[#allocation3 + $0xe0] sm:$0xff] %v2120
      %2153 = vst [vmem:[#allocation3 + $0xe8] sm:$0xff] %v2121
      %2154 = vst [vmem:[#allocation3 + $0xf0] sm:$0xff] %v2122
      %2155 = vst [vmem:[#allocation3 + $0xf8] sm:$0xff] %v2123
      %v2156 = vld [vmem:[%s1415 + $0x2] sm:$0xff]
      %v2157 = vld [vmem:[%s1415 + $0xa] sm:$0xff]
      %v2158 = vld [vmem:[%s1415 + $0x1a] sm:$0xff]
      %v2159 = vld [vmem:[%s1415 + $0x22] sm:$0xff]
      %v2160 = vld [vmem:[%s1415 + $0x32] sm:$0xff]
      %v2161 = vld [vmem:[%s1415 + $0x3a] sm:$0xff]
      %v2162 = vld [vmem:[%s1415 + $0x4a] sm:$0xff]
      %v2163 = vld [vmem:[%s1415 + $0x52] sm:$0xff]
      %v2164 = vld [vmem:[%s1415 + $0x62] sm:$0xff]
      %v2165 = vld [vmem:[%s1415 + $0x6a] sm:$0xff]
      %v2166 = vld [vmem:[%s1415 + $0x7a] sm:$0xff]
      %v2167 = vld [vmem:[%s1415 + $0x82] sm:$0xff]
      %v2168 = vld [vmem:[%s1415 + $0x92] sm:$0xff]
      %v2169 = vld [vmem:[%s1415 + $0x9a] sm:$0xff]
      %v2170 = vld [vmem:[%s1415 + $0xaa] sm:$0xff]
      %v2171 = vld [vmem:[%s1415 + $0xb2] sm:$0xff]
      %v2172 = vld [vmem:[%s1415 + $0xc2] sm:$0xff]
      %v2173 = vld [vmem:[%s1415 + $0xca] sm:$0xff]
      %v2174 = vld [vmem:[%s1415 + $0xda] sm:$0xff]
      %v2175 = vld [vmem:[%s1415 + $0xe2] sm:$0xff]
      %v2176 = vld [vmem:[%s1415 + $0xf2] sm:$0xff]
      %v2177 = vld [vmem:[%s1415 + $0xfa] sm:$0xff]
      %v2178 = vld [vmem:[%s1415 + $0x10a] sm:$0xff]
      %v2179 = vld [vmem:[%s1415 + $0x112] sm:$0xff]
      %v2180 = vld [vmem:[%s1415 + $0x122] sm:$0xff]
      %v2181 = vld [vmem:[%s1415 + $0x12a] sm:$0xff]
      %v2182 = vld [vmem:[%s1415 + $0x13a] sm:$0xff]
      %v2183 = vld [vmem:[%s1415 + $0x142] sm:$0xff]
      %v2184 = vld [vmem:[%s1415 + $0x152] sm:$0xff]
      %v2185 = vld [vmem:[%s1415 + $0x15a] sm:$0xff]
      %v2186 = vld [vmem:[%s1415 + $0x16a] sm:$0xff]
      %v2187 = vld [vmem:[%s1415 + $0x172] sm:$0xff]
      %v2188 = vpack.c.bf16 %v2157, %v2156
      %v2189 = vpack.c.bf16 %v2159, %v2158
      %v2190 = vpack.c.bf16 %v2161, %v2160
      %v2191 = vpack.c.bf16 %v2163, %v2162
      %v2192 = vpack.c.bf16 %v2165, %v2164
      %v2193 = vpack.c.bf16 %v2167, %v2166
      %v2194 = vpack.c.bf16 %v2169, %v2168
      %v2195 = vpack.c.bf16 %v2171, %v2170
      %v2196 = vpack.c.bf16 %v2173, %v2172
      %v2197 = vpack.c.bf16 %v2175, %v2174
      %v2198 = vpack.c.bf16 %v2177, %v2176
      %v2199 = vpack.c.bf16 %v2179, %v2178
      %v2200 = vpack.c.bf16 %v2181, %v2180
      %v2201 = vpack.c.bf16 %v2183, %v2182
      %v2202 = vpack.c.bf16 %v2185, %v2184
      %v2203 = vpack.c.bf16 %v2187, %v2186
      %s2204 = scalar_lea.vmem %s1, 320
      %v2205 = vld [vmem:[%s2204] sm:$0xf]
      %v2206 = vld [vmem:[%s2204 + $0x4] sm:$0xf]
      %v2207 = vld [vmem:[%s2204 + $0x8] sm:$0xf]
      %v2208 = vld [vmem:[%s2204 + $0xc] sm:$0xf]
      %v2209 = vld [vmem:[%s2204 + $0x10] sm:$0xf]
      %v2210 = vld [vmem:[%s2204 + $0x14] sm:$0xf]
      %v2211 = vld [vmem:[%s2204 + $0x18] sm:$0xf]
      %v2212 = vld [vmem:[%s2204 + $0x1c] sm:$0xf]
      %v2213 = vld [vmem:[%s2204 + $0x20] sm:$0xf]
      %v2214 = vld [vmem:[%s2204 + $0x24] sm:$0xf]
      %v2215 = vld [vmem:[%s2204 + $0x28] sm:$0xf]
      %v2216 = vld [vmem:[%s2204 + $0x2c] sm:$0xf]
      %v2217 = vld [vmem:[%s2204 + $0x30] sm:$0xf]
      %v2218 = vld [vmem:[%s2204 + $0x34] sm:$0xf]
      %v2219 = vld [vmem:[%s2204 + $0x38] sm:$0xf]
      %v2220 = vld [vmem:[%s2204 + $0x3c] sm:$0xf]
      %v2237 = vunpack.c.l.b16 %v2205
      %v2238 = vunpack.c.l.b16 %v2206
      %v2239 = vunpack.c.l.b16 %v2207
      %v2240 = vunpack.c.l.b16 %v2208
      %v2241 = vunpack.c.l.b16 %v2209
      %v2242 = vunpack.c.l.b16 %v2210
      %v2243 = vunpack.c.l.b16 %v2211
      %v2244 = vunpack.c.l.b16 %v2212
      %v2245 = vunpack.c.l.b16 %v2213
      %v2246 = vunpack.c.l.b16 %v2214
      %v2247 = vunpack.c.l.b16 %v2215
      %v2248 = vunpack.c.l.b16 %v2216
      %v2249 = vunpack.c.l.b16 %v2217
      %v2250 = vunpack.c.l.b16 %v2218
      %v2251 = vunpack.c.l.b16 %v2219
      %v2252 = vunpack.c.l.b16 %v2220
      %v2253 = vpack.c.b16 %v2238, %v2237
      %v2254 = vpack.c.b16 %v2240, %v2239
      %v2255 = vpack.c.b16 %v2242, %v2241
      %v2256 = vpack.c.b16 %v2244, %v2243
      %v2257 = vpack.c.b16 %v2246, %v2245
      %v2258 = vpack.c.b16 %v2248, %v2247
      %v2259 = vpack.c.b16 %v2250, %v2249
      %v2260 = vpack.c.b16 %v2252, %v2251
      %2269 = vmatprep.subr.bf16.mxu0 0
      %2270 = vmatpush1.bf16.msra.mxu0 %v2260
      %2271 = vmatprep.subr.bf16.mxu0 0
      %2272 = vmatpush1.bf16.msra.mxu0 %v2259
      %2273 = vmatprep.subr.bf16.mxu0 0
      %2274 = vmatpush1.bf16.msra.mxu0 %v2258
      %2275 = vmatprep.subr.bf16.mxu0 0
      %2276 = vmatpush1.bf16.msra.mxu0 %v2257
      %2277 = vmatprep.subr.bf16.mxu0 0
      %2278 = vmatpush1.bf16.msra.mxu0 %v2256
      %2279 = vmatprep.subr.bf16.mxu0 0
      %2280 = vmatpush1.bf16.msra.mxu0 %v2255
      %2281 = vmatprep.subr.bf16.mxu0 0
      %2282 = vmatpush1.bf16.msra.mxu0 %v2254
      %2283 = vmatprep.subr.bf16.mxu0 0
      %2284 = vmatpush1.bf16.msra.mxu0 %v2253
      %2285 = vmatprep.subr.bf16.mxu0 0
      %2286 = vmatpush2.bf16.msra.mxu0 0
      %2287 = vmatprep.subr.bf16.mxu0 0
      %2288 = vmatpush2.bf16.msra.mxu0 0
      %2289 = vmatprep.subr.bf16.mxu0 0
      %2290 = vmatpush2.bf16.msra.mxu0 0
      %2291 = vmatprep.subr.bf16.mxu0 0
      %2292 = vmatpush2.bf16.msra.mxu0 0
      %2293 = vmatprep.subr.bf16.mxu0 0
      %2294 = vmatpush2.bf16.msra.mxu0 0
      %2295 = vmatprep.subr.bf16.mxu0 0
      %2296 = vmatpush2.bf16.msra.mxu0 0
      %2297 = vmatprep.subr.bf16.mxu0 0
      %2298 = vmatpush2.bf16.msra.mxu0 0
      %2299 = vmatprep.subr.bf16.mxu0 0
      %2300 = vmatpush2.bf16.msra.mxu0 0
      %2301 = vmatprep.mubr.bf16.mxu0 0
      %2302 = vmatmul.mubr.bf16.gmra.mxu0 %v2188
      %v2303 = vpop.f32.mrf.mxu0
      %v2304 = vadd.f32 0.0, %v2303
      %v2305 = vpop.f32.mrf.mxu0
      %v2306 = vpop.f32.mrf.mxu0
      %v2307 = vadd.f32 0.0, %v2306
      %v2308 = vpop.f32.mrf.mxu0
      %2309 = vmatprep.mubr.bf16.mxu0 0
      %2310 = vmatmul.mubr.bf16.gmra.mxu0 %v2189
      %v2311 = vpop.f32.mrf.mxu0
      %v2312 = vadd.f32 0.0, %v2311
      %v2313 = vpop.f32.mrf.mxu0
      %v2314 = vpop.f32.mrf.mxu0
      %v2315 = vadd.f32 0.0, %v2314
      %v2316 = vpop.f32.mrf.mxu0
      %2317 = vmatprep.mubr.bf16.mxu0 0
      %2318 = vmatmul.mubr.bf16.gmra.mxu0 %v2190
      %v2319 = vpop.f32.mrf.mxu0
      %v2320 = vadd.f32 0.0, %v2319
      %v2321 = vpop.f32.mrf.mxu0
      %v2322 = vpop.f32.mrf.mxu0
      %v2323 = vadd.f32 0.0, %v2322
      %v2324 = vpop.f32.mrf.mxu0
      %2325 = vmatprep.mubr.bf16.mxu0 0
      %2326 = vmatmul.mubr.bf16.gmra.mxu0 %v2191
      %v2327 = vpop.f32.mrf.mxu0
      %v2328 = vadd.f32 0.0, %v2327
      %v2329 = vpop.f32.mrf.mxu0
      %v2330 = vpop.f32.mrf.mxu0
      %v2331 = vadd.f32 0.0, %v2330
      %v2332 = vpop.f32.mrf.mxu0
      %2333 = vmatprep.mubr.bf16.mxu0 0
      %2334 = vmatmul.mubr.bf16.gmra.mxu0 %v2192
      %v2335 = vpop.f32.mrf.mxu0
      %v2336 = vadd.f32 0.0, %v2335
      %v2337 = vpop.f32.mrf.mxu0
      %v2338 = vpop.f32.mrf.mxu0
      %v2339 = vadd.f32 0.0, %v2338
      %v2340 = vpop.f32.mrf.mxu0
      %2341 = vmatprep.mubr.bf16.mxu0 0
      %2342 = vmatmul.mubr.bf16.gmra.mxu0 %v2193
      %v2343 = vpop.f32.mrf.mxu0
      %v2344 = vadd.f32 0.0, %v2343
      %v2345 = vpop.f32.mrf.mxu0
      %v2346 = vpop.f32.mrf.mxu0
      %v2347 = vadd.f32 0.0, %v2346
      %v2348 = vpop.f32.mrf.mxu0
      %2349 = vmatprep.mubr.bf16.mxu0 0
      %2350 = vmatmul.mubr.bf16.gmra.mxu0 %v2194
      %v2351 = vpop.f32.mrf.mxu0
      %v2352 = vadd.f32 0.0, %v2351
      %v2353 = vpop.f32.mrf.mxu0
      %v2354 = vpop.f32.mrf.mxu0
      %v2355 = vadd.f32 0.0, %v2354
      %v2356 = vpop.f32.mrf.mxu0
      %2357 = vmatprep.mubr.bf16.mxu0 0
      %2358 = vmatmul.mubr.bf16.gmra.mxu0 %v2195
      %v2359 = vpop.f32.mrf.mxu0
      %v2360 = vadd.f32 0.0, %v2359
      %v2361 = vpop.f32.mrf.mxu0
      %v2362 = vpop.f32.mrf.mxu0
      %v2363 = vadd.f32 0.0, %v2362
      %v2364 = vpop.f32.mrf.mxu0
      %2365 = vmatprep.mubr.bf16.mxu0 0
      %2366 = vmatmul.mubr.bf16.gmra.mxu0 %v2196
      %v2367 = vpop.f32.mrf.mxu0
      %v2368 = vadd.f32 0.0, %v2367
      %v2369 = vpop.f32.mrf.mxu0
      %v2370 = vpop.f32.mrf.mxu0
      %v2371 = vadd.f32 0.0, %v2370
      %v2372 = vpop.f32.mrf.mxu0
      %2373 = vmatprep.mubr.bf16.mxu0 0
      %2374 = vmatmul.mubr.bf16.gmra.mxu0 %v2197
      %v2375 = vpop.f32.mrf.mxu0
      %v2376 = vadd.f32 0.0, %v2375
      %v2377 = vpop.f32.mrf.mxu0
      %v2378 = vpop.f32.mrf.mxu0
      %v2379 = vadd.f32 0.0, %v2378
      %v2380 = vpop.f32.mrf.mxu0
      %2381 = vmatprep.mubr.bf16.mxu0 0
      %2382 = vmatmul.mubr.bf16.gmra.mxu0 %v2198
      %v2383 = vpop.f32.mrf.mxu0
      %v2384 = vadd.f32 0.0, %v2383
      %v2385 = vpop.f32.mrf.mxu0
      %v2386 = vpop.f32.mrf.mxu0
      %v2387 = vadd.f32 0.0, %v2386
      %v2388 = vpop.f32.mrf.mxu0
      %2389 = vmatprep.mubr.bf16.mxu0 0
      %2390 = vmatmul.mubr.bf16.gmra.mxu0 %v2199
      %v2391 = vpop.f32.mrf.mxu0
      %v2392 = vadd.f32 0.0, %v2391
      %v2393 = vpop.f32.mrf.mxu0
      %v2394 = vpop.f32.mrf.mxu0
      %v2395 = vadd.f32 0.0, %v2394
      %v2396 = vpop.f32.mrf.mxu0
      %2397 = vmatprep.mubr.bf16.mxu0 0
      %2398 = vmatmul.mubr.bf16.gmra.mxu0 %v2200
      %v2399 = vpop.f32.mrf.mxu0
      %v2400 = vadd.f32 0.0, %v2399
      %v2401 = vpop.f32.mrf.mxu0
      %v2402 = vpop.f32.mrf.mxu0
      %v2403 = vadd.f32 0.0, %v2402
      %v2404 = vpop.f32.mrf.mxu0
      %2405 = vmatprep.mubr.bf16.mxu0 0
      %2406 = vmatmul.mubr.bf16.gmra.mxu0 %v2201
      %v2407 = vpop.f32.mrf.mxu0
      %v2408 = vadd.f32 0.0, %v2407
      %v2409 = vpop.f32.mrf.mxu0
      %v2410 = vpop.f32.mrf.mxu0
      %v2411 = vadd.f32 0.0, %v2410
      %v2412 = vpop.f32.mrf.mxu0
      %2413 = vmatprep.mubr.bf16.mxu0 0
      %2414 = vmatmul.mubr.bf16.gmra.mxu0 %v2202
      %v2415 = vpop.f32.mrf.mxu0
      %v2416 = vadd.f32 0.0, %v2415
      %v2417 = vpop.f32.mrf.mxu0
      %v2418 = vpop.f32.mrf.mxu0
      %v2419 = vadd.f32 0.0, %v2418
      %v2420 = vpop.f32.mrf.mxu0
      %2421 = vmatprep.mubr.bf16.mxu0 0
      %2422 = vmatmul.mubr.bf16.gmra.mxu0 %v2203
      %v2423 = vpop.f32.mrf.mxu0
      %v2424 = vadd.f32 0.0, %v2423
      %v2425 = vpop.f32.mrf.mxu0
      %v2426 = vpop.f32.mrf.mxu0
      %v2427 = vadd.f32 0.0, %v2426
      %v2428 = vpop.f32.mrf.mxu0
      %2429 = vdwg.mxu0
      %v2430 = vld [vmem:[#allocation3] sm:$0xff]
      %v2431 = vld [vmem:[#allocation3 + $0x8] sm:$0xff]
      %v2432 = vld [vmem:[#allocation3 + $0x10] sm:$0xff]
      %v2433 = vld [vmem:[#allocation3 + $0x18] sm:$0xff]
      %v2434 = vld [vmem:[#allocation3 + $0x20] sm:$0xff]
      %v2435 = vld [vmem:[#allocation3 + $0x28] sm:$0xff]
      %v2436 = vld [vmem:[#allocation3 + $0x30] sm:$0xff]
      %v2437 = vld [vmem:[#allocation3 + $0x38] sm:$0xff]
      %v2438 = vld [vmem:[#allocation3 + $0x40] sm:$0xff]
      %v2439 = vld [vmem:[#allocation3 + $0x48] sm:$0xff]
      %v2440 = vld [vmem:[#allocation3 + $0x50] sm:$0xff]
      %v2441 = vld [vmem:[#allocation3 + $0x58] sm:$0xff]
      %v2442 = vld [vmem:[#allocation3 + $0x60] sm:$0xff]
      %v2443 = vld [vmem:[#allocation3 + $0x68] sm:$0xff]
      %v2444 = vld [vmem:[#allocation3 + $0x70] sm:$0xff]
      %v2445 = vld [vmem:[#allocation3 + $0x78] sm:$0xff]
      %v2446 = vld [vmem:[#allocation3 + $0x80] sm:$0xff]
      %v2447 = vld [vmem:[#allocation3 + $0x88] sm:$0xff]
      %v2448 = vld [vmem:[#allocation3 + $0x90] sm:$0xff]
      %v2449 = vld [vmem:[#allocation3 + $0x98] sm:$0xff]
      %v2450 = vld [vmem:[#allocation3 + $0xa0] sm:$0xff]
      %v2451 = vld [vmem:[#allocation3 + $0xa8] sm:$0xff]
      %v2452 = vld [vmem:[#allocation3 + $0xb0] sm:$0xff]
      %v2453 = vld [vmem:[#allocation3 + $0xb8] sm:$0xff]
      %v2454 = vld [vmem:[#allocation3 + $0xc0] sm:$0xff]
      %v2455 = vld [vmem:[#allocation3 + $0xc8] sm:$0xff]
      %v2456 = vld [vmem:[#allocation3 + $0xd0] sm:$0xff]
      %v2457 = vld [vmem:[#allocation3 + $0xd8] sm:$0xff]
      %v2458 = vld [vmem:[#allocation3 + $0xe0] sm:$0xff]
      %v2459 = vld [vmem:[#allocation3 + $0xe8] sm:$0xff]
      %v2460 = vld [vmem:[#allocation3 + $0xf0] sm:$0xff]
      %v2461 = vld [vmem:[#allocation3 + $0xf8] sm:$0xff]
      %v2462 = vadd.f32 %v2430, %v2304
      %v2463 = vadd.f32 %v2431, %v2307
      %v2464 = vadd.f32 %v2432, %v2312
      %v2465 = vadd.f32 %v2433, %v2315
      %v2466 = vadd.f32 %v2434, %v2320
      %v2467 = vadd.f32 %v2435, %v2323
      %v2468 = vadd.f32 %v2436, %v2328
      %v2469 = vadd.f32 %v2437, %v2331
      %v2470 = vadd.f32 %v2438, %v2336
      %v2471 = vadd.f32 %v2439, %v2339
      %v2472 = vadd.f32 %v2440, %v2344
      %v2473 = vadd.f32 %v2441, %v2347
      %v2474 = vadd.f32 %v2442, %v2352
      %v2475 = vadd.f32 %v2443, %v2355
      %v2476 = vadd.f32 %v2444, %v2360
      %v2477 = vadd.f32 %v2445, %v2363
      %v2478 = vadd.f32 %v2446, %v2368
      %v2479 = vadd.f32 %v2447, %v2371
      %v2480 = vadd.f32 %v2448, %v2376
      %v2481 = vadd.f32 %v2449, %v2379
      %v2482 = vadd.f32 %v2450, %v2384
      %v2483 = vadd.f32 %v2451, %v2387
      %v2484 = vadd.f32 %v2452, %v2392
      %v2485 = vadd.f32 %v2453, %v2395
      %v2486 = vadd.f32 %v2454, %v2400
      %v2487 = vadd.f32 %v2455, %v2403
      %v2488 = vadd.f32 %v2456, %v2408
      %v2489 = vadd.f32 %v2457, %v2411
      %v2490 = vadd.f32 %v2458, %v2416
      %v2491 = vadd.f32 %v2459, %v2419
      %v2492 = vadd.f32 %v2460, %v2424
      %v2493 = vadd.f32 %v2461, %v2427
      %2494 = vst [vmem:[#allocation3] sm:$0xff] %v2462
      %2495 = vst [vmem:[#allocation3 + $0x8] sm:$0xff] %v2463
      %2496 = vst [vmem:[#allocation3 + $0x10] sm:$0xff] %v2464
      %2497 = vst [vmem:[#allocation3 + $0x18] sm:$0xff] %v2465
      %2498 = vst [vmem:[#allocation3 + $0x20] sm:$0xff] %v2466
      %2499 = vst [vmem:[#allocation3 + $0x28] sm:$0xff] %v2467
      %2500 = vst [vmem:[#allocation3 + $0x30] sm:$0xff] %v2468
      %2501 = vst [vmem:[#allocation3 + $0x38] sm:$0xff] %v2469
      %2502 = vst [vmem:[#allocation3 + $0x40] sm:$0xff] %v2470
      %2503 = vst [vmem:[#allocation3 + $0x48] sm:$0xff] %v2471
      %2504 = vst [vmem:[#allocation3 + $0x50] sm:$0xff] %v2472
      %2505 = vst [vmem:[#allocation3 + $0x58] sm:$0xff] %v2473
      %2506 = vst [vmem:[#allocation3 + $0x60] sm:$0xff] %v2474
      %2507 = vst [vmem:[#allocation3 + $0x68] sm:$0xff] %v2475
      %2508 = vst [vmem:[#allocation3 + $0x70] sm:$0xff] %v2476
      %2509 = vst [vmem:[#allocation3 + $0x78] sm:$0xff] %v2477
      %2510 = vst [vmem:[#allocation3 + $0x80] sm:$0xff] %v2478
      %2511 = vst [vmem:[#allocation3 + $0x88] sm:$0xff] %v2479
      %2512 = vst [vmem:[#allocation3 + $0x90] sm:$0xff] %v2480
      %2513 = vst [vmem:[#allocation3 + $0x98] sm:$0xff] %v2481
      %2514 = vst [vmem:[#allocation3 + $0xa0] sm:$0xff] %v2482
      %2515 = vst [vmem:[#allocation3 + $0xa8] sm:$0xff] %v2483
      %2516 = vst [vmem:[#allocation3 + $0xb0] sm:$0xff] %v2484
      %2517 = vst [vmem:[#allocation3 + $0xb8] sm:$0xff] %v2485
      %2518 = vst [vmem:[#allocation3 + $0xc0] sm:$0xff] %v2486
      %2519 = vst [vmem:[#allocation3 + $0xc8] sm:$0xff] %v2487
      %2520 = vst [vmem:[#allocation3 + $0xd0] sm:$0xff] %v2488
      %2521 = vst [vmem:[#allocation3 + $0xd8] sm:$0xff] %v2489
      %2522 = vst [vmem:[#allocation3 + $0xe0] sm:$0xff] %v2490
      %2523 = vst [vmem:[#allocation3 + $0xe8] sm:$0xff] %v2491
      %2524 = vst [vmem:[#allocation3 + $0xf0] sm:$0xff] %v2492
      %2525 = vst [vmem:[#allocation3 + $0xf8] sm:$0xff] %v2493
      %s2526 = sadd.s32 %s365, 2
      %s2527 = smul.u32 %s2526, 24
      %s2528 = scalar_lea.vmem [#allocation2], %s2527
      %v2529 = vld [vmem:[%s2528] sm:$0xff]
      %v2530 = vld [vmem:[%s2528 + $0x8] sm:$0xff]
      %v2531 = vld [vmem:[%s2528 + $0x18] sm:$0xff]
      %v2532 = vld [vmem:[%s2528 + $0x20] sm:$0xff]
      %v2533 = vld [vmem:[%s2528 + $0x30] sm:$0xff]
      %v2534 = vld [vmem:[%s2528 + $0x38] sm:$0xff]
      %v2535 = vld [vmem:[%s2528 + $0x48] sm:$0xff]
      %v2536 = vld [vmem:[%s2528 + $0x50] sm:$0xff]
      %v2537 = vld [vmem:[%s2528 + $0x60] sm:$0xff]
      %v2538 = vld [vmem:[%s2528 + $0x68] sm:$0xff]
      %v2539 = vld [vmem:[%s2528 + $0x78] sm:$0xff]
      %v2540 = vld [vmem:[%s2528 + $0x80] sm:$0xff]
      %v2541 = vld [vmem:[%s2528 + $0x90] sm:$0xff]
      %v2542 = vld [vmem:[%s2528 + $0x98] sm:$0xff]
      %v2543 = vld [vmem:[%s2528 + $0xa8] sm:$0xff]
      %v2544 = vld [vmem:[%s2528 + $0xb0] sm:$0xff]
      %v2545 = vld [vmem:[%s2528 + $0xc0] sm:$0xff]
      %v2546 = vld [vmem:[%s2528 + $0xc8] sm:$0xff]
      %v2547 = vld [vmem:[%s2528 + $0xd8] sm:$0xff]
      %v2548 = vld [vmem:[%s2528 + $0xe0] sm:$0xff]
      %v2549 = vld [vmem:[%s2528 + $0xf0] sm:$0xff]
      %v2550 = vld [vmem:[%s2528 + $0xf8] sm:$0xff]
      %v2551 = vld [vmem:[%s2528 + $0x108] sm:$0xff]
      %v2552 = vld [vmem:[%s2528 + $0x110] sm:$0xff]
      %v2553 = vld [vmem:[%s2528 + $0x120] sm:$0xff]
      %v2554 = vld [vmem:[%s2528 + $0x128] sm:$0xff]
      %v2555 = vld [vmem:[%s2528 + $0x138] sm:$0xff]
      %v2556 = vld [vmem:[%s2528 + $0x140] sm:$0xff]
      %v2557 = vld [vmem:[%s2528 + $0x150] sm:$0xff]
      %v2558 = vld [vmem:[%s2528 + $0x158] sm:$0xff]
      %v2559 = vld [vmem:[%s2528 + $0x168] sm:$0xff]
      %v2560 = vld [vmem:[%s2528 + $0x170] sm:$0xff]
      %v2561 = vpack.c.bf16 %v2530, %v2529
      %v2562 = vpack.c.bf16 %v2532, %v2531
      %v2563 = vpack.c.bf16 %v2534, %v2533
      %v2564 = vpack.c.bf16 %v2536, %v2535
      %v2565 = vpack.c.bf16 %v2538, %v2537
      %v2566 = vpack.c.bf16 %v2540, %v2539
      %v2567 = vpack.c.bf16 %v2542, %v2541
      %v2568 = vpack.c.bf16 %v2544, %v2543
      %v2569 = vpack.c.bf16 %v2546, %v2545
      %v2570 = vpack.c.bf16 %v2548, %v2547
      %v2571 = vpack.c.bf16 %v2550, %v2549
      %v2572 = vpack.c.bf16 %v2552, %v2551
      %v2573 = vpack.c.bf16 %v2554, %v2553
      %v2574 = vpack.c.bf16 %v2556, %v2555
      %v2575 = vpack.c.bf16 %v2558, %v2557
      %v2576 = vpack.c.bf16 %v2560, %v2559
      %s2577 = scalar_lea.vmem %s1, 384
      %v2578 = vld [vmem:[%s2577] sm:$0xf]
      %v2579 = vld [vmem:[%s2577 + $0x4] sm:$0xf]
      %v2580 = vld [vmem:[%s2577 + $0x8] sm:$0xf]
      %v2581 = vld [vmem:[%s2577 + $0xc] sm:$0xf]
      %v2582 = vld [vmem:[%s2577 + $0x10] sm:$0xf]
      %v2583 = vld [vmem:[%s2577 + $0x14] sm:$0xf]
      %v2584 = vld [vmem:[%s2577 + $0x18] sm:$0xf]
      %v2585 = vld [vmem:[%s2577 + $0x1c] sm:$0xf]
      %v2586 = vld [vmem:[%s2577 + $0x20] sm:$0xf]
      %v2587 = vld [vmem:[%s2577 + $0x24] sm:$0xf]
      %v2588 = vld [vmem:[%s2577 + $0x28] sm:$0xf]
      %v2589 = vld [vmem:[%s2577 + $0x2c] sm:$0xf]
      %v2590 = vld [vmem:[%s2577 + $0x30] sm:$0xf]
      %v2591 = vld [vmem:[%s2577 + $0x34] sm:$0xf]
      %v2592 = vld [vmem:[%s2577 + $0x38] sm:$0xf]
      %v2593 = vld [vmem:[%s2577 + $0x3c] sm:$0xf]
      %v2610 = vunpack.c.l.b16 %v2578
      %v2611 = vunpack.c.l.b16 %v2579
      %v2612 = vunpack.c.l.b16 %v2580
      %v2613 = vunpack.c.l.b16 %v2581
      %v2614 = vunpack.c.l.b16 %v2582
      %v2615 = vunpack.c.l.b16 %v2583
      %v2616 = vunpack.c.l.b16 %v2584
      %v2617 = vunpack.c.l.b16 %v2585
      %v2618 = vunpack.c.l.b16 %v2586
      %v2619 = vunpack.c.l.b16 %v2587
      %v2620 = vunpack.c.l.b16 %v2588
      %v2621 = vunpack.c.l.b16 %v2589
      %v2622 = vunpack.c.l.b16 %v2590
      %v2623 = vunpack.c.l.b16 %v2591
      %v2624 = vunpack.c.l.b16 %v2592
      %v2625 = vunpack.c.l.b16 %v2593
      %v2626 = vpack.c.b16 %v2611, %v2610
      %v2627 = vpack.c.b16 %v2613, %v2612
      %v2628 = vpack.c.b16 %v2615, %v2614
      %v2629 = vpack.c.b16 %v2617, %v2616
      %v2630 = vpack.c.b16 %v2619, %v2618
      %v2631 = vpack.c.b16 %v2621, %v2620
      %v2632 = vpack.c.b16 %v2623, %v2622
      %v2633 = vpack.c.b16 %v2625, %v2624
      %2642 = vmatprep.subr.bf16.mxu0 0
      %2643 = vmatpush1.bf16.msra.mxu0 %v2633
      %2644 = vmatprep.subr.bf16.mxu0 0
      %2645 = vmatpush1.bf16.msra.mxu0 %v2632
      %2646 = vmatprep.subr.bf16.mxu0 0
      %2647 = vmatpush1.bf16.msra.mxu0 %v2631
      %2648 = vmatprep.subr.bf16.mxu0 0
      %2649 = vmatpush1.bf16.msra.mxu0 %v2630
      %2650 = vmatprep.subr.bf16.mxu0 0
      %2651 = vmatpush1.bf16.msra.mxu0 %v2629
      %2652 = vmatprep.subr.bf16.mxu0 0
      %2653 = vmatpush1.bf16.msra.mxu0 %v2628
      %2654 = vmatprep.subr.bf16.mxu0 0
      %2655 = vmatpush1.bf16.msra.mxu0 %v2627
      %2656 = vmatprep.subr.bf16.mxu0 0
      %2657 = vmatpush1.bf16.msra.mxu0 %v2626
      %2658 = vmatprep.subr.bf16.mxu0 0
      %2659 = vmatpush2.bf16.msra.mxu0 0
      %2660 = vmatprep.subr.bf16.mxu0 0
      %2661 = vmatpush2.bf16.msra.mxu0 0
      %2662 = vmatprep.subr.bf16.mxu0 0
      %2663 = vmatpush2.bf16.msra.mxu0 0
      %2664 = vmatprep.subr.bf16.mxu0 0
      %2665 = vmatpush2.bf16.msra.mxu0 0
      %2666 = vmatprep.subr.bf16.mxu0 0
      %2667 = vmatpush2.bf16.msra.mxu0 0
      %2668 = vmatprep.subr.bf16.mxu0 0
      %2669 = vmatpush2.bf16.msra.mxu0 0
      %2670 = vmatprep.subr.bf16.mxu0 0
      %2671 = vmatpush2.bf16.msra.mxu0 0
      %2672 = vmatprep.subr.bf16.mxu0 0
      %2673 = vmatpush2.bf16.msra.mxu0 0
      %2674 = vmatprep.mubr.bf16.mxu0 0
      %2675 = vmatmul.mubr.bf16.gmra.mxu0 %v2561
      %v2676 = vpop.f32.mrf.mxu0
      %v2677 = vadd.f32 0.0, %v2676
      %v2678 = vpop.f32.mrf.mxu0
      %v2679 = vpop.f32.mrf.mxu0
      %v2680 = vadd.f32 0.0, %v2679
      %v2681 = vpop.f32.mrf.mxu0
      %2682 = vmatprep.mubr.bf16.mxu0 0
      %2683 = vmatmul.mubr.bf16.gmra.mxu0 %v2562
      %v2684 = vpop.f32.mrf.mxu0
      %v2685 = vadd.f32 0.0, %v2684
      %v2686 = vpop.f32.mrf.mxu0
      %v2687 = vpop.f32.mrf.mxu0
      %v2688 = vadd.f32 0.0, %v2687
      %v2689 = vpop.f32.mrf.mxu0
      %2690 = vmatprep.mubr.bf16.mxu0 0
      %2691 = vmatmul.mubr.bf16.gmra.mxu0 %v2563
      %v2692 = vpop.f32.mrf.mxu0
      %v2693 = vadd.f32 0.0, %v2692
      %v2694 = vpop.f32.mrf.mxu0
      %v2695 = vpop.f32.mrf.mxu0
      %v2696 = vadd.f32 0.0, %v2695
      %v2697 = vpop.f32.mrf.mxu0
      %2698 = vmatprep.mubr.bf16.mxu0 0
      %2699 = vmatmul.mubr.bf16.gmra.mxu0 %v2564
      %v2700 = vpop.f32.mrf.mxu0
      %v2701 = vadd.f32 0.0, %v2700
      %v2702 = vpop.f32.mrf.mxu0
      %v2703 = vpop.f32.mrf.mxu0
      %v2704 = vadd.f32 0.0, %v2703
      %v2705 = vpop.f32.mrf.mxu0
      %2706 = vmatprep.mubr.bf16.mxu0 0
      %2707 = vmatmul.mubr.bf16.gmra.mxu0 %v2565
      %v2708 = vpop.f32.mrf.mxu0
      %v2709 = vadd.f32 0.0, %v2708
      %v2710 = vpop.f32.mrf.mxu0
      %v2711 = vpop.f32.mrf.mxu0
      %v2712 = vadd.f32 0.0, %v2711
      %v2713 = vpop.f32.mrf.mxu0
      %2714 = vmatprep.mubr.bf16.mxu0 0
      %2715 = vmatmul.mubr.bf16.gmra.mxu0 %v2566
      %v2716 = vpop.f32.mrf.mxu0
      %v2717 = vadd.f32 0.0, %v2716
      %v2718 = vpop.f32.mrf.mxu0
      %v2719 = vpop.f32.mrf.mxu0
      %v2720 = vadd.f32 0.0, %v2719
      %v2721 = vpop.f32.mrf.mxu0
      %2722 = vmatprep.mubr.bf16.mxu0 0
      %2723 = vmatmul.mubr.bf16.gmra.mxu0 %v2567
      %v2724 = vpop.f32.mrf.mxu0
      %v2725 = vadd.f32 0.0, %v2724
      %v2726 = vpop.f32.mrf.mxu0
      %v2727 = vpop.f32.mrf.mxu0
      %v2728 = vadd.f32 0.0, %v2727
      %v2729 = vpop.f32.mrf.mxu0
      %2730 = vmatprep.mubr.bf16.mxu0 0
      %2731 = vmatmul.mubr.bf16.gmra.mxu0 %v2568
      %v2732 = vpop.f32.mrf.mxu0
      %v2733 = vadd.f32 0.0, %v2732
      %v2734 = vpop.f32.mrf.mxu0
      %v2735 = vpop.f32.mrf.mxu0
      %v2736 = vadd.f32 0.0, %v2735
      %v2737 = vpop.f32.mrf.mxu0
      %2738 = vmatprep.mubr.bf16.mxu0 0
      %2739 = vmatmul.mubr.bf16.gmra.mxu0 %v2569
      %v2740 = vpop.f32.mrf.mxu0
      %v2741 = vadd.f32 0.0, %v2740
      %v2742 = vpop.f32.mrf.mxu0
      %v2743 = vpop.f32.mrf.mxu0
      %v2744 = vadd.f32 0.0, %v2743
      %v2745 = vpop.f32.mrf.mxu0
      %2746 = vmatprep.mubr.bf16.mxu0 0
      %2747 = vmatmul.mubr.bf16.gmra.mxu0 %v2570
      %v2748 = vpop.f32.mrf.mxu0
      %v2749 = vadd.f32 0.0, %v2748
      %v2750 = vpop.f32.mrf.mxu0
      %v2751 = vpop.f32.mrf.mxu0
      %v2752 = vadd.f32 0.0, %v2751
      %v2753 = vpop.f32.mrf.mxu0
      %2754 = vmatprep.mubr.bf16.mxu0 0
      %2755 = vmatmul.mubr.bf16.gmra.mxu0 %v2571
      %v2756 = vpop.f32.mrf.mxu0
      %v2757 = vadd.f32 0.0, %v2756
      %v2758 = vpop.f32.mrf.mxu0
      %v2759 = vpop.f32.mrf.mxu0
      %v2760 = vadd.f32 0.0, %v2759
      %v2761 = vpop.f32.mrf.mxu0
      %2762 = vmatprep.mubr.bf16.mxu0 0
      %2763 = vmatmul.mubr.bf16.gmra.mxu0 %v2572
      %v2764 = vpop.f32.mrf.mxu0
      %v2765 = vadd.f32 0.0, %v2764
      %v2766 = vpop.f32.mrf.mxu0
      %v2767 = vpop.f32.mrf.mxu0
      %v2768 = vadd.f32 0.0, %v2767
      %v2769 = vpop.f32.mrf.mxu0
      %2770 = vmatprep.mubr.bf16.mxu0 0
      %2771 = vmatmul.mubr.bf16.gmra.mxu0 %v2573
      %v2772 = vpop.f32.mrf.mxu0
      %v2773 = vadd.f32 0.0, %v2772
      %v2774 = vpop.f32.mrf.mxu0
      %v2775 = vpop.f32.mrf.mxu0
      %v2776 = vadd.f32 0.0, %v2775
      %v2777 = vpop.f32.mrf.mxu0
      %2778 = vmatprep.mubr.bf16.mxu0 0
      %2779 = vmatmul.mubr.bf16.gmra.mxu0 %v2574
      %v2780 = vpop.f32.mrf.mxu0
      %v2781 = vadd.f32 0.0, %v2780
      %v2782 = vpop.f32.mrf.mxu0
      %v2783 = vpop.f32.mrf.mxu0
      %v2784 = vadd.f32 0.0, %v2783
      %v2785 = vpop.f32.mrf.mxu0
      %2786 = vmatprep.mubr.bf16.mxu0 0
      %2787 = vmatmul.mubr.bf16.gmra.mxu0 %v2575
      %v2788 = vpop.f32.mrf.mxu0
      %v2789 = vadd.f32 0.0, %v2788
      %v2790 = vpop.f32.mrf.mxu0
      %v2791 = vpop.f32.mrf.mxu0
      %v2792 = vadd.f32 0.0, %v2791
      %v2793 = vpop.f32.mrf.mxu0
      %2794 = vmatprep.mubr.bf16.mxu0 0
      %2795 = vmatmul.mubr.bf16.gmra.mxu0 %v2576
      %v2796 = vpop.f32.mrf.mxu0
      %v2797 = vadd.f32 0.0, %v2796
      %v2798 = vpop.f32.mrf.mxu0
      %v2799 = vpop.f32.mrf.mxu0
      %v2800 = vadd.f32 0.0, %v2799
      %v2801 = vpop.f32.mrf.mxu0
      %2802 = vdwg.mxu0
      %v2803 = vld [vmem:[#allocation3] sm:$0xff]
      %v2804 = vld [vmem:[#allocation3 + $0x8] sm:$0xff]
      %v2805 = vld [vmem:[#allocation3 + $0x10] sm:$0xff]
      %v2806 = vld [vmem:[#allocation3 + $0x18] sm:$0xff]
      %v2807 = vld [vmem:[#allocation3 + $0x20] sm:$0xff]
      %v2808 = vld [vmem:[#allocation3 + $0x28] sm:$0xff]
      %v2809 = vld [vmem:[#allocation3 + $0x30] sm:$0xff]
      %v2810 = vld [vmem:[#allocation3 + $0x38] sm:$0xff]
      %v2811 = vld [vmem:[#allocation3 + $0x40] sm:$0xff]
      %v2812 = vld [vmem:[#allocation3 + $0x48] sm:$0xff]
      %v2813 = vld [vmem:[#allocation3 + $0x50] sm:$0xff]
      %v2814 = vld [vmem:[#allocation3 + $0x58] sm:$0xff]
      %v2815 = vld [vmem:[#allocation3 + $0x60] sm:$0xff]
      %v2816 = vld [vmem:[#allocation3 + $0x68] sm:$0xff]
      %v2817 = vld [vmem:[#allocation3 + $0x70] sm:$0xff]
      %v2818 = vld [vmem:[#allocation3 + $0x78] sm:$0xff]
      %v2819 = vld [vmem:[#allocation3 + $0x80] sm:$0xff]
      %v2820 = vld [vmem:[#allocation3 + $0x88] sm:$0xff]
      %v2821 = vld [vmem:[#allocation3 + $0x90] sm:$0xff]
      %v2822 = vld [vmem:[#allocation3 + $0x98] sm:$0xff]
      %v2823 = vld [vmem:[#allocation3 + $0xa0] sm:$0xff]
      %v2824 = vld [vmem:[#allocation3 + $0xa8] sm:$0xff]
      %v2825 = vld [vmem:[#allocation3 + $0xb0] sm:$0xff]
      %v2826 = vld [vmem:[#allocation3 + $0xb8] sm:$0xff]
      %v2827 = vld [vmem:[#allocation3 + $0xc0] sm:$0xff]
      %v2828 = vld [vmem:[#allocation3 + $0xc8] sm:$0xff]
      %v2829 = vld [vmem:[#allocation3 + $0xd0] sm:$0xff]
      %v2830 = vld [vmem:[#allocation3 + $0xd8] sm:$0xff]
      %v2831 = vld [vmem:[#allocation3 + $0xe0] sm:$0xff]
      %v2832 = vld [vmem:[#allocation3 + $0xe8] sm:$0xff]
      %v2833 = vld [vmem:[#allocation3 + $0xf0] sm:$0xff]
      %v2834 = vld [vmem:[#allocation3 + $0xf8] sm:$0xff]
      %v2835 = vadd.f32 %v2803, %v2677
      %v2836 = vadd.f32 %v2804, %v2680
      %v2837 = vadd.f32 %v2805, %v2685
      %v2838 = vadd.f32 %v2806, %v2688
      %v2839 = vadd.f32 %v2807, %v2693
      %v2840 = vadd.f32 %v2808, %v2696
      %v2841 = vadd.f32 %v2809, %v2701
      %v2842 = vadd.f32 %v2810, %v2704
      %v2843 = vadd.f32 %v2811, %v2709
      %v2844 = vadd.f32 %v2812, %v2712
      %v2845 = vadd.f32 %v2813, %v2717
      %v2846 = vadd.f32 %v2814, %v2720
      %v2847 = vadd.f32 %v2815, %v2725
      %v2848 = vadd.f32 %v2816, %v2728
      %v2849 = vadd.f32 %v2817, %v2733
      %v2850 = vadd.f32 %v2818, %v2736
      %v2851 = vadd.f32 %v2819, %v2741
      %v2852 = vadd.f32 %v2820, %v2744
      %v2853 = vadd.f32 %v2821, %v2749
      %v2854 = vadd.f32 %v2822, %v2752
      %v2855 = vadd.f32 %v2823, %v2757
      %v2856 = vadd.f32 %v2824, %v2760
      %v2857 = vadd.f32 %v2825, %v2765
      %v2858 = vadd.f32 %v2826, %v2768
      %v2859 = vadd.f32 %v2827, %v2773
      %v2860 = vadd.f32 %v2828, %v2776
      %v2861 = vadd.f32 %v2829, %v2781
      %v2862 = vadd.f32 %v2830, %v2784
      %v2863 = vadd.f32 %v2831, %v2789
      %v2864 = vadd.f32 %v2832, %v2792
      %v2865 = vadd.f32 %v2833, %v2797
      %v2866 = vadd.f32 %v2834, %v2800
      %2867 = vst [vmem:[#allocation3] sm:$0xff] %v2835
      %2868 = vst [vmem:[#allocation3 + $0x8] sm:$0xff] %v2836
      %2869 = vst [vmem:[#allocation3 + $0x10] sm:$0xff] %v2837
      %2870 = vst [vmem:[#allocation3 + $0x18] sm:$0xff] %v2838
      %2871 = vst [vmem:[#allocation3 + $0x20] sm:$0xff] %v2839
      %2872 = vst [vmem:[#allocation3 + $0x28] sm:$0xff] %v2840
      %2873 = vst [vmem:[#allocation3 + $0x30] sm:$0xff] %v2841
      %2874 = vst [vmem:[#allocation3 + $0x38] sm:$0xff] %v2842
      %2875 = vst [vmem:[#allocation3 + $0x40] sm:$0xff] %v2843
      %2876 = vst [vmem:[#allocation3 + $0x48] sm:$0xff] %v2844
      %2877 = vst [vmem:[#allocation3 + $0x50] sm:$0xff] %v2845
      %2878 = vst [vmem:[#allocation3 + $0x58] sm:$0xff] %v2846
      %2879 = vst [vmem:[#allocation3 + $0x60] sm:$0xff] %v2847
      %2880 = vst [vmem:[#allocation3 + $0x68] sm:$0xff] %v2848
      %2881 = vst [vmem:[#allocation3 + $0x70] sm:$0xff] %v2849
      %2882 = vst [vmem:[#allocation3 + $0x78] sm:$0xff] %v2850
      %2883 = vst [vmem:[#allocation3 + $0x80] sm:$0xff] %v2851
      %2884 = vst [vmem:[#allocation3 + $0x88] sm:$0xff] %v2852
      %2885 = vst [vmem:[#allocation3 + $0x90] sm:$0xff] %v2853
      %2886 = vst [vmem:[#allocation3 + $0x98] sm:$0xff] %v2854
      %2887 = vst [vmem:[#allocation3 + $0xa0] sm:$0xff] %v2855
      %2888 = vst [vmem:[#allocation3 + $0xa8] sm:$0xff] %v2856
      %2889 = vst [vmem:[#allocation3 + $0xb0] sm:$0xff] %v2857
      %2890 = vst [vmem:[#allocation3 + $0xb8] sm:$0xff] %v2858
      %2891 = vst [vmem:[#allocation3 + $0xc0] sm:$0xff] %v2859
      %2892 = vst [vmem:[#allocation3 + $0xc8] sm:$0xff] %v2860
      %2893 = vst [vmem:[#allocation3 + $0xd0] sm:$0xff] %v2861
      %2894 = vst [vmem:[#allocation3 + $0xd8] sm:$0xff] %v2862
      %2895 = vst [vmem:[#allocation3 + $0xe0] sm:$0xff] %v2863
      %2896 = vst [vmem:[#allocation3 + $0xe8] sm:$0xff] %v2864
      %2897 = vst [vmem:[#allocation3 + $0xf0] sm:$0xff] %v2865
      %2898 = vst [vmem:[#allocation3 + $0xf8] sm:$0xff] %v2866
      %v2899 = vld [vmem:[%s2528 + $0x1] sm:$0xff]
      %v2900 = vld [vmem:[%s2528 + $0x9] sm:$0xff]
      %v2901 = vld [vmem:[%s2528 + $0x19] sm:$0xff]
      %v2902 = vld [vmem:[%s2528 + $0x21] sm:$0xff]
      %v2903 = vld [vmem:[%s2528 + $0x31] sm:$0xff]
      %v2904 = vld [vmem:[%s2528 + $0x39] sm:$0xff]
      %v2905 = vld [vmem:[%s2528 + $0x49] sm:$0xff]
      %v2906 = vld [vmem:[%s2528 + $0x51] sm:$0xff]
      %v2907 = vld [vmem:[%s2528 + $0x61] sm:$0xff]
      %v2908 = vld [vmem:[%s2528 + $0x69] sm:$0xff]
      %v2909 = vld [vmem:[%s2528 + $0x79] sm:$0xff]
      %v2910 = vld [vmem:[%s2528 + $0x81] sm:$0xff]
      %v2911 = vld [vmem:[%s2528 + $0x91] sm:$0xff]
      %v2912 = vld [vmem:[%s2528 + $0x99] sm:$0xff]
      %v2913 = vld [vmem:[%s2528 + $0xa9] sm:$0xff]
      %v2914 = vld [vmem:[%s2528 + $0xb1] sm:$0xff]
      %v2915 = vld [vmem:[%s2528 + $0xc1] sm:$0xff]
      %v2916 = vld [vmem:[%s2528 + $0xc9] sm:$0xff]
      %v2917 = vld [vmem:[%s2528 + $0xd9] sm:$0xff]
      %v2918 = vld [vmem:[%s2528 + $0xe1] sm:$0xff]
      %v2919 = vld [vmem:[%s2528 + $0xf1] sm:$0xff]
      %v2920 = vld [vmem:[%s2528 + $0xf9] sm:$0xff]
      %v2921 = vld [vmem:[%s2528 + $0x109] sm:$0xff]
      %v2922 = vld [vmem:[%s2528 + $0x111] sm:$0xff]
      %v2923 = vld [vmem:[%s2528 + $0x121] sm:$0xff]
      %v2924 = vld [vmem:[%s2528 + $0x129] sm:$0xff]
      %v2925 = vld [vmem:[%s2528 + $0x139] sm:$0xff]
      %v2926 = vld [vmem:[%s2528 + $0x141] sm:$0xff]
      %v2927 = vld [vmem:[%s2528 + $0x151] sm:$0xff]
      %v2928 = vld [vmem:[%s2528 + $0x159] sm:$0xff]
      %v2929 = vld [vmem:[%s2528 + $0x169] sm:$0xff]
      %v2930 = vld [vmem:[%s2528 + $0x171] sm:$0xff]
      %v2931 = vpack.c.bf16 %v2900, %v2899
      %v2932 = vpack.c.bf16 %v2902, %v2901
      %v2933 = vpack.c.bf16 %v2904, %v2903
      %v2934 = vpack.c.bf16 %v2906, %v2905
      %v2935 = vpack.c.bf16 %v2908, %v2907
      %v2936 = vpack.c.bf16 %v2910, %v2909
      %v2937 = vpack.c.bf16 %v2912, %v2911
      %v2938 = vpack.c.bf16 %v2914, %v2913
      %v2939 = vpack.c.bf16 %v2916, %v2915
      %v2940 = vpack.c.bf16 %v2918, %v2917
      %v2941 = vpack.c.bf16 %v2920, %v2919
      %v2942 = vpack.c.bf16 %v2922, %v2921
      %v2943 = vpack.c.bf16 %v2924, %v2923
      %v2944 = vpack.c.bf16 %v2926, %v2925
      %v2945 = vpack.c.bf16 %v2928, %v2927
      %v2946 = vpack.c.bf16 %v2930, %v2929
      %s2947 = scalar_lea.vmem %s1, 448
      %v2948 = vld [vmem:[%s2947] sm:$0xf]
      %v2949 = vld [vmem:[%s2947 + $0x4] sm:$0xf]
      %v2950 = vld [vmem:[%s2947 + $0x8] sm:$0xf]
      %v2951 = vld [vmem:[%s2947 + $0xc] sm:$0xf]
      %v2952 = vld [vmem:[%s2947 + $0x10] sm:$0xf]
      %v2953 = vld [vmem:[%s2947 + $0x14] sm:$0xf]
      %v2954 = vld [vmem:[%s2947 + $0x18] sm:$0xf]
      %v2955 = vld [vmem:[%s2947 + $0x1c] sm:$0xf]
      %v2956 = vld [vmem:[%s2947 + $0x20] sm:$0xf]
      %v2957 = vld [vmem:[%s2947 + $0x24] sm:$0xf]
      %v2958 = vld [vmem:[%s2947 + $0x28] sm:$0xf]
      %v2959 = vld [vmem:[%s2947 + $0x2c] sm:$0xf]
      %v2960 = vld [vmem:[%s2947 + $0x30] sm:$0xf]
      %v2961 = vld [vmem:[%s2947 + $0x34] sm:$0xf]
      %v2962 = vld [vmem:[%s2947 + $0x38] sm:$0xf]
      %v2963 = vld [vmem:[%s2947 + $0x3c] sm:$0xf]
      %v2980 = vunpack.c.l.b16 %v2948
      %v2981 = vunpack.c.l.b16 %v2949
      %v2982 = vunpack.c.l.b16 %v2950
      %v2983 = vunpack.c.l.b16 %v2951
      %v2984 = vunpack.c.l.b16 %v2952
      %v2985 = vunpack.c.l.b16 %v2953
      %v2986 = vunpack.c.l.b16 %v2954
      %v2987 = vunpack.c.l.b16 %v2955
      %v2988 = vunpack.c.l.b16 %v2956
      %v2989 = vunpack.c.l.b16 %v2957
      %v2990 = vunpack.c.l.b16 %v2958
      %v2991 = vunpack.c.l.b16 %v2959
      %v2992 = vunpack.c.l.b16 %v2960
      %v2993 = vunpack.c.l.b16 %v2961
      %v2994 = vunpack.c.l.b16 %v2962
      %v2995 = vunpack.c.l.b16 %v2963
      %v2996 = vpack.c.b16 %v2981, %v2980
      %v2997 = vpack.c.b16 %v2983, %v2982
      %v2998 = vpack.c.b16 %v2985, %v2984
      %v2999 = vpack.c.b16 %v2987, %v2986
      %v3000 = vpack.c.b16 %v2989, %v2988
      %v3001 = vpack.c.b16 %v2991, %v2990
      %v3002 = vpack.c.b16 %v2993, %v2992
      %v3003 = vpack.c.b16 %v2995, %v2994
      %3012 = vmatprep.subr.bf16.mxu0 0
      %3013 = vmatpush1.bf16.msra.mxu0 %v3003
      %3014 = vmatprep.subr.bf16.mxu0 0
      %3015 = vmatpush1.bf16.msra.mxu0 %v3002
      %3016 = vmatprep.subr.bf16.mxu0 0
      %3017 = vmatpush1.bf16.msra.mxu0 %v3001
      %3018 = vmatprep.subr.bf16.mxu0 0
      %3019 = vmatpush1.bf16.msra.mxu0 %v3000
      %3020 = vmatprep.subr.bf16.mxu0 0
      %3021 = vmatpush1.bf16.msra.mxu0 %v2999
      %3022 = vmatprep.subr.bf16.mxu0 0
      %3023 = vmatpush1.bf16.msra.mxu0 %v2998
      %3024 = vmatprep.subr.bf16.mxu0 0
      %3025 = vmatpush1.bf16.msra.mxu0 %v2997
      %3026 = vmatprep.subr.bf16.mxu0 0
      %3027 = vmatpush1.bf16.msra.mxu0 %v2996
      %3028 = vmatprep.subr.bf16.mxu0 0
      %3029 = vmatpush2.bf16.msra.mxu0 0
      %3030 = vmatprep.subr.bf16.mxu0 0
      %3031 = vmatpush2.bf16.msra.mxu0 0
      %3032 = vmatprep.subr.bf16.mxu0 0
      %3033 = vmatpush2.bf16.msra.mxu0 0
      %3034 = vmatprep.subr.bf16.mxu0 0
      %3035 = vmatpush2.bf16.msra.mxu0 0
      %3036 = vmatprep.subr.bf16.mxu0 0
      %3037 = vmatpush2.bf16.msra.mxu0 0
      %3038 = vmatprep.subr.bf16.mxu0 0
      %3039 = vmatpush2.bf16.msra.mxu0 0
      %3040 = vmatprep.subr.bf16.mxu0 0
      %3041 = vmatpush2.bf16.msra.mxu0 0
      %3042 = vmatprep.subr.bf16.mxu0 0
      %3043 = vmatpush2.bf16.msra.mxu0 0
      %3044 = vmatprep.mubr.bf16.mxu0 0
      %3045 = vmatmul.mubr.bf16.gmra.mxu0 %v2931
      %v3046 = vpop.f32.mrf.mxu0
      %v3047 = vadd.f32 0.0, %v3046
      %v3048 = vpop.f32.mrf.mxu0
      %v3049 = vpop.f32.mrf.mxu0
      %v3050 = vadd.f32 0.0, %v3049
      %v3051 = vpop.f32.mrf.mxu0
      %3052 = vmatprep.mubr.bf16.mxu0 0
      %3053 = vmatmul.mubr.bf16.gmra.mxu0 %v2932
      %v3054 = vpop.f32.mrf.mxu0
      %v3055 = vadd.f32 0.0, %v3054
      %v3056 = vpop.f32.mrf.mxu0
      %v3057 = vpop.f32.mrf.mxu0
      %v3058 = vadd.f32 0.0, %v3057
      %v3059 = vpop.f32.mrf.mxu0
      %3060 = vmatprep.mubr.bf16.mxu0 0
      %3061 = vmatmul.mubr.bf16.gmra.mxu0 %v2933
      %v3062 = vpop.f32.mrf.mxu0
      %v3063 = vadd.f32 0.0, %v3062
      %v3064 = vpop.f32.mrf.mxu0
      %v3065 = vpop.f32.mrf.mxu0
      %v3066 = vadd.f32 0.0, %v3065
      %v3067 = vpop.f32.mrf.mxu0
      %3068 = vmatprep.mubr.bf16.mxu0 0
      %3069 = vmatmul.mubr.bf16.gmra.mxu0 %v2934
      %v3070 = vpop.f32.mrf.mxu0
      %v3071 = vadd.f32 0.0, %v3070
      %v3072 = vpop.f32.mrf.mxu0
      %v3073 = vpop.f32.mrf.mxu0
      %v3074 = vadd.f32 0.0, %v3073
      %v3075 = vpop.f32.mrf.mxu0
      %3076 = vmatprep.mubr.bf16.mxu0 0
      %3077 = vmatmul.mubr.bf16.gmra.mxu0 %v2935
      %v3078 = vpop.f32.mrf.mxu0
      %v3079 = vadd.f32 0.0, %v3078
      %v3080 = vpop.f32.mrf.mxu0
      %v3081 = vpop.f32.mrf.mxu0
      %v3082 = vadd.f32 0.0, %v3081
      %v3083 = vpop.f32.mrf.mxu0
      %3084 = vmatprep.mubr.bf16.mxu0 0
      %3085 = vmatmul.mubr.bf16.gmra.mxu0 %v2936
      %v3086 = vpop.f32.mrf.mxu0
      %v3087 = vadd.f32 0.0, %v3086
      %v3088 = vpop.f32.mrf.mxu0
      %v3089 = vpop.f32.mrf.mxu0
      %v3090 = vadd.f32 0.0, %v3089
      %v3091 = vpop.f32.mrf.mxu0
      %3092 = vmatprep.mubr.bf16.mxu0 0
      %3093 = vmatmul.mubr.bf16.gmra.mxu0 %v2937
      %v3094 = vpop.f32.mrf.mxu0
      %v3095 = vadd.f32 0.0, %v3094
      %v3096 = vpop.f32.mrf.mxu0
      %v3097 = vpop.f32.mrf.mxu0
      %v3098 = vadd.f32 0.0, %v3097
      %v3099 = vpop.f32.mrf.mxu0
      %3100 = vmatprep.mubr.bf16.mxu0 0
      %3101 = vmatmul.mubr.bf16.gmra.mxu0 %v2938
      %v3102 = vpop.f32.mrf.mxu0
      %v3103 = vadd.f32 0.0, %v3102
      %v3104 = vpop.f32.mrf.mxu0
      %v3105 = vpop.f32.mrf.mxu0
      %v3106 = vadd.f32 0.0, %v3105
      %v3107 = vpop.f32.mrf.mxu0
      %3108 = vmatprep.mubr.bf16.mxu0 0
      %3109 = vmatmul.mubr.bf16.gmra.mxu0 %v2939
      %v3110 = vpop.f32.mrf.mxu0
      %v3111 = vadd.f32 0.0, %v3110
      %v3112 = vpop.f32.mrf.mxu0
      %v3113 = vpop.f32.mrf.mxu0
      %v3114 = vadd.f32 0.0, %v3113
      %v3115 = vpop.f32.mrf.mxu0
      %3116 = vmatprep.mubr.bf16.mxu0 0
      %3117 = vmatmul.mubr.bf16.gmra.mxu0 %v2940
      %v3118 = vpop.f32.mrf.mxu0
      %v3119 = vadd.f32 0.0, %v3118
      %v3120 = vpop.f32.mrf.mxu0
      %v3121 = vpop.f32.mrf.mxu0
      %v3122 = vadd.f32 0.0, %v3121
      %v3123 = vpop.f32.mrf.mxu0
      %3124 = vmatprep.mubr.bf16.mxu0 0
      %3125 = vmatmul.mubr.bf16.gmra.mxu0 %v2941
      %v3126 = vpop.f32.mrf.mxu0
      %v3127 = vadd.f32 0.0, %v3126
      %v3128 = vpop.f32.mrf.mxu0
      %v3129 = vpop.f32.mrf.mxu0
      %v3130 = vadd.f32 0.0, %v3129
      %v3131 = vpop.f32.mrf.mxu0
      %3132 = vmatprep.mubr.bf16.mxu0 0
      %3133 = vmatmul.mubr.bf16.gmra.mxu0 %v2942
      %v3134 = vpop.f32.mrf.mxu0
      %v3135 = vadd.f32 0.0, %v3134
      %v3136 = vpop.f32.mrf.mxu0
      %v3137 = vpop.f32.mrf.mxu0
      %v3138 = vadd.f32 0.0, %v3137
      %v3139 = vpop.f32.mrf.mxu0
      %3140 = vmatprep.mubr.bf16.mxu0 0
      %3141 = vmatmul.mubr.bf16.gmra.mxu0 %v2943
      %v3142 = vpop.f32.mrf.mxu0
      %v3143 = vadd.f32 0.0, %v3142
      %v3144 = vpop.f32.mrf.mxu0
      %v3145 = vpop.f32.mrf.mxu0
      %v3146 = vadd.f32 0.0, %v3145
      %v3147 = vpop.f32.mrf.mxu0
      %3148 = vmatprep.mubr.bf16.mxu0 0
      %3149 = vmatmul.mubr.bf16.gmra.mxu0 %v2944
      %v3150 = vpop.f32.mrf.mxu0
      %v3151 = vadd.f32 0.0, %v3150
      %v3152 = vpop.f32.mrf.mxu0
      %v3153 = vpop.f32.mrf.mxu0
      %v3154 = vadd.f32 0.0, %v3153
      %v3155 = vpop.f32.mrf.mxu0
      %3156 = vmatprep.mubr.bf16.mxu0 0
      %3157 = vmatmul.mubr.bf16.gmra.mxu0 %v2945
      %v3158 = vpop.f32.mrf.mxu0
      %v3159 = vadd.f32 0.0, %v3158
      %v3160 = vpop.f32.mrf.mxu0
      %v3161 = vpop.f32.mrf.mxu0
      %v3162 = vadd.f32 0.0, %v3161
      %v3163 = vpop.f32.mrf.mxu0
      %3164 = vmatprep.mubr.bf16.mxu0 0
      %3165 = vmatmul.mubr.bf16.gmra.mxu0 %v2946
      %v3166 = vpop.f32.mrf.mxu0
      %v3167 = vadd.f32 0.0, %v3166
      %v3168 = vpop.f32.mrf.mxu0
      %v3169 = vpop.f32.mrf.mxu0
      %v3170 = vadd.f32 0.0, %v3169
      %v3171 = vpop.f32.mrf.mxu0
      %3172 = vdwg.mxu0
      %v3173 = vld [vmem:[#allocation3] sm:$0xff]
      %v3174 = vld [vmem:[#allocation3 + $0x8] sm:$0xff]
      %v3175 = vld [vmem:[#allocation3 + $0x10] sm:$0xff]
      %v3176 = vld [vmem:[#allocation3 + $0x18] sm:$0xff]
      %v3177 = vld [vmem:[#allocation3 + $0x20] sm:$0xff]
      %v3178 = vld [vmem:[#allocation3 + $0x28] sm:$0xff]
      %v3179 = vld [vmem:[#allocation3 + $0x30] sm:$0xff]
      %v3180 = vld [vmem:[#allocation3 + $0x38] sm:$0xff]
      %v3181 = vld [vmem:[#allocation3 + $0x40] sm:$0xff]
      %v3182 = vld [vmem:[#allocation3 + $0x48] sm:$0xff]
      %v3183 = vld [vmem:[#allocation3 + $0x50] sm:$0xff]
      %v3184 = vld [vmem:[#allocation3 + $0x58] sm:$0xff]
      %v3185 = vld [vmem:[#allocation3 + $0x60] sm:$0xff]
      %v3186 = vld [vmem:[#allocation3 + $0x68] sm:$0xff]
      %v3187 = vld [vmem:[#allocation3 + $0x70] sm:$0xff]
      %v3188 = vld [vmem:[#allocation3 + $0x78] sm:$0xff]
      %v3189 = vld [vmem:[#allocation3 + $0x80] sm:$0xff]
      %v3190 = vld [vmem:[#allocation3 + $0x88] sm:$0xff]
      %v3191 = vld [vmem:[#allocation3 + $0x90] sm:$0xff]
      %v3192 = vld [vmem:[#allocation3 + $0x98] sm:$0xff]
      %v3193 = vld [vmem:[#allocation3 + $0xa0] sm:$0xff]
      %v3194 = vld [vmem:[#allocation3 + $0xa8] sm:$0xff]
      %v3195 = vld [vmem:[#allocation3 + $0xb0] sm:$0xff]
      %v3196 = vld [vmem:[#allocation3 + $0xb8] sm:$0xff]
      %v3197 = vld [vmem:[#allocation3 + $0xc0] sm:$0xff]
      %v3198 = vld [vmem:[#allocation3 + $0xc8] sm:$0xff]
      %v3199 = vld [vmem:[#allocation3 + $0xd0] sm:$0xff]
      %v3200 = vld [vmem:[#allocation3 + $0xd8] sm:$0xff]
      %v3201 = vld [vmem:[#allocation3 + $0xe0] sm:$0xff]
      %v3202 = vld [vmem:[#allocation3 + $0xe8] sm:$0xff]
      %v3203 = vld [vmem:[#allocation3 + $0xf0] sm:$0xff]
      %v3204 = vld [vmem:[#allocation3 + $0xf8] sm:$0xff]
      %v3205 = vadd.f32 %v3173, %v3047
      %v3206 = vadd.f32 %v3174, %v3050
      %v3207 = vadd.f32 %v3175, %v3055
      %v3208 = vadd.f32 %v3176, %v3058
      %v3209 = vadd.f32 %v3177, %v3063
      %v3210 = vadd.f32 %v3178, %v3066
      %v3211 = vadd.f32 %v3179, %v3071
      %v3212 = vadd.f32 %v3180, %v3074
      %v3213 = vadd.f32 %v3181, %v3079
      %v3214 = vadd.f32 %v3182, %v3082
      %v3215 = vadd.f32 %v3183, %v3087
      %v3216 = vadd.f32 %v3184, %v3090
      %v3217 = vadd.f32 %v3185, %v3095
      %v3218 = vadd.f32 %v3186, %v3098
      %v3219 = vadd.f32 %v3187, %v3103
      %v3220 = vadd.f32 %v3188, %v3106
      %v3221 = vadd.f32 %v3189, %v3111
      %v3222 = vadd.f32 %v3190, %v3114
      %v3223 = vadd.f32 %v3191, %v3119
      %v3224 = vadd.f32 %v3192, %v3122
      %v3225 = vadd.f32 %v3193, %v3127
      %v3226 = vadd.f32 %v3194, %v3130
      %v3227 = vadd.f32 %v3195, %v3135
      %v3228 = vadd.f32 %v3196, %v3138
      %v3229 = vadd.f32 %v3197, %v3143
      %v3230 = vadd.f32 %v3198, %v3146
      %v3231 = vadd.f32 %v3199, %v3151
      %v3232 = vadd.f32 %v3200, %v3154
      %v3233 = vadd.f32 %v3201, %v3159
      %v3234 = vadd.f32 %v3202, %v3162
      %v3235 = vadd.f32 %v3203, %v3167
      %v3236 = vadd.f32 %v3204, %v3170
      %3237 = vst [vmem:[#allocation3] sm:$0xff] %v3205
      %3238 = vst [vmem:[#allocation3 + $0x8] sm:$0xff] %v3206
      %3239 = vst [vmem:[#allocation3 + $0x10] sm:$0xff] %v3207
      %3240 = vst [vmem:[#allocation3 + $0x18] sm:$0xff] %v3208
      %3241 = vst [vmem:[#allocation3 + $0x20] sm:$0xff] %v3209
      %3242 = vst [vmem:[#allocation3 + $0x28] sm:$0xff] %v3210
      %3243 = vst [vmem:[#allocation3 + $0x30] sm:$0xff] %v3211
      %3244 = vst [vmem:[#allocation3 + $0x38] sm:$0xff] %v3212
      %3245 = vst [vmem:[#allocation3 + $0x40] sm:$0xff] %v3213
      %3246 = vst [vmem:[#allocation3 + $0x48] sm:$0xff] %v3214
      %3247 = vst [vmem:[#allocation3 + $0x50] sm:$0xff] %v3215
      %3248 = vst [vmem:[#allocation3 + $0x58] sm:$0xff] %v3216
      %3249 = vst [vmem:[#allocation3 + $0x60] sm:$0xff] %v3217
      %3250 = vst [vmem:[#allocation3 + $0x68] sm:$0xff] %v3218
      %3251 = vst [vmem:[#allocation3 + $0x70] sm:$0xff] %v3219
      %3252 = vst [vmem:[#allocation3 + $0x78] sm:$0xff] %v3220
      %3253 = vst [vmem:[#allocation3 + $0x80] sm:$0xff] %v3221
      %3254 = vst [vmem:[#allocation3 + $0x88] sm:$0xff] %v3222
      %3255 = vst [vmem:[#allocation3 + $0x90] sm:$0xff] %v3223
      %3256 = vst [vmem:[#allocation3 + $0x98] sm:$0xff] %v3224
      %3257 = vst [vmem:[#allocation3 + $0xa0] sm:$0xff] %v3225
      %3258 = vst [vmem:[#allocation3 + $0xa8] sm:$0xff] %v3226
      %3259 = vst [vmem:[#allocation3 + $0xb0] sm:$0xff] %v3227
      %3260 = vst [vmem:[#allocation3 + $0xb8] sm:$0xff] %v3228
      %3261 = vst [vmem:[#allocation3 + $0xc0] sm:$0xff] %v3229
      %3262 = vst [vmem:[#allocation3 + $0xc8] sm:$0xff] %v3230
      %3263 = vst [vmem:[#allocation3 + $0xd0] sm:$0xff] %v3231
      %3264 = vst [vmem:[#allocation3 + $0xd8] sm:$0xff] %v3232
      %3265 = vst [vmem:[#allocation3 + $0xe0] sm:$0xff] %v3233
      %3266 = vst [vmem:[#allocation3 + $0xe8] sm:$0xff] %v3234
      %3267 = vst [vmem:[#allocation3 + $0xf0] sm:$0xff] %v3235
      %3268 = vst [vmem:[#allocation3 + $0xf8] sm:$0xff] %v3236
      %v3269 = vld [vmem:[%s2528 + $0x2] sm:$0xff]
      %v3270 = vld [vmem:[%s2528 + $0xa] sm:$0xff]
      %v3271 = vld [vmem:[%s2528 + $0x1a] sm:$0xff]
      %v3272 = vld [vmem:[%s2528 + $0x22] sm:$0xff]
      %v3273 = vld [vmem:[%s2528 + $0x32] sm:$0xff]
      %v3274 = vld [vmem:[%s2528 + $0x3a] sm:$0xff]
      %v3275 = vld [vmem:[%s2528 + $0x4a] sm:$0xff]
      %v3276 = vld [vmem:[%s2528 + $0x52] sm:$0xff]
      %v3277 = vld [vmem:[%s2528 + $0x62] sm:$0xff]
      %v3278 = vld [vmem:[%s2528 + $0x6a] sm:$0xff]
      %v3279 = vld [vmem:[%s2528 + $0x7a] sm:$0xff]
      %v3280 = vld [vmem:[%s2528 + $0x82] sm:$0xff]
      %v3281 = vld [vmem:[%s2528 + $0x92] sm:$0xff]
      %v3282 = vld [vmem:[%s2528 + $0x9a] sm:$0xff]
      %v3283 = vld [vmem:[%s2528 + $0xaa] sm:$0xff]
      %v3284 = vld [vmem:[%s2528 + $0xb2] sm:$0xff]
      %v3285 = vld [vmem:[%s2528 + $0xc2] sm:$0xff]
      %v3286 = vld [vmem:[%s2528 + $0xca] sm:$0xff]
      %v3287 = vld [vmem:[%s2528 + $0xda] sm:$0xff]
      %v3288 = vld [vmem:[%s2528 + $0xe2] sm:$0xff]
      %v3289 = vld [vmem:[%s2528 + $0xf2] sm:$0xff]
      %v3290 = vld [vmem:[%s2528 + $0xfa] sm:$0xff]
      %v3291 = vld [vmem:[%s2528 + $0x10a] sm:$0xff]
      %v3292 = vld [vmem:[%s2528 + $0x112] sm:$0xff]
      %v3293 = vld [vmem:[%s2528 + $0x122] sm:$0xff]
      %v3294 = vld [vmem:[%s2528 + $0x12a] sm:$0xff]
      %v3295 = vld [vmem:[%s2528 + $0x13a] sm:$0xff]
      %v3296 = vld [vmem:[%s2528 + $0x142] sm:$0xff]
      %v3297 = vld [vmem:[%s2528 + $0x152] sm:$0xff]
      %v3298 = vld [vmem:[%s2528 + $0x15a] sm:$0xff]
      %v3299 = vld [vmem:[%s2528 + $0x16a] sm:$0xff]
      %v3300 = vld [vmem:[%s2528 + $0x172] sm:$0xff]
      %v3301 = vpack.c.bf16 %v3270, %v3269
      %v3302 = vpack.c.bf16 %v3272, %v3271
      %v3303 = vpack.c.bf16 %v3274, %v3273
      %v3304 = vpack.c.bf16 %v3276, %v3275
      %v3305 = vpack.c.bf16 %v3278, %v3277
      %v3306 = vpack.c.bf16 %v3280, %v3279
      %v3307 = vpack.c.bf16 %v3282, %v3281
      %v3308 = vpack.c.bf16 %v3284, %v3283
      %v3309 = vpack.c.bf16 %v3286, %v3285
      %v3310 = vpack.c.bf16 %v3288, %v3287
      %v3311 = vpack.c.bf16 %v3290, %v3289
      %v3312 = vpack.c.bf16 %v3292, %v3291
      %v3313 = vpack.c.bf16 %v3294, %v3293
      %v3314 = vpack.c.bf16 %v3296, %v3295
      %v3315 = vpack.c.bf16 %v3298, %v3297
      %v3316 = vpack.c.bf16 %v3300, %v3299
      %s3317 = scalar_lea.vmem %s1, 512
      %v3318 = vld [vmem:[%s3317] sm:$0xf]
      %v3319 = vld [vmem:[%s3317 + $0x4] sm:$0xf]
      %v3320 = vld [vmem:[%s3317 + $0x8] sm:$0xf]
      %v3321 = vld [vmem:[%s3317 + $0xc] sm:$0xf]
      %v3322 = vld [vmem:[%s3317 + $0x10] sm:$0xf]
      %v3323 = vld [vmem:[%s3317 + $0x14] sm:$0xf]
      %v3324 = vld [vmem:[%s3317 + $0x18] sm:$0xf]
      %v3325 = vld [vmem:[%s3317 + $0x1c] sm:$0xf]
      %v3326 = vld [vmem:[%s3317 + $0x20] sm:$0xf]
      %v3327 = vld [vmem:[%s3317 + $0x24] sm:$0xf]
      %v3328 = vld [vmem:[%s3317 + $0x28] sm:$0xf]
      %v3329 = vld [vmem:[%s3317 + $0x2c] sm:$0xf]
      %v3330 = vld [vmem:[%s3317 + $0x30] sm:$0xf]
      %v3331 = vld [vmem:[%s3317 + $0x34] sm:$0xf]
      %v3332 = vld [vmem:[%s3317 + $0x38] sm:$0xf]
      %v3333 = vld [vmem:[%s3317 + $0x3c] sm:$0xf]
      %v3350 = vunpack.c.l.b16 %v3318
      %v3351 = vunpack.c.l.b16 %v3319
      %v3352 = vunpack.c.l.b16 %v3320
      %v3353 = vunpack.c.l.b16 %v3321
      %v3354 = vunpack.c.l.b16 %v3322
      %v3355 = vunpack.c.l.b16 %v3323
      %v3356 = vunpack.c.l.b16 %v3324
      %v3357 = vunpack.c.l.b16 %v3325
      %v3358 = vunpack.c.l.b16 %v3326
      %v3359 = vunpack.c.l.b16 %v3327
      %v3360 = vunpack.c.l.b16 %v3328
      %v3361 = vunpack.c.l.b16 %v3329
      %v3362 = vunpack.c.l.b16 %v3330
      %v3363 = vunpack.c.l.b16 %v3331
      %v3364 = vunpack.c.l.b16 %v3332
      %v3365 = vunpack.c.l.b16 %v3333
      %v3366 = vpack.c.b16 %v3351, %v3350
      %v3367 = vpack.c.b16 %v3353, %v3352
      %v3368 = vpack.c.b16 %v3355, %v3354
      %v3369 = vpack.c.b16 %v3357, %v3356
      %v3370 = vpack.c.b16 %v3359, %v3358
      %v3371 = vpack.c.b16 %v3361, %v3360
      %v3372 = vpack.c.b16 %v3363, %v3362
      %v3373 = vpack.c.b16 %v3365, %v3364
      %3382 = vmatprep.subr.bf16.mxu0 0
      %3383 = vmatpush1.bf16.msra.mxu0 %v3373
      %3384 = vmatprep.subr.bf16.mxu0 0
      %3385 = vmatpush1.bf16.msra.mxu0 %v3372
      %3386 = vmatprep.subr.bf16.mxu0 0
      %3387 = vmatpush1.bf16.msra.mxu0 %v3371
      %3388 = vmatprep.subr.bf16.mxu0 0
      %3389 = vmatpush1.bf16.msra.mxu0 %v3370
      %3390 = vmatprep.subr.bf16.mxu0 0
      %3391 = vmatpush1.bf16.msra.mxu0 %v3369
      %3392 = vmatprep.subr.bf16.mxu0 0
      %3393 = vmatpush1.bf16.msra.mxu0 %v3368
      %3394 = vmatprep.subr.bf16.mxu0 0
      %3395 = vmatpush1.bf16.msra.mxu0 %v3367
      %3396 = vmatprep.subr.bf16.mxu0 0
      %3397 = vmatpush1.bf16.msra.mxu0 %v3366
      %3398 = vmatprep.subr.bf16.mxu0 0
      %3399 = vmatpush2.bf16.msra.mxu0 0
      %3400 = vmatprep.subr.bf16.mxu0 0
      %3401 = vmatpush2.bf16.msra.mxu0 0
      %3402 = vmatprep.subr.bf16.mxu0 0
      %3403 = vmatpush2.bf16.msra.mxu0 0
      %3404 = vmatprep.subr.bf16.mxu0 0
      %3405 = vmatpush2.bf16.msra.mxu0 0
      %3406 = vmatprep.subr.bf16.mxu0 0
      %3407 = vmatpush2.bf16.msra.mxu0 0
      %3408 = vmatprep.subr.bf16.mxu0 0
      %3409 = vmatpush2.bf16.msra.mxu0 0
      %3410 = vmatprep.subr.bf16.mxu0 0
      %3411 = vmatpush2.bf16.msra.mxu0 0
      %3412 = vmatprep.subr.bf16.mxu0 0
      %3413 = vmatpush2.bf16.msra.mxu0 0
      %3414 = vmatprep.mubr.bf16.mxu0 0
      %3415 = vmatmul.mubr.bf16.gmra.mxu0 %v3301
      %v3416 = vpop.f32.mrf.mxu0
      %v3417 = vadd.f32 0.0, %v3416
      %v3418 = vpop.f32.mrf.mxu0
      %v3419 = vpop.f32.mrf.mxu0
      %v3420 = vadd.f32 0.0, %v3419
      %v3421 = vpop.f32.mrf.mxu0
      %3422 = vmatprep.mubr.bf16.mxu0 0
      %3423 = vmatmul.mubr.bf16.gmra.mxu0 %v3302
      %v3424 = vpop.f32.mrf.mxu0
      %v3425 = vadd.f32 0.0, %v3424
      %v3426 = vpop.f32.mrf.mxu0
      %v3427 = vpop.f32.mrf.mxu0
      %v3428 = vadd.f32 0.0, %v3427
      %v3429 = vpop.f32.mrf.mxu0
      %3430 = vmatprep.mubr.bf16.mxu0 0
      %3431 = vmatmul.mubr.bf16.gmra.mxu0 %v3303
      %v3432 = vpop.f32.mrf.mxu0
      %v3433 = vadd.f32 0.0, %v3432
      %v3434 = vpop.f32.mrf.mxu0
      %v3435 = vpop.f32.mrf.mxu0
      %v3436 = vadd.f32 0.0, %v3435
      %v3437 = vpop.f32.mrf.mxu0
      %3438 = vmatprep.mubr.bf16.mxu0 0
      %3439 = vmatmul.mubr.bf16.gmra.mxu0 %v3304
      %v3440 = vpop.f32.mrf.mxu0
      %v3441 = vadd.f32 0.0, %v3440
      %v3442 = vpop.f32.mrf.mxu0
      %v3443 = vpop.f32.mrf.mxu0
      %v3444 = vadd.f32 0.0, %v3443
      %v3445 = vpop.f32.mrf.mxu0
      %3446 = vmatprep.mubr.bf16.mxu0 0
      %3447 = vmatmul.mubr.bf16.gmra.mxu0 %v3305
      %v3448 = vpop.f32.mrf.mxu0
      %v3449 = vadd.f32 0.0, %v3448
      %v3450 = vpop.f32.mrf.mxu0
      %v3451 = vpop.f32.mrf.mxu0
      %v3452 = vadd.f32 0.0, %v3451
      %v3453 = vpop.f32.mrf.mxu0
      %3454 = vmatprep.mubr.bf16.mxu0 0
      %3455 = vmatmul.mubr.bf16.gmra.mxu0 %v3306
      %v3456 = vpop.f32.mrf.mxu0
      %v3457 = vadd.f32 0.0, %v3456
      %v3458 = vpop.f32.mrf.mxu0
      %v3459 = vpop.f32.mrf.mxu0
      %v3460 = vadd.f32 0.0, %v3459
      %v3461 = vpop.f32.mrf.mxu0
      %3462 = vmatprep.mubr.bf16.mxu0 0
      %3463 = vmatmul.mubr.bf16.gmra.mxu0 %v3307
      %v3464 = vpop.f32.mrf.mxu0
      %v3465 = vadd.f32 0.0, %v3464
      %v3466 = vpop.f32.mrf.mxu0
      %v3467 = vpop.f32.mrf.mxu0
      %v3468 = vadd.f32 0.0, %v3467
      %v3469 = vpop.f32.mrf.mxu0
      %3470 = vmatprep.mubr.bf16.mxu0 0
      %3471 = vmatmul.mubr.bf16.gmra.mxu0 %v3308
      %v3472 = vpop.f32.mrf.mxu0
      %v3473 = vadd.f32 0.0, %v3472
      %v3474 = vpop.f32.mrf.mxu0
      %v3475 = vpop.f32.mrf.mxu0
      %v3476 = vadd.f32 0.0, %v3475
      %v3477 = vpop.f32.mrf.mxu0
      %3478 = vmatprep.mubr.bf16.mxu0 0
      %3479 = vmatmul.mubr.bf16.gmra.mxu0 %v3309
      %v3480 = vpop.f32.mrf.mxu0
      %v3481 = vadd.f32 0.0, %v3480
      %v3482 = vpop.f32.mrf.mxu0
      %v3483 = vpop.f32.mrf.mxu0
      %v3484 = vadd.f32 0.0, %v3483
      %v3485 = vpop.f32.mrf.mxu0
      %3486 = vmatprep.mubr.bf16.mxu0 0
      %3487 = vmatmul.mubr.bf16.gmra.mxu0 %v3310
      %v3488 = vpop.f32.mrf.mxu0
      %v3489 = vadd.f32 0.0, %v3488
      %v3490 = vpop.f32.mrf.mxu0
      %v3491 = vpop.f32.mrf.mxu0
      %v3492 = vadd.f32 0.0, %v3491
      %v3493 = vpop.f32.mrf.mxu0
      %3494 = vmatprep.mubr.bf16.mxu0 0
      %3495 = vmatmul.mubr.bf16.gmra.mxu0 %v3311
      %v3496 = vpop.f32.mrf.mxu0
      %v3497 = vadd.f32 0.0, %v3496
      %v3498 = vpop.f32.mrf.mxu0
      %v3499 = vpop.f32.mrf.mxu0
      %v3500 = vadd.f32 0.0, %v3499
      %v3501 = vpop.f32.mrf.mxu0
      %3502 = vmatprep.mubr.bf16.mxu0 0
      %3503 = vmatmul.mubr.bf16.gmra.mxu0 %v3312
      %v3504 = vpop.f32.mrf.mxu0
      %v3505 = vadd.f32 0.0, %v3504
      %v3506 = vpop.f32.mrf.mxu0
      %v3507 = vpop.f32.mrf.mxu0
      %v3508 = vadd.f32 0.0, %v3507
      %v3509 = vpop.f32.mrf.mxu0
      %3510 = vmatprep.mubr.bf16.mxu0 0
      %3511 = vmatmul.mubr.bf16.gmra.mxu0 %v3313
      %v3512 = vpop.f32.mrf.mxu0
      %v3513 = vadd.f32 0.0, %v3512
      %v3514 = vpop.f32.mrf.mxu0
      %v3515 = vpop.f32.mrf.mxu0
      %v3516 = vadd.f32 0.0, %v3515
      %v3517 = vpop.f32.mrf.mxu0
      %3518 = vmatprep.mubr.bf16.mxu0 0
      %3519 = vmatmul.mubr.bf16.gmra.mxu0 %v3314
      %v3520 = vpop.f32.mrf.mxu0
      %v3521 = vadd.f32 0.0, %v3520
      %v3522 = vpop.f32.mrf.mxu0
      %v3523 = vpop.f32.mrf.mxu0
      %v3524 = vadd.f32 0.0, %v3523
      %v3525 = vpop.f32.mrf.mxu0
      %3526 = vmatprep.mubr.bf16.mxu0 0
      %3527 = vmatmul.mubr.bf16.gmra.mxu0 %v3315
      %v3528 = vpop.f32.mrf.mxu0
      %v3529 = vadd.f32 0.0, %v3528
      %v3530 = vpop.f32.mrf.mxu0
      %v3531 = vpop.f32.mrf.mxu0
      %v3532 = vadd.f32 0.0, %v3531
      %v3533 = vpop.f32.mrf.mxu0
      %3534 = vmatprep.mubr.bf16.mxu0 0
      %3535 = vmatmul.mubr.bf16.gmra.mxu0 %v3316
      %v3536 = vpop.f32.mrf.mxu0
      %v3537 = vadd.f32 0.0, %v3536
      %v3538 = vpop.f32.mrf.mxu0
      %v3539 = vpop.f32.mrf.mxu0
      %v3540 = vadd.f32 0.0, %v3539
      %v3541 = vpop.f32.mrf.mxu0
      %3542 = vdwg.mxu0
      %v3543 = vld [vmem:[#allocation3] sm:$0xff]
      %v3544 = vld [vmem:[#allocation3 + $0x8] sm:$0xff]
      %v3545 = vld [vmem:[#allocation3 + $0x10] sm:$0xff]
      %v3546 = vld [vmem:[#allocation3 + $0x18] sm:$0xff]
      %v3547 = vld [vmem:[#allocation3 + $0x20] sm:$0xff]
      %v3548 = vld [vmem:[#allocation3 + $0x28] sm:$0xff]
      %v3549 = vld [vmem:[#allocation3 + $0x30] sm:$0xff]
      %v3550 = vld [vmem:[#allocation3 + $0x38] sm:$0xff]
      %v3551 = vld [vmem:[#allocation3 + $0x40] sm:$0xff]
      %v3552 = vld [vmem:[#allocation3 + $0x48] sm:$0xff]
      %v3553 = vld [vmem:[#allocation3 + $0x50] sm:$0xff]
      %v3554 = vld [vmem:[#allocation3 + $0x58] sm:$0xff]
      %v3555 = vld [vmem:[#allocation3 + $0x60] sm:$0xff]
      %v3556 = vld [vmem:[#allocation3 + $0x68] sm:$0xff]
      %v3557 = vld [vmem:[#allocation3 + $0x70] sm:$0xff]
      %v3558 = vld [vmem:[#allocation3 + $0x78] sm:$0xff]
      %v3559 = vld [vmem:[#allocation3 + $0x80] sm:$0xff]
      %v3560 = vld [vmem:[#allocation3 + $0x88] sm:$0xff]
      %v3561 = vld [vmem:[#allocation3 + $0x90] sm:$0xff]
      %v3562 = vld [vmem:[#allocation3 + $0x98] sm:$0xff]
      %v3563 = vld [vmem:[#allocation3 + $0xa0] sm:$0xff]
      %v3564 = vld [vmem:[#allocation3 + $0xa8] sm:$0xff]
      %v3565 = vld [vmem:[#allocation3 + $0xb0] sm:$0xff]
      %v3566 = vld [vmem:[#allocation3 + $0xb8] sm:$0xff]
      %v3567 = vld [vmem:[#allocation3 + $0xc0] sm:$0xff]
      %v3568 = vld [vmem:[#allocation3 + $0xc8] sm:$0xff]
      %v3569 = vld [vmem:[#allocation3 + $0xd0] sm:$0xff]
      %v3570 = vld [vmem:[#allocation3 + $0xd8] sm:$0xff]
      %v3571 = vld [vmem:[#allocation3 + $0xe0] sm:$0xff]
      %v3572 = vld [vmem:[#allocation3 + $0xe8] sm:$0xff]
      %v3573 = vld [vmem:[#allocation3 + $0xf0] sm:$0xff]
      %v3574 = vld [vmem:[#allocation3 + $0xf8] sm:$0xff]
      %v3575 = vadd.f32 %v3543, %v3417
      %v3576 = vadd.f32 %v3544, %v3420
      %v3577 = vadd.f32 %v3545, %v3425
      %v3578 = vadd.f32 %v3546, %v3428
      %v3579 = vadd.f32 %v3547, %v3433
      %v3580 = vadd.f32 %v3548, %v3436
      %v3581 = vadd.f32 %v3549, %v3441
      %v3582 = vadd.f32 %v3550, %v3444
      %v3583 = vadd.f32 %v3551, %v3449
      %v3584 = vadd.f32 %v3552, %v3452
      %v3585 = vadd.f32 %v3553, %v3457
      %v3586 = vadd.f32 %v3554, %v3460
      %v3587 = vadd.f32 %v3555, %v3465
      %v3588 = vadd.f32 %v3556, %v3468
      %v3589 = vadd.f32 %v3557, %v3473
      %v3590 = vadd.f32 %v3558, %v3476
      %v3591 = vadd.f32 %v3559, %v3481
      %v3592 = vadd.f32 %v3560, %v3484
      %v3593 = vadd.f32 %v3561, %v3489
      %v3594 = vadd.f32 %v3562, %v3492
      %v3595 = vadd.f32 %v3563, %v3497
      %v3596 = vadd.f32 %v3564, %v3500
      %v3597 = vadd.f32 %v3565, %v3505
      %v3598 = vadd.f32 %v3566, %v3508
      %v3599 = vadd.f32 %v3567, %v3513
      %v3600 = vadd.f32 %v3568, %v3516
      %v3601 = vadd.f32 %v3569, %v3521
      %v3602 = vadd.f32 %v3570, %v3524
      %v3603 = vadd.f32 %v3571, %v3529
      %v3604 = vadd.f32 %v3572, %v3532
      %v3605 = vadd.f32 %v3573, %v3537
      %v3606 = vadd.f32 %v3574, %v3540
      %3607 = vst [vmem:[#allocation3] sm:$0xff] %v3575
      %3608 = vst [vmem:[#allocation3 + $0x8] sm:$0xff] %v3576
      %3609 = vst [vmem:[#allocation3 + $0x10] sm:$0xff] %v3577
      %3610 = vst [vmem:[#allocation3 + $0x18] sm:$0xff] %v3578
      %3611 = vst [vmem:[#allocation3 + $0x20] sm:$0xff] %v3579
      %3612 = vst [vmem:[#allocation3 + $0x28] sm:$0xff] %v3580
      %3613 = vst [vmem:[#allocation3 + $0x30] sm:$0xff] %v3581
      %3614 = vst [vmem:[#allocation3 + $0x38] sm:$0xff] %v3582
      %3615 = vst [vmem:[#allocation3 + $0x40] sm:$0xff] %v3583
      %3616 = vst [vmem:[#allocation3 + $0x48] sm:$0xff] %v3584
      %3617 = vst [vmem:[#allocation3 + $0x50] sm:$0xff] %v3585
      %3618 = vst [vmem:[#allocation3 + $0x58] sm:$0xff] %v3586
      %3619 = vst [vmem:[#allocation3 + $0x60] sm:$0xff] %v3587
      %3620 = vst [vmem:[#allocation3 + $0x68] sm:$0xff] %v3588
      %3621 = vst [vmem:[#allocation3 + $0x70] sm:$0xff] %v3589
      %3622 = vst [vmem:[#allocation3 + $0x78] sm:$0xff] %v3590
      %3623 = vst [vmem:[#allocation3 + $0x80] sm:$0xff] %v3591
      %3624 = vst [vmem:[#allocation3 + $0x88] sm:$0xff] %v3592
      %3625 = vst [vmem:[#allocation3 + $0x90] sm:$0xff] %v3593
      %3626 = vst [vmem:[#allocation3 + $0x98] sm:$0xff] %v3594
      %3627 = vst [vmem:[#allocation3 + $0xa0] sm:$0xff] %v3595
      %3628 = vst [vmem:[#allocation3 + $0xa8] sm:$0xff] %v3596
      %3629 = vst [vmem:[#allocation3 + $0xb0] sm:$0xff] %v3597
      %3630 = vst [vmem:[#allocation3 + $0xb8] sm:$0xff] %v3598
      %3631 = vst [vmem:[#allocation3 + $0xc0] sm:$0xff] %v3599
      %3632 = vst [vmem:[#allocation3 + $0xc8] sm:$0xff] %v3600
      %3633 = vst [vmem:[#allocation3 + $0xd0] sm:$0xff] %v3601
      %3634 = vst [vmem:[#allocation3 + $0xd8] sm:$0xff] %v3602
      %3635 = vst [vmem:[#allocation3 + $0xe0] sm:$0xff] %v3603
      %3636 = vst [vmem:[#allocation3 + $0xe8] sm:$0xff] %v3604
      %3637 = vst [vmem:[#allocation3 + $0xf0] sm:$0xff] %v3605
      %3638 = vst [vmem:[#allocation3 + $0xf8] sm:$0xff] %v3606
      %v3639 = vld [vmem:[#allocation3] sm:$0xff]
      %v3640 = vld [vmem:[#allocation3 + $0x8] sm:$0xff]
      %v3641 = vld [vmem:[#allocation3 + $0x10] sm:$0xff]
      %v3642 = vld [vmem:[#allocation3 + $0x18] sm:$0xff]
      %v3643 = vld [vmem:[#allocation3 + $0x20] sm:$0xff]
      %v3644 = vld [vmem:[#allocation3 + $0x28] sm:$0xff]
      %v3645 = vld [vmem:[#allocation3 + $0x30] sm:$0xff]
      %v3646 = vld [vmem:[#allocation3 + $0x38] sm:$0xff]
      %v3647 = vld [vmem:[#allocation3 + $0x40] sm:$0xff]
      %v3648 = vld [vmem:[#allocation3 + $0x48] sm:$0xff]
      %v3649 = vld [vmem:[#allocation3 + $0x50] sm:$0xff]
      %v3650 = vld [vmem:[#allocation3 + $0x58] sm:$0xff]
      %v3651 = vld [vmem:[#allocation3 + $0x60] sm:$0xff]
      %v3652 = vld [vmem:[#allocation3 + $0x68] sm:$0xff]
      %v3653 = vld [vmem:[#allocation3 + $0x70] sm:$0xff]
      %v3654 = vld [vmem:[#allocation3 + $0x78] sm:$0xff]
      %v3655 = vld [vmem:[#allocation3 + $0x80] sm:$0xff]
      %v3656 = vld [vmem:[#allocation3 + $0x88] sm:$0xff]
      %v3657 = vld [vmem:[#allocation3 + $0x90] sm:$0xff]
      %v3658 = vld [vmem:[#allocation3 + $0x98] sm:$0xff]
      %v3659 = vld [vmem:[#allocation3 + $0xa0] sm:$0xff]
      %v3660 = vld [vmem:[#allocation3 + $0xa8] sm:$0xff]
      %v3661 = vld [vmem:[#allocation3 + $0xb0] sm:$0xff]
      %v3662 = vld [vmem:[#allocation3 + $0xb8] sm:$0xff]
      %v3663 = vld [vmem:[#allocation3 + $0xc0] sm:$0xff]
      %v3664 = vld [vmem:[#allocation3 + $0xc8] sm:$0xff]
      %v3665 = vld [vmem:[#allocation3 + $0xd0] sm:$0xff]
      %v3666 = vld [vmem:[#allocation3 + $0xd8] sm:$0xff]
      %v3667 = vld [vmem:[#allocation3 + $0xe0] sm:$0xff]
      %v3668 = vld [vmem:[#allocation3 + $0xe8] sm:$0xff]
      %v3669 = vld [vmem:[#allocation3 + $0xf0] sm:$0xff]
      %v3670 = vld [vmem:[#allocation3 + $0xf8] sm:$0xff]
      %v3671 = vpack.c.bf16 %v3640, %v3639
      %v3672 = vpack.c.bf16 %v3642, %v3641
      %v3673 = vpack.c.bf16 %v3644, %v3643
      %v3674 = vpack.c.bf16 %v3646, %v3645
      %v3675 = vpack.c.bf16 %v3648, %v3647
      %v3676 = vpack.c.bf16 %v3650, %v3649
      %v3677 = vpack.c.bf16 %v3652, %v3651
      %v3678 = vpack.c.bf16 %v3654, %v3653
      %v3679 = vpack.c.bf16 %v3656, %v3655
      %v3680 = vpack.c.bf16 %v3658, %v3657
      %v3681 = vpack.c.bf16 %v3660, %v3659
      %v3682 = vpack.c.bf16 %v3662, %v3661
      %v3683 = vpack.c.bf16 %v3664, %v3663
      %v3684 = vpack.c.bf16 %v3666, %v3665
      %v3685 = vpack.c.bf16 %v3668, %v3667
      %v3686 = vpack.c.bf16 %v3670, %v3669
      %v3703 = vunpack.c.l.b16 %v3671
      %v3704 = vunpack.c.h.b16 %v3671
      %v3705 = vunpack.c.l.b16 %v3672
      %v3706 = vunpack.c.h.b16 %v3672
      %v3707 = vunpack.c.l.b16 %v3673
      %v3708 = vunpack.c.h.b16 %v3673
      %v3709 = vunpack.c.l.b16 %v3674
      %v3710 = vunpack.c.h.b16 %v3674
      %v3711 = vunpack.c.l.b16 %v3675
      %v3712 = vunpack.c.h.b16 %v3675
      %v3713 = vunpack.c.l.b16 %v3676
      %v3714 = vunpack.c.h.b16 %v3676
      %v3715 = vunpack.c.l.b16 %v3677
      %v3716 = vunpack.c.h.b16 %v3677
      %v3717 = vunpack.c.l.b16 %v3678
      %v3718 = vunpack.c.h.b16 %v3678
      %v3719 = vunpack.c.l.b16 %v3679
      %v3720 = vunpack.c.h.b16 %v3679
      %v3721 = vunpack.c.l.b16 %v3680
      %v3722 = vunpack.c.h.b16 %v3680
      %v3723 = vunpack.c.l.b16 %v3681
      %v3724 = vunpack.c.h.b16 %v3681
      %v3725 = vunpack.c.l.b16 %v3682
      %v3726 = vunpack.c.h.b16 %v3682
      %v3727 = vunpack.c.l.b16 %v3683
      %v3728 = vunpack.c.h.b16 %v3683
      %v3729 = vunpack.c.l.b16 %v3684
      %v3730 = vunpack.c.h.b16 %v3684
      %v3731 = vunpack.c.l.b16 %v3685
      %v3732 = vunpack.c.h.b16 %v3685
      %v3733 = vunpack.c.l.b16 %v3686
      %v3734 = vunpack.c.h.b16 %v3686
      %v3735 = vpack.c.b16 %v3703, %v3703
      %v3736 = vpack.c.b16 %v3704, %v3704
      %v3737 = vpack.c.b16 %v3705, %v3705
      %v3738 = vpack.c.b16 %v3706, %v3706
      %v3739 = vpack.c.b16 %v3707, %v3707
      %v3740 = vpack.c.b16 %v3708, %v3708
      %v3741 = vpack.c.b16 %v3709, %v3709
      %v3742 = vpack.c.b16 %v3710, %v3710
      %v3743 = vpack.c.b16 %v3711, %v3711
      %v3744 = vpack.c.b16 %v3712, %v3712
      %v3745 = vpack.c.b16 %v3713, %v3713
      %v3746 = vpack.c.b16 %v3714, %v3714
      %v3747 = vpack.c.b16 %v3715, %v3715
      %v3748 = vpack.c.b16 %v3716, %v3716
      %v3749 = vpack.c.b16 %v3717, %v3717
      %v3750 = vpack.c.b16 %v3718, %v3718
      %v3751 = vpack.c.b16 %v3719, %v3719
      %v3752 = vpack.c.b16 %v3720, %v3720
      %v3753 = vpack.c.b16 %v3721, %v3721
      %v3754 = vpack.c.b16 %v3722, %v3722
      %v3755 = vpack.c.b16 %v3723, %v3723
      %v3756 = vpack.c.b16 %v3724, %v3724
      %v3757 = vpack.c.b16 %v3725, %v3725
      %v3758 = vpack.c.b16 %v3726, %v3726
      %v3759 = vpack.c.b16 %v3727, %v3727
      %v3760 = vpack.c.b16 %v3728, %v3728
      %v3761 = vpack.c.b16 %v3729, %v3729
      %v3762 = vpack.c.b16 %v3730, %v3730
      %v3763 = vpack.c.b16 %v3731, %v3731
      %v3764 = vpack.c.b16 %v3732, %v3732
      %v3765 = vpack.c.b16 %v3733, %v3733
      %v3766 = vpack.c.b16 %v3734, %v3734
      %3799 = vst [vmem:[%s201] sm:$0xf] %v3735
      %3800 = vst [vmem:[%s201 + $0x4] sm:$0xf] %v3736
      %3801 = vst [vmem:[%s201 + $0x8] sm:$0xf] %v3737
      %3802 = vst [vmem:[%s201 + $0xc] sm:$0xf] %v3738
      %3803 = vst [vmem:[%s201 + $0x10] sm:$0xf] %v3739
      %3804 = vst [vmem:[%s201 + $0x14] sm:$0xf] %v3740
      %3805 = vst [vmem:[%s201 + $0x18] sm:$0xf] %v3741
      %3806 = vst [vmem:[%s201 + $0x1c] sm:$0xf] %v3742
      %3807 = vst [vmem:[%s201 + $0x20] sm:$0xf] %v3743
      %3808 = vst [vmem:[%s201 + $0x24] sm:$0xf] %v3744
      %3809 = vst [vmem:[%s201 + $0x28] sm:$0xf] %v3745
      %3810 = vst [vmem:[%s201 + $0x2c] sm:$0xf] %v3746
      %3811 = vst [vmem:[%s201 + $0x30] sm:$0xf] %v3747
      %3812 = vst [vmem:[%s201 + $0x34] sm:$0xf] %v3748
      %3813 = vst [vmem:[%s201 + $0x38] sm:$0xf] %v3749
      %3814 = vst [vmem:[%s201 + $0x3c] sm:$0xf] %v3750
      %3815 = vst [vmem:[%s201 + $0x40] sm:$0xf] %v3751
      %3816 = vst [vmem:[%s201 + $0x44] sm:$0xf] %v3752
      %3817 = vst [vmem:[%s201 + $0x48] sm:$0xf] %v3753
      %3818 = vst [vmem:[%s201 + $0x4c] sm:$0xf] %v3754
      %3819 = vst [vmem:[%s201 + $0x50] sm:$0xf] %v3755
      %3820 = vst [vmem:[%s201 + $0x54] sm:$0xf] %v3756
      %3821 = vst [vmem:[%s201 + $0x58] sm:$0xf] %v3757
      %3822 = vst [vmem:[%s201 + $0x5c] sm:$0xf] %v3758
      %3823 = vst [vmem:[%s201 + $0x60] sm:$0xf] %v3759
      %3824 = vst [vmem:[%s201 + $0x64] sm:$0xf] %v3760
      %3825 = vst [vmem:[%s201 + $0x68] sm:$0xf] %v3761
      %3826 = vst [vmem:[%s201 + $0x6c] sm:$0xf] %v3762
      %3827 = vst [vmem:[%s201 + $0x70] sm:$0xf] %v3763
      %3828 = vst [vmem:[%s201 + $0x74] sm:$0xf] %v3764
      %3829 = vst [vmem:[%s201 + $0x78] sm:$0xf] %v3765
      %3830 = vst [vmem:[%s201 + $0x7c] sm:$0xf] %v3766
      %v3831 = vld [vmem:[#allocation4] sm:$0x1]
      %v3832 = vadd.f32 %v3639, %v3640
      %v3833 = vadd.f32 %v3832, %v3641
      %v3834 = vadd.f32 %v3833, %v3642
      %v3835 = vadd.f32 %v3834, %v3643
      %v3836 = vadd.f32 %v3835, %v3644
      %v3837 = vadd.f32 %v3836, %v3645
      %v3838 = vadd.f32 %v3837, %v3646
      %v3839 = vadd.f32 %v3838, %v3647
      %v3840 = vadd.f32 %v3839, %v3648
      %v3841 = vadd.f32 %v3840, %v3649
      %v3842 = vadd.f32 %v3841, %v3650
      %v3843 = vadd.f32 %v3842, %v3651
      %v3844 = vadd.f32 %v3843, %v3652
      %v3845 = vadd.f32 %v3844, %v3653
      %v3846 = vadd.f32 %v3845, %v3654
      %v3847 = vadd.f32 %v3846, %v3655
      %v3848 = vadd.f32 %v3847, %v3656
      %v3849 = vadd.f32 %v3848, %v3657
      %v3850 = vadd.f32 %v3849, %v3658
      %v3851 = vadd.f32 %v3850, %v3659
      %v3852 = vadd.f32 %v3851, %v3660
      %v3853 = vadd.f32 %v3852, %v3661
      %v3854 = vadd.f32 %v3853, %v3662
      %v3855 = vadd.f32 %v3854, %v3663
      %v3856 = vadd.f32 %v3855, %v3664
      %v3857 = vadd.f32 %v3856, %v3665
      %v3858 = vadd.f32 %v3857, %v3666
      %v3859 = vadd.f32 %v3858, %v3667
      %v3860 = vadd.f32 %v3859, %v3668
      %v3861 = vadd.f32 %v3860, %v3669
      %v3862 = vadd.f32 %v3861, %v3670
      %v3863 = vrot.slane %v3862, 4
      %v3864 = vadd.f32 %v3862, %v3863
      %v3865 = vrot.slane %v3864, 2
      %v3866 = vadd.f32 %v3864, %v3865
      %v3867 = vrot.slane %v3866, 1
      %v3868 = vadd.f32 %v3866, %v3867
      %v3869 = vadd.f32 %v3831, %v3868
      %3870 = vst [vmem:[#allocation4] sm:$0x1] %v3869
      %v3871 = vld [vmem:[#allocation5] sm:$0x1]
      %v3872 = vmul.f32 %v3639, %v3639
      %v3873 = vmul.f32 %v3640, %v3640
      %v3874 = vmul.f32 %v3641, %v3641
      %v3875 = vmul.f32 %v3642, %v3642
      %v3876 = vmul.f32 %v3643, %v3643
      %v3877 = vmul.f32 %v3644, %v3644
      %v3878 = vmul.f32 %v3645, %v3645
      %v3879 = vmul.f32 %v3646, %v3646
      %v3880 = vmul.f32 %v3647, %v3647
      %v3881 = vmul.f32 %v3648, %v3648
      %v3882 = vmul.f32 %v3649, %v3649
      %v3883 = vmul.f32 %v3650, %v3650
      %v3884 = vmul.f32 %v3651, %v3651
      %v3885 = vmul.f32 %v3652, %v3652
      %v3886 = vmul.f32 %v3653, %v3653
      %v3887 = vmul.f32 %v3654, %v3654
      %v3888 = vmul.f32 %v3655, %v3655
      %v3889 = vmul.f32 %v3656, %v3656
      %v3890 = vmul.f32 %v3657, %v3657
      %v3891 = vmul.f32 %v3658, %v3658
      %v3892 = vmul.f32 %v3659, %v3659
      %v3893 = vmul.f32 %v3660, %v3660
      %v3894 = vmul.f32 %v3661, %v3661
      %v3895 = vmul.f32 %v3662, %v3662
      %v3896 = vmul.f32 %v3663, %v3663
      %v3897 = vmul.f32 %v3664, %v3664
      %v3898 = vmul.f32 %v3665, %v3665
      %v3899 = vmul.f32 %v3666, %v3666
      %v3900 = vmul.f32 %v3667, %v3667
      %v3901 = vmul.f32 %v3668, %v3668
      %v3902 = vmul.f32 %v3669, %v3669
      %v3903 = vmul.f32 %v3670, %v3670
      %v3904 = vadd.f32 %v3872, %v3873
      %v3905 = vadd.f32 %v3904, %v3874
      %v3906 = vadd.f32 %v3905, %v3875
      %v3907 = vadd.f32 %v3906, %v3876
      %v3908 = vadd.f32 %v3907, %v3877
      %v3909 = vadd.f32 %v3908, %v3878
      %v3910 = vadd.f32 %v3909, %v3879
      %v3911 = vadd.f32 %v3910, %v3880
      %v3912 = vadd.f32 %v3911, %v3881
      %v3913 = vadd.f32 %v3912, %v3882
      %v3914 = vadd.f32 %v3913, %v3883
      %v3915 = vadd.f32 %v3914, %v3884
      %v3916 = vadd.f32 %v3915, %v3885
      %v3917 = vadd.f32 %v3916, %v3886
      %v3918 = vadd.f32 %v3917, %v3887
      %v3919 = vadd.f32 %v3918, %v3888
      %v3920 = vadd.f32 %v3919, %v3889
      %v3921 = vadd.f32 %v3920, %v3890
      %v3922 = vadd.f32 %v3921, %v3891
      %v3923 = vadd.f32 %v3922, %v3892
      %v3924 = vadd.f32 %v3923, %v3893
      %v3925 = vadd.f32 %v3924, %v3894
      %v3926 = vadd.f32 %v3925, %v3895
      %v3927 = vadd.f32 %v3926, %v3896
      %v3928 = vadd.f32 %v3927, %v3897
      %v3929 = vadd.f32 %v3928, %v3898
      %v3930 = vadd.f32 %v3929, %v3899
      %v3931 = vadd.f32 %v3930, %v3900
      %v3932 = vadd.f32 %v3931, %v3901
      %v3933 = vadd.f32 %v3932, %v3902
      %v3934 = vadd.f32 %v3933, %v3903
      %v3935 = vrot.slane %v3934, 4
      %v3936 = vadd.f32 %v3934, %v3935
      %v3937 = vrot.slane %v3936, 2
      %v3938 = vadd.f32 %v3936, %v3937
      %v3939 = vrot.slane %v3938, 1
      %v3940 = vadd.f32 %v3938, %v3939
      %v3941 = vadd.f32 %v3871, %v3940
      %3942 = vst [vmem:[#allocation5] sm:$0x1] %v3941
      // Predicated region
      $region33: #{conv_block_forward.3} parent=27 // pred_check
        %p3943 = pneg %p208
      $region34: #{conv_block_forward.3} parent=27 // pred_check_branch
        %3945 = sbr.rel (%p3943) target = $region36
      $region35: #{conv_block_forward.3} parent=27 // pred_region
        %v3946 = vld [vmem:[#allocation4] sm:$0x1]
        %3947 = vst [vmem:[%s206] sm:$0x1] %v3946
        %v3948 = vld [vmem:[#allocation5] sm:$0x1]
        %3949 = vst [vmem:[%s206 + $0x1] sm:$0x1] %v3948
      $region36: #{conv_block_forward.3} parent=27 // pred_fallthru
        _
      %s3950 = smul.u32 16, %s20
      %p3951 = scmp.lt.s32.totalorder %s19, 1
      %s3952 = scalar_select %p3951, %s19, 1
      %p3953 = scmp.lt.s32.totalorder %s3950, 15
      %s3954 = scalar_select %p3953, %s3950, 15
      %s3955 = smul.addr %s3954, 2
      %s3956 = smul.addr %s3952, 32
      %s3957 = sadd.s32 %s3955, %s3956
      %s3958 = smul.addr %s3957, 4
      %s3959 = scalar_lea.vmem %s2, %s3958
      %p3960 = scmp.lt.s32.totalorder %s19, 1
      %s3961 = scalar_select %p3960, %s19, 1
      %s3962 = smul.addr %s3961, 2
      %s3963 = scalar_lea.vmem %s3, %s3962
      // Predicated region
      $region37: #{conv_block_forward.3} parent=27 // pred_check
        %p3964 = pneg %p94
      $region38: #{conv_block_forward.3} parent=27 // pred_check_branch
        %3966 = sbr.rel (%p3964) target = $region40
      $region39: #{conv_block_forward.3} parent=27 // pred_region
        %s3967 = smul.u32 16, %s20
      $region40: #{conv_block_forward.3} parent=27 // pred_fallthru
        _
      // Predicated region
      $region41: #{conv_block_forward.3} parent=27 // pred_check
        %p3968 = pneg %p120
      $region42: #{conv_block_forward.3} parent=27 // pred_check_branch
        %3970 = sbr.rel (%p3968) target = $region44
      $region43: #{conv_block_forward.3} parent=27 // pred_region
        _
      $region44: #{conv_block_forward.3} parent=27 // pred_fallthru
        _
    $region28: #{conv_block_forward.3} parent=5 // pred_fallthru
      _
    %p3971 = scmp.le.s32.totalorder 2, %s10
    // Predicated region
    $region45: #{conv_block_forward.3} parent=5 // pred_check
      %p3972 = pneg %p3971
    $region46: #{conv_block_forward.3} parent=5 // pred_check_branch
      %3974 = sbr.rel (%p3972) target = $region48
    $region47: #{conv_block_forward.3} parent=5 // pred_region
      %s3975 = ssub.s32 %s10, 2
      // Predicated region
      $region49: #{conv_block_forward.3} parent=47 // pred_check
        %p3976 = pneg %p100
      $region50: #{conv_block_forward.3} parent=47 // pred_check_branch
        %3978 = sbr.rel (%p3976) target = $region52
      $region51: #{conv_block_forward.3} parent=47 // pred_region
        %s3979 = smul.u32 16, %s22
        %p3980 = scmp.lt.s32.totalorder %s21, 1
        %s3981 = scalar_select %p3980, %s21, 1
        %p3982 = scmp.lt.s32.totalorder %s3979, 15
        %s3983 = scalar_select %p3982, %s3979, 15
        %s3984 = smul.addr %s3983, 2
        %s3985 = smul.addr %s3981, 32
        %s3986 = sadd.s32 %s3984, %s3985
        %s3987 = smul.addr %s3986, 4
        %s3988 = scalar_lea.vmem %s2, %s3987
      $region52: #{conv_block_forward.3} parent=47 // pred_fallthru
        _
      // Predicated region
      $region53: #{conv_block_forward.3} parent=47 // pred_check
        %p3989 = pneg %p126
      $region54: #{conv_block_forward.3} parent=47 // pred_check_branch
        %3991 = sbr.rel (%p3989) target = $region56
      $region55: #{conv_block_forward.3} parent=47 // pred_region
        %p3992 = scmp.lt.s32.totalorder %s21, 1
        %s3993 = scalar_select %p3992, %s21, 1
        %s3994 = smul.addr %s3993, 2
        %s3995 = scalar_lea.vmem %s3, %s3994
      $region56: #{conv_block_forward.3} parent=47 // pred_fallthru
        _
    $region48: #{conv_block_forward.3} parent=5 // pred_fallthru
      _
  $region6: #{conv_block_forward.3} parent=0 // loop_footer
    %s14 = sadd.s32 1, %s10
  $region7: #{conv_block_forward.3} parent=0 // loop_footer_branch
    %9 = sbr.rel target = $region3
  $region8: #{conv_block_forward.3} parent=0 // loop_exit
    _

// kernel: conv_block_forward.5
$region0: #{conv_block_forward.5}
  #allocation0 [shape = 'u32[]', space=smem, size = 0x4, offset = 0x4, fixed_abs, tag = 'smem constant byte address 0x4 - core index']
  #allocation1 [shape = 'u32[144,128]{1,0:T(1,128)}', space=vmem, size = 0x12000, scoped, tag = 'internal scratch']
  %s0 = inlined_call_operand.vmem [shape: bf16[2,16,16,128], index: 0, kind: input, shape index: {}]
  %s1 = inlined_call_operand.vmem [shape: bf16[2,16,16,128], index: 1, kind: input, shape index: {}]
  %s2 = inlined_call_operand.vmem [shape: f32[1,128], index: 2, kind: input, shape index: {}]
  %s3 = inlined_call_operand.vmem [shape: f32[1,128], index: 3, kind: input, shape index: {}]
  %s4 = inlined_call_operand.vmem [shape: f32[1,128], index: 4, kind: input, shape index: {}]
  %s5 = inlined_call_operand.vmem [shape: f32[1,128], index: 5, kind: input, shape index: {}]
  %s6 = inlined_call_operand.vmem [shape: f32[2,16,16,128], index: 6, kind: output, shape index: {}]
  %s7 = sld [smem:[#allocation0]]
  $region57: #{conv_block_forward.5} parent=0
    _
  %s9 = ssub.s32 1, %s7
  %s10 = scalar_select 0, %s9, %s7
  loop: start=0, step=1, limit=4
  $region2: #{conv_block_forward.5} parent=0 // loop_pre_header
    _
  $region3: #{conv_block_forward.5} parent=0 // loop_header
    %s12 = sphi 0, %s16
    %p13 = scmp.ge.s32.totalorder %s12, 4
    %s19 = sphi 0, %s31
    %s20 = sphi 0, %s27
    %s21 = sphi 0, %s19
    %s22 = sphi 0, %s20
    %s23 = sphi 0, %s21
    %s24 = sphi 0, %s22
    %s36 = sphi 0, %s38
    %s39 = sphi 0, %s36
    %s40 = sphi 0, %s39
    %s56 = sphi 0, %s40
    %s64 = sphi 0, %s66
    %s67 = sphi 0, %s64
    %s68 = sphi 0, %s67
    %s84 = sphi 0, %s68
    %s88 = sphi 0, %s88
    %s90 = sphi 0, %s88
    %s91 = sphi 0, %s90
    %s105 = sphi 0, %s91
    %s109 = sphi 0, %s109
    %s111 = sphi 0, %s109
    %s112 = sphi 0, %s111
    %s126 = sphi 0, %s112
    %s130 = sphi 0, %s130
    %s132 = sphi 0, %s130
    %s133 = sphi 0, %s132
    %s147 = sphi 0, %s133
    %s151 = sphi 0, %s151
    %s153 = sphi 0, %s151
    %s154 = sphi 0, %s153
    %s168 = sphi 0, %s154
    %s176 = sphi 0, %s178
    %s179 = sphi 0, %s176
    %s180 = sphi 0, %s179
    %s196 = sphi 0, %s180
  $region4: #{conv_block_forward.5} parent=0 // loop_header_branch
    %15 = sbr.rel (%p13) target = $region8
  $region5: #{conv_block_forward.5} parent=0 // loop_body
    %s17 = ssub.s32 %s12, 1
    %s18 = ssub.s32 %s12, 2
    %s25 = sadd.s32 1, %s20
    %p26 = scmp.ge.s32.totalorder %s25, 1
    %s27 = scalar_select %p26, 0, %s25
    %s28 = sadd.s32 1, %s19
    %s29 = scalar_select %p26, %s28, %s19
    %p30 = scmp.ge.s32.totalorder %s29, 2
    %s31 = scalar_select %p30, 0, %s29
    %s32 = ssub.s32 %s19, %s31
    %s33 = ssub.s32 %s20, %s27
    %s34 = sor.u32 %s32, %s33
    %p35 = scmp.eq.s32.totalorder %s34, 0
    %s37 = sadd.s32 %s36, 1
    %s38 = scalar_select %p35, %s36, %s37
    %p41 = pneg %p35
    %p42 = scmp.eq.s32.totalorder %s12, 1
    %p43 = por %p41, %p42
    %p44 = scmp.ne.s32.totalorder %s36, %s39
    %p45 = scmp.eq.s32.totalorder %s12, 0
    %p46 = por %p44, %p45
    %p47 = scmp.ne.s32.totalorder %s36, %s39
    %p48 = scmp.eq.s32.totalorder %s17, 1
    %p49 = por %p47, %p48
    %p50 = scmp.ne.s32.totalorder %s39, %s40
    %p51 = scmp.eq.s32.totalorder %s17, 0
    %p52 = por %p50, %p51
    %p53 = scmp.ne.s32.totalorder %s39, %s40
    %p54 = scmp.eq.s32.totalorder %s18, 1
    %p55 = por %p53, %p54
    %p57 = scmp.ne.s32.totalorder %s40, %s56
    %p58 = scmp.eq.s32.totalorder %s18, 0
    %p59 = por %p57, %p58
    %s60 = ssub.s32 %s19, %s31
    %s61 = ssub.s32 %s20, %s27
    %s62 = sor.u32 %s60, %s61
    %p63 = scmp.eq.s32.totalorder %s62, 0
    %s65 = sadd.s32 %s64, 1
    %s66 = scalar_select %p63, %s64, %s65
    %p69 = pneg %p63
    %p70 = scmp.eq.s32.totalorder %s12, 1
    %p71 = por %p69, %p70
    %p72 = scmp.ne.s32.totalorder %s64, %s67
    %p73 = scmp.eq.s32.totalorder %s12, 0
    %p74 = por %p72, %p73
    %p75 = scmp.ne.s32.totalorder %s64, %s67
    %p76 = scmp.eq.s32.totalorder %s17, 1
    %p77 = por %p75, %p76
    %p78 = scmp.ne.s32.totalorder %s67, %s68
    %p79 = scmp.eq.s32.totalorder %s17, 0
    %p80 = por %p78, %p79
    %p81 = scmp.ne.s32.totalorder %s67, %s68
    %p82 = scmp.eq.s32.totalorder %s18, 1
    %p83 = por %p81, %p82
    %p85 = scmp.ne.s32.totalorder %s68, %s84
    %p86 = scmp.eq.s32.totalorder %s18, 0
    %p87 = por %p85, %p86
    %s89 = sadd.s32 %s88, 1
    %p92 = scmp.eq.s32.totalorder %s12, 1
    %p93 = scmp.ne.s32.totalorder %s88, %s90
    %p94 = scmp.eq.s32.totalorder %s12, 0
    %p95 = por %p93, %p94
    %p96 = scmp.ne.s32.totalorder %s88, %s90
    %p97 = scmp.eq.s32.totalorder %s17, 1
    %p98 = por %p96, %p97
    %p99 = scmp.ne.s32.totalorder %s90, %s91
    %p100 = scmp.eq.s32.totalorder %s17, 0
    %p101 = por %p99, %p100
    %p102 = scmp.ne.s32.totalorder %s90, %s91
    %p103 = scmp.eq.s32.totalorder %s18, 1
    %p104 = por %p102, %p103
    %p106 = scmp.ne.s32.totalorder %s91, %s105
    %p107 = scmp.eq.s32.totalorder %s18, 0
    %p108 = por %p106, %p107
    %s110 = sadd.s32 %s109, 1
    %p113 = scmp.eq.s32.totalorder %s12, 1
    %p114 = scmp.ne.s32.totalorder %s109, %s111
    %p115 = scmp.eq.s32.totalorder %s12, 0
    %p116 = por %p114, %p115
    %p117 = scmp.ne.s32.totalorder %s109, %s111
    %p118 = scmp.eq.s32.totalorder %s17, 1
    %p119 = por %p117, %p118
    %p120 = scmp.ne.s32.totalorder %s111, %s112
    %p121 = scmp.eq.s32.totalorder %s17, 0
    %p122 = por %p120, %p121
    %p123 = scmp.ne.s32.totalorder %s111, %s112
    %p124 = scmp.eq.s32.totalorder %s18, 1
    %p125 = por %p123, %p124
    %p127 = scmp.ne.s32.totalorder %s112, %s126
    %p128 = scmp.eq.s32.totalorder %s18, 0
    %p129 = por %p127, %p128
    %s131 = sadd.s32 %s130, 1
    %p134 = scmp.eq.s32.totalorder %s12, 1
    %p135 = scmp.ne.s32.totalorder %s130, %s132
    %p136 = scmp.eq.s32.totalorder %s12, 0
    %p137 = por %p135, %p136
    %p138 = scmp.ne.s32.totalorder %s130, %s132
    %p139 = scmp.eq.s32.totalorder %s17, 1
    %p140 = por %p138, %p139
    %p141 = scmp.ne.s32.totalorder %s132, %s133
    %p142 = scmp.eq.s32.totalorder %s17, 0
    %p143 = por %p141, %p142
    %p144 = scmp.ne.s32.totalorder %s132, %s133
    %p145 = scmp.eq.s32.totalorder %s18, 1
    %p146 = por %p144, %p145
    %p148 = scmp.ne.s32.totalorder %s133, %s147
    %p149 = scmp.eq.s32.totalorder %s18, 0
    %p150 = por %p148, %p149
    %s152 = sadd.s32 %s151, 1
    %p155 = scmp.eq.s32.totalorder %s12, 1
    %p156 = scmp.ne.s32.totalorder %s151, %s153
    %p157 = scmp.eq.s32.totalorder %s12, 0
    %p158 = por %p156, %p157
    %p159 = scmp.ne.s32.totalorder %s151, %s153
    %p160 = scmp.eq.s32.totalorder %s17, 1
    %p161 = por %p159, %p160
    %p162 = scmp.ne.s32.totalorder %s153, %s154
    %p163 = scmp.eq.s32.totalorder %s17, 0
    %p164 = por %p162, %p163
    %p165 = scmp.ne.s32.totalorder %s153, %s154
    %p166 = scmp.eq.s32.totalorder %s18, 1
    %p167 = por %p165, %p166
    %p169 = scmp.ne.s32.totalorder %s154, %s168
    %p170 = scmp.eq.s32.totalorder %s18, 0
    %p171 = por %p169, %p170
    %s172 = ssub.s32 %s19, %s31
    %s173 = ssub.s32 %s20, %s27
    %s174 = sor.u32 %s172, %s173
    %p175 = scmp.eq.s32.totalorder %s174, 0
    %s177 = sadd.s32 %s176, 1
    %s178 = scalar_select %p175, %s176, %s177
    %p181 = pneg %p175
    %p182 = scmp.eq.s32.totalorder %s12, 1
    %p183 = por %p181, %p182
    %p184 = scmp.ne.s32.totalorder %s176, %s179
    %p185 = scmp.eq.s32.totalorder %s12, 0
    %p186 = por %p184, %p185
    %p187 = scmp.ne.s32.totalorder %s176, %s179
    %p188 = scmp.eq.s32.totalorder %s17, 1
    %p189 = por %p187, %p188
    %p190 = scmp.ne.s32.totalorder %s179, %s180
    %p191 = scmp.eq.s32.totalorder %s17, 0
    %p192 = por %p190, %p191
    %p193 = scmp.ne.s32.totalorder %s179, %s180
    %p194 = scmp.eq.s32.totalorder %s18, 1
    %p195 = por %p193, %p194
    %p197 = scmp.ne.s32.totalorder %s180, %s196
    %p198 = scmp.eq.s32.totalorder %s18, 0
    %p199 = por %p197, %p198
    %p200 = scmp.le.s32.totalorder 1, %s12
    %p201 = scmp.lt.s32.totalorder %s12, 3
    %p202 = pnand %p200, %p201
    %p203 = pneg %p202
    // Predicated region
    $region9: #{conv_block_forward.5} parent=5 // pred_check
      _
    $region10: #{conv_block_forward.5} parent=5 // pred_check_branch
      %205 = sbr.rel (%p202) target = $region12
    $region11: #{conv_block_forward.5} parent=5 // pred_region
      %s206 = ssub.s32 %s12, 1
      // Predicated region
      $region13: #{conv_block_forward.5} parent=11 // pred_check
        %p207 = pneg %p101
      $region14: #{conv_block_forward.5} parent=11 // pred_check_branch
        %209 = sbr.rel (%p207) target = $region16
      $region15: #{conv_block_forward.5} parent=11 // pred_region
        _
      $region16: #{conv_block_forward.5} parent=11 // pred_fallthru
        _
      // Predicated region
      $region17: #{conv_block_forward.5} parent=11 // pred_check
        %p210 = pneg %p122
      $region18: #{conv_block_forward.5} parent=11 // pred_check_branch
        %212 = sbr.rel (%p210) target = $region20
      $region19: #{conv_block_forward.5} parent=11 // pred_region
        _
      $region20: #{conv_block_forward.5} parent=11 // pred_fallthru
        _
      // Predicated region
      $region21: #{conv_block_forward.5} parent=11 // pred_check
        %p213 = pneg %p143
      $region22: #{conv_block_forward.5} parent=11 // pred_check_branch
        %215 = sbr.rel (%p213) target = $region24
      $region23: #{conv_block_forward.5} parent=11 // pred_region
        _
      $region24: #{conv_block_forward.5} parent=11 // pred_fallthru
        _
      // Predicated region
      $region25: #{conv_block_forward.5} parent=11 // pred_check
        %p216 = pneg %p164
      $region26: #{conv_block_forward.5} parent=11 // pred_check_branch
        %218 = sbr.rel (%p216) target = $region28
      $region27: #{conv_block_forward.5} parent=11 // pred_region
        _
      $region28: #{conv_block_forward.5} parent=11 // pred_fallthru
        _
    $region12: #{conv_block_forward.5} parent=5 // pred_fallthru
      _
    %p219 = scmp.lt.s32.totalorder %s12, 2
    // Predicated region
    $region29: #{conv_block_forward.5} parent=5 // pred_check
      %p220 = pneg %p219
    $region30: #{conv_block_forward.5} parent=5 // pred_check_branch
      %222 = sbr.rel (%p220) target = $region32
    $region31: #{conv_block_forward.5} parent=5 // pred_region
      // Predicated region
      $region33: #{conv_block_forward.5} parent=31 // pred_check
        %p223 = pneg %p46
      $region34: #{conv_block_forward.5} parent=31 // pred_check_branch
        %225 = sbr.rel (%p223) target = $region36
      $region35: #{conv_block_forward.5} parent=31 // pred_region
        %s226 = smul.u32 16, %s20
        %p227 = scmp.lt.s32.totalorder %s19, 1
        %s228 = scalar_select %p227, %s19, 1
        %p229 = scmp.lt.s32.totalorder %s226, 15
        %s230 = scalar_select %p229, %s226, 15
        %s231 = smul.addr %s230, 2
        %s232 = smul.addr %s228, 32
        %s233 = sadd.s32 %s231, %s232
        %s234 = smul.addr %s233, 4
        %s235 = scalar_lea.vmem %s0, %s234
        %s236 = smul.u32 16, %s20
      $region36: #{conv_block_forward.5} parent=31 // pred_fallthru
        _
      // Predicated region
      $region37: #{conv_block_forward.5} parent=31 // pred_check
        %p237 = pneg %p74
      $region38: #{conv_block_forward.5} parent=31 // pred_check_branch
        %239 = sbr.rel (%p237) target = $region40
      $region39: #{conv_block_forward.5} parent=31 // pred_region
        %s240 = smul.u32 16, %s20
        %p241 = scmp.lt.s32.totalorder %s19, 1
        %s242 = scalar_select %p241, %s19, 1
        %p243 = scmp.lt.s32.totalorder %s240, 15
        %s244 = scalar_select %p243, %s240, 15
        %s245 = smul.addr %s244, 2
        %s246 = smul.addr %s242, 32
        %s247 = sadd.s32 %s245, %s246
        %s248 = smul.addr %s247, 4
        %s249 = scalar_lea.vmem %s1, %s248
        %s250 = smul.u32 16, %s20
      $region40: #{conv_block_forward.5} parent=31 // pred_fallthru
        _
    $region32: #{conv_block_forward.5} parent=5 // pred_fallthru
      _
    %p251 = scmp.le.s32.totalorder 1, %s12
    %p252 = scmp.lt.s32.totalorder %s12, 3
    %p253 = pnand %p251, %p252
    %p254 = pneg %p253
    // Predicated region
    $region41: #{conv_block_forward.5} parent=5 // pred_check
      _
    $region42: #{conv_block_forward.5} parent=5 // pred_check_branch
      %256 = sbr.rel (%p253) target = $region44
    $region43: #{conv_block_forward.5} parent=5 // pred_region
      %s257 = ssub.s32 %s12, 1
      %s258 = smul.u32 16, %s22
      %p259 = scmp.lt.s32.totalorder %s21, 1
      %s260 = scalar_select %p259, %s21, 1
      %p261 = scmp.lt.s32.totalorder %s258, 15
      %s262 = scalar_select %p261, %s258, 15
      %s263 = smul.addr %s262, 2
      %s264 = smul.addr %s260, 32
      %s265 = sadd.s32 %s263, %s264
      %s266 = smul.addr %s265, 4
      %s267 = scalar_lea.vmem %s0, %s266
      %p268 = pneg %p52
      %p269 = pneg %p49
      %s270 = smul.u32 16, %s22
      %p271 = scmp.lt.s32.totalorder %s21, 1
      %s272 = scalar_select %p271, %s21, 1
      %p273 = scmp.lt.s32.totalorder %s270, 15
      %s274 = scalar_select %p273, %s270, 15
      %s275 = smul.addr %s274, 2
      %s276 = smul.addr %s272, 32
      %s277 = sadd.s32 %s275, %s276
      %s278 = smul.addr %s277, 4
      %s279 = scalar_lea.vmem %s1, %s278
      %p280 = pneg %p80
      %p281 = pneg %p77
      %p282 = pneg %p101
      %p283 = pneg %p98
      %p284 = pneg %p122
      %p285 = pneg %p119
      %p286 = pneg %p143
      %p287 = pneg %p140
      %p288 = pneg %p164
      %p289 = pneg %p161
      %p290 = pneg %p192
      %p291 = pneg %p189
      %s292 = smul.u32 16, %s22
      %p293 = scmp.lt.s32.totalorder %s21, 1
      %s294 = scalar_select %p293, %s21, 1
      %p295 = scmp.lt.s32.totalorder %s292, 15
      %s296 = scalar_select %p295, %s292, 15
      %s297 = smul.addr %s296, 2
      %s298 = smul.addr %s294, 32
      %s299 = sadd.s32 %s297, %s298
      %s300 = smul.addr %s299, 8
      %s301 = scalar_lea.vmem %s6, %s300
      %s302 = smul.u32 16, %s22
      %p303 = scmp.lt.s32.totalorder %s21, 1
      %s304 = scalar_select %p303, %s21, 1
      %p305 = scmp.lt.s32.totalorder %s302, 15
      %s306 = scalar_select %p305, %s302, 15
      %s307 = smul.addr %s306, 2
      %s308 = smul.addr %s304, 32
      %s309 = sadd.s32 %s307, %s308
      %s310 = smul.addr %s309, 4
      %s311 = scalar_lea.vmem %s0, %s310
      %s312 = smul.u32 16, %s22
      %s313 = smul.u32 16, %s22
      %p314 = scmp.lt.s32.totalorder %s21, 1
      %s315 = scalar_select %p314, %s21, 1
      %p316 = scmp.lt.s32.totalorder %s313, 15
      %s317 = scalar_select %p316, %s313, 15
      %s318 = smul.addr %s317, 2
      %s319 = smul.addr %s315, 32
      %s320 = sadd.s32 %s318, %s319
      %s321 = smul.addr %s320, 4
      %s322 = scalar_lea.vmem %s1, %s321
      %s323 = smul.u32 16, %s22
      %s324 = smul.u32 16, %s22
      %p325 = scmp.lt.s32.totalorder %s21, 1
      %s326 = scalar_select %p325, %s21, 1
      %p327 = scmp.lt.s32.totalorder %s324, 15
      %s328 = scalar_select %p327, %s324, 15
      %s329 = smul.addr %s328, 2
      %s330 = smul.addr %s326, 32
      %s331 = sadd.s32 %s329, %s330
      %s332 = smul.addr %s331, 8
      %s333 = scalar_lea.vmem %s6, %s332
      %s334 = smul.u32 16, %s22
      %v335 = vld [vmem:[%s311] sm:$0xf]
      %v336 = vld [vmem:[%s311 + $0x4] sm:$0xf]
      %v337 = vld [vmem:[%s311 + $0x8] sm:$0xf]
      %v338 = vld [vmem:[%s311 + $0xc] sm:$0xf]
      %v339 = vld [vmem:[%s311 + $0x10] sm:$0xf]
      %v340 = vld [vmem:[%s311 + $0x14] sm:$0xf]
      %v341 = vld [vmem:[%s311 + $0x18] sm:$0xf]
      %v342 = vld [vmem:[%s311 + $0x1c] sm:$0xf]
      %v343 = vld [vmem:[%s311 + $0x20] sm:$0xf]
      %v344 = vld [vmem:[%s311 + $0x24] sm:$0xf]
      %v345 = vld [vmem:[%s311 + $0x28] sm:$0xf]
      %v346 = vld [vmem:[%s311 + $0x2c] sm:$0xf]
      %v347 = vld [vmem:[%s311 + $0x30] sm:$0xf]
      %v348 = vld [vmem:[%s311 + $0x34] sm:$0xf]
      %v349 = vld [vmem:[%s311 + $0x38] sm:$0xf]
      %v350 = vld [vmem:[%s311 + $0x3c] sm:$0xf]
      %v351 = vld [vmem:[%s311 + $0x40] sm:$0xf]
      %v352 = vld [vmem:[%s311 + $0x44] sm:$0xf]
      %v353 = vld [vmem:[%s311 + $0x48] sm:$0xf]
      %v354 = vld [vmem:[%s311 + $0x4c] sm:$0xf]
      %v355 = vld [vmem:[%s311 + $0x50] sm:$0xf]
      %v356 = vld [vmem:[%s311 + $0x54] sm:$0xf]
      %v357 = vld [vmem:[%s311 + $0x58] sm:$0xf]
      %v358 = vld [vmem:[%s311 + $0x5c] sm:$0xf]
      %v359 = vld [vmem:[%s311 + $0x60] sm:$0xf]
      %v360 = vld [vmem:[%s311 + $0x64] sm:$0xf]
      %v361 = vld [vmem:[%s311 + $0x68] sm:$0xf]
      %v362 = vld [vmem:[%s311 + $0x6c] sm:$0xf]
      %v363 = vld [vmem:[%s311 + $0x70] sm:$0xf]
      %v364 = vld [vmem:[%s311 + $0x74] sm:$0xf]
      %v365 = vld [vmem:[%s311 + $0x78] sm:$0xf]
      %v366 = vld [vmem:[%s311 + $0x7c] sm:$0xf]
      %v367 = vunpack.c.l.bf16 %v335
      %v368 = vunpack.c.l.bf16 %v336
      %v369 = vunpack.c.l.bf16 %v337
      %v370 = vunpack.c.l.bf16 %v338
      %v371 = vunpack.c.l.bf16 %v339
      %v372 = vunpack.c.l.bf16 %v340
      %v373 = vunpack.c.l.bf16 %v341
      %v374 = vunpack.c.l.bf16 %v342
      %v375 = vunpack.c.l.bf16 %v343
      %v376 = vunpack.c.l.bf16 %v344
      %v377 = vunpack.c.l.bf16 %v345
      %v378 = vunpack.c.l.bf16 %v346
      %v379 = vunpack.c.l.bf16 %v347
      %v380 = vunpack.c.l.bf16 %v348
      %v381 = vunpack.c.l.bf16 %v349
      %v382 = vunpack.c.l.bf16 %v350
      %v383 = vunpack.c.l.bf16 %v351
      %v384 = vunpack.c.l.bf16 %v352
      %v385 = vunpack.c.l.bf16 %v353
      %v386 = vunpack.c.l.bf16 %v354
      %v387 = vunpack.c.l.bf16 %v355
      %v388 = vunpack.c.l.bf16 %v356
      %v389 = vunpack.c.l.bf16 %v357
      %v390 = vunpack.c.l.bf16 %v358
      %v391 = vunpack.c.l.bf16 %v359
      %v392 = vunpack.c.l.bf16 %v360
      %v393 = vunpack.c.l.bf16 %v361
      %v394 = vunpack.c.l.bf16 %v362
      %v395 = vunpack.c.l.bf16 %v363
      %v396 = vunpack.c.l.bf16 %v364
      %v397 = vunpack.c.l.bf16 %v365
      %v398 = vunpack.c.l.bf16 %v366
      %v399 = vld [vmem:[%s2] sm:$0x1]
      %v401 = vlaneseq
      %v402 = vshrl.u32 %v401, 7
      %v403 = vsub.s32 0, %v402
      %v404 = vrot.slane %v399, %v403
      %v406 = vmul.f32 %v367, %v404
      %v407 = vmul.f32 %v368, %v404
      %v408 = vmul.f32 %v369, %v404
      %v409 = vmul.f32 %v370, %v404
      %v410 = vmul.f32 %v371, %v404
      %v411 = vmul.f32 %v372, %v404
      %v412 = vmul.f32 %v373, %v404
      %v413 = vmul.f32 %v374, %v404
      %v414 = vmul.f32 %v375, %v404
      %v415 = vmul.f32 %v376, %v404
      %v416 = vmul.f32 %v377, %v404
      %v417 = vmul.f32 %v378, %v404
      %v418 = vmul.f32 %v379, %v404
      %v419 = vmul.f32 %v380, %v404
      %v420 = vmul.f32 %v381, %v404
      %v421 = vmul.f32 %v382, %v404
      %v422 = vmul.f32 %v383, %v404
      %v423 = vmul.f32 %v384, %v404
      %v424 = vmul.f32 %v385, %v404
      %v425 = vmul.f32 %v386, %v404
      %v426 = vmul.f32 %v387, %v404
      %v427 = vmul.f32 %v388, %v404
      %v428 = vmul.f32 %v389, %v404
      %v429 = vmul.f32 %v390, %v404
      %v430 = vmul.f32 %v391, %v404
      %v431 = vmul.f32 %v392, %v404
      %v432 = vmul.f32 %v393, %v404
      %v433 = vmul.f32 %v394, %v404
      %v434 = vmul.f32 %v395, %v404
      %v435 = vmul.f32 %v396, %v404
      %v436 = vmul.f32 %v397, %v404
      %v437 = vmul.f32 %v398, %v404
      %v438 = vld [vmem:[%s3] sm:$0x1]
      %v440 = vlaneseq
      %v441 = vshrl.u32 %v440, 7
      %v442 = vsub.s32 0, %v441
      %v443 = vrot.slane %v438, %v442
      %v445 = vadd.f32 %v406, %v443
      %v446 = vadd.f32 %v407, %v443
      %v447 = vadd.f32 %v408, %v443
      %v448 = vadd.f32 %v409, %v443
      %v449 = vadd.f32 %v410, %v443
      %v450 = vadd.f32 %v411, %v443
      %v451 = vadd.f32 %v412, %v443
      %v452 = vadd.f32 %v413, %v443
      %v453 = vadd.f32 %v414, %v443
      %v454 = vadd.f32 %v415, %v443
      %v455 = vadd.f32 %v416, %v443
      %v456 = vadd.f32 %v417, %v443
      %v457 = vadd.f32 %v418, %v443
      %v458 = vadd.f32 %v419, %v443
      %v459 = vadd.f32 %v420, %v443
      %v460 = vadd.f32 %v421, %v443
      %v461 = vadd.f32 %v422, %v443
      %v462 = vadd.f32 %v423, %v443
      %v463 = vadd.f32 %v424, %v443
      %v464 = vadd.f32 %v425, %v443
      %v465 = vadd.f32 %v426, %v443
      %v466 = vadd.f32 %v427, %v443
      %v467 = vadd.f32 %v428, %v443
      %v468 = vadd.f32 %v429, %v443
      %v469 = vadd.f32 %v430, %v443
      %v470 = vadd.f32 %v431, %v443
      %v471 = vadd.f32 %v432, %v443
      %v472 = vadd.f32 %v433, %v443
      %v473 = vadd.f32 %v434, %v443
      %v474 = vadd.f32 %v435, %v443
      %v475 = vadd.f32 %v436, %v443
      %v476 = vadd.f32 %v437, %v443
      %v477 = vmax.f32 %v445, 0.0
      %v478 = vmax.f32 %v446, 0.0
      %v479 = vmax.f32 %v447, 0.0
      %v480 = vmax.f32 %v448, 0.0
      %v481 = vmax.f32 %v449, 0.0
      %v482 = vmax.f32 %v450, 0.0
      %v483 = vmax.f32 %v451, 0.0
      %v484 = vmax.f32 %v452, 0.0
      %v485 = vmax.f32 %v453, 0.0
      %v486 = vmax.f32 %v454, 0.0
      %v487 = vmax.f32 %v455, 0.0
      %v488 = vmax.f32 %v456, 0.0
      %v489 = vmax.f32 %v457, 0.0
      %v490 = vmax.f32 %v458, 0.0
      %v491 = vmax.f32 %v459, 0.0
      %v492 = vmax.f32 %v460, 0.0
      %v493 = vmax.f32 %v461, 0.0
      %v494 = vmax.f32 %v462, 0.0
      %v495 = vmax.f32 %v463, 0.0
      %v496 = vmax.f32 %v464, 0.0
      %v497 = vmax.f32 %v465, 0.0
      %v498 = vmax.f32 %v466, 0.0
      %v499 = vmax.f32 %v467, 0.0
      %v500 = vmax.f32 %v468, 0.0
      %v501 = vmax.f32 %v469, 0.0
      %v502 = vmax.f32 %v470, 0.0
      %v503 = vmax.f32 %v471, 0.0
      %v504 = vmax.f32 %v472, 0.0
      %v505 = vmax.f32 %v473, 0.0
      %v506 = vmax.f32 %v474, 0.0
      %v507 = vmax.f32 %v475, 0.0
      %v508 = vmax.f32 %v476, 0.0
      %v509 = vld [vmem:[%s322] sm:$0xf]
      %v510 = vld [vmem:[%s322 + $0x4] sm:$0xf]
      %v511 = vld [vmem:[%s322 + $0x8] sm:$0xf]
      %v512 = vld [vmem:[%s322 + $0xc] sm:$0xf]
      %v513 = vld [vmem:[%s322 + $0x10] sm:$0xf]
      %v514 = vld [vmem:[%s322 + $0x14] sm:$0xf]
      %v515 = vld [vmem:[%s322 + $0x18] sm:$0xf]
      %v516 = vld [vmem:[%s322 + $0x1c] sm:$0xf]
      %v517 = vld [vmem:[%s322 + $0x20] sm:$0xf]
      %v518 = vld [vmem:[%s322 + $0x24] sm:$0xf]
      %v519 = vld [vmem:[%s322 + $0x28] sm:$0xf]
      %v520 = vld [vmem:[%s322 + $0x2c] sm:$0xf]
      %v521 = vld [vmem:[%s322 + $0x30] sm:$0xf]
      %v522 = vld [vmem:[%s322 + $0x34] sm:$0xf]
      %v523 = vld [vmem:[%s322 + $0x38] sm:$0xf]
      %v524 = vld [vmem:[%s322 + $0x3c] sm:$0xf]
      %v525 = vld [vmem:[%s322 + $0x40] sm:$0xf]
      %v526 = vld [vmem:[%s322 + $0x44] sm:$0xf]
      %v527 = vld [vmem:[%s322 + $0x48] sm:$0xf]
      %v528 = vld [vmem:[%s322 + $0x4c] sm:$0xf]
      %v529 = vld [vmem:[%s322 + $0x50] sm:$0xf]
      %v530 = vld [vmem:[%s322 + $0x54] sm:$0xf]
      %v531 = vld [vmem:[%s322 + $0x58] sm:$0xf]
      %v532 = vld [vmem:[%s322 + $0x5c] sm:$0xf]
      %v533 = vld [vmem:[%s322 + $0x60] sm:$0xf]
      %v534 = vld [vmem:[%s322 + $0x64] sm:$0xf]
      %v535 = vld [vmem:[%s322 + $0x68] sm:$0xf]
      %v536 = vld [vmem:[%s322 + $0x6c] sm:$0xf]
      %v537 = vld [vmem:[%s322 + $0x70] sm:$0xf]
      %v538 = vld [vmem:[%s322 + $0x74] sm:$0xf]
      %v539 = vld [vmem:[%s322 + $0x78] sm:$0xf]
      %v540 = vld [vmem:[%s322 + $0x7c] sm:$0xf]
      %v541 = vunpack.c.l.bf16 %v509
      %v542 = vunpack.c.l.bf16 %v510
      %v543 = vunpack.c.l.bf16 %v511
      %v544 = vunpack.c.l.bf16 %v512
      %v545 = vunpack.c.l.bf16 %v513
      %v546 = vunpack.c.l.bf16 %v514
      %v547 = vunpack.c.l.bf16 %v515
      %v548 = vunpack.c.l.bf16 %v516
      %v549 = vunpack.c.l.bf16 %v517
      %v550 = vunpack.c.l.bf16 %v518
      %v551 = vunpack.c.l.bf16 %v519
      %v552 = vunpack.c.l.bf16 %v520
      %v553 = vunpack.c.l.bf16 %v521
      %v554 = vunpack.c.l.bf16 %v522
      %v555 = vunpack.c.l.bf16 %v523
      %v556 = vunpack.c.l.bf16 %v524
      %v557 = vunpack.c.l.bf16 %v525
      %v558 = vunpack.c.l.bf16 %v526
      %v559 = vunpack.c.l.bf16 %v527
      %v560 = vunpack.c.l.bf16 %v528
      %v561 = vunpack.c.l.bf16 %v529
      %v562 = vunpack.c.l.bf16 %v530
      %v563 = vunpack.c.l.bf16 %v531
      %v564 = vunpack.c.l.bf16 %v532
      %v565 = vunpack.c.l.bf16 %v533
      %v566 = vunpack.c.l.bf16 %v534
      %v567 = vunpack.c.l.bf16 %v535
      %v568 = vunpack.c.l.bf16 %v536
      %v569 = vunpack.c.l.bf16 %v537
      %v570 = vunpack.c.l.bf16 %v538
      %v571 = vunpack.c.l.bf16 %v539
      %v572 = vunpack.c.l.bf16 %v540
      %v573 = vld [vmem:[%s4] sm:$0x1]
      %v575 = vlaneseq
      %v576 = vshrl.u32 %v575, 7
      %v577 = vsub.s32 0, %v576
      %v578 = vrot.slane %v573, %v577
      %v580 = vmul.f32 %v541, %v578
      %v581 = vmul.f32 %v542, %v578
      %v582 = vmul.f32 %v543, %v578
      %v583 = vmul.f32 %v544, %v578
      %v584 = vmul.f32 %v545, %v578
      %v585 = vmul.f32 %v546, %v578
      %v586 = vmul.f32 %v547, %v578
      %v587 = vmul.f32 %v548, %v578
      %v588 = vmul.f32 %v549, %v578
      %v589 = vmul.f32 %v550, %v578
      %v590 = vmul.f32 %v551, %v578
      %v591 = vmul.f32 %v552, %v578
      %v592 = vmul.f32 %v553, %v578
      %v593 = vmul.f32 %v554, %v578
      %v594 = vmul.f32 %v555, %v578
      %v595 = vmul.f32 %v556, %v578
      %v596 = vmul.f32 %v557, %v578
      %v597 = vmul.f32 %v558, %v578
      %v598 = vmul.f32 %v559, %v578
      %v599 = vmul.f32 %v560, %v578
      %v600 = vmul.f32 %v561, %v578
      %v601 = vmul.f32 %v562, %v578
      %v602 = vmul.f32 %v563, %v578
      %v603 = vmul.f32 %v564, %v578
      %v604 = vmul.f32 %v565, %v578
      %v605 = vmul.f32 %v566, %v578
      %v606 = vmul.f32 %v567, %v578
      %v607 = vmul.f32 %v568, %v578
      %v608 = vmul.f32 %v569, %v578
      %v609 = vmul.f32 %v570, %v578
      %v610 = vmul.f32 %v571, %v578
      %v611 = vmul.f32 %v572, %v578
      %v612 = vld [vmem:[%s5] sm:$0x1]
      %v614 = vlaneseq
      %v615 = vshrl.u32 %v614, 7
      %v616 = vsub.s32 0, %v615
      %v617 = vrot.slane %v612, %v616
      %v619 = vadd.f32 %v580, %v617
      %v620 = vadd.f32 %v581, %v617
      %v621 = vadd.f32 %v582, %v617
      %v622 = vadd.f32 %v583, %v617
      %v623 = vadd.f32 %v584, %v617
      %v624 = vadd.f32 %v585, %v617
      %v625 = vadd.f32 %v586, %v617
      %v626 = vadd.f32 %v587, %v617
      %v627 = vadd.f32 %v588, %v617
      %v628 = vadd.f32 %v589, %v617
      %v629 = vadd.f32 %v590, %v617
      %v630 = vadd.f32 %v591, %v617
      %v631 = vadd.f32 %v592, %v617
      %v632 = vadd.f32 %v593, %v617
      %v633 = vadd.f32 %v594, %v617
      %v634 = vadd.f32 %v595, %v617
      %v635 = vadd.f32 %v596, %v617
      %v636 = vadd.f32 %v597, %v617
      %v637 = vadd.f32 %v598, %v617
      %v638 = vadd.f32 %v599, %v617
      %v639 = vadd.f32 %v600, %v617
      %v640 = vadd.f32 %v601, %v617
      %v641 = vadd.f32 %v602, %v617
      %v642 = vadd.f32 %v603, %v617
      %v643 = vadd.f32 %v604, %v617
      %v644 = vadd.f32 %v605, %v617
      %v645 = vadd.f32 %v606, %v617
      %v646 = vadd.f32 %v607, %v617
      %v647 = vadd.f32 %v608, %v617
      %v648 = vadd.f32 %v609, %v617
      %v649 = vadd.f32 %v610, %v617
      %v650 = vadd.f32 %v611, %v617
      %v651 = vmax.f32 %v619, 0.0
      %v652 = vmax.f32 %v620, 0.0
      %v653 = vmax.f32 %v621, 0.0
      %v654 = vmax.f32 %v622, 0.0
      %v655 = vmax.f32 %v623, 0.0
      %v656 = vmax.f32 %v624, 0.0
      %v657 = vmax.f32 %v625, 0.0
      %v658 = vmax.f32 %v626, 0.0
      %v659 = vmax.f32 %v627, 0.0
      %v660 = vmax.f32 %v628, 0.0
      %v661 = vmax.f32 %v629, 0.0
      %v662 = vmax.f32 %v630, 0.0
      %v663 = vmax.f32 %v631, 0.0
      %v664 = vmax.f32 %v632, 0.0
      %v665 = vmax.f32 %v633, 0.0
      %v666 = vmax.f32 %v634, 0.0
      %v667 = vmax.f32 %v635, 0.0
      %v668 = vmax.f32 %v636, 0.0
      %v669 = vmax.f32 %v637, 0.0
      %v670 = vmax.f32 %v638, 0.0
      %v671 = vmax.f32 %v639, 0.0
      %v672 = vmax.f32 %v640, 0.0
      %v673 = vmax.f32 %v641, 0.0
      %v674 = vmax.f32 %v642, 0.0
      %v675 = vmax.f32 %v643, 0.0
      %v676 = vmax.f32 %v644, 0.0
      %v677 = vmax.f32 %v645, 0.0
      %v678 = vmax.f32 %v646, 0.0
      %v679 = vmax.f32 %v647, 0.0
      %v680 = vmax.f32 %v648, 0.0
      %v681 = vmax.f32 %v649, 0.0
      %v682 = vmax.f32 %v650, 0.0
      %v683 = vadd.f32 %v477, %v651
      %v684 = vadd.f32 %v478, %v652
      %v685 = vadd.f32 %v479, %v653
      %v686 = vadd.f32 %v480, %v654
      %v687 = vadd.f32 %v481, %v655
      %v688 = vadd.f32 %v482, %v656
      %v689 = vadd.f32 %v483, %v657
      %v690 = vadd.f32 %v484, %v658
      %v691 = vadd.f32 %v485, %v659
      %v692 = vadd.f32 %v486, %v660
      %v693 = vadd.f32 %v487, %v661
      %v694 = vadd.f32 %v488, %v662
      %v695 = vadd.f32 %v489, %v663
      %v696 = vadd.f32 %v490, %v664
      %v697 = vadd.f32 %v491, %v665
      %v698 = vadd.f32 %v492, %v666
      %v699 = vadd.f32 %v493, %v667
      %v700 = vadd.f32 %v494, %v668
      %v701 = vadd.f32 %v495, %v669
      %v702 = vadd.f32 %v496, %v670
      %v703 = vadd.f32 %v497, %v671
      %v704 = vadd.f32 %v498, %v672
      %v705 = vadd.f32 %v499, %v673
      %v706 = vadd.f32 %v500, %v674
      %v707 = vadd.f32 %v501, %v675
      %v708 = vadd.f32 %v502, %v676
      %v709 = vadd.f32 %v503, %v677
      %v710 = vadd.f32 %v504, %v678
      %v711 = vadd.f32 %v505, %v679
      %v712 = vadd.f32 %v506, %v680
      %v713 = vadd.f32 %v507, %v681
      %v714 = vadd.f32 %v508, %v682
      %715 = vst [vmem:[%s333] sm:$0xff] %v683
      %716 = vst [vmem:[%s333 + $0x8] sm:$0xff] %v684
      %717 = vst [vmem:[%s333 + $0x10] sm:$0xff] %v685
      %718 = vst [vmem:[%s333 + $0x18] sm:$0xff] %v686
      %719 = vst [vmem:[%s333 + $0x20] sm:$0xff] %v687
      %720 = vst [vmem:[%s333 + $0x28] sm:$0xff] %v688
      %721 = vst [vmem:[%s333 + $0x30] sm:$0xff] %v689
      %722 = vst [vmem:[%s333 + $0x38] sm:$0xff] %v690
      %723 = vst [vmem:[%s333 + $0x40] sm:$0xff] %v691
      %724 = vst [vmem:[%s333 + $0x48] sm:$0xff] %v692
      %725 = vst [vmem:[%s333 + $0x50] sm:$0xff] %v693
      %726 = vst [vmem:[%s333 + $0x58] sm:$0xff] %v694
      %727 = vst [vmem:[%s333 + $0x60] sm:$0xff] %v695
      %728 = vst [vmem:[%s333 + $0x68] sm:$0xff] %v696
      %729 = vst [vmem:[%s333 + $0x70] sm:$0xff] %v697
      %730 = vst [vmem:[%s333 + $0x78] sm:$0xff] %v698
      %731 = vst [vmem:[%s333 + $0x80] sm:$0xff] %v699
      %732 = vst [vmem:[%s333 + $0x88] sm:$0xff] %v700
      %733 = vst [vmem:[%s333 + $0x90] sm:$0xff] %v701
      %734 = vst [vmem:[%s333 + $0x98] sm:$0xff] %v702
      %735 = vst [vmem:[%s333 + $0xa0] sm:$0xff] %v703
      %736 = vst [vmem:[%s333 + $0xa8] sm:$0xff] %v704
      %737 = vst [vmem:[%s333 + $0xb0] sm:$0xff] %v705
      %738 = vst [vmem:[%s333 + $0xb8] sm:$0xff] %v706
      %739 = vst [vmem:[%s333 + $0xc0] sm:$0xff] %v707
      %740 = vst [vmem:[%s333 + $0xc8] sm:$0xff] %v708
      %741 = vst [vmem:[%s333 + $0xd0] sm:$0xff] %v709
      %742 = vst [vmem:[%s333 + $0xd8] sm:$0xff] %v710
      %743 = vst [vmem:[%s333 + $0xe0] sm:$0xff] %v711
      %744 = vst [vmem:[%s333 + $0xe8] sm:$0xff] %v712
      %745 = vst [vmem:[%s333 + $0xf0] sm:$0xff] %v713
      %746 = vst [vmem:[%s333 + $0xf8] sm:$0xff] %v714
      %s747 = smul.u32 16, %s22
      %p748 = scmp.lt.s32.totalorder %s21, 1
      %s749 = scalar_select %p748, %s21, 1
      %p750 = scmp.lt.s32.totalorder %s747, 15
      %s751 = scalar_select %p750, %s747, 15
      %s752 = smul.addr %s751, 2
      %s753 = smul.addr %s749, 32
      %s754 = sadd.s32 %s752, %s753
      %s755 = smul.addr %s754, 8
      %s756 = scalar_lea.vmem %s6, %s755
      // Predicated region
      $region45: #{conv_block_forward.5} parent=43 // pred_check
        %p757 = pneg %p189
      $region46: #{conv_block_forward.5} parent=43 // pred_check_branch
        %759 = sbr.rel (%p757) target = $region48
      $region47: #{conv_block_forward.5} parent=43 // pred_region
        %s760 = smul.u32 16, %s22
      $region48: #{conv_block_forward.5} parent=43 // pred_fallthru
        _
    $region44: #{conv_block_forward.5} parent=5 // pred_fallthru
      _
    %p761 = scmp.le.s32.totalorder 2, %s12
    // Predicated region
    $region49: #{conv_block_forward.5} parent=5 // pred_check
      %p762 = pneg %p761
    $region50: #{conv_block_forward.5} parent=5 // pred_check_branch
      %764 = sbr.rel (%p762) target = $region52
    $region51: #{conv_block_forward.5} parent=5 // pred_region
      %s765 = ssub.s32 %s12, 2
      // Predicated region
      $region53: #{conv_block_forward.5} parent=51 // pred_check
        %p766 = pneg %p195
      $region54: #{conv_block_forward.5} parent=51 // pred_check_branch
        %768 = sbr.rel (%p766) target = $region56
      $region55: #{conv_block_forward.5} parent=51 // pred_region
        %s769 = smul.u32 16, %s24
        %p770 = scmp.lt.s32.totalorder %s23, 1
        %s771 = scalar_select %p770, %s23, 1
        %p772 = scmp.lt.s32.totalorder %s769, 15
        %s773 = scalar_select %p772, %s769, 15
        %s774 = smul.addr %s773, 2
        %s775 = smul.addr %s771, 32
        %s776 = sadd.s32 %s774, %s775
        %s777 = smul.addr %s776, 8
        %s778 = scalar_lea.vmem %s6, %s777
      $region56: #{conv_block_forward.5} parent=51 // pred_fallthru
        _
    $region52: #{conv_block_forward.5} parent=5 // pred_fallthru
      _
  $region6: #{conv_block_forward.5} parent=0 // loop_footer
    %s16 = sadd.s32 1, %s12
  $region7: #{conv_block_forward.5} parent=0 // loop_footer_branch
    %11 = sbr.rel target = $region3
  $region8: #{conv_block_forward.5} parent=0 // loop_exit
    _

// kernel: conv_block_forward.4
$region0: #{conv_block_forward.4}
  #allocation0 [shape = 'u32[]', space=smem, size = 0x4, offset = 0x4, fixed_abs, tag = 'smem constant byte address 0x4 - core index']
  #allocation1 [shape = 'u32[144,128]{1,0:T(1,128)}', space=vmem, size = 0x12000, scoped, tag = 'internal scratch']
  #allocation2 [shape = 'f32[18,18,128]{2,1,0:T(8,128)}', space=vmem, size = 0x36000, scoped, tag = 'scratch operand']
  #allocation3 [shape = 'f32[256,128]{1,0:T(8,128)}', space=vmem, size = 0x20000, scoped, tag = 'scratch operand']
  #allocation4 [shape = 'f32[1,128]{1,0:T(1,128)}', space=vmem, size = 0x200, scoped, tag = 'scratch operand']
  #allocation5 [shape = 'f32[1,128]{1,0:T(1,128)}', space=vmem, size = 0x200, scoped, tag = 'scratch operand']
  %s0 = inlined_call_operand.vmem [shape: bf16[2,16,16,128], index: 0, kind: input, shape index: {}]
  %s1 = inlined_call_operand.vmem [shape: f32[1,128], index: 1, kind: input, shape index: {}]
  %s2 = inlined_call_operand.vmem [shape: f32[1,128], index: 2, kind: input, shape index: {}]
  %s3 = inlined_call_operand.vmem [shape: bf16[9,128,128], index: 3, kind: input, shape index: {}]
  %s4 = inlined_call_operand.vmem [shape: bf16[2,16,16,128], index: 4, kind: output, shape index: {0}]
  %s5 = inlined_call_operand.vmem [shape: f32[2,2,128], index: 5, kind: output, shape index: {1}]
  %6 = xla_tuple %s4, %s5
  %s7 = sld [smem:[#allocation0]]
  $region65: #{conv_block_forward.4} parent=0
    _
  %s9 = ssub.s32 1, %s7
  %s10 = scalar_select 0, %s9, %s7
  loop: start=0, step=1, limit=4
  $region2: #{conv_block_forward.4} parent=0 // loop_pre_header
    _
  $region3: #{conv_block_forward.4} parent=0 // loop_header
    %s12 = sphi 0, %s16
    %p13 = scmp.ge.s32.totalorder %s12, 4
    %s19 = sphi 0, %s31
    %s20 = sphi 0, %s27
    %s21 = sphi 0, %s19
    %s22 = sphi 0, %s20
    %s23 = sphi 0, %s21
    %s24 = sphi 0, %s22
    %s34 = sphi 0, %s36
    %s37 = sphi 0, %s34
    %s38 = sphi 0, %s37
    %s54 = sphi 0, %s38
    %s58 = sphi 0, %s58
    %s60 = sphi 0, %s58
    %s61 = sphi 0, %s60
    %s75 = sphi 0, %s61
    %s79 = sphi 0, %s79
    %s81 = sphi 0, %s79
    %s82 = sphi 0, %s81
    %s96 = sphi 0, %s82
    %s100 = sphi 0, %s100
    %s102 = sphi 0, %s100
    %s103 = sphi 0, %s102
    %s117 = sphi 0, %s103
    %s125 = sphi 0, %s127
    %s128 = sphi 0, %s125
    %s129 = sphi 0, %s128
    %s145 = sphi 0, %s129
    %s151 = sphi 0, %s153
    %s154 = sphi 0, %s151
    %s155 = sphi 0, %s154
    %s171 = sphi 0, %s155
  $region4: #{conv_block_forward.4} parent=0 // loop_header_branch
    %15 = sbr.rel (%p13) target = $region8
  $region5: #{conv_block_forward.4} parent=0 // loop_body
    %s17 = ssub.s32 %s12, 1
    %s18 = ssub.s32 %s12, 2
    %s25 = sadd.s32 1, %s20
    %p26 = scmp.ge.s32.totalorder %s25, 1
    %s27 = scalar_select %p26, 0, %s25
    %s28 = sadd.s32 1, %s19
    %s29 = scalar_select %p26, %s28, %s19
    %p30 = scmp.ge.s32.totalorder %s29, 2
    %s31 = scalar_select %p30, 0, %s29
    %s32 = ssub.s32 %s19, %s31
    %p33 = scmp.eq.s32.totalorder %s32, 0
    %s35 = sadd.s32 %s34, 1
    %s36 = scalar_select %p33, %s34, %s35
    %p39 = pneg %p33
    %p40 = scmp.eq.s32.totalorder %s12, 1
    %p41 = por %p39, %p40
    %p42 = scmp.ne.s32.totalorder %s34, %s37
    %p43 = scmp.eq.s32.totalorder %s12, 0
    %p44 = por %p42, %p43
    %p45 = scmp.ne.s32.totalorder %s34, %s37
    %p46 = scmp.eq.s32.totalorder %s17, 1
    %p47 = por %p45, %p46
    %p48 = scmp.ne.s32.totalorder %s37, %s38
    %p49 = scmp.eq.s32.totalorder %s17, 0
    %p50 = por %p48, %p49
    %p51 = scmp.ne.s32.totalorder %s37, %s38
    %p52 = scmp.eq.s32.totalorder %s18, 1
    %p53 = por %p51, %p52
    %p55 = scmp.ne.s32.totalorder %s38, %s54
    %p56 = scmp.eq.s32.totalorder %s18, 0
    %p57 = por %p55, %p56
    %s59 = sadd.s32 %s58, 1
    %p62 = scmp.eq.s32.totalorder %s12, 1
    %p63 = scmp.ne.s32.totalorder %s58, %s60
    %p64 = scmp.eq.s32.totalorder %s12, 0
    %p65 = por %p63, %p64
    %p66 = scmp.ne.s32.totalorder %s58, %s60
    %p67 = scmp.eq.s32.totalorder %s17, 1
    %p68 = por %p66, %p67
    %p69 = scmp.ne.s32.totalorder %s60, %s61
    %p70 = scmp.eq.s32.totalorder %s17, 0
    %p71 = por %p69, %p70
    %p72 = scmp.ne.s32.totalorder %s60, %s61
    %p73 = scmp.eq.s32.totalorder %s18, 1
    %p74 = por %p72, %p73
    %p76 = scmp.ne.s32.totalorder %s61, %s75
    %p77 = scmp.eq.s32.totalorder %s18, 0
    %p78 = por %p76, %p77
    %s80 = sadd.s32 %s79, 1
    %p83 = scmp.eq.s32.totalorder %s12, 1
    %p84 = scmp.ne.s32.totalorder %s79, %s81
    %p85 = scmp.eq.s32.totalorder %s12, 0
    %p86 = por %p84, %p85
    %p87 = scmp.ne.s32.totalorder %s79, %s81
    %p88 = scmp.eq.s32.totalorder %s17, 1
    %p89 = por %p87, %p88
    %p90 = scmp.ne.s32.totalorder %s81, %s82
    %p91 = scmp.eq.s32.totalorder %s17, 0
    %p92 = por %p90, %p91
    %p93 = scmp.ne.s32.totalorder %s81, %s82
    %p94 = scmp.eq.s32.totalorder %s18, 1
    %p95 = por %p93, %p94
    %p97 = scmp.ne.s32.totalorder %s82, %s96
    %p98 = scmp.eq.s32.totalorder %s18, 0
    %p99 = por %p97, %p98
    %s101 = sadd.s32 %s100, 1
    %p104 = scmp.eq.s32.totalorder %s12, 1
    %p105 = scmp.ne.s32.totalorder %s100, %s102
    %p106 = scmp.eq.s32.totalorder %s12, 0
    %p107 = por %p105, %p106
    %p108 = scmp.ne.s32.totalorder %s100, %s102
    %p109 = scmp.eq.s32.totalorder %s17, 1
    %p110 = por %p108, %p109
    %p111 = scmp.ne.s32.totalorder %s102, %s103
    %p112 = scmp.eq.s32.totalorder %s17, 0
    %p113 = por %p111, %p112
    %p114 = scmp.ne.s32.totalorder %s102, %s103
    %p115 = scmp.eq.s32.totalorder %s18, 1
    %p116 = por %p114, %p115
    %p118 = scmp.ne.s32.totalorder %s103, %s117
    %p119 = scmp.eq.s32.totalorder %s18, 0
    %p120 = por %p118, %p119
    %s121 = ssub.s32 %s19, %s31
    %s122 = ssub.s32 %s20, %s27
    %s123 = sor.u32 %s121, %s122
    %p124 = scmp.eq.s32.totalorder %s123, 0
    %s126 = sadd.s32 %s125, 1
    %s127 = scalar_select %p124, %s125, %s126
    %p130 = pneg %p124
    %p131 = scmp.eq.s32.totalorder %s12, 1
    %p132 = por %p130, %p131
    %p133 = scmp.ne.s32.totalorder %s125, %s128
    %p134 = scmp.eq.s32.totalorder %s12, 0
    %p135 = por %p133, %p134
    %p136 = scmp.ne.s32.totalorder %s125, %s128
    %p137 = scmp.eq.s32.totalorder %s17, 1
    %p138 = por %p136, %p137
    %p139 = scmp.ne.s32.totalorder %s128, %s129
    %p140 = scmp.eq.s32.totalorder %s17, 0
    %p141 = por %p139, %p140
    %p142 = scmp.ne.s32.totalorder %s128, %s129
    %p143 = scmp.eq.s32.totalorder %s18, 1
    %p144 = por %p142, %p143
    %p146 = scmp.ne.s32.totalorder %s129, %s145
    %p147 = scmp.eq.s32.totalorder %s18, 0
    %p148 = por %p146, %p147
    %s149 = ssub.s32 %s19, %s31
    %p150 = scmp.eq.s32.totalorder %s149, 0
    %s152 = sadd.s32 %s151, 1
    %s153 = scalar_select %p150, %s151, %s152
    %p156 = pneg %p150
    %p157 = scmp.eq.s32.totalorder %s12, 1
    %p158 = por %p156, %p157
    %p159 = scmp.ne.s32.totalorder %s151, %s154
    %p160 = scmp.eq.s32.totalorder %s12, 0
    %p161 = por %p159, %p160
    %p162 = scmp.ne.s32.totalorder %s151, %s154
    %p163 = scmp.eq.s32.totalorder %s17, 1
    %p164 = por %p162, %p163
    %p165 = scmp.ne.s32.totalorder %s154, %s155
    %p166 = scmp.eq.s32.totalorder %s17, 0
    %p167 = por %p165, %p166
    %p168 = scmp.ne.s32.totalorder %s154, %s155
    %p169 = scmp.eq.s32.totalorder %s18, 1
    %p170 = por %p168, %p169
    %p172 = scmp.ne.s32.totalorder %s155, %s171
    %p173 = scmp.eq.s32.totalorder %s18, 0
    %p174 = por %p172, %p173
    %p175 = scmp.le.s32.totalorder 1, %s12
    %p176 = scmp.lt.s32.totalorder %s12, 3
    %p177 = pnand %p175, %p176
    %p178 = pneg %p177
    // Predicated region
    $region9: #{conv_block_forward.4} parent=5 // pred_check
      _
    $region10: #{conv_block_forward.4} parent=5 // pred_check_branch
      %180 = sbr.rel (%p177) target = $region12
    $region11: #{conv_block_forward.4} parent=5 // pred_region
      %s181 = ssub.s32 %s12, 1
      // Predicated region
      $region13: #{conv_block_forward.4} parent=11 // pred_check
        %p182 = pneg %p71
      $region14: #{conv_block_forward.4} parent=11 // pred_check_branch
        %184 = sbr.rel (%p182) target = $region16
      $region15: #{conv_block_forward.4} parent=11 // pred_region
        _
      $region16: #{conv_block_forward.4} parent=11 // pred_fallthru
        _
      // Predicated region
      $region17: #{conv_block_forward.4} parent=11 // pred_check
        %p185 = pneg %p92
      $region18: #{conv_block_forward.4} parent=11 // pred_check_branch
        %187 = sbr.rel (%p185) target = $region20
      $region19: #{conv_block_forward.4} parent=11 // pred_region
        _
      $region20: #{conv_block_forward.4} parent=11 // pred_fallthru
        _
      // Predicated region
      $region21: #{conv_block_forward.4} parent=11 // pred_check
        %p188 = pneg %p113
      $region22: #{conv_block_forward.4} parent=11 // pred_check_branch
        %190 = sbr.rel (%p188) target = $region24
      $region23: #{conv_block_forward.4} parent=11 // pred_region
        _
      $region24: #{conv_block_forward.4} parent=11 // pred_fallthru
        _
    $region12: #{conv_block_forward.4} parent=5 // pred_fallthru
      _
    %p191 = scmp.lt.s32.totalorder %s12, 2
    // Predicated region
    $region25: #{conv_block_forward.4} parent=5 // pred_check
      %p192 = pneg %p191
    $region26: #{conv_block_forward.4} parent=5 // pred_check_branch
      %194 = sbr.rel (%p192) target = $region28
    $region27: #{conv_block_forward.4} parent=5 // pred_region
      // Predicated region
      $region29: #{conv_block_forward.4} parent=27 // pred_check
        %p195 = pneg %p44
      $region30: #{conv_block_forward.4} parent=27 // pred_check_branch
        %197 = sbr.rel (%p195) target = $region32
      $region31: #{conv_block_forward.4} parent=27 // pred_region
        %p198 = scmp.lt.s32.totalorder %s19, 1
        %s199 = scalar_select %p198, %s19, 1
        %s200 = smul.addr %s199, 32
        %s201 = smul.addr %s200, 4
        %s202 = scalar_lea.vmem %s0, %s201
      $region32: #{conv_block_forward.4} parent=27 // pred_fallthru
        _
    $region28: #{conv_block_forward.4} parent=5 // pred_fallthru
      _
    %p203 = scmp.le.s32.totalorder 1, %s12
    %p204 = scmp.lt.s32.totalorder %s12, 3
    %p205 = pnand %p203, %p204
    %p206 = pneg %p205
    // Predicated region
    $region33: #{conv_block_forward.4} parent=5 // pred_check
      _
    $region34: #{conv_block_forward.4} parent=5 // pred_check_branch
      %208 = sbr.rel (%p205) target = $region36
    $region35: #{conv_block_forward.4} parent=5 // pred_region
      %s209 = ssub.s32 %s12, 1
      %p210 = scmp.lt.s32.totalorder %s21, 1
      %s211 = scalar_select %p210, %s21, 1
      %s212 = smul.addr %s211, 32
      %s213 = smul.addr %s212, 4
      %s214 = scalar_lea.vmem %s0, %s213
      %p215 = pneg %p50
      %p216 = pneg %p47
      %p217 = pneg %p71
      %p218 = pneg %p68
      %p219 = pneg %p92
      %p220 = pneg %p89
      %p221 = pneg %p113
      %p222 = pneg %p110
      %p223 = pneg %p141
      %p224 = pneg %p138
      %s225 = smul.u32 16, %s22
      %p226 = scmp.lt.s32.totalorder %s21, 1
      %s227 = scalar_select %p226, %s21, 1
      %p228 = scmp.lt.s32.totalorder %s225, 15
      %s229 = scalar_select %p228, %s225, 15
      %s230 = smul.addr %s229, 2
      %s231 = smul.addr %s227, 32
      %s232 = sadd.s32 %s230, %s231
      %s233 = smul.addr %s232, 4
      %s234 = scalar_lea.vmem %s4, %s233
      %p235 = pneg %p167
      %p236 = pneg %p164
      %p237 = scmp.lt.s32.totalorder %s21, 1
      %s238 = scalar_select %p237, %s21, 1
      %s239 = smul.addr %s238, 2
      %s240 = scalar_lea.vmem %s5, %s239
      %p241 = scmp.lt.s32.totalorder %s21, 1
      %s242 = scalar_select %p241, %s21, 1
      %s243 = smul.addr %s242, 32
      %s244 = smul.addr %s243, 4
      %s245 = scalar_lea.vmem %s0, %s244
      %s246 = smul.u32 16, %s22
      %p247 = scmp.lt.s32.totalorder %s21, 1
      %s248 = scalar_select %p247, %s21, 1
      %p249 = scmp.lt.s32.totalorder %s246, 15
      %s250 = scalar_select %p249, %s246, 15
      %s251 = smul.addr %s250, 2
      %s252 = smul.addr %s248, 32
      %s253 = sadd.s32 %s251, %s252
      %s254 = smul.addr %s253, 4
      %s255 = scalar_lea.vmem %s4, %s254
      %s256 = smul.u32 16, %s22
      %p257 = scmp.lt.s32.totalorder %s21, 1
      %s258 = scalar_select %p257, %s21, 1
      %s259 = smul.addr %s258, 2
      %s260 = scalar_lea.vmem %s5, %s259
      %p262 = scmp.eq.s32.totalorder %s22, 0
      // Predicated region
      $region37: #{conv_block_forward.4} parent=35 // pred_check
        %p263 = pneg %p262
      $region38: #{conv_block_forward.4} parent=35 // pred_check_branch
        %265 = sbr.rel (%p263) target = $region40
      $region39: #{conv_block_forward.4} parent=35 // pred_region
        %266 = vst [vmem:[#allocation2] sm:$0xff] 0.0
        %267 = vst [vmem:[#allocation2 + $0x8] sm:$0xff] 0.0
        %268 = vst [vmem:[#allocation2 + $0x10] sm:$0x3] 0.0
        %269 = vst [vmem:[#allocation2 + $0x18] sm:$0xff] 0.0
        %270 = vst [vmem:[#allocation2 + $0x20] sm:$0xff] 0.0
        %271 = vst [vmem:[#allocation2 + $0x28] sm:$0x3] 0.0
        %272 = vst [vmem:[#allocation2 + $0x30] sm:$0xff] 0.0
        %273 = vst [vmem:[#allocation2 + $0x38] sm:$0xff] 0.0
        %274 = vst [vmem:[#allocation2 + $0x40] sm:$0x3] 0.0
        %275 = vst [vmem:[#allocation2 + $0x48] sm:$0xff] 0.0
        %276 = vst [vmem:[#allocation2 + $0x50] sm:$0xff] 0.0
        %277 = vst [vmem:[#allocation2 + $0x58] sm:$0x3] 0.0
        %278 = vst [vmem:[#allocation2 + $0x60] sm:$0xff] 0.0
        %279 = vst [vmem:[#allocation2 + $0x68] sm:$0xff] 0.0
        %280 = vst [vmem:[#allocation2 + $0x70] sm:$0x3] 0.0
        %281 = vst [vmem:[#allocation2 + $0x78] sm:$0xff] 0.0
        %282 = vst [vmem:[#allocation2 + $0x80] sm:$0xff] 0.0
        %283 = vst [vmem:[#allocation2 + $0x88] sm:$0x3] 0.0
        %284 = vst [vmem:[#allocation2 + $0x90] sm:$0xff] 0.0
        %285 = vst [vmem:[#allocation2 + $0x98] sm:$0xff] 0.0
        %286 = vst [vmem:[#allocation2 + $0xa0] sm:$0x3] 0.0
        %287 = vst [vmem:[#allocation2 + $0xa8] sm:$0xff] 0.0
        %288 = vst [vmem:[#allocation2 + $0xb0] sm:$0xff] 0.0
        %289 = vst [vmem:[#allocation2 + $0xb8] sm:$0x3] 0.0
        %290 = vst [vmem:[#allocation2 + $0xc0] sm:$0xff] 0.0
        %291 = vst [vmem:[#allocation2 + $0xc8] sm:$0xff] 0.0
        %292 = vst [vmem:[#allocation2 + $0xd0] sm:$0x3] 0.0
        %293 = vst [vmem:[#allocation2 + $0xd8] sm:$0xff] 0.0
        %294 = vst [vmem:[#allocation2 + $0xe0] sm:$0xff] 0.0
        %295 = vst [vmem:[#allocation2 + $0xe8] sm:$0x3] 0.0
        %296 = vst [vmem:[#allocation2 + $0xf0] sm:$0xff] 0.0
        %297 = vst [vmem:[#allocation2 + $0xf8] sm:$0xff] 0.0
        %298 = vst [vmem:[#allocation2 + $0x100] sm:$0x3] 0.0
        %299 = vst [vmem:[#allocation2 + $0x108] sm:$0xff] 0.0
        %300 = vst [vmem:[#allocation2 + $0x110] sm:$0xff] 0.0
        %301 = vst [vmem:[#allocation2 + $0x118] sm:$0x3] 0.0
        %302 = vst [vmem:[#allocation2 + $0x120] sm:$0xff] 0.0
        %303 = vst [vmem:[#allocation2 + $0x128] sm:$0xff] 0.0
        %304 = vst [vmem:[#allocation2 + $0x130] sm:$0x3] 0.0
        %305 = vst [vmem:[#allocation2 + $0x138] sm:$0xff] 0.0
        %306 = vst [vmem:[#allocation2 + $0x140] sm:$0xff] 0.0
        %307 = vst [vmem:[#allocation2 + $0x148] sm:$0x3] 0.0
        %308 = vst [vmem:[#allocation2 + $0x150] sm:$0xff] 0.0
        %309 = vst [vmem:[#allocation2 + $0x158] sm:$0xff] 0.0
        %310 = vst [vmem:[#allocation2 + $0x160] sm:$0x3] 0.0
        %311 = vst [vmem:[#allocation2 + $0x168] sm:$0xff] 0.0
        %312 = vst [vmem:[#allocation2 + $0x170] sm:$0xff] 0.0
        %313 = vst [vmem:[#allocation2 + $0x178] sm:$0x3] 0.0
        %314 = vst [vmem:[#allocation2 + $0x180] sm:$0xff] 0.0
        %315 = vst [vmem:[#allocation2 + $0x188] sm:$0xff] 0.0
        %316 = vst [vmem:[#allocation2 + $0x190] sm:$0x3] 0.0
        %317 = vst [vmem:[#allocation2 + $0x198] sm:$0xff] 0.0
        %318 = vst [vmem:[#allocation2 + $0x1a0] sm:$0xff] 0.0
        %319 = vst [vmem:[#allocation2 + $0x1a8] sm:$0x3] 0.0
        %v320 = vld [vmem:[%s245] sm:$0xf]
        %v321 = vld [vmem:[%s245 + $0x4] sm:$0xf]
        %v322 = vld [vmem:[%s245 + $0x8] sm:$0xf]
        %v323 = vld [vmem:[%s245 + $0xc] sm:$0xf]
        %v324 = vld [vmem:[%s245 + $0x10] sm:$0xf]
        %v325 = vld [vmem:[%s245 + $0x14] sm:$0xf]
        %v326 = vld [vmem:[%s245 + $0x18] sm:$0xf]
        %v327 = vld [vmem:[%s245 + $0x1c] sm:$0xf]
        %v328 = vld [vmem:[%s245 + $0x20] sm:$0xf]
        %v329 = vld [vmem:[%s245 + $0x24] sm:$0xf]
        %v330 = vld [vmem:[%s245 + $0x28] sm:$0xf]
        %v331 = vld [vmem:[%s245 + $0x2c] sm:$0xf]
        %v332 = vld [vmem:[%s245 + $0x30] sm:$0xf]
        %v333 = vld [vmem:[%s245 + $0x34] sm:$0xf]
        %v334 = vld [vmem:[%s245 + $0x38] sm:$0xf]
        %v335 = vld [vmem:[%s245 + $0x3c] sm:$0xf]
        %v336 = vld [vmem:[%s245 + $0x40] sm:$0xf]
        %v337 = vld [vmem:[%s245 + $0x44] sm:$0xf]
        %v338 = vld [vmem:[%s245 + $0x48] sm:$0xf]
        %v339 = vld [vmem:[%s245 + $0x4c] sm:$0xf]
        %v340 = vld [vmem:[%s245 + $0x50] sm:$0xf]
        %v341 = vld [vmem:[%s245 + $0x54] sm:$0xf]
        %v342 = vld [vmem:[%s245 + $0x58] sm:$0xf]
        %v343 = vld [vmem:[%s245 + $0x5c] sm:$0xf]
        %v344 = vld [vmem:[%s245 + $0x60] sm:$0xf]
        %v345 = vld [vmem:[%s245 + $0x64] sm:$0xf]
        %v346 = vld [vmem:[%s245 + $0x68] sm:$0xf]
        %v347 = vld [vmem:[%s245 + $0x6c] sm:$0xf]
        %v348 = vld [vmem:[%s245 + $0x70] sm:$0xf]
        %v349 = vld [vmem:[%s245 + $0x74] sm:$0xf]
        %v350 = vld [vmem:[%s245 + $0x78] sm:$0xf]
        %v351 = vld [vmem:[%s245 + $0x7c] sm:$0xf]
        %v352 = vunpack.c.l.bf16 %v320
        %v353 = vunpack.c.l.bf16 %v321
        %v354 = vunpack.c.l.bf16 %v322
        %v355 = vunpack.c.l.bf16 %v323
        %v356 = vunpack.c.l.bf16 %v324
        %v357 = vunpack.c.l.bf16 %v325
        %v358 = vunpack.c.l.bf16 %v326
        %v359 = vunpack.c.l.bf16 %v327
        %v360 = vunpack.c.l.bf16 %v328
        %v361 = vunpack.c.l.bf16 %v329
        %v362 = vunpack.c.l.bf16 %v330
        %v363 = vunpack.c.l.bf16 %v331
        %v364 = vunpack.c.l.bf16 %v332
        %v365 = vunpack.c.l.bf16 %v333
        %v366 = vunpack.c.l.bf16 %v334
        %v367 = vunpack.c.l.bf16 %v335
        %v368 = vunpack.c.l.bf16 %v336
        %v369 = vunpack.c.l.bf16 %v337
        %v370 = vunpack.c.l.bf16 %v338
        %v371 = vunpack.c.l.bf16 %v339
        %v372 = vunpack.c.l.bf16 %v340
        %v373 = vunpack.c.l.bf16 %v341
        %v374 = vunpack.c.l.bf16 %v342
        %v375 = vunpack.c.l.bf16 %v343
        %v376 = vunpack.c.l.bf16 %v344
        %v377 = vunpack.c.l.bf16 %v345
        %v378 = vunpack.c.l.bf16 %v346
        %v379 = vunpack.c.l.bf16 %v347
        %v380 = vunpack.c.l.bf16 %v348
        %v381 = vunpack.c.l.bf16 %v349
        %v382 = vunpack.c.l.bf16 %v350
        %v383 = vunpack.c.l.bf16 %v351
        %v384 = vld [vmem:[%s1] sm:$0x1]
        %v386 = vlaneseq
        %v387 = vshrl.u32 %v386, 7
        %v388 = vsub.s32 0, %v387
        %v389 = vrot.slane %v384, %v388
        %v391 = vmul.f32 %v352, %v389
        %v392 = vmul.f32 %v353, %v389
        %v393 = vmul.f32 %v354, %v389
        %v394 = vmul.f32 %v355, %v389
        %v395 = vmul.f32 %v356, %v389
        %v396 = vmul.f32 %v357, %v389
        %v397 = vmul.f32 %v358, %v389
        %v398 = vmul.f32 %v359, %v389
        %v399 = vmul.f32 %v360, %v389
        %v400 = vmul.f32 %v361, %v389
        %v401 = vmul.f32 %v362, %v389
        %v402 = vmul.f32 %v363, %v389
        %v403 = vmul.f32 %v364, %v389
        %v404 = vmul.f32 %v365, %v389
        %v405 = vmul.f32 %v366, %v389
        %v406 = vmul.f32 %v367, %v389
        %v407 = vmul.f32 %v368, %v389
        %v408 = vmul.f32 %v369, %v389
        %v409 = vmul.f32 %v370, %v389
        %v410 = vmul.f32 %v371, %v389
        %v411 = vmul.f32 %v372, %v389
        %v412 = vmul.f32 %v373, %v389
        %v413 = vmul.f32 %v374, %v389
        %v414 = vmul.f32 %v375, %v389
        %v415 = vmul.f32 %v376, %v389
        %v416 = vmul.f32 %v377, %v389
        %v417 = vmul.f32 %v378, %v389
        %v418 = vmul.f32 %v379, %v389
        %v419 = vmul.f32 %v380, %v389
        %v420 = vmul.f32 %v381, %v389
        %v421 = vmul.f32 %v382, %v389
        %v422 = vmul.f32 %v383, %v389
        %v423 = vld [vmem:[%s2] sm:$0x1]
        %v425 = vlaneseq
        %v426 = vshrl.u32 %v425, 7
        %v427 = vsub.s32 0, %v426
        %v428 = vrot.slane %v423, %v427
        %v430 = vadd.f32 %v391, %v428
        %v431 = vadd.f32 %v392, %v428
        %v432 = vadd.f32 %v393, %v428
        %v433 = vadd.f32 %v394, %v428
        %v434 = vadd.f32 %v395, %v428
        %v435 = vadd.f32 %v396, %v428
        %v436 = vadd.f32 %v397, %v428
        %v437 = vadd.f32 %v398, %v428
        %v438 = vadd.f32 %v399, %v428
        %v439 = vadd.f32 %v400, %v428
        %v440 = vadd.f32 %v401, %v428
        %v441 = vadd.f32 %v402, %v428
        %v442 = vadd.f32 %v403, %v428
        %v443 = vadd.f32 %v404, %v428
        %v444 = vadd.f32 %v405, %v428
        %v445 = vadd.f32 %v406, %v428
        %v446 = vadd.f32 %v407, %v428
        %v447 = vadd.f32 %v408, %v428
        %v448 = vadd.f32 %v409, %v428
        %v449 = vadd.f32 %v410, %v428
        %v450 = vadd.f32 %v411, %v428
        %v451 = vadd.f32 %v412, %v428
        %v452 = vadd.f32 %v413, %v428
        %v453 = vadd.f32 %v414, %v428
        %v454 = vadd.f32 %v415, %v428
        %v455 = vadd.f32 %v416, %v428
        %v456 = vadd.f32 %v417, %v428
        %v457 = vadd.f32 %v418, %v428
        %v458 = vadd.f32 %v419, %v428
        %v459 = vadd.f32 %v420, %v428
        %v460 = vadd.f32 %v421, %v428
        %v461 = vadd.f32 %v422, %v428
        %v462 = vmax.f32 %v430, 0.0
        %v463 = vmax.f32 %v431, 0.0
        %v464 = vmax.f32 %v432, 0.0
        %v465 = vmax.f32 %v433, 0.0
        %v466 = vmax.f32 %v434, 0.0
        %v467 = vmax.f32 %v435, 0.0
        %v468 = vmax.f32 %v436, 0.0
        %v469 = vmax.f32 %v437, 0.0
        %v470 = vmax.f32 %v438, 0.0
        %v471 = vmax.f32 %v439, 0.0
        %v472 = vmax.f32 %v440, 0.0
        %v473 = vmax.f32 %v441, 0.0
        %v474 = vmax.f32 %v442, 0.0
        %v475 = vmax.f32 %v443, 0.0
        %v476 = vmax.f32 %v444, 0.0
        %v477 = vmax.f32 %v445, 0.0
        %v478 = vmax.f32 %v446, 0.0
        %v479 = vmax.f32 %v447, 0.0
        %v480 = vmax.f32 %v448, 0.0
        %v481 = vmax.f32 %v449, 0.0
        %v482 = vmax.f32 %v450, 0.0
        %v483 = vmax.f32 %v451, 0.0
        %v484 = vmax.f32 %v452, 0.0
        %v485 = vmax.f32 %v453, 0.0
        %v486 = vmax.f32 %v454, 0.0
        %v487 = vmax.f32 %v455, 0.0
        %v488 = vmax.f32 %v456, 0.0
        %v489 = vmax.f32 %v457, 0.0
        %v490 = vmax.f32 %v458, 0.0
        %v491 = vmax.f32 %v459, 0.0
        %v492 = vmax.f32 %v460, 0.0
        %v493 = vmax.f32 %v461, 0.0
        %s494 = scalar_lea.vmem [#allocation2], 24
        %495 = vst [vmem:[%s494 + $0x1] sm:$0xff] %v462
        %496 = vst [vmem:[%s494 + $0x9] sm:$0xff] %v463
        %497 = vst [vmem:[%s494 + $0x19] sm:$0xff] %v464
        %498 = vst [vmem:[%s494 + $0x21] sm:$0xff] %v465
        %499 = vst [vmem:[%s494 + $0x31] sm:$0xff] %v466
        %500 = vst [vmem:[%s494 + $0x39] sm:$0xff] %v467
        %501 = vst [vmem:[%s494 + $0x49] sm:$0xff] %v468
        %502 = vst [vmem:[%s494 + $0x51] sm:$0xff] %v469
        %503 = vst [vmem:[%s494 + $0x61] sm:$0xff] %v470
        %504 = vst [vmem:[%s494 + $0x69] sm:$0xff] %v471
        %505 = vst [vmem:[%s494 + $0x79] sm:$0xff] %v472
        %506 = vst [vmem:[%s494 + $0x81] sm:$0xff] %v473
        %507 = vst [vmem:[%s494 + $0x91] sm:$0xff] %v474
        %508 = vst [vmem:[%s494 + $0x99] sm:$0xff] %v475
        %509 = vst [vmem:[%s494 + $0xa9] sm:$0xff] %v476
        %510 = vst [vmem:[%s494 + $0xb1] sm:$0xff] %v477
        %511 = vst [vmem:[%s494 + $0xc1] sm:$0xff] %v478
        %512 = vst [vmem:[%s494 + $0xc9] sm:$0xff] %v479
        %513 = vst [vmem:[%s494 + $0xd9] sm:$0xff] %v480
        %514 = vst [vmem:[%s494 + $0xe1] sm:$0xff] %v481
        %515 = vst [vmem:[%s494 + $0xf1] sm:$0xff] %v482
        %516 = vst [vmem:[%s494 + $0xf9] sm:$0xff] %v483
        %517 = vst [vmem:[%s494 + $0x109] sm:$0xff] %v484
        %518 = vst [vmem:[%s494 + $0x111] sm:$0xff] %v485
        %519 = vst [vmem:[%s494 + $0x121] sm:$0xff] %v486
        %520 = vst [vmem:[%s494 + $0x129] sm:$0xff] %v487
        %521 = vst [vmem:[%s494 + $0x139] sm:$0xff] %v488
        %522 = vst [vmem:[%s494 + $0x141] sm:$0xff] %v489
        %523 = vst [vmem:[%s494 + $0x151] sm:$0xff] %v490
        %524 = vst [vmem:[%s494 + $0x159] sm:$0xff] %v491
        %525 = vst [vmem:[%s494 + $0x169] sm:$0xff] %v492
        %526 = vst [vmem:[%s494 + $0x171] sm:$0xff] %v493
        %527 = vst [vmem:[#allocation4] sm:$0x1] 0.0
        %528 = vst [vmem:[#allocation5] sm:$0x1] 0.0
      $region40: #{conv_block_forward.4} parent=35 // pred_fallthru
        _
      %s529 = smul.u32 %s22, 16
      %s530 = smul.u32 %s529, 24
      %s531 = scalar_lea.vmem [#allocation2], %s530
      %v532 = vld [vmem:[%s531] sm:$0xff]
      %v533 = vld [vmem:[%s531 + $0x8] sm:$0xff]
      %v534 = vld [vmem:[%s531 + $0x18] sm:$0xff]
      %v535 = vld [vmem:[%s531 + $0x20] sm:$0xff]
      %v536 = vld [vmem:[%s531 + $0x30] sm:$0xff]
      %v537 = vld [vmem:[%s531 + $0x38] sm:$0xff]
      %v538 = vld [vmem:[%s531 + $0x48] sm:$0xff]
      %v539 = vld [vmem:[%s531 + $0x50] sm:$0xff]
      %v540 = vld [vmem:[%s531 + $0x60] sm:$0xff]
      %v541 = vld [vmem:[%s531 + $0x68] sm:$0xff]
      %v542 = vld [vmem:[%s531 + $0x78] sm:$0xff]
      %v543 = vld [vmem:[%s531 + $0x80] sm:$0xff]
      %v544 = vld [vmem:[%s531 + $0x90] sm:$0xff]
      %v545 = vld [vmem:[%s531 + $0x98] sm:$0xff]
      %v546 = vld [vmem:[%s531 + $0xa8] sm:$0xff]
      %v547 = vld [vmem:[%s531 + $0xb0] sm:$0xff]
      %v548 = vld [vmem:[%s531 + $0xc0] sm:$0xff]
      %v549 = vld [vmem:[%s531 + $0xc8] sm:$0xff]
      %v550 = vld [vmem:[%s531 + $0xd8] sm:$0xff]
      %v551 = vld [vmem:[%s531 + $0xe0] sm:$0xff]
      %v552 = vld [vmem:[%s531 + $0xf0] sm:$0xff]
      %v553 = vld [vmem:[%s531 + $0xf8] sm:$0xff]
      %v554 = vld [vmem:[%s531 + $0x108] sm:$0xff]
      %v555 = vld [vmem:[%s531 + $0x110] sm:$0xff]
      %v556 = vld [vmem:[%s531 + $0x120] sm:$0xff]
      %v557 = vld [vmem:[%s531 + $0x128] sm:$0xff]
      %v558 = vld [vmem:[%s531 + $0x138] sm:$0xff]
      %v559 = vld [vmem:[%s531 + $0x140] sm:$0xff]
      %v560 = vld [vmem:[%s531 + $0x150] sm:$0xff]
      %v561 = vld [vmem:[%s531 + $0x158] sm:$0xff]
      %v562 = vld [vmem:[%s531 + $0x168] sm:$0xff]
      %v563 = vld [vmem:[%s531 + $0x170] sm:$0xff]
      %v564 = vpack.c.bf16 %v533, %v532
      %v565 = vpack.c.bf16 %v535, %v534
      %v566 = vpack.c.bf16 %v537, %v536
      %v567 = vpack.c.bf16 %v539, %v538
      %v568 = vpack.c.bf16 %v541, %v540
      %v569 = vpack.c.bf16 %v543, %v542
      %v570 = vpack.c.bf16 %v545, %v544
      %v571 = vpack.c.bf16 %v547, %v546
      %v572 = vpack.c.bf16 %v549, %v548
      %v573 = vpack.c.bf16 %v551, %v550
      %v574 = vpack.c.bf16 %v553, %v552
      %v575 = vpack.c.bf16 %v555, %v554
      %v576 = vpack.c.bf16 %v557, %v556
      %v577 = vpack.c.bf16 %v559, %v558
      %v578 = vpack.c.bf16 %v561, %v560
      %v579 = vpack.c.bf16 %v563, %v562
      %v580 = vld [vmem:[%s3] sm:$0xf]
      %v581 = vld [vmem:[%s3 + $0x4] sm:$0xf]
      %v582 = vld [vmem:[%s3 + $0x8] sm:$0xf]
      %v583 = vld [vmem:[%s3 + $0xc] sm:$0xf]
      %v584 = vld [vmem:[%s3 + $0x10] sm:$0xf]
      %v585 = vld [vmem:[%s3 + $0x14] sm:$0xf]
      %v586 = vld [vmem:[%s3 + $0x18] sm:$0xf]
      %v587 = vld [vmem:[%s3 + $0x1c] sm:$0xf]
      %v588 = vld [vmem:[%s3 + $0x20] sm:$0xf]
      %v589 = vld [vmem:[%s3 + $0x24] sm:$0xf]
      %v590 = vld [vmem:[%s3 + $0x28] sm:$0xf]
      %v591 = vld [vmem:[%s3 + $0x2c] sm:$0xf]
      %v592 = vld [vmem:[%s3 + $0x30] sm:$0xf]
      %v593 = vld [vmem:[%s3 + $0x34] sm:$0xf]
      %v594 = vld [vmem:[%s3 + $0x38] sm:$0xf]
      %v595 = vld [vmem:[%s3 + $0x3c] sm:$0xf]
      %v612 = vunpack.c.l.b16 %v580
      %v613 = vunpack.c.l.b16 %v581
      %v614 = vunpack.c.l.b16 %v582
      %v615 = vunpack.c.l.b16 %v583
      %v616 = vunpack.c.l.b16 %v584
      %v617 = vunpack.c.l.b16 %v585
      %v618 = vunpack.c.l.b16 %v586
      %v619 = vunpack.c.l.b16 %v587
      %v620 = vunpack.c.l.b16 %v588
      %v621 = vunpack.c.l.b16 %v589
      %v622 = vunpack.c.l.b16 %v590
      %v623 = vunpack.c.l.b16 %v591
      %v624 = vunpack.c.l.b16 %v592
      %v625 = vunpack.c.l.b16 %v593
      %v626 = vunpack.c.l.b16 %v594
      %v627 = vunpack.c.l.b16 %v595
      %v628 = vpack.c.b16 %v613, %v612
      %v629 = vpack.c.b16 %v615, %v614
      %v630 = vpack.c.b16 %v617, %v616
      %v631 = vpack.c.b16 %v619, %v618
      %v632 = vpack.c.b16 %v621, %v620
      %v633 = vpack.c.b16 %v623, %v622
      %v634 = vpack.c.b16 %v625, %v624
      %v635 = vpack.c.b16 %v627, %v626
      %644 = vmatprep.subr.bf16.mxu0 0
      %645 = vmatpush1.bf16.msra.mxu0 %v635
      %646 = vmatprep.subr.bf16.mxu0 0
      %647 = vmatpush1.bf16.msra.mxu0 %v634
      %648 = vmatprep.subr.bf16.mxu0 0
      %649 = vmatpush1.bf16.msra.mxu0 %v633
      %650 = vmatprep.subr.bf16.mxu0 0
      %651 = vmatpush1.bf16.msra.mxu0 %v632
      %652 = vmatprep.subr.bf16.mxu0 0
      %653 = vmatpush1.bf16.msra.mxu0 %v631
      %654 = vmatprep.subr.bf16.mxu0 0
      %655 = vmatpush1.bf16.msra.mxu0 %v630
      %656 = vmatprep.subr.bf16.mxu0 0
      %657 = vmatpush1.bf16.msra.mxu0 %v629
      %658 = vmatprep.subr.bf16.mxu0 0
      %659 = vmatpush1.bf16.msra.mxu0 %v628
      %660 = vmatprep.subr.bf16.mxu0 0
      %661 = vmatpush2.bf16.msra.mxu0 0
      %662 = vmatprep.subr.bf16.mxu0 0
      %663 = vmatpush2.bf16.msra.mxu0 0
      %664 = vmatprep.subr.bf16.mxu0 0
      %665 = vmatpush2.bf16.msra.mxu0 0
      %666 = vmatprep.subr.bf16.mxu0 0
      %667 = vmatpush2.bf16.msra.mxu0 0
      %668 = vmatprep.subr.bf16.mxu0 0
      %669 = vmatpush2.bf16.msra.mxu0 0
      %670 = vmatprep.subr.bf16.mxu0 0
      %671 = vmatpush2.bf16.msra.mxu0 0
      %672 = vmatprep.subr.bf16.mxu0 0
      %673 = vmatpush2.bf16.msra.mxu0 0
      %674 = vmatprep.subr.bf16.mxu0 0
      %675 = vmatpush2.bf16.msra.mxu0 0
      %676 = vmatprep.mubr.bf16.mxu0 0
      %677 = vmatmul.mubr.bf16.gmra.mxu0 %v564
      %v678 = vpop.f32.mrf.mxu0
      %v679 = vadd.f32 0.0, %v678
      %v680 = vpop.f32.mrf.mxu0
      %v681 = vpop.f32.mrf.mxu0
      %v682 = vadd.f32 0.0, %v681
      %v683 = vpop.f32.mrf.mxu0
      %684 = vmatprep.mubr.bf16.mxu0 0
      %685 = vmatmul.mubr.bf16.gmra.mxu0 %v565
      %v686 = vpop.f32.mrf.mxu0
      %v687 = vadd.f32 0.0, %v686
      %v688 = vpop.f32.mrf.mxu0
      %v689 = vpop.f32.mrf.mxu0
      %v690 = vadd.f32 0.0, %v689
      %v691 = vpop.f32.mrf.mxu0
      %692 = vmatprep.mubr.bf16.mxu0 0
      %693 = vmatmul.mubr.bf16.gmra.mxu0 %v566
      %v694 = vpop.f32.mrf.mxu0
      %v695 = vadd.f32 0.0, %v694
      %v696 = vpop.f32.mrf.mxu0
      %v697 = vpop.f32.mrf.mxu0
      %v698 = vadd.f32 0.0, %v697
      %v699 = vpop.f32.mrf.mxu0
      %700 = vmatprep.mubr.bf16.mxu0 0
      %701 = vmatmul.mubr.bf16.gmra.mxu0 %v567
      %v702 = vpop.f32.mrf.mxu0
      %v703 = vadd.f32 0.0, %v702
      %v704 = vpop.f32.mrf.mxu0
      %v705 = vpop.f32.mrf.mxu0
      %v706 = vadd.f32 0.0, %v705
      %v707 = vpop.f32.mrf.mxu0
      %708 = vmatprep.mubr.bf16.mxu0 0
      %709 = vmatmul.mubr.bf16.gmra.mxu0 %v568
      %v710 = vpop.f32.mrf.mxu0
      %v711 = vadd.f32 0.0, %v710
      %v712 = vpop.f32.mrf.mxu0
      %v713 = vpop.f32.mrf.mxu0
      %v714 = vadd.f32 0.0, %v713
      %v715 = vpop.f32.mrf.mxu0
      %716 = vmatprep.mubr.bf16.mxu0 0
      %717 = vmatmul.mubr.bf16.gmra.mxu0 %v569
      %v718 = vpop.f32.mrf.mxu0
      %v719 = vadd.f32 0.0, %v718
      %v720 = vpop.f32.mrf.mxu0
      %v721 = vpop.f32.mrf.mxu0
      %v722 = vadd.f32 0.0, %v721
      %v723 = vpop.f32.mrf.mxu0
      %724 = vmatprep.mubr.bf16.mxu0 0
      %725 = vmatmul.mubr.bf16.gmra.mxu0 %v570
      %v726 = vpop.f32.mrf.mxu0
      %v727 = vadd.f32 0.0, %v726
      %v728 = vpop.f32.mrf.mxu0
      %v729 = vpop.f32.mrf.mxu0
      %v730 = vadd.f32 0.0, %v729
      %v731 = vpop.f32.mrf.mxu0
      %732 = vmatprep.mubr.bf16.mxu0 0
      %733 = vmatmul.mubr.bf16.gmra.mxu0 %v571
      %v734 = vpop.f32.mrf.mxu0
      %v735 = vadd.f32 0.0, %v734
      %v736 = vpop.f32.mrf.mxu0
      %v737 = vpop.f32.mrf.mxu0
      %v738 = vadd.f32 0.0, %v737
      %v739 = vpop.f32.mrf.mxu0
      %740 = vmatprep.mubr.bf16.mxu0 0
      %741 = vmatmul.mubr.bf16.gmra.mxu0 %v572
      %v742 = vpop.f32.mrf.mxu0
      %v743 = vadd.f32 0.0, %v742
      %v744 = vpop.f32.mrf.mxu0
      %v745 = vpop.f32.mrf.mxu0
      %v746 = vadd.f32 0.0, %v745
      %v747 = vpop.f32.mrf.mxu0
      %748 = vmatprep.mubr.bf16.mxu0 0
      %749 = vmatmul.mubr.bf16.gmra.mxu0 %v573
      %v750 = vpop.f32.mrf.mxu0
      %v751 = vadd.f32 0.0, %v750
      %v752 = vpop.f32.mrf.mxu0
      %v753 = vpop.f32.mrf.mxu0
      %v754 = vadd.f32 0.0, %v753
      %v755 = vpop.f32.mrf.mxu0
      %756 = vmatprep.mubr.bf16.mxu0 0
      %757 = vmatmul.mubr.bf16.gmra.mxu0 %v574
      %v758 = vpop.f32.mrf.mxu0
      %v759 = vadd.f32 0.0, %v758
      %v760 = vpop.f32.mrf.mxu0
      %v761 = vpop.f32.mrf.mxu0
      %v762 = vadd.f32 0.0, %v761
      %v763 = vpop.f32.mrf.mxu0
      %764 = vmatprep.mubr.bf16.mxu0 0
      %765 = vmatmul.mubr.bf16.gmra.mxu0 %v575
      %v766 = vpop.f32.mrf.mxu0
      %v767 = vadd.f32 0.0, %v766
      %v768 = vpop.f32.mrf.mxu0
      %v769 = vpop.f32.mrf.mxu0
      %v770 = vadd.f32 0.0, %v769
      %v771 = vpop.f32.mrf.mxu0
      %772 = vmatprep.mubr.bf16.mxu0 0
      %773 = vmatmul.mubr.bf16.gmra.mxu0 %v576
      %v774 = vpop.f32.mrf.mxu0
      %v775 = vadd.f32 0.0, %v774
      %v776 = vpop.f32.mrf.mxu0
      %v777 = vpop.f32.mrf.mxu0
      %v778 = vadd.f32 0.0, %v777
      %v779 = vpop.f32.mrf.mxu0
      %780 = vmatprep.mubr.bf16.mxu0 0
      %781 = vmatmul.mubr.bf16.gmra.mxu0 %v577
      %v782 = vpop.f32.mrf.mxu0
      %v783 = vadd.f32 0.0, %v782
      %v784 = vpop.f32.mrf.mxu0
      %v785 = vpop.f32.mrf.mxu0
      %v786 = vadd.f32 0.0, %v785
      %v787 = vpop.f32.mrf.mxu0
      %788 = vmatprep.mubr.bf16.mxu0 0
      %789 = vmatmul.mubr.bf16.gmra.mxu0 %v578
      %v790 = vpop.f32.mrf.mxu0
      %v791 = vadd.f32 0.0, %v790
      %v792 = vpop.f32.mrf.mxu0
      %v793 = vpop.f32.mrf.mxu0
      %v794 = vadd.f32 0.0, %v793
      %v795 = vpop.f32.mrf.mxu0
      %796 = vmatprep.mubr.bf16.mxu0 0
      %797 = vmatmul.mubr.bf16.gmra.mxu0 %v579
      %v798 = vpop.f32.mrf.mxu0
      %v799 = vadd.f32 0.0, %v798
      %v800 = vpop.f32.mrf.mxu0
      %v801 = vpop.f32.mrf.mxu0
      %v802 = vadd.f32 0.0, %v801
      %v803 = vpop.f32.mrf.mxu0
      %804 = vdwg.mxu0
      %805 = vst [vmem:[#allocation3] sm:$0xff] %v679
      %806 = vst [vmem:[#allocation3 + $0x8] sm:$0xff] %v682
      %807 = vst [vmem:[#allocation3 + $0x10] sm:$0xff] %v687
      %808 = vst [vmem:[#allocation3 + $0x18] sm:$0xff] %v690
      %809 = vst [vmem:[#allocation3 + $0x20] sm:$0xff] %v695
      %810 = vst [vmem:[#allocation3 + $0x28] sm:$0xff] %v698
      %811 = vst [vmem:[#allocation3 + $0x30] sm:$0xff] %v703
      %812 = vst [vmem:[#allocation3 + $0x38] sm:$0xff] %v706
      %813 = vst [vmem:[#allocation3 + $0x40] sm:$0xff] %v711
      %814 = vst [vmem:[#allocation3 + $0x48] sm:$0xff] %v714
      %815 = vst [vmem:[#allocation3 + $0x50] sm:$0xff] %v719
      %816 = vst [vmem:[#allocation3 + $0x58] sm:$0xff] %v722
      %817 = vst [vmem:[#allocation3 + $0x60] sm:$0xff] %v727
      %818 = vst [vmem:[#allocation3 + $0x68] sm:$0xff] %v730
      %819 = vst [vmem:[#allocation3 + $0x70] sm:$0xff] %v735
      %820 = vst [vmem:[#allocation3 + $0x78] sm:$0xff] %v738
      %821 = vst [vmem:[#allocation3 + $0x80] sm:$0xff] %v743
      %822 = vst [vmem:[#allocation3 + $0x88] sm:$0xff] %v746
      %823 = vst [vmem:[#allocation3 + $0x90] sm:$0xff] %v751
      %824 = vst [vmem:[#allocation3 + $0x98] sm:$0xff] %v754
      %825 = vst [vmem:[#allocation3 + $0xa0] sm:$0xff] %v759
      %826 = vst [vmem:[#allocation3 + $0xa8] sm:$0xff] %v762
      %827 = vst [vmem:[#allocation3 + $0xb0] sm:$0xff] %v767
      %828 = vst [vmem:[#allocation3 + $0xb8] sm:$0xff] %v770
      %829 = vst [vmem:[#allocation3 + $0xc0] sm:$0xff] %v775
      %830 = vst [vmem:[#allocation3 + $0xc8] sm:$0xff] %v778
      %831 = vst [vmem:[#allocation3 + $0xd0] sm:$0xff] %v783
      %832 = vst [vmem:[#allocation3 + $0xd8] sm:$0xff] %v786
      %833 = vst [vmem:[#allocation3 + $0xe0] sm:$0xff] %v791
      %834 = vst [vmem:[#allocation3 + $0xe8] sm:$0xff] %v794
      %835 = vst [vmem:[#allocation3 + $0xf0] sm:$0xff] %v799
      %836 = vst [vmem:[#allocation3 + $0xf8] sm:$0xff] %v802
      %v837 = vld [vmem:[%s531 + $0x1] sm:$0xff]
      %v838 = vld [vmem:[%s531 + $0x9] sm:$0xff]
      %v839 = vld [vmem:[%s531 + $0x19] sm:$0xff]
      %v840 = vld [vmem:[%s531 + $0x21] sm:$0xff]
      %v841 = vld [vmem:[%s531 + $0x31] sm:$0xff]
      %v842 = vld [vmem:[%s531 + $0x39] sm:$0xff]
      %v843 = vld [vmem:[%s531 + $0x49] sm:$0xff]
      %v844 = vld [vmem:[%s531 + $0x51] sm:$0xff]
      %v845 = vld [vmem:[%s531 + $0x61] sm:$0xff]
      %v846 = vld [vmem:[%s531 + $0x69] sm:$0xff]
      %v847 = vld [vmem:[%s531 + $0x79] sm:$0xff]
      %v848 = vld [vmem:[%s531 + $0x81] sm:$0xff]
      %v849 = vld [vmem:[%s531 + $0x91] sm:$0xff]
      %v850 = vld [vmem:[%s531 + $0x99] sm:$0xff]
      %v851 = vld [vmem:[%s531 + $0xa9] sm:$0xff]
      %v852 = vld [vmem:[%s531 + $0xb1] sm:$0xff]
      %v853 = vld [vmem:[%s531 + $0xc1] sm:$0xff]
      %v854 = vld [vmem:[%s531 + $0xc9] sm:$0xff]
      %v855 = vld [vmem:[%s531 + $0xd9] sm:$0xff]
      %v856 = vld [vmem:[%s531 + $0xe1] sm:$0xff]
      %v857 = vld [vmem:[%s531 + $0xf1] sm:$0xff]
      %v858 = vld [vmem:[%s531 + $0xf9] sm:$0xff]
      %v859 = vld [vmem:[%s531 + $0x109] sm:$0xff]
      %v860 = vld [vmem:[%s531 + $0x111] sm:$0xff]
      %v861 = vld [vmem:[%s531 + $0x121] sm:$0xff]
      %v862 = vld [vmem:[%s531 + $0x129] sm:$0xff]
      %v863 = vld [vmem:[%s531 + $0x139] sm:$0xff]
      %v864 = vld [vmem:[%s531 + $0x141] sm:$0xff]
      %v865 = vld [vmem:[%s531 + $0x151] sm:$0xff]
      %v866 = vld [vmem:[%s531 + $0x159] sm:$0xff]
      %v867 = vld [vmem:[%s531 + $0x169] sm:$0xff]
      %v868 = vld [vmem:[%s531 + $0x171] sm:$0xff]
      %v869 = vpack.c.bf16 %v838, %v837
      %v870 = vpack.c.bf16 %v840, %v839
      %v871 = vpack.c.bf16 %v842, %v841
      %v872 = vpack.c.bf16 %v844, %v843
      %v873 = vpack.c.bf16 %v846, %v845
      %v874 = vpack.c.bf16 %v848, %v847
      %v875 = vpack.c.bf16 %v850, %v849
      %v876 = vpack.c.bf16 %v852, %v851
      %v877 = vpack.c.bf16 %v854, %v853
      %v878 = vpack.c.bf16 %v856, %v855
      %v879 = vpack.c.bf16 %v858, %v857
      %v880 = vpack.c.bf16 %v860, %v859
      %v881 = vpack.c.bf16 %v862, %v861
      %v882 = vpack.c.bf16 %v864, %v863
      %v883 = vpack.c.bf16 %v866, %v865
      %v884 = vpack.c.bf16 %v868, %v867
      %s885 = scalar_lea.vmem %s3, 64
      %v886 = vld [vmem:[%s885] sm:$0xf]
      %v887 = vld [vmem:[%s885 + $0x4] sm:$0xf]
      %v888 = vld [vmem:[%s885 + $0x8] sm:$0xf]
      %v889 = vld [vmem:[%s885 + $0xc] sm:$0xf]
      %v890 = vld [vmem:[%s885 + $0x10] sm:$0xf]
      %v891 = vld [vmem:[%s885 + $0x14] sm:$0xf]
      %v892 = vld [vmem:[%s885 + $0x18] sm:$0xf]
      %v893 = vld [vmem:[%s885 + $0x1c] sm:$0xf]
      %v894 = vld [vmem:[%s885 + $0x20] sm:$0xf]
      %v895 = vld [vmem:[%s885 + $0x24] sm:$0xf]
      %v896 = vld [vmem:[%s885 + $0x28] sm:$0xf]
      %v897 = vld [vmem:[%s885 + $0x2c] sm:$0xf]
      %v898 = vld [vmem:[%s885 + $0x30] sm:$0xf]
      %v899 = vld [vmem:[%s885 + $0x34] sm:$0xf]
      %v900 = vld [vmem:[%s885 + $0x38] sm:$0xf]
      %v901 = vld [vmem:[%s885 + $0x3c] sm:$0xf]
      %v918 = vunpack.c.l.b16 %v886
      %v919 = vunpack.c.l.b16 %v887
      %v920 = vunpack.c.l.b16 %v888
      %v921 = vunpack.c.l.b16 %v889
      %v922 = vunpack.c.l.b16 %v890
      %v923 = vunpack.c.l.b16 %v891
      %v924 = vunpack.c.l.b16 %v892
      %v925 = vunpack.c.l.b16 %v893
      %v926 = vunpack.c.l.b16 %v894
      %v927 = vunpack.c.l.b16 %v895
      %v928 = vunpack.c.l.b16 %v896
      %v929 = vunpack.c.l.b16 %v897
      %v930 = vunpack.c.l.b16 %v898
      %v931 = vunpack.c.l.b16 %v899
      %v932 = vunpack.c.l.b16 %v900
      %v933 = vunpack.c.l.b16 %v901
      %v934 = vpack.c.b16 %v919, %v918
      %v935 = vpack.c.b16 %v921, %v920
      %v936 = vpack.c.b16 %v923, %v922
      %v937 = vpack.c.b16 %v925, %v924
      %v938 = vpack.c.b16 %v927, %v926
      %v939 = vpack.c.b16 %v929, %v928
      %v940 = vpack.c.b16 %v931, %v930
      %v941 = vpack.c.b16 %v933, %v932
      %950 = vmatprep.subr.bf16.mxu0 0
      %951 = vmatpush1.bf16.msra.mxu0 %v941
      %952 = vmatprep.subr.bf16.mxu0 0
      %953 = vmatpush1.bf16.msra.mxu0 %v940
      %954 = vmatprep.subr.bf16.mxu0 0
      %955 = vmatpush1.bf16.msra.mxu0 %v939
      %956 = vmatprep.subr.bf16.mxu0 0
      %957 = vmatpush1.bf16.msra.mxu0 %v938
      %958 = vmatprep.subr.bf16.mxu0 0
      %959 = vmatpush1.bf16.msra.mxu0 %v937
      %960 = vmatprep.subr.bf16.mxu0 0
      %961 = vmatpush1.bf16.msra.mxu0 %v936
      %962 = vmatprep.subr.bf16.mxu0 0
      %963 = vmatpush1.bf16.msra.mxu0 %v935
      %964 = vmatprep.subr.bf16.mxu0 0
      %965 = vmatpush1.bf16.msra.mxu0 %v934
      %966 = vmatprep.subr.bf16.mxu0 0
      %967 = vmatpush2.bf16.msra.mxu0 0
      %968 = vmatprep.subr.bf16.mxu0 0
      %969 = vmatpush2.bf16.msra.mxu0 0
      %970 = vmatprep.subr.bf16.mxu0 0
      %971 = vmatpush2.bf16.msra.mxu0 0
      %972 = vmatprep.subr.bf16.mxu0 0
      %973 = vmatpush2.bf16.msra.mxu0 0
      %974 = vmatprep.subr.bf16.mxu0 0
      %975 = vmatpush2.bf16.msra.mxu0 0
      %976 = vmatprep.subr.bf16.mxu0 0
      %977 = vmatpush2.bf16.msra.mxu0 0
      %978 = vmatprep.subr.bf16.mxu0 0
      %979 = vmatpush2.bf16.msra.mxu0 0
      %980 = vmatprep.subr.bf16.mxu0 0
      %981 = vmatpush2.bf16.msra.mxu0 0
      %982 = vmatprep.mubr.bf16.mxu0 0
      %983 = vmatmul.mubr.bf16.gmra.mxu0 %v869
      %v984 = vpop.f32.mrf.mxu0
      %v985 = vadd.f32 0.0, %v984
      %v986 = vpop.f32.mrf.mxu0
      %v987 = vpop.f32.mrf.mxu0
      %v988 = vadd.f32 0.0, %v987
      %v989 = vpop.f32.mrf.mxu0
      %990 = vmatprep.mubr.bf16.mxu0 0
      %991 = vmatmul.mubr.bf16.gmra.mxu0 %v870
      %v992 = vpop.f32.mrf.mxu0
      %v993 = vadd.f32 0.0, %v992
      %v994 = vpop.f32.mrf.mxu0
      %v995 = vpop.f32.mrf.mxu0
      %v996 = vadd.f32 0.0, %v995
      %v997 = vpop.f32.mrf.mxu0
      %998 = vmatprep.mubr.bf16.mxu0 0
      %999 = vmatmul.mubr.bf16.gmra.mxu0 %v871
      %v1000 = vpop.f32.mrf.mxu0
      %v1001 = vadd.f32 0.0, %v1000
      %v1002 = vpop.f32.mrf.mxu0
      %v1003 = vpop.f32.mrf.mxu0
      %v1004 = vadd.f32 0.0, %v1003
      %v1005 = vpop.f32.mrf.mxu0
      %1006 = vmatprep.mubr.bf16.mxu0 0
      %1007 = vmatmul.mubr.bf16.gmra.mxu0 %v872
      %v1008 = vpop.f32.mrf.mxu0
      %v1009 = vadd.f32 0.0, %v1008
      %v1010 = vpop.f32.mrf.mxu0
      %v1011 = vpop.f32.mrf.mxu0
      %v1012 = vadd.f32 0.0, %v1011
      %v1013 = vpop.f32.mrf.mxu0
      %1014 = vmatprep.mubr.bf16.mxu0 0
      %1015 = vmatmul.mubr.bf16.gmra.mxu0 %v873
      %v1016 = vpop.f32.mrf.mxu0
      %v1017 = vadd.f32 0.0, %v1016
      %v1018 = vpop.f32.mrf.mxu0
      %v1019 = vpop.f32.mrf.mxu0
      %v1020 = vadd.f32 0.0, %v1019
      %v1021 = vpop.f32.mrf.mxu0
      %1022 = vmatprep.mubr.bf16.mxu0 0
      %1023 = vmatmul.mubr.bf16.gmra.mxu0 %v874
      %v1024 = vpop.f32.mrf.mxu0
      %v1025 = vadd.f32 0.0, %v1024
      %v1026 = vpop.f32.mrf.mxu0
      %v1027 = vpop.f32.mrf.mxu0
      %v1028 = vadd.f32 0.0, %v1027
      %v1029 = vpop.f32.mrf.mxu0
      %1030 = vmatprep.mubr.bf16.mxu0 0
      %1031 = vmatmul.mubr.bf16.gmra.mxu0 %v875
      %v1032 = vpop.f32.mrf.mxu0
      %v1033 = vadd.f32 0.0, %v1032
      %v1034 = vpop.f32.mrf.mxu0
      %v1035 = vpop.f32.mrf.mxu0
      %v1036 = vadd.f32 0.0, %v1035
      %v1037 = vpop.f32.mrf.mxu0
      %1038 = vmatprep.mubr.bf16.mxu0 0
      %1039 = vmatmul.mubr.bf16.gmra.mxu0 %v876
      %v1040 = vpop.f32.mrf.mxu0
      %v1041 = vadd.f32 0.0, %v1040
      %v1042 = vpop.f32.mrf.mxu0
      %v1043 = vpop.f32.mrf.mxu0
      %v1044 = vadd.f32 0.0, %v1043
      %v1045 = vpop.f32.mrf.mxu0
      %1046 = vmatprep.mubr.bf16.mxu0 0
      %1047 = vmatmul.mubr.bf16.gmra.mxu0 %v877
      %v1048 = vpop.f32.mrf.mxu0
      %v1049 = vadd.f32 0.0, %v1048
      %v1050 = vpop.f32.mrf.mxu0
      %v1051 = vpop.f32.mrf.mxu0
      %v1052 = vadd.f32 0.0, %v1051
      %v1053 = vpop.f32.mrf.mxu0
      %1054 = vmatprep.mubr.bf16.mxu0 0
      %1055 = vmatmul.mubr.bf16.gmra.mxu0 %v878
      %v1056 = vpop.f32.mrf.mxu0
      %v1057 = vadd.f32 0.0, %v1056
      %v1058 = vpop.f32.mrf.mxu0
      %v1059 = vpop.f32.mrf.mxu0
      %v1060 = vadd.f32 0.0, %v1059
      %v1061 = vpop.f32.mrf.mxu0
      %1062 = vmatprep.mubr.bf16.mxu0 0
      %1063 = vmatmul.mubr.bf16.gmra.mxu0 %v879
      %v1064 = vpop.f32.mrf.mxu0
      %v1065 = vadd.f32 0.0, %v1064
      %v1066 = vpop.f32.mrf.mxu0
      %v1067 = vpop.f32.mrf.mxu0
      %v1068 = vadd.f32 0.0, %v1067
      %v1069 = vpop.f32.mrf.mxu0
      %1070 = vmatprep.mubr.bf16.mxu0 0
      %1071 = vmatmul.mubr.bf16.gmra.mxu0 %v880
      %v1072 = vpop.f32.mrf.mxu0
      %v1073 = vadd.f32 0.0, %v1072
      %v1074 = vpop.f32.mrf.mxu0
      %v1075 = vpop.f32.mrf.mxu0
      %v1076 = vadd.f32 0.0, %v1075
      %v1077 = vpop.f32.mrf.mxu0
      %1078 = vmatprep.mubr.bf16.mxu0 0
      %1079 = vmatmul.mubr.bf16.gmra.mxu0 %v881
      %v1080 = vpop.f32.mrf.mxu0
      %v1081 = vadd.f32 0.0, %v1080
      %v1082 = vpop.f32.mrf.mxu0
      %v1083 = vpop.f32.mrf.mxu0
      %v1084 = vadd.f32 0.0, %v1083
      %v1085 = vpop.f32.mrf.mxu0
      %1086 = vmatprep.mubr.bf16.mxu0 0
      %1087 = vmatmul.mubr.bf16.gmra.mxu0 %v882
      %v1088 = vpop.f32.mrf.mxu0
      %v1089 = vadd.f32 0.0, %v1088
      %v1090 = vpop.f32.mrf.mxu0
      %v1091 = vpop.f32.mrf.mxu0
      %v1092 = vadd.f32 0.0, %v1091
      %v1093 = vpop.f32.mrf.mxu0
      %1094 = vmatprep.mubr.bf16.mxu0 0
      %1095 = vmatmul.mubr.bf16.gmra.mxu0 %v883
      %v1096 = vpop.f32.mrf.mxu0
      %v1097 = vadd.f32 0.0, %v1096
      %v1098 = vpop.f32.mrf.mxu0
      %v1099 = vpop.f32.mrf.mxu0
      %v1100 = vadd.f32 0.0, %v1099
      %v1101 = vpop.f32.mrf.mxu0
      %1102 = vmatprep.mubr.bf16.mxu0 0
      %1103 = vmatmul.mubr.bf16.gmra.mxu0 %v884
      %v1104 = vpop.f32.mrf.mxu0
      %v1105 = vadd.f32 0.0, %v1104
      %v1106 = vpop.f32.mrf.mxu0
      %v1107 = vpop.f32.mrf.mxu0
      %v1108 = vadd.f32 0.0, %v1107
      %v1109 = vpop.f32.mrf.mxu0
      %1110 = vdwg.mxu0
      %v1111 = vld [vmem:[#allocation3] sm:$0xff]
      %v1112 = vld [vmem:[#allocation3 + $0x8] sm:$0xff]
      %v1113 = vld [vmem:[#allocation3 + $0x10] sm:$0xff]
      %v1114 = vld [vmem:[#allocation3 + $0x18] sm:$0xff]
      %v1115 = vld [vmem:[#allocation3 + $0x20] sm:$0xff]
      %v1116 = vld [vmem:[#allocation3 + $0x28] sm:$0xff]
      %v1117 = vld [vmem:[#allocation3 + $0x30] sm:$0xff]
      %v1118 = vld [vmem:[#allocation3 + $0x38] sm:$0xff]
      %v1119 = vld [vmem:[#allocation3 + $0x40] sm:$0xff]
      %v1120 = vld [vmem:[#allocation3 + $0x48] sm:$0xff]
      %v1121 = vld [vmem:[#allocation3 + $0x50] sm:$0xff]
      %v1122 = vld [vmem:[#allocation3 + $0x58] sm:$0xff]
      %v1123 = vld [vmem:[#allocation3 + $0x60] sm:$0xff]
      %v1124 = vld [vmem:[#allocation3 + $0x68] sm:$0xff]
      %v1125 = vld [vmem:[#allocation3 + $0x70] sm:$0xff]
      %v1126 = vld [vmem:[#allocation3 + $0x78] sm:$0xff]
      %v1127 = vld [vmem:[#allocation3 + $0x80] sm:$0xff]
      %v1128 = vld [vmem:[#allocation3 + $0x88] sm:$0xff]
      %v1129 = vld [vmem:[#allocation3 + $0x90] sm:$0xff]
      %v1130 = vld [vmem:[#allocation3 + $0x98] sm:$0xff]
      %v1131 = vld [vmem:[#allocation3 + $0xa0] sm:$0xff]
      %v1132 = vld [vmem:[#allocation3 + $0xa8] sm:$0xff]
      %v1133 = vld [vmem:[#allocation3 + $0xb0] sm:$0xff]
      %v1134 = vld [vmem:[#allocation3 + $0xb8] sm:$0xff]
      %v1135 = vld [vmem:[#allocation3 + $0xc0] sm:$0xff]
      %v1136 = vld [vmem:[#allocation3 + $0xc8] sm:$0xff]
      %v1137 = vld [vmem:[#allocation3 + $0xd0] sm:$0xff]
      %v1138 = vld [vmem:[#allocation3 + $0xd8] sm:$0xff]
      %v1139 = vld [vmem:[#allocation3 + $0xe0] sm:$0xff]
      %v1140 = vld [vmem:[#allocation3 + $0xe8] sm:$0xff]
      %v1141 = vld [vmem:[#allocation3 + $0xf0] sm:$0xff]
      %v1142 = vld [vmem:[#allocation3 + $0xf8] sm:$0xff]
      %v1143 = vadd.f32 %v1111, %v985
      %v1144 = vadd.f32 %v1112, %v988
      %v1145 = vadd.f32 %v1113, %v993
      %v1146 = vadd.f32 %v1114, %v996
      %v1147 = vadd.f32 %v1115, %v1001
      %v1148 = vadd.f32 %v1116, %v1004
      %v1149 = vadd.f32 %v1117, %v1009
      %v1150 = vadd.f32 %v1118, %v1012
      %v1151 = vadd.f32 %v1119, %v1017
      %v1152 = vadd.f32 %v1120, %v1020
      %v1153 = vadd.f32 %v1121, %v1025
      %v1154 = vadd.f32 %v1122, %v1028
      %v1155 = vadd.f32 %v1123, %v1033
      %v1156 = vadd.f32 %v1124, %v1036
      %v1157 = vadd.f32 %v1125, %v1041
      %v1158 = vadd.f32 %v1126, %v1044
      %v1159 = vadd.f32 %v1127, %v1049
      %v1160 = vadd.f32 %v1128, %v1052
      %v1161 = vadd.f32 %v1129, %v1057
      %v1162 = vadd.f32 %v1130, %v1060
      %v1163 = vadd.f32 %v1131, %v1065
      %v1164 = vadd.f32 %v1132, %v1068
      %v1165 = vadd.f32 %v1133, %v1073
      %v1166 = vadd.f32 %v1134, %v1076
      %v1167 = vadd.f32 %v1135, %v1081
      %v1168 = vadd.f32 %v1136, %v1084
      %v1169 = vadd.f32 %v1137, %v1089
      %v1170 = vadd.f32 %v1138, %v1092
      %v1171 = vadd.f32 %v1139, %v1097
      %v1172 = vadd.f32 %v1140, %v1100
      %v1173 = vadd.f32 %v1141, %v1105
      %v1174 = vadd.f32 %v1142, %v1108
      %1175 = vst [vmem:[#allocation3] sm:$0xff] %v1143
      %1176 = vst [vmem:[#allocation3 + $0x8] sm:$0xff] %v1144
      %1177 = vst [vmem:[#allocation3 + $0x10] sm:$0xff] %v1145
      %1178 = vst [vmem:[#allocation3 + $0x18] sm:$0xff] %v1146
      %1179 = vst [vmem:[#allocation3 + $0x20] sm:$0xff] %v1147
      %1180 = vst [vmem:[#allocation3 + $0x28] sm:$0xff] %v1148
      %1181 = vst [vmem:[#allocation3 + $0x30] sm:$0xff] %v1149
      %1182 = vst [vmem:[#allocation3 + $0x38] sm:$0xff] %v1150
      %1183 = vst [vmem:[#allocation3 + $0x40] sm:$0xff] %v1151
      %1184 = vst [vmem:[#allocation3 + $0x48] sm:$0xff] %v1152
      %1185 = vst [vmem:[#allocation3 + $0x50] sm:$0xff] %v1153
      %1186 = vst [vmem:[#allocation3 + $0x58] sm:$0xff] %v1154
      %1187 = vst [vmem:[#allocation3 + $0x60] sm:$0xff] %v1155
      %1188 = vst [vmem:[#allocation3 + $0x68] sm:$0xff] %v1156
      %1189 = vst [vmem:[#allocation3 + $0x70] sm:$0xff] %v1157
      %1190 = vst [vmem:[#allocation3 + $0x78] sm:$0xff] %v1158
      %1191 = vst [vmem:[#allocation3 + $0x80] sm:$0xff] %v1159
      %1192 = vst [vmem:[#allocation3 + $0x88] sm:$0xff] %v1160
      %1193 = vst [vmem:[#allocation3 + $0x90] sm:$0xff] %v1161
      %1194 = vst [vmem:[#allocation3 + $0x98] sm:$0xff] %v1162
      %1195 = vst [vmem:[#allocation3 + $0xa0] sm:$0xff] %v1163
      %1196 = vst [vmem:[#allocation3 + $0xa8] sm:$0xff] %v1164
      %1197 = vst [vmem:[#allocation3 + $0xb0] sm:$0xff] %v1165
      %1198 = vst [vmem:[#allocation3 + $0xb8] sm:$0xff] %v1166
      %1199 = vst [vmem:[#allocation3 + $0xc0] sm:$0xff] %v1167
      %1200 = vst [vmem:[#allocation3 + $0xc8] sm:$0xff] %v1168
      %1201 = vst [vmem:[#allocation3 + $0xd0] sm:$0xff] %v1169
      %1202 = vst [vmem:[#allocation3 + $0xd8] sm:$0xff] %v1170
      %1203 = vst [vmem:[#allocation3 + $0xe0] sm:$0xff] %v1171
      %1204 = vst [vmem:[#allocation3 + $0xe8] sm:$0xff] %v1172
      %1205 = vst [vmem:[#allocation3 + $0xf0] sm:$0xff] %v1173
      %1206 = vst [vmem:[#allocation3 + $0xf8] sm:$0xff] %v1174
      %v1207 = vld [vmem:[%s531 + $0x2] sm:$0xff]
      %v1208 = vld [vmem:[%s531 + $0xa] sm:$0xff]
      %v1209 = vld [vmem:[%s531 + $0x1a] sm:$0xff]
      %v1210 = vld [vmem:[%s531 + $0x22] sm:$0xff]
      %v1211 = vld [vmem:[%s531 + $0x32] sm:$0xff]
      %v1212 = vld [vmem:[%s531 + $0x3a] sm:$0xff]
      %v1213 = vld [vmem:[%s531 + $0x4a] sm:$0xff]
      %v1214 = vld [vmem:[%s531 + $0x52] sm:$0xff]
      %v1215 = vld [vmem:[%s531 + $0x62] sm:$0xff]
      %v1216 = vld [vmem:[%s531 + $0x6a] sm:$0xff]
      %v1217 = vld [vmem:[%s531 + $0x7a] sm:$0xff]
      %v1218 = vld [vmem:[%s531 + $0x82] sm:$0xff]
      %v1219 = vld [vmem:[%s531 + $0x92] sm:$0xff]
      %v1220 = vld [vmem:[%s531 + $0x9a] sm:$0xff]
      %v1221 = vld [vmem:[%s531 + $0xaa] sm:$0xff]
      %v1222 = vld [vmem:[%s531 + $0xb2] sm:$0xff]
      %v1223 = vld [vmem:[%s531 + $0xc2] sm:$0xff]
      %v1224 = vld [vmem:[%s531 + $0xca] sm:$0xff]
      %v1225 = vld [vmem:[%s531 + $0xda] sm:$0xff]
      %v1226 = vld [vmem:[%s531 + $0xe2] sm:$0xff]
      %v1227 = vld [vmem:[%s531 + $0xf2] sm:$0xff]
      %v1228 = vld [vmem:[%s531 + $0xfa] sm:$0xff]
      %v1229 = vld [vmem:[%s531 + $0x10a] sm:$0xff]
      %v1230 = vld [vmem:[%s531 + $0x112] sm:$0xff]
      %v1231 = vld [vmem:[%s531 + $0x122] sm:$0xff]
      %v1232 = vld [vmem:[%s531 + $0x12a] sm:$0xff]
      %v1233 = vld [vmem:[%s531 + $0x13a] sm:$0xff]
      %v1234 = vld [vmem:[%s531 + $0x142] sm:$0xff]
      %v1235 = vld [vmem:[%s531 + $0x152] sm:$0xff]
      %v1236 = vld [vmem:[%s531 + $0x15a] sm:$0xff]
      %v1237 = vld [vmem:[%s531 + $0x16a] sm:$0xff]
      %v1238 = vld [vmem:[%s531 + $0x172] sm:$0xff]
      %v1239 = vpack.c.bf16 %v1208, %v1207
      %v1240 = vpack.c.bf16 %v1210, %v1209
      %v1241 = vpack.c.bf16 %v1212, %v1211
      %v1242 = vpack.c.bf16 %v1214, %v1213
      %v1243 = vpack.c.bf16 %v1216, %v1215
      %v1244 = vpack.c.bf16 %v1218, %v1217
      %v1245 = vpack.c.bf16 %v1220, %v1219
      %v1246 = vpack.c.bf16 %v1222, %v1221
      %v1247 = vpack.c.bf16 %v1224, %v1223
      %v1248 = vpack.c.bf16 %v1226, %v1225
      %v1249 = vpack.c.bf16 %v1228, %v1227
      %v1250 = vpack.c.bf16 %v1230, %v1229
      %v1251 = vpack.c.bf16 %v1232, %v1231
      %v1252 = vpack.c.bf16 %v1234, %v1233
      %v1253 = vpack.c.bf16 %v1236, %v1235
      %v1254 = vpack.c.bf16 %v1238, %v1237
      %s1255 = scalar_lea.vmem %s3, 128
      %v1256 = vld [vmem:[%s1255] sm:$0xf]
      %v1257 = vld [vmem:[%s1255 + $0x4] sm:$0xf]
      %v1258 = vld [vmem:[%s1255 + $0x8] sm:$0xf]
      %v1259 = vld [vmem:[%s1255 + $0xc] sm:$0xf]
      %v1260 = vld [vmem:[%s1255 + $0x10] sm:$0xf]
      %v1261 = vld [vmem:[%s1255 + $0x14] sm:$0xf]
      %v1262 = vld [vmem:[%s1255 + $0x18] sm:$0xf]
      %v1263 = vld [vmem:[%s1255 + $0x1c] sm:$0xf]
      %v1264 = vld [vmem:[%s1255 + $0x20] sm:$0xf]
      %v1265 = vld [vmem:[%s1255 + $0x24] sm:$0xf]
      %v1266 = vld [vmem:[%s1255 + $0x28] sm:$0xf]
      %v1267 = vld [vmem:[%s1255 + $0x2c] sm:$0xf]
      %v1268 = vld [vmem:[%s1255 + $0x30] sm:$0xf]
      %v1269 = vld [vmem:[%s1255 + $0x34] sm:$0xf]
      %v1270 = vld [vmem:[%s1255 + $0x38] sm:$0xf]
      %v1271 = vld [vmem:[%s1255 + $0x3c] sm:$0xf]
      %v1288 = vunpack.c.l.b16 %v1256
      %v1289 = vunpack.c.l.b16 %v1257
      %v1290 = vunpack.c.l.b16 %v1258
      %v1291 = vunpack.c.l.b16 %v1259
      %v1292 = vunpack.c.l.b16 %v1260
      %v1293 = vunpack.c.l.b16 %v1261
      %v1294 = vunpack.c.l.b16 %v1262
      %v1295 = vunpack.c.l.b16 %v1263
      %v1296 = vunpack.c.l.b16 %v1264
      %v1297 = vunpack.c.l.b16 %v1265
      %v1298 = vunpack.c.l.b16 %v1266
      %v1299 = vunpack.c.l.b16 %v1267
      %v1300 = vunpack.c.l.b16 %v1268
      %v1301 = vunpack.c.l.b16 %v1269
      %v1302 = vunpack.c.l.b16 %v1270
      %v1303 = vunpack.c.l.b16 %v1271
      %v1304 = vpack.c.b16 %v1289, %v1288
      %v1305 = vpack.c.b16 %v1291, %v1290
      %v1306 = vpack.c.b16 %v1293, %v1292
      %v1307 = vpack.c.b16 %v1295, %v1294
      %v1308 = vpack.c.b16 %v1297, %v1296
      %v1309 = vpack.c.b16 %v1299, %v1298
      %v1310 = vpack.c.b16 %v1301, %v1300
      %v1311 = vpack.c.b16 %v1303, %v1302
      %1320 = vmatprep.subr.bf16.mxu0 0
      %1321 = vmatpush1.bf16.msra.mxu0 %v1311
      %1322 = vmatprep.subr.bf16.mxu0 0
      %1323 = vmatpush1.bf16.msra.mxu0 %v1310
      %1324 = vmatprep.subr.bf16.mxu0 0
      %1325 = vmatpush1.bf16.msra.mxu0 %v1309
      %1326 = vmatprep.subr.bf16.mxu0 0
      %1327 = vmatpush1.bf16.msra.mxu0 %v1308
      %1328 = vmatprep.subr.bf16.mxu0 0
      %1329 = vmatpush1.bf16.msra.mxu0 %v1307
      %1330 = vmatprep.subr.bf16.mxu0 0
      %1331 = vmatpush1.bf16.msra.mxu0 %v1306
      %1332 = vmatprep.subr.bf16.mxu0 0
      %1333 = vmatpush1.bf16.msra.mxu0 %v1305
      %1334 = vmatprep.subr.bf16.mxu0 0
      %1335 = vmatpush1.bf16.msra.mxu0 %v1304
      %1336 = vmatprep.subr.bf16.mxu0 0
      %1337 = vmatpush2.bf16.msra.mxu0 0
      %1338 = vmatprep.subr.bf16.mxu0 0
      %1339 = vmatpush2.bf16.msra.mxu0 0
      %1340 = vmatprep.subr.bf16.mxu0 0
      %1341 = vmatpush2.bf16.msra.mxu0 0
      %1342 = vmatprep.subr.bf16.mxu0 0
      %1343 = vmatpush2.bf16.msra.mxu0 0
      %1344 = vmatprep.subr.bf16.mxu0 0
      %1345 = vmatpush2.bf16.msra.mxu0 0
      %1346 = vmatprep.subr.bf16.mxu0 0
      %1347 = vmatpush2.bf16.msra.mxu0 0
      %1348 = vmatprep.subr.bf16.mxu0 0
      %1349 = vmatpush2.bf16.msra.mxu0 0
      %1350 = vmatprep.subr.bf16.mxu0 0
      %1351 = vmatpush2.bf16.msra.mxu0 0
      %1352 = vmatprep.mubr.bf16.mxu0 0
      %1353 = vmatmul.mubr.bf16.gmra.mxu0 %v1239
      %v1354 = vpop.f32.mrf.mxu0
      %v1355 = vadd.f32 0.0, %v1354
      %v1356 = vpop.f32.mrf.mxu0
      %v1357 = vpop.f32.mrf.mxu0
      %v1358 = vadd.f32 0.0, %v1357
      %v1359 = vpop.f32.mrf.mxu0
      %1360 = vmatprep.mubr.bf16.mxu0 0
      %1361 = vmatmul.mubr.bf16.gmra.mxu0 %v1240
      %v1362 = vpop.f32.mrf.mxu0
      %v1363 = vadd.f32 0.0, %v1362
      %v1364 = vpop.f32.mrf.mxu0
      %v1365 = vpop.f32.mrf.mxu0
      %v1366 = vadd.f32 0.0, %v1365
      %v1367 = vpop.f32.mrf.mxu0
      %1368 = vmatprep.mubr.bf16.mxu0 0
      %1369 = vmatmul.mubr.bf16.gmra.mxu0 %v1241
      %v1370 = vpop.f32.mrf.mxu0
      %v1371 = vadd.f32 0.0, %v1370
      %v1372 = vpop.f32.mrf.mxu0
      %v1373 = vpop.f32.mrf.mxu0
      %v1374 = vadd.f32 0.0, %v1373
      %v1375 = vpop.f32.mrf.mxu0
      %1376 = vmatprep.mubr.bf16.mxu0 0
      %1377 = vmatmul.mubr.bf16.gmra.mxu0 %v1242
      %v1378 = vpop.f32.mrf.mxu0
      %v1379 = vadd.f32 0.0, %v1378
      %v1380 = vpop.f32.mrf.mxu0
      %v1381 = vpop.f32.mrf.mxu0
      %v1382 = vadd.f32 0.0, %v1381
      %v1383 = vpop.f32.mrf.mxu0
      %1384 = vmatprep.mubr.bf16.mxu0 0
      %1385 = vmatmul.mubr.bf16.gmra.mxu0 %v1243
      %v1386 = vpop.f32.mrf.mxu0
      %v1387 = vadd.f32 0.0, %v1386
      %v1388 = vpop.f32.mrf.mxu0
      %v1389 = vpop.f32.mrf.mxu0
      %v1390 = vadd.f32 0.0, %v1389
      %v1391 = vpop.f32.mrf.mxu0
      %1392 = vmatprep.mubr.bf16.mxu0 0
      %1393 = vmatmul.mubr.bf16.gmra.mxu0 %v1244
      %v1394 = vpop.f32.mrf.mxu0
      %v1395 = vadd.f32 0.0, %v1394
      %v1396 = vpop.f32.mrf.mxu0
      %v1397 = vpop.f32.mrf.mxu0
      %v1398 = vadd.f32 0.0, %v1397
      %v1399 = vpop.f32.mrf.mxu0
      %1400 = vmatprep.mubr.bf16.mxu0 0
      %1401 = vmatmul.mubr.bf16.gmra.mxu0 %v1245
      %v1402 = vpop.f32.mrf.mxu0
      %v1403 = vadd.f32 0.0, %v1402
      %v1404 = vpop.f32.mrf.mxu0
      %v1405 = vpop.f32.mrf.mxu0
      %v1406 = vadd.f32 0.0, %v1405
      %v1407 = vpop.f32.mrf.mxu0
      %1408 = vmatprep.mubr.bf16.mxu0 0
      %1409 = vmatmul.mubr.bf16.gmra.mxu0 %v1246
      %v1410 = vpop.f32.mrf.mxu0
      %v1411 = vadd.f32 0.0, %v1410
      %v1412 = vpop.f32.mrf.mxu0
      %v1413 = vpop.f32.mrf.mxu0
      %v1414 = vadd.f32 0.0, %v1413
      %v1415 = vpop.f32.mrf.mxu0
      %1416 = vmatprep.mubr.bf16.mxu0 0
      %1417 = vmatmul.mubr.bf16.gmra.mxu0 %v1247
      %v1418 = vpop.f32.mrf.mxu0
      %v1419 = vadd.f32 0.0, %v1418
      %v1420 = vpop.f32.mrf.mxu0
      %v1421 = vpop.f32.mrf.mxu0
      %v1422 = vadd.f32 0.0, %v1421
      %v1423 = vpop.f32.mrf.mxu0
      %1424 = vmatprep.mubr.bf16.mxu0 0
      %1425 = vmatmul.mubr.bf16.gmra.mxu0 %v1248
      %v1426 = vpop.f32.mrf.mxu0
      %v1427 = vadd.f32 0.0, %v1426
      %v1428 = vpop.f32.mrf.mxu0
      %v1429 = vpop.f32.mrf.mxu0
      %v1430 = vadd.f32 0.0, %v1429
      %v1431 = vpop.f32.mrf.mxu0
      %1432 = vmatprep.mubr.bf16.mxu0 0
      %1433 = vmatmul.mubr.bf16.gmra.mxu0 %v1249
      %v1434 = vpop.f32.mrf.mxu0
      %v1435 = vadd.f32 0.0, %v1434
      %v1436 = vpop.f32.mrf.mxu0
      %v1437 = vpop.f32.mrf.mxu0
      %v1438 = vadd.f32 0.0, %v1437
      %v1439 = vpop.f32.mrf.mxu0
      %1440 = vmatprep.mubr.bf16.mxu0 0
      %1441 = vmatmul.mubr.bf16.gmra.mxu0 %v1250
      %v1442 = vpop.f32.mrf.mxu0
      %v1443 = vadd.f32 0.0, %v1442
      %v1444 = vpop.f32.mrf.mxu0
      %v1445 = vpop.f32.mrf.mxu0
      %v1446 = vadd.f32 0.0, %v1445
      %v1447 = vpop.f32.mrf.mxu0
      %1448 = vmatprep.mubr.bf16.mxu0 0
      %1449 = vmatmul.mubr.bf16.gmra.mxu0 %v1251
      %v1450 = vpop.f32.mrf.mxu0
      %v1451 = vadd.f32 0.0, %v1450
      %v1452 = vpop.f32.mrf.mxu0
      %v1453 = vpop.f32.mrf.mxu0
      %v1454 = vadd.f32 0.0, %v1453
      %v1455 = vpop.f32.mrf.mxu0
      %1456 = vmatprep.mubr.bf16.mxu0 0
      %1457 = vmatmul.mubr.bf16.gmra.mxu0 %v1252
      %v1458 = vpop.f32.mrf.mxu0
      %v1459 = vadd.f32 0.0, %v1458
      %v1460 = vpop.f32.mrf.mxu0
      %v1461 = vpop.f32.mrf.mxu0
      %v1462 = vadd.f32 0.0, %v1461
      %v1463 = vpop.f32.mrf.mxu0
      %1464 = vmatprep.mubr.bf16.mxu0 0
      %1465 = vmatmul.mubr.bf16.gmra.mxu0 %v1253
      %v1466 = vpop.f32.mrf.mxu0
      %v1467 = vadd.f32 0.0, %v1466
      %v1468 = vpop.f32.mrf.mxu0
      %v1469 = vpop.f32.mrf.mxu0
      %v1470 = vadd.f32 0.0, %v1469
      %v1471 = vpop.f32.mrf.mxu0
      %1472 = vmatprep.mubr.bf16.mxu0 0
      %1473 = vmatmul.mubr.bf16.gmra.mxu0 %v1254
      %v1474 = vpop.f32.mrf.mxu0
      %v1475 = vadd.f32 0.0, %v1474
      %v1476 = vpop.f32.mrf.mxu0
      %v1477 = vpop.f32.mrf.mxu0
      %v1478 = vadd.f32 0.0, %v1477
      %v1479 = vpop.f32.mrf.mxu0
      %1480 = vdwg.mxu0
      %v1481 = vld [vmem:[#allocation3] sm:$0xff]
      %v1482 = vld [vmem:[#allocation3 + $0x8] sm:$0xff]
      %v1483 = vld [vmem:[#allocation3 + $0x10] sm:$0xff]
      %v1484 = vld [vmem:[#allocation3 + $0x18] sm:$0xff]
      %v1485 = vld [vmem:[#allocation3 + $0x20] sm:$0xff]
      %v1486 = vld [vmem:[#allocation3 + $0x28] sm:$0xff]
      %v1487 = vld [vmem:[#allocation3 + $0x30] sm:$0xff]
      %v1488 = vld [vmem:[#allocation3 + $0x38] sm:$0xff]
      %v1489 = vld [vmem:[#allocation3 + $0x40] sm:$0xff]
      %v1490 = vld [vmem:[#allocation3 + $0x48] sm:$0xff]
      %v1491 = vld [vmem:[#allocation3 + $0x50] sm:$0xff]
      %v1492 = vld [vmem:[#allocation3 + $0x58] sm:$0xff]
      %v1493 = vld [vmem:[#allocation3 + $0x60] sm:$0xff]
      %v1494 = vld [vmem:[#allocation3 + $0x68] sm:$0xff]
      %v1495 = vld [vmem:[#allocation3 + $0x70] sm:$0xff]
      %v1496 = vld [vmem:[#allocation3 + $0x78] sm:$0xff]
      %v1497 = vld [vmem:[#allocation3 + $0x80] sm:$0xff]
      %v1498 = vld [vmem:[#allocation3 + $0x88] sm:$0xff]
      %v1499 = vld [vmem:[#allocation3 + $0x90] sm:$0xff]
      %v1500 = vld [vmem:[#allocation3 + $0x98] sm:$0xff]
      %v1501 = vld [vmem:[#allocation3 + $0xa0] sm:$0xff]
      %v1502 = vld [vmem:[#allocation3 + $0xa8] sm:$0xff]
      %v1503 = vld [vmem:[#allocation3 + $0xb0] sm:$0xff]
      %v1504 = vld [vmem:[#allocation3 + $0xb8] sm:$0xff]
      %v1505 = vld [vmem:[#allocation3 + $0xc0] sm:$0xff]
      %v1506 = vld [vmem:[#allocation3 + $0xc8] sm:$0xff]
      %v1507 = vld [vmem:[#allocation3 + $0xd0] sm:$0xff]
      %v1508 = vld [vmem:[#allocation3 + $0xd8] sm:$0xff]
      %v1509 = vld [vmem:[#allocation3 + $0xe0] sm:$0xff]
      %v1510 = vld [vmem:[#allocation3 + $0xe8] sm:$0xff]
      %v1511 = vld [vmem:[#allocation3 + $0xf0] sm:$0xff]
      %v1512 = vld [vmem:[#allocation3 + $0xf8] sm:$0xff]
      %v1513 = vadd.f32 %v1481, %v1355
      %v1514 = vadd.f32 %v1482, %v1358
      %v1515 = vadd.f32 %v1483, %v1363
      %v1516 = vadd.f32 %v1484, %v1366
      %v1517 = vadd.f32 %v1485, %v1371
      %v1518 = vadd.f32 %v1486, %v1374
      %v1519 = vadd.f32 %v1487, %v1379
      %v1520 = vadd.f32 %v1488, %v1382
      %v1521 = vadd.f32 %v1489, %v1387
      %v1522 = vadd.f32 %v1490, %v1390
      %v1523 = vadd.f32 %v1491, %v1395
      %v1524 = vadd.f32 %v1492, %v1398
      %v1525 = vadd.f32 %v1493, %v1403
      %v1526 = vadd.f32 %v1494, %v1406
      %v1527 = vadd.f32 %v1495, %v1411
      %v1528 = vadd.f32 %v1496, %v1414
      %v1529 = vadd.f32 %v1497, %v1419
      %v1530 = vadd.f32 %v1498, %v1422
      %v1531 = vadd.f32 %v1499, %v1427
      %v1532 = vadd.f32 %v1500, %v1430
      %v1533 = vadd.f32 %v1501, %v1435
      %v1534 = vadd.f32 %v1502, %v1438
      %v1535 = vadd.f32 %v1503, %v1443
      %v1536 = vadd.f32 %v1504, %v1446
      %v1537 = vadd.f32 %v1505, %v1451
      %v1538 = vadd.f32 %v1506, %v1454
      %v1539 = vadd.f32 %v1507, %v1459
      %v1540 = vadd.f32 %v1508, %v1462
      %v1541 = vadd.f32 %v1509, %v1467
      %v1542 = vadd.f32 %v1510, %v1470
      %v1543 = vadd.f32 %v1511, %v1475
      %v1544 = vadd.f32 %v1512, %v1478
      %1545 = vst [vmem:[#allocation3] sm:$0xff] %v1513
      %1546 = vst [vmem:[#allocation3 + $0x8] sm:$0xff] %v1514
      %1547 = vst [vmem:[#allocation3 + $0x10] sm:$0xff] %v1515
      %1548 = vst [vmem:[#allocation3 + $0x18] sm:$0xff] %v1516
      %1549 = vst [vmem:[#allocation3 + $0x20] sm:$0xff] %v1517
      %1550 = vst [vmem:[#allocation3 + $0x28] sm:$0xff] %v1518
      %1551 = vst [vmem:[#allocation3 + $0x30] sm:$0xff] %v1519
      %1552 = vst [vmem:[#allocation3 + $0x38] sm:$0xff] %v1520
      %1553 = vst [vmem:[#allocation3 + $0x40] sm:$0xff] %v1521
      %1554 = vst [vmem:[#allocation3 + $0x48] sm:$0xff] %v1522
      %1555 = vst [vmem:[#allocation3 + $0x50] sm:$0xff] %v1523
      %1556 = vst [vmem:[#allocation3 + $0x58] sm:$0xff] %v1524
      %1557 = vst [vmem:[#allocation3 + $0x60] sm:$0xff] %v1525
      %1558 = vst [vmem:[#allocation3 + $0x68] sm:$0xff] %v1526
      %1559 = vst [vmem:[#allocation3 + $0x70] sm:$0xff] %v1527
      %1560 = vst [vmem:[#allocation3 + $0x78] sm:$0xff] %v1528
      %1561 = vst [vmem:[#allocation3 + $0x80] sm:$0xff] %v1529
      %1562 = vst [vmem:[#allocation3 + $0x88] sm:$0xff] %v1530
      %1563 = vst [vmem:[#allocation3 + $0x90] sm:$0xff] %v1531
      %1564 = vst [vmem:[#allocation3 + $0x98] sm:$0xff] %v1532
      %1565 = vst [vmem:[#allocation3 + $0xa0] sm:$0xff] %v1533
      %1566 = vst [vmem:[#allocation3 + $0xa8] sm:$0xff] %v1534
      %1567 = vst [vmem:[#allocation3 + $0xb0] sm:$0xff] %v1535
      %1568 = vst [vmem:[#allocation3 + $0xb8] sm:$0xff] %v1536
      %1569 = vst [vmem:[#allocation3 + $0xc0] sm:$0xff] %v1537
      %1570 = vst [vmem:[#allocation3 + $0xc8] sm:$0xff] %v1538
      %1571 = vst [vmem:[#allocation3 + $0xd0] sm:$0xff] %v1539
      %1572 = vst [vmem:[#allocation3 + $0xd8] sm:$0xff] %v1540
      %1573 = vst [vmem:[#allocation3 + $0xe0] sm:$0xff] %v1541
      %1574 = vst [vmem:[#allocation3 + $0xe8] sm:$0xff] %v1542
      %1575 = vst [vmem:[#allocation3 + $0xf0] sm:$0xff] %v1543
      %1576 = vst [vmem:[#allocation3 + $0xf8] sm:$0xff] %v1544
      %s1577 = sadd.s32 %s529, 1
      %s1578 = smul.u32 %s1577, 24
      %s1579 = scalar_lea.vmem [#allocation2], %s1578
      %v1580 = vld [vmem:[%s1579] sm:$0xff]
      %v1581 = vld [vmem:[%s1579 + $0x8] sm:$0xff]
      %v1582 = vld [vmem:[%s1579 + $0x18] sm:$0xff]
      %v1583 = vld [vmem:[%s1579 + $0x20] sm:$0xff]
      %v1584 = vld [vmem:[%s1579 + $0x30] sm:$0xff]
      %v1585 = vld [vmem:[%s1579 + $0x38] sm:$0xff]
      %v1586 = vld [vmem:[%s1579 + $0x48] sm:$0xff]
      %v1587 = vld [vmem:[%s1579 + $0x50] sm:$0xff]
      %v1588 = vld [vmem:[%s1579 + $0x60] sm:$0xff]
      %v1589 = vld [vmem:[%s1579 + $0x68] sm:$0xff]
      %v1590 = vld [vmem:[%s1579 + $0x78] sm:$0xff]
      %v1591 = vld [vmem:[%s1579 + $0x80] sm:$0xff]
      %v1592 = vld [vmem:[%s1579 + $0x90] sm:$0xff]
      %v1593 = vld [vmem:[%s1579 + $0x98] sm:$0xff]
      %v1594 = vld [vmem:[%s1579 + $0xa8] sm:$0xff]
      %v1595 = vld [vmem:[%s1579 + $0xb0] sm:$0xff]
      %v1596 = vld [vmem:[%s1579 + $0xc0] sm:$0xff]
      %v1597 = vld [vmem:[%s1579 + $0xc8] sm:$0xff]
      %v1598 = vld [vmem:[%s1579 + $0xd8] sm:$0xff]
      %v1599 = vld [vmem:[%s1579 + $0xe0] sm:$0xff]
      %v1600 = vld [vmem:[%s1579 + $0xf0] sm:$0xff]
      %v1601 = vld [vmem:[%s1579 + $0xf8] sm:$0xff]
      %v1602 = vld [vmem:[%s1579 + $0x108] sm:$0xff]
      %v1603 = vld [vmem:[%s1579 + $0x110] sm:$0xff]
      %v1604 = vld [vmem:[%s1579 + $0x120] sm:$0xff]
      %v1605 = vld [vmem:[%s1579 + $0x128] sm:$0xff]
      %v1606 = vld [vmem:[%s1579 + $0x138] sm:$0xff]
      %v1607 = vld [vmem:[%s1579 + $0x140] sm:$0xff]
      %v1608 = vld [vmem:[%s1579 + $0x150] sm:$0xff]
      %v1609 = vld [vmem:[%s1579 + $0x158] sm:$0xff]
      %v1610 = vld [vmem:[%s1579 + $0x168] sm:$0xff]
      %v1611 = vld [vmem:[%s1579 + $0x170] sm:$0xff]
      %v1612 = vpack.c.bf16 %v1581, %v1580
      %v1613 = vpack.c.bf16 %v1583, %v1582
      %v1614 = vpack.c.bf16 %v1585, %v1584
      %v1615 = vpack.c.bf16 %v1587, %v1586
      %v1616 = vpack.c.bf16 %v1589, %v1588
      %v1617 = vpack.c.bf16 %v1591, %v1590
      %v1618 = vpack.c.bf16 %v1593, %v1592
      %v1619 = vpack.c.bf16 %v1595, %v1594
      %v1620 = vpack.c.bf16 %v1597, %v1596
      %v1621 = vpack.c.bf16 %v1599, %v1598
      %v1622 = vpack.c.bf16 %v1601, %v1600
      %v1623 = vpack.c.bf16 %v1603, %v1602
      %v1624 = vpack.c.bf16 %v1605, %v1604
      %v1625 = vpack.c.bf16 %v1607, %v1606
      %v1626 = vpack.c.bf16 %v1609, %v1608
      %v1627 = vpack.c.bf16 %v1611, %v1610
      %s1628 = scalar_lea.vmem %s3, 192
      %v1629 = vld [vmem:[%s1628] sm:$0xf]
      %v1630 = vld [vmem:[%s1628 + $0x4] sm:$0xf]
      %v1631 = vld [vmem:[%s1628 + $0x8] sm:$0xf]
      %v1632 = vld [vmem:[%s1628 + $0xc] sm:$0xf]
      %v1633 = vld [vmem:[%s1628 + $0x10] sm:$0xf]
      %v1634 = vld [vmem:[%s1628 + $0x14] sm:$0xf]
      %v1635 = vld [vmem:[%s1628 + $0x18] sm:$0xf]
      %v1636 = vld [vmem:[%s1628 + $0x1c] sm:$0xf]
      %v1637 = vld [vmem:[%s1628 + $0x20] sm:$0xf]
      %v1638 = vld [vmem:[%s1628 + $0x24] sm:$0xf]
      %v1639 = vld [vmem:[%s1628 + $0x28] sm:$0xf]
      %v1640 = vld [vmem:[%s1628 + $0x2c] sm:$0xf]
      %v1641 = vld [vmem:[%s1628 + $0x30] sm:$0xf]
      %v1642 = vld [vmem:[%s1628 + $0x34] sm:$0xf]
      %v1643 = vld [vmem:[%s1628 + $0x38] sm:$0xf]
      %v1644 = vld [vmem:[%s1628 + $0x3c] sm:$0xf]
      %v1661 = vunpack.c.l.b16 %v1629
      %v1662 = vunpack.c.l.b16 %v1630
      %v1663 = vunpack.c.l.b16 %v1631
      %v1664 = vunpack.c.l.b16 %v1632
      %v1665 = vunpack.c.l.b16 %v1633
      %v1666 = vunpack.c.l.b16 %v1634
      %v1667 = vunpack.c.l.b16 %v1635
      %v1668 = vunpack.c.l.b16 %v1636
      %v1669 = vunpack.c.l.b16 %v1637
      %v1670 = vunpack.c.l.b16 %v1638
      %v1671 = vunpack.c.l.b16 %v1639
      %v1672 = vunpack.c.l.b16 %v1640
      %v1673 = vunpack.c.l.b16 %v1641
      %v1674 = vunpack.c.l.b16 %v1642
      %v1675 = vunpack.c.l.b16 %v1643
      %v1676 = vunpack.c.l.b16 %v1644
      %v1677 = vpack.c.b16 %v1662, %v1661
      %v1678 = vpack.c.b16 %v1664, %v1663
      %v1679 = vpack.c.b16 %v1666, %v1665
      %v1680 = vpack.c.b16 %v1668, %v1667
      %v1681 = vpack.c.b16 %v1670, %v1669
      %v1682 = vpack.c.b16 %v1672, %v1671
      %v1683 = vpack.c.b16 %v1674, %v1673
      %v1684 = vpack.c.b16 %v1676, %v1675
      %1693 = vmatprep.subr.bf16.mxu0 0
      %1694 = vmatpush1.bf16.msra.mxu0 %v1684
      %1695 = vmatprep.subr.bf16.mxu0 0
      %1696 = vmatpush1.bf16.msra.mxu0 %v1683
      %1697 = vmatprep.subr.bf16.mxu0 0
      %1698 = vmatpush1.bf16.msra.mxu0 %v1682
      %1699 = vmatprep.subr.bf16.mxu0 0
      %1700 = vmatpush1.bf16.msra.mxu0 %v1681
      %1701 = vmatprep.subr.bf16.mxu0 0
      %1702 = vmatpush1.bf16.msra.mxu0 %v1680
      %1703 = vmatprep.subr.bf16.mxu0 0
      %1704 = vmatpush1.bf16.msra.mxu0 %v1679
      %1705 = vmatprep.subr.bf16.mxu0 0
      %1706 = vmatpush1.bf16.msra.mxu0 %v1678
      %1707 = vmatprep.subr.bf16.mxu0 0
      %1708 = vmatpush1.bf16.msra.mxu0 %v1677
      %1709 = vmatprep.subr.bf16.mxu0 0
      %1710 = vmatpush2.bf16.msra.mxu0 0
      %1711 = vmatprep.subr.bf16.mxu0 0
      %1712 = vmatpush2.bf16.msra.mxu0 0
      %1713 = vmatprep.subr.bf16.mxu0 0
      %1714 = vmatpush2.bf16.msra.mxu0 0
      %1715 = vmatprep.subr.bf16.mxu0 0
      %1716 = vmatpush2.bf16.msra.mxu0 0
      %1717 = vmatprep.subr.bf16.mxu0 0
      %1718 = vmatpush2.bf16.msra.mxu0 0
      %1719 = vmatprep.subr.bf16.mxu0 0
      %1720 = vmatpush2.bf16.msra.mxu0 0
      %1721 = vmatprep.subr.bf16.mxu0 0
      %1722 = vmatpush2.bf16.msra.mxu0 0
      %1723 = vmatprep.subr.bf16.mxu0 0
      %1724 = vmatpush2.bf16.msra.mxu0 0
      %1725 = vmatprep.mubr.bf16.mxu0 0
      %1726 = vmatmul.mubr.bf16.gmra.mxu0 %v1612
      %v1727 = vpop.f32.mrf.mxu0
      %v1728 = vadd.f32 0.0, %v1727
      %v1729 = vpop.f32.mrf.mxu0
      %v1730 = vpop.f32.mrf.mxu0
      %v1731 = vadd.f32 0.0, %v1730
      %v1732 = vpop.f32.mrf.mxu0
      %1733 = vmatprep.mubr.bf16.mxu0 0
      %1734 = vmatmul.mubr.bf16.gmra.mxu0 %v1613
      %v1735 = vpop.f32.mrf.mxu0
      %v1736 = vadd.f32 0.0, %v1735
      %v1737 = vpop.f32.mrf.mxu0
      %v1738 = vpop.f32.mrf.mxu0
      %v1739 = vadd.f32 0.0, %v1738
      %v1740 = vpop.f32.mrf.mxu0
      %1741 = vmatprep.mubr.bf16.mxu0 0
      %1742 = vmatmul.mubr.bf16.gmra.mxu0 %v1614
      %v1743 = vpop.f32.mrf.mxu0
      %v1744 = vadd.f32 0.0, %v1743
      %v1745 = vpop.f32.mrf.mxu0
      %v1746 = vpop.f32.mrf.mxu0
      %v1747 = vadd.f32 0.0, %v1746
      %v1748 = vpop.f32.mrf.mxu0
      %1749 = vmatprep.mubr.bf16.mxu0 0
      %1750 = vmatmul.mubr.bf16.gmra.mxu0 %v1615
      %v1751 = vpop.f32.mrf.mxu0
      %v1752 = vadd.f32 0.0, %v1751
      %v1753 = vpop.f32.mrf.mxu0
      %v1754 = vpop.f32.mrf.mxu0
      %v1755 = vadd.f32 0.0, %v1754
      %v1756 = vpop.f32.mrf.mxu0
      %1757 = vmatprep.mubr.bf16.mxu0 0
      %1758 = vmatmul.mubr.bf16.gmra.mxu0 %v1616
      %v1759 = vpop.f32.mrf.mxu0
      %v1760 = vadd.f32 0.0, %v1759
      %v1761 = vpop.f32.mrf.mxu0
      %v1762 = vpop.f32.mrf.mxu0
      %v1763 = vadd.f32 0.0, %v1762
      %v1764 = vpop.f32.mrf.mxu0
      %1765 = vmatprep.mubr.bf16.mxu0 0
      %1766 = vmatmul.mubr.bf16.gmra.mxu0 %v1617
      %v1767 = vpop.f32.mrf.mxu0
      %v1768 = vadd.f32 0.0, %v1767
      %v1769 = vpop.f32.mrf.mxu0
      %v1770 = vpop.f32.mrf.mxu0
      %v1771 = vadd.f32 0.0, %v1770
      %v1772 = vpop.f32.mrf.mxu0
      %1773 = vmatprep.mubr.bf16.mxu0 0
      %1774 = vmatmul.mubr.bf16.gmra.mxu0 %v1618
      %v1775 = vpop.f32.mrf.mxu0
      %v1776 = vadd.f32 0.0, %v1775
      %v1777 = vpop.f32.mrf.mxu0
      %v1778 = vpop.f32.mrf.mxu0
      %v1779 = vadd.f32 0.0, %v1778
      %v1780 = vpop.f32.mrf.mxu0
      %1781 = vmatprep.mubr.bf16.mxu0 0
      %1782 = vmatmul.mubr.bf16.gmra.mxu0 %v1619
      %v1783 = vpop.f32.mrf.mxu0
      %v1784 = vadd.f32 0.0, %v1783
      %v1785 = vpop.f32.mrf.mxu0
      %v1786 = vpop.f32.mrf.mxu0
      %v1787 = vadd.f32 0.0, %v1786
      %v1788 = vpop.f32.mrf.mxu0
      %1789 = vmatprep.mubr.bf16.mxu0 0
      %1790 = vmatmul.mubr.bf16.gmra.mxu0 %v1620
      %v1791 = vpop.f32.mrf.mxu0
      %v1792 = vadd.f32 0.0, %v1791
      %v1793 = vpop.f32.mrf.mxu0
      %v1794 = vpop.f32.mrf.mxu0
      %v1795 = vadd.f32 0.0, %v1794
      %v1796 = vpop.f32.mrf.mxu0
      %1797 = vmatprep.mubr.bf16.mxu0 0
      %1798 = vmatmul.mubr.bf16.gmra.mxu0 %v1621
      %v1799 = vpop.f32.mrf.mxu0
      %v1800 = vadd.f32 0.0, %v1799
      %v1801 = vpop.f32.mrf.mxu0
      %v1802 = vpop.f32.mrf.mxu0
      %v1803 = vadd.f32 0.0, %v1802
      %v1804 = vpop.f32.mrf.mxu0
      %1805 = vmatprep.mubr.bf16.mxu0 0
      %1806 = vmatmul.mubr.bf16.gmra.mxu0 %v1622
      %v1807 = vpop.f32.mrf.mxu0
      %v1808 = vadd.f32 0.0, %v1807
      %v1809 = vpop.f32.mrf.mxu0
      %v1810 = vpop.f32.mrf.mxu0
      %v1811 = vadd.f32 0.0, %v1810
      %v1812 = vpop.f32.mrf.mxu0
      %1813 = vmatprep.mubr.bf16.mxu0 0
      %1814 = vmatmul.mubr.bf16.gmra.mxu0 %v1623
      %v1815 = vpop.f32.mrf.mxu0
      %v1816 = vadd.f32 0.0, %v1815
      %v1817 = vpop.f32.mrf.mxu0
      %v1818 = vpop.f32.mrf.mxu0
      %v1819 = vadd.f32 0.0, %v1818
      %v1820 = vpop.f32.mrf.mxu0
      %1821 = vmatprep.mubr.bf16.mxu0 0
      %1822 = vmatmul.mubr.bf16.gmra.mxu0 %v1624
      %v1823 = vpop.f32.mrf.mxu0
      %v1824 = vadd.f32 0.0, %v1823
      %v1825 = vpop.f32.mrf.mxu0
      %v1826 = vpop.f32.mrf.mxu0
      %v1827 = vadd.f32 0.0, %v1826
      %v1828 = vpop.f32.mrf.mxu0
      %1829 = vmatprep.mubr.bf16.mxu0 0
      %1830 = vmatmul.mubr.bf16.gmra.mxu0 %v1625
      %v1831 = vpop.f32.mrf.mxu0
      %v1832 = vadd.f32 0.0, %v1831
      %v1833 = vpop.f32.mrf.mxu0
      %v1834 = vpop.f32.mrf.mxu0
      %v1835 = vadd.f32 0.0, %v1834
      %v1836 = vpop.f32.mrf.mxu0
      %1837 = vmatprep.mubr.bf16.mxu0 0
      %1838 = vmatmul.mubr.bf16.gmra.mxu0 %v1626
      %v1839 = vpop.f32.mrf.mxu0
      %v1840 = vadd.f32 0.0, %v1839
      %v1841 = vpop.f32.mrf.mxu0
      %v1842 = vpop.f32.mrf.mxu0
      %v1843 = vadd.f32 0.0, %v1842
      %v1844 = vpop.f32.mrf.mxu0
      %1845 = vmatprep.mubr.bf16.mxu0 0
      %1846 = vmatmul.mubr.bf16.gmra.mxu0 %v1627
      %v1847 = vpop.f32.mrf.mxu0
      %v1848 = vadd.f32 0.0, %v1847
      %v1849 = vpop.f32.mrf.mxu0
      %v1850 = vpop.f32.mrf.mxu0
      %v1851 = vadd.f32 0.0, %v1850
      %v1852 = vpop.f32.mrf.mxu0
      %1853 = vdwg.mxu0
      %v1854 = vld [vmem:[#allocation3] sm:$0xff]
      %v1855 = vld [vmem:[#allocation3 + $0x8] sm:$0xff]
      %v1856 = vld [vmem:[#allocation3 + $0x10] sm:$0xff]
      %v1857 = vld [vmem:[#allocation3 + $0x18] sm:$0xff]
      %v1858 = vld [vmem:[#allocation3 + $0x20] sm:$0xff]
      %v1859 = vld [vmem:[#allocation3 + $0x28] sm:$0xff]
      %v1860 = vld [vmem:[#allocation3 + $0x30] sm:$0xff]
      %v1861 = vld [vmem:[#allocation3 + $0x38] sm:$0xff]
      %v1862 = vld [vmem:[#allocation3 + $0x40] sm:$0xff]
      %v1863 = vld [vmem:[#allocation3 + $0x48] sm:$0xff]
      %v1864 = vld [vmem:[#allocation3 + $0x50] sm:$0xff]
      %v1865 = vld [vmem:[#allocation3 + $0x58] sm:$0xff]
      %v1866 = vld [vmem:[#allocation3 + $0x60] sm:$0xff]
      %v1867 = vld [vmem:[#allocation3 + $0x68] sm:$0xff]
      %v1868 = vld [vmem:[#allocation3 + $0x70] sm:$0xff]
      %v1869 = vld [vmem:[#allocation3 + $0x78] sm:$0xff]
      %v1870 = vld [vmem:[#allocation3 + $0x80] sm:$0xff]
      %v1871 = vld [vmem:[#allocation3 + $0x88] sm:$0xff]
      %v1872 = vld [vmem:[#allocation3 + $0x90] sm:$0xff]
      %v1873 = vld [vmem:[#allocation3 + $0x98] sm:$0xff]
      %v1874 = vld [vmem:[#allocation3 + $0xa0] sm:$0xff]
      %v1875 = vld [vmem:[#allocation3 + $0xa8] sm:$0xff]
      %v1876 = vld [vmem:[#allocation3 + $0xb0] sm:$0xff]
      %v1877 = vld [vmem:[#allocation3 + $0xb8] sm:$0xff]
      %v1878 = vld [vmem:[#allocation3 + $0xc0] sm:$0xff]
      %v1879 = vld [vmem:[#allocation3 + $0xc8] sm:$0xff]
      %v1880 = vld [vmem:[#allocation3 + $0xd0] sm:$0xff]
      %v1881 = vld [vmem:[#allocation3 + $0xd8] sm:$0xff]
      %v1882 = vld [vmem:[#allocation3 + $0xe0] sm:$0xff]
      %v1883 = vld [vmem:[#allocation3 + $0xe8] sm:$0xff]
      %v1884 = vld [vmem:[#allocation3 + $0xf0] sm:$0xff]
      %v1885 = vld [vmem:[#allocation3 + $0xf8] sm:$0xff]
      %v1886 = vadd.f32 %v1854, %v1728
      %v1887 = vadd.f32 %v1855, %v1731
      %v1888 = vadd.f32 %v1856, %v1736
      %v1889 = vadd.f32 %v1857, %v1739
      %v1890 = vadd.f32 %v1858, %v1744
      %v1891 = vadd.f32 %v1859, %v1747
      %v1892 = vadd.f32 %v1860, %v1752
      %v1893 = vadd.f32 %v1861, %v1755
      %v1894 = vadd.f32 %v1862, %v1760
      %v1895 = vadd.f32 %v1863, %v1763
      %v1896 = vadd.f32 %v1864, %v1768
      %v1897 = vadd.f32 %v1865, %v1771
      %v1898 = vadd.f32 %v1866, %v1776
      %v1899 = vadd.f32 %v1867, %v1779
      %v1900 = vadd.f32 %v1868, %v1784
      %v1901 = vadd.f32 %v1869, %v1787
      %v1902 = vadd.f32 %v1870, %v1792
      %v1903 = vadd.f32 %v1871, %v1795
      %v1904 = vadd.f32 %v1872, %v1800
      %v1905 = vadd.f32 %v1873, %v1803
      %v1906 = vadd.f32 %v1874, %v1808
      %v1907 = vadd.f32 %v1875, %v1811
      %v1908 = vadd.f32 %v1876, %v1816
      %v1909 = vadd.f32 %v1877, %v1819
      %v1910 = vadd.f32 %v1878, %v1824
      %v1911 = vadd.f32 %v1879, %v1827
      %v1912 = vadd.f32 %v1880, %v1832
      %v1913 = vadd.f32 %v1881, %v1835
      %v1914 = vadd.f32 %v1882, %v1840
      %v1915 = vadd.f32 %v1883, %v1843
      %v1916 = vadd.f32 %v1884, %v1848
      %v1917 = vadd.f32 %v1885, %v1851
      %1918 = vst [vmem:[#allocation3] sm:$0xff] %v1886
      %1919 = vst [vmem:[#allocation3 + $0x8] sm:$0xff] %v1887
      %1920 = vst [vmem:[#allocation3 + $0x10] sm:$0xff] %v1888
      %1921 = vst [vmem:[#allocation3 + $0x18] sm:$0xff] %v1889
      %1922 = vst [vmem:[#allocation3 + $0x20] sm:$0xff] %v1890
      %1923 = vst [vmem:[#allocation3 + $0x28] sm:$0xff] %v1891
      %1924 = vst [vmem:[#allocation3 + $0x30] sm:$0xff] %v1892
      %1925 = vst [vmem:[#allocation3 + $0x38] sm:$0xff] %v1893
      %1926 = vst [vmem:[#allocation3 + $0x40] sm:$0xff] %v1894
      %1927 = vst [vmem:[#allocation3 + $0x48] sm:$0xff] %v1895
      %1928 = vst [vmem:[#allocation3 + $0x50] sm:$0xff] %v1896
      %1929 = vst [vmem:[#allocation3 + $0x58] sm:$0xff] %v1897
      %1930 = vst [vmem:[#allocation3 + $0x60] sm:$0xff] %v1898
      %1931 = vst [vmem:[#allocation3 + $0x68] sm:$0xff] %v1899
      %1932 = vst [vmem:[#allocation3 + $0x70] sm:$0xff] %v1900
      %1933 = vst [vmem:[#allocation3 + $0x78] sm:$0xff] %v1901
      %1934 = vst [vmem:[#allocation3 + $0x80] sm:$0xff] %v1902
      %1935 = vst [vmem:[#allocation3 + $0x88] sm:$0xff] %v1903
      %1936 = vst [vmem:[#allocation3 + $0x90] sm:$0xff] %v1904
      %1937 = vst [vmem:[#allocation3 + $0x98] sm:$0xff] %v1905
      %1938 = vst [vmem:[#allocation3 + $0xa0] sm:$0xff] %v1906
      %1939 = vst [vmem:[#allocation3 + $0xa8] sm:$0xff] %v1907
      %1940 = vst [vmem:[#allocation3 + $0xb0] sm:$0xff] %v1908
      %1941 = vst [vmem:[#allocation3 + $0xb8] sm:$0xff] %v1909
      %1942 = vst [vmem:[#allocation3 + $0xc0] sm:$0xff] %v1910
      %1943 = vst [vmem:[#allocation3 + $0xc8] sm:$0xff] %v1911
      %1944 = vst [vmem:[#allocation3 + $0xd0] sm:$0xff] %v1912
      %1945 = vst [vmem:[#allocation3 + $0xd8] sm:$0xff] %v1913
      %1946 = vst [vmem:[#allocation3 + $0xe0] sm:$0xff] %v1914
      %1947 = vst [vmem:[#allocation3 + $0xe8] sm:$0xff] %v1915
      %1948 = vst [vmem:[#allocation3 + $0xf0] sm:$0xff] %v1916
      %1949 = vst [vmem:[#allocation3 + $0xf8] sm:$0xff] %v1917
      %v1950 = vld [vmem:[%s1579 + $0x1] sm:$0xff]
      %v1951 = vld [vmem:[%s1579 + $0x9] sm:$0xff]
      %v1952 = vld [vmem:[%s1579 + $0x19] sm:$0xff]
      %v1953 = vld [vmem:[%s1579 + $0x21] sm:$0xff]
      %v1954 = vld [vmem:[%s1579 + $0x31] sm:$0xff]
      %v1955 = vld [vmem:[%s1579 + $0x39] sm:$0xff]
      %v1956 = vld [vmem:[%s1579 + $0x49] sm:$0xff]
      %v1957 = vld [vmem:[%s1579 + $0x51] sm:$0xff]
      %v1958 = vld [vmem:[%s1579 + $0x61] sm:$0xff]
      %v1959 = vld [vmem:[%s1579 + $0x69] sm:$0xff]
      %v1960 = vld [vmem:[%s1579 + $0x79] sm:$0xff]
      %v1961 = vld [vmem:[%s1579 + $0x81] sm:$0xff]
      %v1962 = vld [vmem:[%s1579 + $0x91] sm:$0xff]
      %v1963 = vld [vmem:[%s1579 + $0x99] sm:$0xff]
      %v1964 = vld [vmem:[%s1579 + $0xa9] sm:$0xff]
      %v1965 = vld [vmem:[%s1579 + $0xb1] sm:$0xff]
      %v1966 = vld [vmem:[%s1579 + $0xc1] sm:$0xff]
      %v1967 = vld [vmem:[%s1579 + $0xc9] sm:$0xff]
      %v1968 = vld [vmem:[%s1579 + $0xd9] sm:$0xff]
      %v1969 = vld [vmem:[%s1579 + $0xe1] sm:$0xff]
      %v1970 = vld [vmem:[%s1579 + $0xf1] sm:$0xff]
      %v1971 = vld [vmem:[%s1579 + $0xf9] sm:$0xff]
      %v1972 = vld [vmem:[%s1579 + $0x109] sm:$0xff]
      %v1973 = vld [vmem:[%s1579 + $0x111] sm:$0xff]
      %v1974 = vld [vmem:[%s1579 + $0x121] sm:$0xff]
      %v1975 = vld [vmem:[%s1579 + $0x129] sm:$0xff]
      %v1976 = vld [vmem:[%s1579 + $0x139] sm:$0xff]
      %v1977 = vld [vmem:[%s1579 + $0x141] sm:$0xff]
      %v1978 = vld [vmem:[%s1579 + $0x151] sm:$0xff]
      %v1979 = vld [vmem:[%s1579 + $0x159] sm:$0xff]
      %v1980 = vld [vmem:[%s1579 + $0x169] sm:$0xff]
      %v1981 = vld [vmem:[%s1579 + $0x171] sm:$0xff]
      %v1982 = vpack.c.bf16 %v1951, %v1950
      %v1983 = vpack.c.bf16 %v1953, %v1952
      %v1984 = vpack.c.bf16 %v1955, %v1954
      %v1985 = vpack.c.bf16 %v1957, %v1956
      %v1986 = vpack.c.bf16 %v1959, %v1958
      %v1987 = vpack.c.bf16 %v1961, %v1960
      %v1988 = vpack.c.bf16 %v1963, %v1962
      %v1989 = vpack.c.bf16 %v1965, %v1964
      %v1990 = vpack.c.bf16 %v1967, %v1966
      %v1991 = vpack.c.bf16 %v1969, %v1968
      %v1992 = vpack.c.bf16 %v1971, %v1970
      %v1993 = vpack.c.bf16 %v1973, %v1972
      %v1994 = vpack.c.bf16 %v1975, %v1974
      %v1995 = vpack.c.bf16 %v1977, %v1976
      %v1996 = vpack.c.bf16 %v1979, %v1978
      %v1997 = vpack.c.bf16 %v1981, %v1980
      %s1998 = scalar_lea.vmem %s3, 256
      %v1999 = vld [vmem:[%s1998] sm:$0xf]
      %v2000 = vld [vmem:[%s1998 + $0x4] sm:$0xf]
      %v2001 = vld [vmem:[%s1998 + $0x8] sm:$0xf]
      %v2002 = vld [vmem:[%s1998 + $0xc] sm:$0xf]
      %v2003 = vld [vmem:[%s1998 + $0x10] sm:$0xf]
      %v2004 = vld [vmem:[%s1998 + $0x14] sm:$0xf]
      %v2005 = vld [vmem:[%s1998 + $0x18] sm:$0xf]
      %v2006 = vld [vmem:[%s1998 + $0x1c] sm:$0xf]
      %v2007 = vld [vmem:[%s1998 + $0x20] sm:$0xf]
      %v2008 = vld [vmem:[%s1998 + $0x24] sm:$0xf]
      %v2009 = vld [vmem:[%s1998 + $0x28] sm:$0xf]
      %v2010 = vld [vmem:[%s1998 + $0x2c] sm:$0xf]
      %v2011 = vld [vmem:[%s1998 + $0x30] sm:$0xf]
      %v2012 = vld [vmem:[%s1998 + $0x34] sm:$0xf]
      %v2013 = vld [vmem:[%s1998 + $0x38] sm:$0xf]
      %v2014 = vld [vmem:[%s1998 + $0x3c] sm:$0xf]
      %v2031 = vunpack.c.l.b16 %v1999
      %v2032 = vunpack.c.l.b16 %v2000
      %v2033 = vunpack.c.l.b16 %v2001
      %v2034 = vunpack.c.l.b16 %v2002
      %v2035 = vunpack.c.l.b16 %v2003
      %v2036 = vunpack.c.l.b16 %v2004
      %v2037 = vunpack.c.l.b16 %v2005
      %v2038 = vunpack.c.l.b16 %v2006
      %v2039 = vunpack.c.l.b16 %v2007
      %v2040 = vunpack.c.l.b16 %v2008
      %v2041 = vunpack.c.l.b16 %v2009
      %v2042 = vunpack.c.l.b16 %v2010
      %v2043 = vunpack.c.l.b16 %v2011
      %v2044 = vunpack.c.l.b16 %v2012
      %v2045 = vunpack.c.l.b16 %v2013
      %v2046 = vunpack.c.l.b16 %v2014
      %v2047 = vpack.c.b16 %v2032, %v2031
      %v2048 = vpack.c.b16 %v2034, %v2033
      %v2049 = vpack.c.b16 %v2036, %v2035
      %v2050 = vpack.c.b16 %v2038, %v2037
      %v2051 = vpack.c.b16 %v2040, %v2039
      %v2052 = vpack.c.b16 %v2042, %v2041
      %v2053 = vpack.c.b16 %v2044, %v2043
      %v2054 = vpack.c.b16 %v2046, %v2045
      %2063 = vmatprep.subr.bf16.mxu0 0
      %2064 = vmatpush1.bf16.msra.mxu0 %v2054
      %2065 = vmatprep.subr.bf16.mxu0 0
      %2066 = vmatpush1.bf16.msra.mxu0 %v2053
      %2067 = vmatprep.subr.bf16.mxu0 0
      %2068 = vmatpush1.bf16.msra.mxu0 %v2052
      %2069 = vmatprep.subr.bf16.mxu0 0
      %2070 = vmatpush1.bf16.msra.mxu0 %v2051
      %2071 = vmatprep.subr.bf16.mxu0 0
      %2072 = vmatpush1.bf16.msra.mxu0 %v2050
      %2073 = vmatprep.subr.bf16.mxu0 0
      %2074 = vmatpush1.bf16.msra.mxu0 %v2049
      %2075 = vmatprep.subr.bf16.mxu0 0
      %2076 = vmatpush1.bf16.msra.mxu0 %v2048
      %2077 = vmatprep.subr.bf16.mxu0 0
      %2078 = vmatpush1.bf16.msra.mxu0 %v2047
      %2079 = vmatprep.subr.bf16.mxu0 0
      %2080 = vmatpush2.bf16.msra.mxu0 0
      %2081 = vmatprep.subr.bf16.mxu0 0
      %2082 = vmatpush2.bf16.msra.mxu0 0
      %2083 = vmatprep.subr.bf16.mxu0 0
      %2084 = vmatpush2.bf16.msra.mxu0 0
      %2085 = vmatprep.subr.bf16.mxu0 0
      %2086 = vmatpush2.bf16.msra.mxu0 0
      %2087 = vmatprep.subr.bf16.mxu0 0
      %2088 = vmatpush2.bf16.msra.mxu0 0
      %2089 = vmatprep.subr.bf16.mxu0 0
      %2090 = vmatpush2.bf16.msra.mxu0 0
      %2091 = vmatprep.subr.bf16.mxu0 0
      %2092 = vmatpush2.bf16.msra.mxu0 0
      %2093 = vmatprep.subr.bf16.mxu0 0
      %2094 = vmatpush2.bf16.msra.mxu0 0
      %2095 = vmatprep.mubr.bf16.mxu0 0
      %2096 = vmatmul.mubr.bf16.gmra.mxu0 %v1982
      %v2097 = vpop.f32.mrf.mxu0
      %v2098 = vadd.f32 0.0, %v2097
      %v2099 = vpop.f32.mrf.mxu0
      %v2100 = vpop.f32.mrf.mxu0
      %v2101 = vadd.f32 0.0, %v2100
      %v2102 = vpop.f32.mrf.mxu0
      %2103 = vmatprep.mubr.bf16.mxu0 0
      %2104 = vmatmul.mubr.bf16.gmra.mxu0 %v1983
      %v2105 = vpop.f32.mrf.mxu0
      %v2106 = vadd.f32 0.0, %v2105
      %v2107 = vpop.f32.mrf.mxu0
      %v2108 = vpop.f32.mrf.mxu0
      %v2109 = vadd.f32 0.0, %v2108
      %v2110 = vpop.f32.mrf.mxu0
      %2111 = vmatprep.mubr.bf16.mxu0 0
      %2112 = vmatmul.mubr.bf16.gmra.mxu0 %v1984
      %v2113 = vpop.f32.mrf.mxu0
      %v2114 = vadd.f32 0.0, %v2113
      %v2115 = vpop.f32.mrf.mxu0
      %v2116 = vpop.f32.mrf.mxu0
      %v2117 = vadd.f32 0.0, %v2116
      %v2118 = vpop.f32.mrf.mxu0
      %2119 = vmatprep.mubr.bf16.mxu0 0
      %2120 = vmatmul.mubr.bf16.gmra.mxu0 %v1985
      %v2121 = vpop.f32.mrf.mxu0
      %v2122 = vadd.f32 0.0, %v2121
      %v2123 = vpop.f32.mrf.mxu0
      %v2124 = vpop.f32.mrf.mxu0
      %v2125 = vadd.f32 0.0, %v2124
      %v2126 = vpop.f32.mrf.mxu0
      %2127 = vmatprep.mubr.bf16.mxu0 0
      %2128 = vmatmul.mubr.bf16.gmra.mxu0 %v1986
      %v2129 = vpop.f32.mrf.mxu0
      %v2130 = vadd.f32 0.0, %v2129
      %v2131 = vpop.f32.mrf.mxu0
      %v2132 = vpop.f32.mrf.mxu0
      %v2133 = vadd.f32 0.0, %v2132
      %v2134 = vpop.f32.mrf.mxu0
      %2135 = vmatprep.mubr.bf16.mxu0 0
      %2136 = vmatmul.mubr.bf16.gmra.mxu0 %v1987
      %v2137 = vpop.f32.mrf.mxu0
      %v2138 = vadd.f32 0.0, %v2137
      %v2139 = vpop.f32.mrf.mxu0
      %v2140 = vpop.f32.mrf.mxu0
      %v2141 = vadd.f32 0.0, %v2140
      %v2142 = vpop.f32.mrf.mxu0
      %2143 = vmatprep.mubr.bf16.mxu0 0
      %2144 = vmatmul.mubr.bf16.gmra.mxu0 %v1988
      %v2145 = vpop.f32.mrf.mxu0
      %v2146 = vadd.f32 0.0, %v2145
      %v2147 = vpop.f32.mrf.mxu0
      %v2148 = vpop.f32.mrf.mxu0
      %v2149 = vadd.f32 0.0, %v2148
      %v2150 = vpop.f32.mrf.mxu0
      %2151 = vmatprep.mubr.bf16.mxu0 0
      %2152 = vmatmul.mubr.bf16.gmra.mxu0 %v1989
      %v2153 = vpop.f32.mrf.mxu0
      %v2154 = vadd.f32 0.0, %v2153
      %v2155 = vpop.f32.mrf.mxu0
      %v2156 = vpop.f32.mrf.mxu0
      %v2157 = vadd.f32 0.0, %v2156
      %v2158 = vpop.f32.mrf.mxu0
      %2159 = vmatprep.mubr.bf16.mxu0 0
      %2160 = vmatmul.mubr.bf16.gmra.mxu0 %v1990
      %v2161 = vpop.f32.mrf.mxu0
      %v2162 = vadd.f32 0.0, %v2161
      %v2163 = vpop.f32.mrf.mxu0
      %v2164 = vpop.f32.mrf.mxu0
      %v2165 = vadd.f32 0.0, %v2164
      %v2166 = vpop.f32.mrf.mxu0
      %2167 = vmatprep.mubr.bf16.mxu0 0
      %2168 = vmatmul.mubr.bf16.gmra.mxu0 %v1991
      %v2169 = vpop.f32.mrf.mxu0
      %v2170 = vadd.f32 0.0, %v2169
      %v2171 = vpop.f32.mrf.mxu0
      %v2172 = vpop.f32.mrf.mxu0
      %v2173 = vadd.f32 0.0, %v2172
      %v2174 = vpop.f32.mrf.mxu0
      %2175 = vmatprep.mubr.bf16.mxu0 0
      %2176 = vmatmul.mubr.bf16.gmra.mxu0 %v1992
      %v2177 = vpop.f32.mrf.mxu0
      %v2178 = vadd.f32 0.0, %v2177
      %v2179 = vpop.f32.mrf.mxu0
      %v2180 = vpop.f32.mrf.mxu0
      %v2181 = vadd.f32 0.0, %v2180
      %v2182 = vpop.f32.mrf.mxu0
      %2183 = vmatprep.mubr.bf16.mxu0 0
      %2184 = vmatmul.mubr.bf16.gmra.mxu0 %v1993
      %v2185 = vpop.f32.mrf.mxu0
      %v2186 = vadd.f32 0.0, %v2185
      %v2187 = vpop.f32.mrf.mxu0
      %v2188 = vpop.f32.mrf.mxu0
      %v2189 = vadd.f32 0.0, %v2188
      %v2190 = vpop.f32.mrf.mxu0
      %2191 = vmatprep.mubr.bf16.mxu0 0
      %2192 = vmatmul.mubr.bf16.gmra.mxu0 %v1994
      %v2193 = vpop.f32.mrf.mxu0
      %v2194 = vadd.f32 0.0, %v2193
      %v2195 = vpop.f32.mrf.mxu0
      %v2196 = vpop.f32.mrf.mxu0
      %v2197 = vadd.f32 0.0, %v2196
      %v2198 = vpop.f32.mrf.mxu0
      %2199 = vmatprep.mubr.bf16.mxu0 0
      %2200 = vmatmul.mubr.bf16.gmra.mxu0 %v1995
      %v2201 = vpop.f32.mrf.mxu0
      %v2202 = vadd.f32 0.0, %v2201
      %v2203 = vpop.f32.mrf.mxu0
      %v2204 = vpop.f32.mrf.mxu0
      %v2205 = vadd.f32 0.0, %v2204
      %v2206 = vpop.f32.mrf.mxu0
      %2207 = vmatprep.mubr.bf16.mxu0 0
      %2208 = vmatmul.mubr.bf16.gmra.mxu0 %v1996
      %v2209 = vpop.f32.mrf.mxu0
      %v2210 = vadd.f32 0.0, %v2209
      %v2211 = vpop.f32.mrf.mxu0
      %v2212 = vpop.f32.mrf.mxu0
      %v2213 = vadd.f32 0.0, %v2212
      %v2214 = vpop.f32.mrf.mxu0
      %2215 = vmatprep.mubr.bf16.mxu0 0
      %2216 = vmatmul.mubr.bf16.gmra.mxu0 %v1997
      %v2217 = vpop.f32.mrf.mxu0
      %v2218 = vadd.f32 0.0, %v2217
      %v2219 = vpop.f32.mrf.mxu0
      %v2220 = vpop.f32.mrf.mxu0
      %v2221 = vadd.f32 0.0, %v2220
      %v2222 = vpop.f32.mrf.mxu0
      %2223 = vdwg.mxu0
      %v2224 = vld [vmem:[#allocation3] sm:$0xff]
      %v2225 = vld [vmem:[#allocation3 + $0x8] sm:$0xff]
      %v2226 = vld [vmem:[#allocation3 + $0x10] sm:$0xff]
      %v2227 = vld [vmem:[#allocation3 + $0x18] sm:$0xff]
      %v2228 = vld [vmem:[#allocation3 + $0x20] sm:$0xff]
      %v2229 = vld [vmem:[#allocation3 + $0x28] sm:$0xff]
      %v2230 = vld [vmem:[#allocation3 + $0x30] sm:$0xff]
      %v2231 = vld [vmem:[#allocation3 + $0x38] sm:$0xff]
      %v2232 = vld [vmem:[#allocation3 + $0x40] sm:$0xff]
      %v2233 = vld [vmem:[#allocation3 + $0x48] sm:$0xff]
      %v2234 = vld [vmem:[#allocation3 + $0x50] sm:$0xff]
      %v2235 = vld [vmem:[#allocation3 + $0x58] sm:$0xff]
      %v2236 = vld [vmem:[#allocation3 + $0x60] sm:$0xff]
      %v2237 = vld [vmem:[#allocation3 + $0x68] sm:$0xff]
      %v2238 = vld [vmem:[#allocation3 + $0x70] sm:$0xff]
      %v2239 = vld [vmem:[#allocation3 + $0x78] sm:$0xff]
      %v2240 = vld [vmem:[#allocation3 + $0x80] sm:$0xff]
      %v2241 = vld [vmem:[#allocation3 + $0x88] sm:$0xff]
      %v2242 = vld [vmem:[#allocation3 + $0x90] sm:$0xff]
      %v2243 = vld [vmem:[#allocation3 + $0x98] sm:$0xff]
      %v2244 = vld [vmem:[#allocation3 + $0xa0] sm:$0xff]
      %v2245 = vld [vmem:[#allocation3 + $0xa8] sm:$0xff]
      %v2246 = vld [vmem:[#allocation3 + $0xb0] sm:$0xff]
      %v2247 = vld [vmem:[#allocation3 + $0xb8] sm:$0xff]
      %v2248 = vld [vmem:[#allocation3 + $0xc0] sm:$0xff]
      %v2249 = vld [vmem:[#allocation3 + $0xc8] sm:$0xff]
      %v2250 = vld [vmem:[#allocation3 + $0xd0] sm:$0xff]
      %v2251 = vld [vmem:[#allocation3 + $0xd8] sm:$0xff]
      %v2252 = vld [vmem:[#allocation3 + $0xe0] sm:$0xff]
      %v2253 = vld [vmem:[#allocation3 + $0xe8] sm:$0xff]
      %v2254 = vld [vmem:[#allocation3 + $0xf0] sm:$0xff]
      %v2255 = vld [vmem:[#allocation3 + $0xf8] sm:$0xff]
      %v2256 = vadd.f32 %v2224, %v2098
      %v2257 = vadd.f32 %v2225, %v2101
      %v2258 = vadd.f32 %v2226, %v2106
      %v2259 = vadd.f32 %v2227, %v2109
      %v2260 = vadd.f32 %v2228, %v2114
      %v2261 = vadd.f32 %v2229, %v2117
      %v2262 = vadd.f32 %v2230, %v2122
      %v2263 = vadd.f32 %v2231, %v2125
      %v2264 = vadd.f32 %v2232, %v2130
      %v2265 = vadd.f32 %v2233, %v2133
      %v2266 = vadd.f32 %v2234, %v2138
      %v2267 = vadd.f32 %v2235, %v2141
      %v2268 = vadd.f32 %v2236, %v2146
      %v2269 = vadd.f32 %v2237, %v2149
      %v2270 = vadd.f32 %v2238, %v2154
      %v2271 = vadd.f32 %v2239, %v2157
      %v2272 = vadd.f32 %v2240, %v2162
      %v2273 = vadd.f32 %v2241, %v2165
      %v2274 = vadd.f32 %v2242, %v2170
      %v2275 = vadd.f32 %v2243, %v2173
      %v2276 = vadd.f32 %v2244, %v2178
      %v2277 = vadd.f32 %v2245, %v2181
      %v2278 = vadd.f32 %v2246, %v2186
      %v2279 = vadd.f32 %v2247, %v2189
      %v2280 = vadd.f32 %v2248, %v2194
      %v2281 = vadd.f32 %v2249, %v2197
      %v2282 = vadd.f32 %v2250, %v2202
      %v2283 = vadd.f32 %v2251, %v2205
      %v2284 = vadd.f32 %v2252, %v2210
      %v2285 = vadd.f32 %v2253, %v2213
      %v2286 = vadd.f32 %v2254, %v2218
      %v2287 = vadd.f32 %v2255, %v2221
      %2288 = vst [vmem:[#allocation3] sm:$0xff] %v2256
      %2289 = vst [vmem:[#allocation3 + $0x8] sm:$0xff] %v2257
      %2290 = vst [vmem:[#allocation3 + $0x10] sm:$0xff] %v2258
      %2291 = vst [vmem:[#allocation3 + $0x18] sm:$0xff] %v2259
      %2292 = vst [vmem:[#allocation3 + $0x20] sm:$0xff] %v2260
      %2293 = vst [vmem:[#allocation3 + $0x28] sm:$0xff] %v2261
      %2294 = vst [vmem:[#allocation3 + $0x30] sm:$0xff] %v2262
      %2295 = vst [vmem:[#allocation3 + $0x38] sm:$0xff] %v2263
      %2296 = vst [vmem:[#allocation3 + $0x40] sm:$0xff] %v2264
      %2297 = vst [vmem:[#allocation3 + $0x48] sm:$0xff] %v2265
      %2298 = vst [vmem:[#allocation3 + $0x50] sm:$0xff] %v2266
      %2299 = vst [vmem:[#allocation3 + $0x58] sm:$0xff] %v2267
      %2300 = vst [vmem:[#allocation3 + $0x60] sm:$0xff] %v2268
      %2301 = vst [vmem:[#allocation3 + $0x68] sm:$0xff] %v2269
      %2302 = vst [vmem:[#allocation3 + $0x70] sm:$0xff] %v2270
      %2303 = vst [vmem:[#allocation3 + $0x78] sm:$0xff] %v2271
      %2304 = vst [vmem:[#allocation3 + $0x80] sm:$0xff] %v2272
      %2305 = vst [vmem:[#allocation3 + $0x88] sm:$0xff] %v2273
      %2306 = vst [vmem:[#allocation3 + $0x90] sm:$0xff] %v2274
      %2307 = vst [vmem:[#allocation3 + $0x98] sm:$0xff] %v2275
      %2308 = vst [vmem:[#allocation3 + $0xa0] sm:$0xff] %v2276
      %2309 = vst [vmem:[#allocation3 + $0xa8] sm:$0xff] %v2277
      %2310 = vst [vmem:[#allocation3 + $0xb0] sm:$0xff] %v2278
      %2311 = vst [vmem:[#allocation3 + $0xb8] sm:$0xff] %v2279
      %2312 = vst [vmem:[#allocation3 + $0xc0] sm:$0xff] %v2280
      %2313 = vst [vmem:[#allocation3 + $0xc8] sm:$0xff] %v2281
      %2314 = vst [vmem:[#allocation3 + $0xd0] sm:$0xff] %v2282
      %2315 = vst [vmem:[#allocation3 + $0xd8] sm:$0xff] %v2283
      %2316 = vst [vmem:[#allocation3 + $0xe0] sm:$0xff] %v2284
      %2317 = vst [vmem:[#allocation3 + $0xe8] sm:$0xff] %v2285
      %2318 = vst [vmem:[#allocation3 + $0xf0] sm:$0xff] %v2286
      %2319 = vst [vmem:[#allocation3 + $0xf8] sm:$0xff] %v2287
      %v2320 = vld [vmem:[%s1579 + $0x2] sm:$0xff]
      %v2321 = vld [vmem:[%s1579 + $0xa] sm:$0xff]
      %v2322 = vld [vmem:[%s1579 + $0x1a] sm:$0xff]
      %v2323 = vld [vmem:[%s1579 + $0x22] sm:$0xff]
      %v2324 = vld [vmem:[%s1579 + $0x32] sm:$0xff]
      %v2325 = vld [vmem:[%s1579 + $0x3a] sm:$0xff]
      %v2326 = vld [vmem:[%s1579 + $0x4a] sm:$0xff]
      %v2327 = vld [vmem:[%s1579 + $0x52] sm:$0xff]
      %v2328 = vld [vmem:[%s1579 + $0x62] sm:$0xff]
      %v2329 = vld [vmem:[%s1579 + $0x6a] sm:$0xff]
      %v2330 = vld [vmem:[%s1579 + $0x7a] sm:$0xff]
      %v2331 = vld [vmem:[%s1579 + $0x82] sm:$0xff]
      %v2332 = vld [vmem:[%s1579 + $0x92] sm:$0xff]
      %v2333 = vld [vmem:[%s1579 + $0x9a] sm:$0xff]
      %v2334 = vld [vmem:[%s1579 + $0xaa] sm:$0xff]
      %v2335 = vld [vmem:[%s1579 + $0xb2] sm:$0xff]
      %v2336 = vld [vmem:[%s1579 + $0xc2] sm:$0xff]
      %v2337 = vld [vmem:[%s1579 + $0xca] sm:$0xff]
      %v2338 = vld [vmem:[%s1579 + $0xda] sm:$0xff]
      %v2339 = vld [vmem:[%s1579 + $0xe2] sm:$0xff]
      %v2340 = vld [vmem:[%s1579 + $0xf2] sm:$0xff]
      %v2341 = vld [vmem:[%s1579 + $0xfa] sm:$0xff]
      %v2342 = vld [vmem:[%s1579 + $0x10a] sm:$0xff]
      %v2343 = vld [vmem:[%s1579 + $0x112] sm:$0xff]
      %v2344 = vld [vmem:[%s1579 + $0x122] sm:$0xff]
      %v2345 = vld [vmem:[%s1579 + $0x12a] sm:$0xff]
      %v2346 = vld [vmem:[%s1579 + $0x13a] sm:$0xff]
      %v2347 = vld [vmem:[%s1579 + $0x142] sm:$0xff]
      %v2348 = vld [vmem:[%s1579 + $0x152] sm:$0xff]
      %v2349 = vld [vmem:[%s1579 + $0x15a] sm:$0xff]
      %v2350 = vld [vmem:[%s1579 + $0x16a] sm:$0xff]
      %v2351 = vld [vmem:[%s1579 + $0x172] sm:$0xff]
      %v2352 = vpack.c.bf16 %v2321, %v2320
      %v2353 = vpack.c.bf16 %v2323, %v2322
      %v2354 = vpack.c.bf16 %v2325, %v2324
      %v2355 = vpack.c.bf16 %v2327, %v2326
      %v2356 = vpack.c.bf16 %v2329, %v2328
      %v2357 = vpack.c.bf16 %v2331, %v2330
      %v2358 = vpack.c.bf16 %v2333, %v2332
      %v2359 = vpack.c.bf16 %v2335, %v2334
      %v2360 = vpack.c.bf16 %v2337, %v2336
      %v2361 = vpack.c.bf16 %v2339, %v2338
      %v2362 = vpack.c.bf16 %v2341, %v2340
      %v2363 = vpack.c.bf16 %v2343, %v2342
      %v2364 = vpack.c.bf16 %v2345, %v2344
      %v2365 = vpack.c.bf16 %v2347, %v2346
      %v2366 = vpack.c.bf16 %v2349, %v2348
      %v2367 = vpack.c.bf16 %v2351, %v2350
      %s2368 = scalar_lea.vmem %s3, 320
      %v2369 = vld [vmem:[%s2368] sm:$0xf]
      %v2370 = vld [vmem:[%s2368 + $0x4] sm:$0xf]
      %v2371 = vld [vmem:[%s2368 + $0x8] sm:$0xf]
      %v2372 = vld [vmem:[%s2368 + $0xc] sm:$0xf]
      %v2373 = vld [vmem:[%s2368 + $0x10] sm:$0xf]
      %v2374 = vld [vmem:[%s2368 + $0x14] sm:$0xf]
      %v2375 = vld [vmem:[%s2368 + $0x18] sm:$0xf]
      %v2376 = vld [vmem:[%s2368 + $0x1c] sm:$0xf]
      %v2377 = vld [vmem:[%s2368 + $0x20] sm:$0xf]
      %v2378 = vld [vmem:[%s2368 + $0x24] sm:$0xf]
      %v2379 = vld [vmem:[%s2368 + $0x28] sm:$0xf]
      %v2380 = vld [vmem:[%s2368 + $0x2c] sm:$0xf]
      %v2381 = vld [vmem:[%s2368 + $0x30] sm:$0xf]
      %v2382 = vld [vmem:[%s2368 + $0x34] sm:$0xf]
      %v2383 = vld [vmem:[%s2368 + $0x38] sm:$0xf]
      %v2384 = vld [vmem:[%s2368 + $0x3c] sm:$0xf]
      %v2401 = vunpack.c.l.b16 %v2369
      %v2402 = vunpack.c.l.b16 %v2370
      %v2403 = vunpack.c.l.b16 %v2371
      %v2404 = vunpack.c.l.b16 %v2372
      %v2405 = vunpack.c.l.b16 %v2373
      %v2406 = vunpack.c.l.b16 %v2374
      %v2407 = vunpack.c.l.b16 %v2375
      %v2408 = vunpack.c.l.b16 %v2376
      %v2409 = vunpack.c.l.b16 %v2377
      %v2410 = vunpack.c.l.b16 %v2378
      %v2411 = vunpack.c.l.b16 %v2379
      %v2412 = vunpack.c.l.b16 %v2380
      %v2413 = vunpack.c.l.b16 %v2381
      %v2414 = vunpack.c.l.b16 %v2382
      %v2415 = vunpack.c.l.b16 %v2383
      %v2416 = vunpack.c.l.b16 %v2384
      %v2417 = vpack.c.b16 %v2402, %v2401
      %v2418 = vpack.c.b16 %v2404, %v2403
      %v2419 = vpack.c.b16 %v2406, %v2405
      %v2420 = vpack.c.b16 %v2408, %v2407
      %v2421 = vpack.c.b16 %v2410, %v2409
      %v2422 = vpack.c.b16 %v2412, %v2411
      %v2423 = vpack.c.b16 %v2414, %v2413
      %v2424 = vpack.c.b16 %v2416, %v2415
      %2433 = vmatprep.subr.bf16.mxu0 0
      %2434 = vmatpush1.bf16.msra.mxu0 %v2424
      %2435 = vmatprep.subr.bf16.mxu0 0
      %2436 = vmatpush1.bf16.msra.mxu0 %v2423
      %2437 = vmatprep.subr.bf16.mxu0 0
      %2438 = vmatpush1.bf16.msra.mxu0 %v2422
      %2439 = vmatprep.subr.bf16.mxu0 0
      %2440 = vmatpush1.bf16.msra.mxu0 %v2421
      %2441 = vmatprep.subr.bf16.mxu0 0
      %2442 = vmatpush1.bf16.msra.mxu0 %v2420
      %2443 = vmatprep.subr.bf16.mxu0 0
      %2444 = vmatpush1.bf16.msra.mxu0 %v2419
      %2445 = vmatprep.subr.bf16.mxu0 0
      %2446 = vmatpush1.bf16.msra.mxu0 %v2418
      %2447 = vmatprep.subr.bf16.mxu0 0
      %2448 = vmatpush1.bf16.msra.mxu0 %v2417
      %2449 = vmatprep.subr.bf16.mxu0 0
      %2450 = vmatpush2.bf16.msra.mxu0 0
      %2451 = vmatprep.subr.bf16.mxu0 0
      %2452 = vmatpush2.bf16.msra.mxu0 0
      %2453 = vmatprep.subr.bf16.mxu0 0
      %2454 = vmatpush2.bf16.msra.mxu0 0
      %2455 = vmatprep.subr.bf16.mxu0 0
      %2456 = vmatpush2.bf16.msra.mxu0 0
      %2457 = vmatprep.subr.bf16.mxu0 0
      %2458 = vmatpush2.bf16.msra.mxu0 0
      %2459 = vmatprep.subr.bf16.mxu0 0
      %2460 = vmatpush2.bf16.msra.mxu0 0
      %2461 = vmatprep.subr.bf16.mxu0 0
      %2462 = vmatpush2.bf16.msra.mxu0 0
      %2463 = vmatprep.subr.bf16.mxu0 0
      %2464 = vmatpush2.bf16.msra.mxu0 0
      %2465 = vmatprep.mubr.bf16.mxu0 0
      %2466 = vmatmul.mubr.bf16.gmra.mxu0 %v2352
      %v2467 = vpop.f32.mrf.mxu0
      %v2468 = vadd.f32 0.0, %v2467
      %v2469 = vpop.f32.mrf.mxu0
      %v2470 = vpop.f32.mrf.mxu0
      %v2471 = vadd.f32 0.0, %v2470
      %v2472 = vpop.f32.mrf.mxu0
      %2473 = vmatprep.mubr.bf16.mxu0 0
      %2474 = vmatmul.mubr.bf16.gmra.mxu0 %v2353
      %v2475 = vpop.f32.mrf.mxu0
      %v2476 = vadd.f32 0.0, %v2475
      %v2477 = vpop.f32.mrf.mxu0
      %v2478 = vpop.f32.mrf.mxu0
      %v2479 = vadd.f32 0.0, %v2478
      %v2480 = vpop.f32.mrf.mxu0
      %2481 = vmatprep.mubr.bf16.mxu0 0
      %2482 = vmatmul.mubr.bf16.gmra.mxu0 %v2354
      %v2483 = vpop.f32.mrf.mxu0
      %v2484 = vadd.f32 0.0, %v2483
      %v2485 = vpop.f32.mrf.mxu0
      %v2486 = vpop.f32.mrf.mxu0
      %v2487 = vadd.f32 0.0, %v2486
      %v2488 = vpop.f32.mrf.mxu0
      %2489 = vmatprep.mubr.bf16.mxu0 0
      %2490 = vmatmul.mubr.bf16.gmra.mxu0 %v2355
      %v2491 = vpop.f32.mrf.mxu0
      %v2492 = vadd.f32 0.0, %v2491
      %v2493 = vpop.f32.mrf.mxu0
      %v2494 = vpop.f32.mrf.mxu0
      %v2495 = vadd.f32 0.0, %v2494
      %v2496 = vpop.f32.mrf.mxu0
      %2497 = vmatprep.mubr.bf16.mxu0 0
      %2498 = vmatmul.mubr.bf16.gmra.mxu0 %v2356
      %v2499 = vpop.f32.mrf.mxu0
      %v2500 = vadd.f32 0.0, %v2499
      %v2501 = vpop.f32.mrf.mxu0
      %v2502 = vpop.f32.mrf.mxu0
      %v2503 = vadd.f32 0.0, %v2502
      %v2504 = vpop.f32.mrf.mxu0
      %2505 = vmatprep.mubr.bf16.mxu0 0
      %2506 = vmatmul.mubr.bf16.gmra.mxu0 %v2357
      %v2507 = vpop.f32.mrf.mxu0
      %v2508 = vadd.f32 0.0, %v2507
      %v2509 = vpop.f32.mrf.mxu0
      %v2510 = vpop.f32.mrf.mxu0
      %v2511 = vadd.f32 0.0, %v2510
      %v2512 = vpop.f32.mrf.mxu0
      %2513 = vmatprep.mubr.bf16.mxu0 0
      %2514 = vmatmul.mubr.bf16.gmra.mxu0 %v2358
      %v2515 = vpop.f32.mrf.mxu0
      %v2516 = vadd.f32 0.0, %v2515
      %v2517 = vpop.f32.mrf.mxu0
      %v2518 = vpop.f32.mrf.mxu0
      %v2519 = vadd.f32 0.0, %v2518
      %v2520 = vpop.f32.mrf.mxu0
      %2521 = vmatprep.mubr.bf16.mxu0 0
      %2522 = vmatmul.mubr.bf16.gmra.mxu0 %v2359
      %v2523 = vpop.f32.mrf.mxu0
      %v2524 = vadd.f32 0.0, %v2523
      %v2525 = vpop.f32.mrf.mxu0
      %v2526 = vpop.f32.mrf.mxu0
      %v2527 = vadd.f32 0.0, %v2526
      %v2528 = vpop.f32.mrf.mxu0
      %2529 = vmatprep.mubr.bf16.mxu0 0
      %2530 = vmatmul.mubr.bf16.gmra.mxu0 %v2360
      %v2531 = vpop.f32.mrf.mxu0
      %v2532 = vadd.f32 0.0, %v2531
      %v2533 = vpop.f32.mrf.mxu0
      %v2534 = vpop.f32.mrf.mxu0
      %v2535 = vadd.f32 0.0, %v2534
      %v2536 = vpop.f32.mrf.mxu0
      %2537 = vmatprep.mubr.bf16.mxu0 0
      %2538 = vmatmul.mubr.bf16.gmra.mxu0 %v2361
      %v2539 = vpop.f32.mrf.mxu0
      %v2540 = vadd.f32 0.0, %v2539
      %v2541 = vpop.f32.mrf.mxu0
      %v2542 = vpop.f32.mrf.mxu0
      %v2543 = vadd.f32 0.0, %v2542
      %v2544 = vpop.f32.mrf.mxu0
      %2545 = vmatprep.mubr.bf16.mxu0 0
      %2546 = vmatmul.mubr.bf16.gmra.mxu0 %v2362
      %v2547 = vpop.f32.mrf.mxu0
      %v2548 = vadd.f32 0.0, %v2547
      %v2549 = vpop.f32.mrf.mxu0
      %v2550 = vpop.f32.mrf.mxu0
      %v2551 = vadd.f32 0.0, %v2550
      %v2552 = vpop.f32.mrf.mxu0
      %2553 = vmatprep.mubr.bf16.mxu0 0
      %2554 = vmatmul.mubr.bf16.gmra.mxu0 %v2363
      %v2555 = vpop.f32.mrf.mxu0
      %v2556 = vadd.f32 0.0, %v2555
      %v2557 = vpop.f32.mrf.mxu0
      %v2558 = vpop.f32.mrf.mxu0
      %v2559 = vadd.f32 0.0, %v2558
      %v2560 = vpop.f32.mrf.mxu0
      %2561 = vmatprep.mubr.bf16.mxu0 0
      %2562 = vmatmul.mubr.bf16.gmra.mxu0 %v2364
      %v2563 = vpop.f32.mrf.mxu0
      %v2564 = vadd.f32 0.0, %v2563
      %v2565 = vpop.f32.mrf.mxu0
      %v2566 = vpop.f32.mrf.mxu0
      %v2567 = vadd.f32 0.0, %v2566
      %v2568 = vpop.f32.mrf.mxu0
      %2569 = vmatprep.mubr.bf16.mxu0 0
      %2570 = vmatmul.mubr.bf16.gmra.mxu0 %v2365
      %v2571 = vpop.f32.mrf.mxu0
      %v2572 = vadd.f32 0.0, %v2571
      %v2573 = vpop.f32.mrf.mxu0
      %v2574 = vpop.f32.mrf.mxu0
      %v2575 = vadd.f32 0.0, %v2574
      %v2576 = vpop.f32.mrf.mxu0
      %2577 = vmatprep.mubr.bf16.mxu0 0
      %2578 = vmatmul.mubr.bf16.gmra.mxu0 %v2366
      %v2579 = vpop.f32.mrf.mxu0
      %v2580 = vadd.f32 0.0, %v2579
      %v2581 = vpop.f32.mrf.mxu0
      %v2582 = vpop.f32.mrf.mxu0
      %v2583 = vadd.f32 0.0, %v2582
      %v2584 = vpop.f32.mrf.mxu0
      %2585 = vmatprep.mubr.bf16.mxu0 0
      %2586 = vmatmul.mubr.bf16.gmra.mxu0 %v2367
      %v2587 = vpop.f32.mrf.mxu0
      %v2588 = vadd.f32 0.0, %v2587
      %v2589 = vpop.f32.mrf.mxu0
      %v2590 = vpop.f32.mrf.mxu0
      %v2591 = vadd.f32 0.0, %v2590
      %v2592 = vpop.f32.mrf.mxu0
      %2593 = vdwg.mxu0
      %v2594 = vld [vmem:[#allocation3] sm:$0xff]
      %v2595 = vld [vmem:[#allocation3 + $0x8] sm:$0xff]
      %v2596 = vld [vmem:[#allocation3 + $0x10] sm:$0xff]
      %v2597 = vld [vmem:[#allocation3 + $0x18] sm:$0xff]
      %v2598 = vld [vmem:[#allocation3 + $0x20] sm:$0xff]
      %v2599 = vld [vmem:[#allocation3 + $0x28] sm:$0xff]
      %v2600 = vld [vmem:[#allocation3 + $0x30] sm:$0xff]
      %v2601 = vld [vmem:[#allocation3 + $0x38] sm:$0xff]
      %v2602 = vld [vmem:[#allocation3 + $0x40] sm:$0xff]
      %v2603 = vld [vmem:[#allocation3 + $0x48] sm:$0xff]
      %v2604 = vld [vmem:[#allocation3 + $0x50] sm:$0xff]
      %v2605 = vld [vmem:[#allocation3 + $0x58] sm:$0xff]
      %v2606 = vld [vmem:[#allocation3 + $0x60] sm:$0xff]
      %v2607 = vld [vmem:[#allocation3 + $0x68] sm:$0xff]
      %v2608 = vld [vmem:[#allocation3 + $0x70] sm:$0xff]
      %v2609 = vld [vmem:[#allocation3 + $0x78] sm:$0xff]
      %v2610 = vld [vmem:[#allocation3 + $0x80] sm:$0xff]
      %v2611 = vld [vmem:[#allocation3 + $0x88] sm:$0xff]
      %v2612 = vld [vmem:[#allocation3 + $0x90] sm:$0xff]
      %v2613 = vld [vmem:[#allocation3 + $0x98] sm:$0xff]
      %v2614 = vld [vmem:[#allocation3 + $0xa0] sm:$0xff]
      %v2615 = vld [vmem:[#allocation3 + $0xa8] sm:$0xff]
      %v2616 = vld [vmem:[#allocation3 + $0xb0] sm:$0xff]
      %v2617 = vld [vmem:[#allocation3 + $0xb8] sm:$0xff]
      %v2618 = vld [vmem:[#allocation3 + $0xc0] sm:$0xff]
      %v2619 = vld [vmem:[#allocation3 + $0xc8] sm:$0xff]
      %v2620 = vld [vmem:[#allocation3 + $0xd0] sm:$0xff]
      %v2621 = vld [vmem:[#allocation3 + $0xd8] sm:$0xff]
      %v2622 = vld [vmem:[#allocation3 + $0xe0] sm:$0xff]
      %v2623 = vld [vmem:[#allocation3 + $0xe8] sm:$0xff]
      %v2624 = vld [vmem:[#allocation3 + $0xf0] sm:$0xff]
      %v2625 = vld [vmem:[#allocation3 + $0xf8] sm:$0xff]
      %v2626 = vadd.f32 %v2594, %v2468
      %v2627 = vadd.f32 %v2595, %v2471
      %v2628 = vadd.f32 %v2596, %v2476
      %v2629 = vadd.f32 %v2597, %v2479
      %v2630 = vadd.f32 %v2598, %v2484
      %v2631 = vadd.f32 %v2599, %v2487
      %v2632 = vadd.f32 %v2600, %v2492
      %v2633 = vadd.f32 %v2601, %v2495
      %v2634 = vadd.f32 %v2602, %v2500
      %v2635 = vadd.f32 %v2603, %v2503
      %v2636 = vadd.f32 %v2604, %v2508
      %v2637 = vadd.f32 %v2605, %v2511
      %v2638 = vadd.f32 %v2606, %v2516
      %v2639 = vadd.f32 %v2607, %v2519
      %v2640 = vadd.f32 %v2608, %v2524
      %v2641 = vadd.f32 %v2609, %v2527
      %v2642 = vadd.f32 %v2610, %v2532
      %v2643 = vadd.f32 %v2611, %v2535
      %v2644 = vadd.f32 %v2612, %v2540
      %v2645 = vadd.f32 %v2613, %v2543
      %v2646 = vadd.f32 %v2614, %v2548
      %v2647 = vadd.f32 %v2615, %v2551
      %v2648 = vadd.f32 %v2616, %v2556
      %v2649 = vadd.f32 %v2617, %v2559
      %v2650 = vadd.f32 %v2618, %v2564
      %v2651 = vadd.f32 %v2619, %v2567
      %v2652 = vadd.f32 %v2620, %v2572
      %v2653 = vadd.f32 %v2621, %v2575
      %v2654 = vadd.f32 %v2622, %v2580
      %v2655 = vadd.f32 %v2623, %v2583
      %v2656 = vadd.f32 %v2624, %v2588
      %v2657 = vadd.f32 %v2625, %v2591
      %2658 = vst [vmem:[#allocation3] sm:$0xff] %v2626
      %2659 = vst [vmem:[#allocation3 + $0x8] sm:$0xff] %v2627
      %2660 = vst [vmem:[#allocation3 + $0x10] sm:$0xff] %v2628
      %2661 = vst [vmem:[#allocation3 + $0x18] sm:$0xff] %v2629
      %2662 = vst [vmem:[#allocation3 + $0x20] sm:$0xff] %v2630
      %2663 = vst [vmem:[#allocation3 + $0x28] sm:$0xff] %v2631
      %2664 = vst [vmem:[#allocation3 + $0x30] sm:$0xff] %v2632
      %2665 = vst [vmem:[#allocation3 + $0x38] sm:$0xff] %v2633
      %2666 = vst [vmem:[#allocation3 + $0x40] sm:$0xff] %v2634
      %2667 = vst [vmem:[#allocation3 + $0x48] sm:$0xff] %v2635
      %2668 = vst [vmem:[#allocation3 + $0x50] sm:$0xff] %v2636
      %2669 = vst [vmem:[#allocation3 + $0x58] sm:$0xff] %v2637
      %2670 = vst [vmem:[#allocation3 + $0x60] sm:$0xff] %v2638
      %2671 = vst [vmem:[#allocation3 + $0x68] sm:$0xff] %v2639
      %2672 = vst [vmem:[#allocation3 + $0x70] sm:$0xff] %v2640
      %2673 = vst [vmem:[#allocation3 + $0x78] sm:$0xff] %v2641
      %2674 = vst [vmem:[#allocation3 + $0x80] sm:$0xff] %v2642
      %2675 = vst [vmem:[#allocation3 + $0x88] sm:$0xff] %v2643
      %2676 = vst [vmem:[#allocation3 + $0x90] sm:$0xff] %v2644
      %2677 = vst [vmem:[#allocation3 + $0x98] sm:$0xff] %v2645
      %2678 = vst [vmem:[#allocation3 + $0xa0] sm:$0xff] %v2646
      %2679 = vst [vmem:[#allocation3 + $0xa8] sm:$0xff] %v2647
      %2680 = vst [vmem:[#allocation3 + $0xb0] sm:$0xff] %v2648
      %2681 = vst [vmem:[#allocation3 + $0xb8] sm:$0xff] %v2649
      %2682 = vst [vmem:[#allocation3 + $0xc0] sm:$0xff] %v2650
      %2683 = vst [vmem:[#allocation3 + $0xc8] sm:$0xff] %v2651
      %2684 = vst [vmem:[#allocation3 + $0xd0] sm:$0xff] %v2652
      %2685 = vst [vmem:[#allocation3 + $0xd8] sm:$0xff] %v2653
      %2686 = vst [vmem:[#allocation3 + $0xe0] sm:$0xff] %v2654
      %2687 = vst [vmem:[#allocation3 + $0xe8] sm:$0xff] %v2655
      %2688 = vst [vmem:[#allocation3 + $0xf0] sm:$0xff] %v2656
      %2689 = vst [vmem:[#allocation3 + $0xf8] sm:$0xff] %v2657
      %s2690 = sadd.s32 %s529, 2
      %s2691 = smul.u32 %s2690, 24
      %s2692 = scalar_lea.vmem [#allocation2], %s2691
      %v2693 = vld [vmem:[%s2692] sm:$0xff]
      %v2694 = vld [vmem:[%s2692 + $0x8] sm:$0xff]
      %v2695 = vld [vmem:[%s2692 + $0x18] sm:$0xff]
      %v2696 = vld [vmem:[%s2692 + $0x20] sm:$0xff]
      %v2697 = vld [vmem:[%s2692 + $0x30] sm:$0xff]
      %v2698 = vld [vmem:[%s2692 + $0x38] sm:$0xff]
      %v2699 = vld [vmem:[%s2692 + $0x48] sm:$0xff]
      %v2700 = vld [vmem:[%s2692 + $0x50] sm:$0xff]
      %v2701 = vld [vmem:[%s2692 + $0x60] sm:$0xff]
      %v2702 = vld [vmem:[%s2692 + $0x68] sm:$0xff]
      %v2703 = vld [vmem:[%s2692 + $0x78] sm:$0xff]
      %v2704 = vld [vmem:[%s2692 + $0x80] sm:$0xff]
      %v2705 = vld [vmem:[%s2692 + $0x90] sm:$0xff]
      %v2706 = vld [vmem:[%s2692 + $0x98] sm:$0xff]
      %v2707 = vld [vmem:[%s2692 + $0xa8] sm:$0xff]
      %v2708 = vld [vmem:[%s2692 + $0xb0] sm:$0xff]
      %v2709 = vld [vmem:[%s2692 + $0xc0] sm:$0xff]
      %v2710 = vld [vmem:[%s2692 + $0xc8] sm:$0xff]
      %v2711 = vld [vmem:[%s2692 + $0xd8] sm:$0xff]
      %v2712 = vld [vmem:[%s2692 + $0xe0] sm:$0xff]
      %v2713 = vld [vmem:[%s2692 + $0xf0] sm:$0xff]
      %v2714 = vld [vmem:[%s2692 + $0xf8] sm:$0xff]
      %v2715 = vld [vmem:[%s2692 + $0x108] sm:$0xff]
      %v2716 = vld [vmem:[%s2692 + $0x110] sm:$0xff]
      %v2717 = vld [vmem:[%s2692 + $0x120] sm:$0xff]
      %v2718 = vld [vmem:[%s2692 + $0x128] sm:$0xff]
      %v2719 = vld [vmem:[%s2692 + $0x138] sm:$0xff]
      %v2720 = vld [vmem:[%s2692 + $0x140] sm:$0xff]
      %v2721 = vld [vmem:[%s2692 + $0x150] sm:$0xff]
      %v2722 = vld [vmem:[%s2692 + $0x158] sm:$0xff]
      %v2723 = vld [vmem:[%s2692 + $0x168] sm:$0xff]
      %v2724 = vld [vmem:[%s2692 + $0x170] sm:$0xff]
      %v2725 = vpack.c.bf16 %v2694, %v2693
      %v2726 = vpack.c.bf16 %v2696, %v2695
      %v2727 = vpack.c.bf16 %v2698, %v2697
      %v2728 = vpack.c.bf16 %v2700, %v2699
      %v2729 = vpack.c.bf16 %v2702, %v2701
      %v2730 = vpack.c.bf16 %v2704, %v2703
      %v2731 = vpack.c.bf16 %v2706, %v2705
      %v2732 = vpack.c.bf16 %v2708, %v2707
      %v2733 = vpack.c.bf16 %v2710, %v2709
      %v2734 = vpack.c.bf16 %v2712, %v2711
      %v2735 = vpack.c.bf16 %v2714, %v2713
      %v2736 = vpack.c.bf16 %v2716, %v2715
      %v2737 = vpack.c.bf16 %v2718, %v2717
      %v2738 = vpack.c.bf16 %v2720, %v2719
      %v2739 = vpack.c.bf16 %v2722, %v2721
      %v2740 = vpack.c.bf16 %v2724, %v2723
      %s2741 = scalar_lea.vmem %s3, 384
      %v2742 = vld [vmem:[%s2741] sm:$0xf]
      %v2743 = vld [vmem:[%s2741 + $0x4] sm:$0xf]
      %v2744 = vld [vmem:[%s2741 + $0x8] sm:$0xf]
      %v2745 = vld [vmem:[%s2741 + $0xc] sm:$0xf]
      %v2746 = vld [vmem:[%s2741 + $0x10] sm:$0xf]
      %v2747 = vld [vmem:[%s2741 + $0x14] sm:$0xf]
      %v2748 = vld [vmem:[%s2741 + $0x18] sm:$0xf]
      %v2749 = vld [vmem:[%s2741 + $0x1c] sm:$0xf]
      %v2750 = vld [vmem:[%s2741 + $0x20] sm:$0xf]
      %v2751 = vld [vmem:[%s2741 + $0x24] sm:$0xf]
      %v2752 = vld [vmem:[%s2741 + $0x28] sm:$0xf]
      %v2753 = vld [vmem:[%s2741 + $0x2c] sm:$0xf]
      %v2754 = vld [vmem:[%s2741 + $0x30] sm:$0xf]
      %v2755 = vld [vmem:[%s2741 + $0x34] sm:$0xf]
      %v2756 = vld [vmem:[%s2741 + $0x38] sm:$0xf]
      %v2757 = vld [vmem:[%s2741 + $0x3c] sm:$0xf]
      %v2774 = vunpack.c.l.b16 %v2742
      %v2775 = vunpack.c.l.b16 %v2743
      %v2776 = vunpack.c.l.b16 %v2744
      %v2777 = vunpack.c.l.b16 %v2745
      %v2778 = vunpack.c.l.b16 %v2746
      %v2779 = vunpack.c.l.b16 %v2747
      %v2780 = vunpack.c.l.b16 %v2748
      %v2781 = vunpack.c.l.b16 %v2749
      %v2782 = vunpack.c.l.b16 %v2750
      %v2783 = vunpack.c.l.b16 %v2751
      %v2784 = vunpack.c.l.b16 %v2752
      %v2785 = vunpack.c.l.b16 %v2753
      %v2786 = vunpack.c.l.b16 %v2754
      %v2787 = vunpack.c.l.b16 %v2755
      %v2788 = vunpack.c.l.b16 %v2756
      %v2789 = vunpack.c.l.b16 %v2757
      %v2790 = vpack.c.b16 %v2775, %v2774
      %v2791 = vpack.c.b16 %v2777, %v2776
      %v2792 = vpack.c.b16 %v2779, %v2778
      %v2793 = vpack.c.b16 %v2781, %v2780
      %v2794 = vpack.c.b16 %v2783, %v2782
      %v2795 = vpack.c.b16 %v2785, %v2784
      %v2796 = vpack.c.b16 %v2787, %v2786
      %v2797 = vpack.c.b16 %v2789, %v2788
      %2806 = vmatprep.subr.bf16.mxu0 0
      %2807 = vmatpush1.bf16.msra.mxu0 %v2797
      %2808 = vmatprep.subr.bf16.mxu0 0
      %2809 = vmatpush1.bf16.msra.mxu0 %v2796
      %2810 = vmatprep.subr.bf16.mxu0 0
      %2811 = vmatpush1.bf16.msra.mxu0 %v2795
      %2812 = vmatprep.subr.bf16.mxu0 0
      %2813 = vmatpush1.bf16.msra.mxu0 %v2794
      %2814 = vmatprep.subr.bf16.mxu0 0
      %2815 = vmatpush1.bf16.msra.mxu0 %v2793
      %2816 = vmatprep.subr.bf16.mxu0 0
      %2817 = vmatpush1.bf16.msra.mxu0 %v2792
      %2818 = vmatprep.subr.bf16.mxu0 0
      %2819 = vmatpush1.bf16.msra.mxu0 %v2791
      %2820 = vmatprep.subr.bf16.mxu0 0
      %2821 = vmatpush1.bf16.msra.mxu0 %v2790
      %2822 = vmatprep.subr.bf16.mxu0 0
      %2823 = vmatpush2.bf16.msra.mxu0 0
      %2824 = vmatprep.subr.bf16.mxu0 0
      %2825 = vmatpush2.bf16.msra.mxu0 0
      %2826 = vmatprep.subr.bf16.mxu0 0
      %2827 = vmatpush2.bf16.msra.mxu0 0
      %2828 = vmatprep.subr.bf16.mxu0 0
      %2829 = vmatpush2.bf16.msra.mxu0 0
      %2830 = vmatprep.subr.bf16.mxu0 0
      %2831 = vmatpush2.bf16.msra.mxu0 0
      %2832 = vmatprep.subr.bf16.mxu0 0
      %2833 = vmatpush2.bf16.msra.mxu0 0
      %2834 = vmatprep.subr.bf16.mxu0 0
      %2835 = vmatpush2.bf16.msra.mxu0 0
      %2836 = vmatprep.subr.bf16.mxu0 0
      %2837 = vmatpush2.bf16.msra.mxu0 0
      %2838 = vmatprep.mubr.bf16.mxu0 0
      %2839 = vmatmul.mubr.bf16.gmra.mxu0 %v2725
      %v2840 = vpop.f32.mrf.mxu0
      %v2841 = vadd.f32 0.0, %v2840
      %v2842 = vpop.f32.mrf.mxu0
      %v2843 = vpop.f32.mrf.mxu0
      %v2844 = vadd.f32 0.0, %v2843
      %v2845 = vpop.f32.mrf.mxu0
      %2846 = vmatprep.mubr.bf16.mxu0 0
      %2847 = vmatmul.mubr.bf16.gmra.mxu0 %v2726
      %v2848 = vpop.f32.mrf.mxu0
      %v2849 = vadd.f32 0.0, %v2848
      %v2850 = vpop.f32.mrf.mxu0
      %v2851 = vpop.f32.mrf.mxu0
      %v2852 = vadd.f32 0.0, %v2851
      %v2853 = vpop.f32.mrf.mxu0
      %2854 = vmatprep.mubr.bf16.mxu0 0
      %2855 = vmatmul.mubr.bf16.gmra.mxu0 %v2727
      %v2856 = vpop.f32.mrf.mxu0
      %v2857 = vadd.f32 0.0, %v2856
      %v2858 = vpop.f32.mrf.mxu0
      %v2859 = vpop.f32.mrf.mxu0
      %v2860 = vadd.f32 0.0, %v2859
      %v2861 = vpop.f32.mrf.mxu0
      %2862 = vmatprep.mubr.bf16.mxu0 0
      %2863 = vmatmul.mubr.bf16.gmra.mxu0 %v2728
      %v2864 = vpop.f32.mrf.mxu0
      %v2865 = vadd.f32 0.0, %v2864
      %v2866 = vpop.f32.mrf.mxu0
      %v2867 = vpop.f32.mrf.mxu0
      %v2868 = vadd.f32 0.0, %v2867
      %v2869 = vpop.f32.mrf.mxu0
      %2870 = vmatprep.mubr.bf16.mxu0 0
      %2871 = vmatmul.mubr.bf16.gmra.mxu0 %v2729
      %v2872 = vpop.f32.mrf.mxu0
      %v2873 = vadd.f32 0.0, %v2872
      %v2874 = vpop.f32.mrf.mxu0
      %v2875 = vpop.f32.mrf.mxu0
      %v2876 = vadd.f32 0.0, %v2875
      %v2877 = vpop.f32.mrf.mxu0
      %2878 = vmatprep.mubr.bf16.mxu0 0
      %2879 = vmatmul.mubr.bf16.gmra.mxu0 %v2730
      %v2880 = vpop.f32.mrf.mxu0
      %v2881 = vadd.f32 0.0, %v2880
      %v2882 = vpop.f32.mrf.mxu0
      %v2883 = vpop.f32.mrf.mxu0
      %v2884 = vadd.f32 0.0, %v2883
      %v2885 = vpop.f32.mrf.mxu0
      %2886 = vmatprep.mubr.bf16.mxu0 0
      %2887 = vmatmul.mubr.bf16.gmra.mxu0 %v2731
      %v2888 = vpop.f32.mrf.mxu0
      %v2889 = vadd.f32 0.0, %v2888
      %v2890 = vpop.f32.mrf.mxu0
      %v2891 = vpop.f32.mrf.mxu0
      %v2892 = vadd.f32 0.0, %v2891
      %v2893 = vpop.f32.mrf.mxu0
      %2894 = vmatprep.mubr.bf16.mxu0 0
      %2895 = vmatmul.mubr.bf16.gmra.mxu0 %v2732
      %v2896 = vpop.f32.mrf.mxu0
      %v2897 = vadd.f32 0.0, %v2896
      %v2898 = vpop.f32.mrf.mxu0
      %v2899 = vpop.f32.mrf.mxu0
      %v2900 = vadd.f32 0.0, %v2899
      %v2901 = vpop.f32.mrf.mxu0
      %2902 = vmatprep.mubr.bf16.mxu0 0
      %2903 = vmatmul.mubr.bf16.gmra.mxu0 %v2733
      %v2904 = vpop.f32.mrf.mxu0
      %v2905 = vadd.f32 0.0, %v2904
      %v2906 = vpop.f32.mrf.mxu0
      %v2907 = vpop.f32.mrf.mxu0
      %v2908 = vadd.f32 0.0, %v2907
      %v2909 = vpop.f32.mrf.mxu0
      %2910 = vmatprep.mubr.bf16.mxu0 0
      %2911 = vmatmul.mubr.bf16.gmra.mxu0 %v2734
      %v2912 = vpop.f32.mrf.mxu0
      %v2913 = vadd.f32 0.0, %v2912
      %v2914 = vpop.f32.mrf.mxu0
      %v2915 = vpop.f32.mrf.mxu0
      %v2916 = vadd.f32 0.0, %v2915
      %v2917 = vpop.f32.mrf.mxu0
      %2918 = vmatprep.mubr.bf16.mxu0 0
      %2919 = vmatmul.mubr.bf16.gmra.mxu0 %v2735
      %v2920 = vpop.f32.mrf.mxu0
      %v2921 = vadd.f32 0.0, %v2920
      %v2922 = vpop.f32.mrf.mxu0
      %v2923 = vpop.f32.mrf.mxu0
      %v2924 = vadd.f32 0.0, %v2923
      %v2925 = vpop.f32.mrf.mxu0
      %2926 = vmatprep.mubr.bf16.mxu0 0
      %2927 = vmatmul.mubr.bf16.gmra.mxu0 %v2736
      %v2928 = vpop.f32.mrf.mxu0
      %v2929 = vadd.f32 0.0, %v2928
      %v2930 = vpop.f32.mrf.mxu0
      %v2931 = vpop.f32.mrf.mxu0
      %v2932 = vadd.f32 0.0, %v2931
      %v2933 = vpop.f32.mrf.mxu0
      %2934 = vmatprep.mubr.bf16.mxu0 0
      %2935 = vmatmul.mubr.bf16.gmra.mxu0 %v2737
      %v2936 = vpop.f32.mrf.mxu0
      %v2937 = vadd.f32 0.0, %v2936
      %v2938 = vpop.f32.mrf.mxu0
      %v2939 = vpop.f32.mrf.mxu0
      %v2940 = vadd.f32 0.0, %v2939
      %v2941 = vpop.f32.mrf.mxu0
      %2942 = vmatprep.mubr.bf16.mxu0 0
      %2943 = vmatmul.mubr.bf16.gmra.mxu0 %v2738
      %v2944 = vpop.f32.mrf.mxu0
      %v2945 = vadd.f32 0.0, %v2944
      %v2946 = vpop.f32.mrf.mxu0
      %v2947 = vpop.f32.mrf.mxu0
      %v2948 = vadd.f32 0.0, %v2947
      %v2949 = vpop.f32.mrf.mxu0
      %2950 = vmatprep.mubr.bf16.mxu0 0
      %2951 = vmatmul.mubr.bf16.gmra.mxu0 %v2739
      %v2952 = vpop.f32.mrf.mxu0
      %v2953 = vadd.f32 0.0, %v2952
      %v2954 = vpop.f32.mrf.mxu0
      %v2955 = vpop.f32.mrf.mxu0
      %v2956 = vadd.f32 0.0, %v2955
      %v2957 = vpop.f32.mrf.mxu0
      %2958 = vmatprep.mubr.bf16.mxu0 0
      %2959 = vmatmul.mubr.bf16.gmra.mxu0 %v2740
      %v2960 = vpop.f32.mrf.mxu0
      %v2961 = vadd.f32 0.0, %v2960
      %v2962 = vpop.f32.mrf.mxu0
      %v2963 = vpop.f32.mrf.mxu0
      %v2964 = vadd.f32 0.0, %v2963
      %v2965 = vpop.f32.mrf.mxu0
      %2966 = vdwg.mxu0
      %v2967 = vld [vmem:[#allocation3] sm:$0xff]
      %v2968 = vld [vmem:[#allocation3 + $0x8] sm:$0xff]
      %v2969 = vld [vmem:[#allocation3 + $0x10] sm:$0xff]
      %v2970 = vld [vmem:[#allocation3 + $0x18] sm:$0xff]
      %v2971 = vld [vmem:[#allocation3 + $0x20] sm:$0xff]
      %v2972 = vld [vmem:[#allocation3 + $0x28] sm:$0xff]
      %v2973 = vld [vmem:[#allocation3 + $0x30] sm:$0xff]
      %v2974 = vld [vmem:[#allocation3 + $0x38] sm:$0xff]
      %v2975 = vld [vmem:[#allocation3 + $0x40] sm:$0xff]
      %v2976 = vld [vmem:[#allocation3 + $0x48] sm:$0xff]
      %v2977 = vld [vmem:[#allocation3 + $0x50] sm:$0xff]
      %v2978 = vld [vmem:[#allocation3 + $0x58] sm:$0xff]
      %v2979 = vld [vmem:[#allocation3 + $0x60] sm:$0xff]
      %v2980 = vld [vmem:[#allocation3 + $0x68] sm:$0xff]
      %v2981 = vld [vmem:[#allocation3 + $0x70] sm:$0xff]
      %v2982 = vld [vmem:[#allocation3 + $0x78] sm:$0xff]
      %v2983 = vld [vmem:[#allocation3 + $0x80] sm:$0xff]
      %v2984 = vld [vmem:[#allocation3 + $0x88] sm:$0xff]
      %v2985 = vld [vmem:[#allocation3 + $0x90] sm:$0xff]
      %v2986 = vld [vmem:[#allocation3 + $0x98] sm:$0xff]
      %v2987 = vld [vmem:[#allocation3 + $0xa0] sm:$0xff]
      %v2988 = vld [vmem:[#allocation3 + $0xa8] sm:$0xff]
      %v2989 = vld [vmem:[#allocation3 + $0xb0] sm:$0xff]
      %v2990 = vld [vmem:[#allocation3 + $0xb8] sm:$0xff]
      %v2991 = vld [vmem:[#allocation3 + $0xc0] sm:$0xff]
      %v2992 = vld [vmem:[#allocation3 + $0xc8] sm:$0xff]
      %v2993 = vld [vmem:[#allocation3 + $0xd0] sm:$0xff]
      %v2994 = vld [vmem:[#allocation3 + $0xd8] sm:$0xff]
      %v2995 = vld [vmem:[#allocation3 + $0xe0] sm:$0xff]
      %v2996 = vld [vmem:[#allocation3 + $0xe8] sm:$0xff]
      %v2997 = vld [vmem:[#allocation3 + $0xf0] sm:$0xff]
      %v2998 = vld [vmem:[#allocation3 + $0xf8] sm:$0xff]
      %v2999 = vadd.f32 %v2967, %v2841
      %v3000 = vadd.f32 %v2968, %v2844
      %v3001 = vadd.f32 %v2969, %v2849
      %v3002 = vadd.f32 %v2970, %v2852
      %v3003 = vadd.f32 %v2971, %v2857
      %v3004 = vadd.f32 %v2972, %v2860
      %v3005 = vadd.f32 %v2973, %v2865
      %v3006 = vadd.f32 %v2974, %v2868
      %v3007 = vadd.f32 %v2975, %v2873
      %v3008 = vadd.f32 %v2976, %v2876
      %v3009 = vadd.f32 %v2977, %v2881
      %v3010 = vadd.f32 %v2978, %v2884
      %v3011 = vadd.f32 %v2979, %v2889
      %v3012 = vadd.f32 %v2980, %v2892
      %v3013 = vadd.f32 %v2981, %v2897
      %v3014 = vadd.f32 %v2982, %v2900
      %v3015 = vadd.f32 %v2983, %v2905
      %v3016 = vadd.f32 %v2984, %v2908
      %v3017 = vadd.f32 %v2985, %v2913
      %v3018 = vadd.f32 %v2986, %v2916
      %v3019 = vadd.f32 %v2987, %v2921
      %v3020 = vadd.f32 %v2988, %v2924
      %v3021 = vadd.f32 %v2989, %v2929
      %v3022 = vadd.f32 %v2990, %v2932
      %v3023 = vadd.f32 %v2991, %v2937
      %v3024 = vadd.f32 %v2992, %v2940
      %v3025 = vadd.f32 %v2993, %v2945
      %v3026 = vadd.f32 %v2994, %v2948
      %v3027 = vadd.f32 %v2995, %v2953
      %v3028 = vadd.f32 %v2996, %v2956
      %v3029 = vadd.f32 %v2997, %v2961
      %v3030 = vadd.f32 %v2998, %v2964
      %3031 = vst [vmem:[#allocation3] sm:$0xff] %v2999
      %3032 = vst [vmem:[#allocation3 + $0x8] sm:$0xff] %v3000
      %3033 = vst [vmem:[#allocation3 + $0x10] sm:$0xff] %v3001
      %3034 = vst [vmem:[#allocation3 + $0x18] sm:$0xff] %v3002
      %3035 = vst [vmem:[#allocation3 + $0x20] sm:$0xff] %v3003
      %3036 = vst [vmem:[#allocation3 + $0x28] sm:$0xff] %v3004
      %3037 = vst [vmem:[#allocation3 + $0x30] sm:$0xff] %v3005
      %3038 = vst [vmem:[#allocation3 + $0x38] sm:$0xff] %v3006
      %3039 = vst [vmem:[#allocation3 + $0x40] sm:$0xff] %v3007
      %3040 = vst [vmem:[#allocation3 + $0x48] sm:$0xff] %v3008
      %3041 = vst [vmem:[#allocation3 + $0x50] sm:$0xff] %v3009
      %3042 = vst [vmem:[#allocation3 + $0x58] sm:$0xff] %v3010
      %3043 = vst [vmem:[#allocation3 + $0x60] sm:$0xff] %v3011
      %3044 = vst [vmem:[#allocation3 + $0x68] sm:$0xff] %v3012
      %3045 = vst [vmem:[#allocation3 + $0x70] sm:$0xff] %v3013
      %3046 = vst [vmem:[#allocation3 + $0x78] sm:$0xff] %v3014
      %3047 = vst [vmem:[#allocation3 + $0x80] sm:$0xff] %v3015
      %3048 = vst [vmem:[#allocation3 + $0x88] sm:$0xff] %v3016
      %3049 = vst [vmem:[#allocation3 + $0x90] sm:$0xff] %v3017
      %3050 = vst [vmem:[#allocation3 + $0x98] sm:$0xff] %v3018
      %3051 = vst [vmem:[#allocation3 + $0xa0] sm:$0xff] %v3019
      %3052 = vst [vmem:[#allocation3 + $0xa8] sm:$0xff] %v3020
      %3053 = vst [vmem:[#allocation3 + $0xb0] sm:$0xff] %v3021
      %3054 = vst [vmem:[#allocation3 + $0xb8] sm:$0xff] %v3022
      %3055 = vst [vmem:[#allocation3 + $0xc0] sm:$0xff] %v3023
      %3056 = vst [vmem:[#allocation3 + $0xc8] sm:$0xff] %v3024
      %3057 = vst [vmem:[#allocation3 + $0xd0] sm:$0xff] %v3025
      %3058 = vst [vmem:[#allocation3 + $0xd8] sm:$0xff] %v3026
      %3059 = vst [vmem:[#allocation3 + $0xe0] sm:$0xff] %v3027
      %3060 = vst [vmem:[#allocation3 + $0xe8] sm:$0xff] %v3028
      %3061 = vst [vmem:[#allocation3 + $0xf0] sm:$0xff] %v3029
      %3062 = vst [vmem:[#allocation3 + $0xf8] sm:$0xff] %v3030
      %v3063 = vld [vmem:[%s2692 + $0x1] sm:$0xff]
      %v3064 = vld [vmem:[%s2692 + $0x9] sm:$0xff]
      %v3065 = vld [vmem:[%s2692 + $0x19] sm:$0xff]
      %v3066 = vld [vmem:[%s2692 + $0x21] sm:$0xff]
      %v3067 = vld [vmem:[%s2692 + $0x31] sm:$0xff]
      %v3068 = vld [vmem:[%s2692 + $0x39] sm:$0xff]
      %v3069 = vld [vmem:[%s2692 + $0x49] sm:$0xff]
      %v3070 = vld [vmem:[%s2692 + $0x51] sm:$0xff]
      %v3071 = vld [vmem:[%s2692 + $0x61] sm:$0xff]
      %v3072 = vld [vmem:[%s2692 + $0x69] sm:$0xff]
      %v3073 = vld [vmem:[%s2692 + $0x79] sm:$0xff]
      %v3074 = vld [vmem:[%s2692 + $0x81] sm:$0xff]
      %v3075 = vld [vmem:[%s2692 + $0x91] sm:$0xff]
      %v3076 = vld [vmem:[%s2692 + $0x99] sm:$0xff]
      %v3077 = vld [vmem:[%s2692 + $0xa9] sm:$0xff]
      %v3078 = vld [vmem:[%s2692 + $0xb1] sm:$0xff]
      %v3079 = vld [vmem:[%s2692 + $0xc1] sm:$0xff]
      %v3080 = vld [vmem:[%s2692 + $0xc9] sm:$0xff]
      %v3081 = vld [vmem:[%s2692 + $0xd9] sm:$0xff]
      %v3082 = vld [vmem:[%s2692 + $0xe1] sm:$0xff]
      %v3083 = vld [vmem:[%s2692 + $0xf1] sm:$0xff]
      %v3084 = vld [vmem:[%s2692 + $0xf9] sm:$0xff]
      %v3085 = vld [vmem:[%s2692 + $0x109] sm:$0xff]
      %v3086 = vld [vmem:[%s2692 + $0x111] sm:$0xff]
      %v3087 = vld [vmem:[%s2692 + $0x121] sm:$0xff]
      %v3088 = vld [vmem:[%s2692 + $0x129] sm:$0xff]
      %v3089 = vld [vmem:[%s2692 + $0x139] sm:$0xff]
      %v3090 = vld [vmem:[%s2692 + $0x141] sm:$0xff]
      %v3091 = vld [vmem:[%s2692 + $0x151] sm:$0xff]
      %v3092 = vld [vmem:[%s2692 + $0x159] sm:$0xff]
      %v3093 = vld [vmem:[%s2692 + $0x169] sm:$0xff]
      %v3094 = vld [vmem:[%s2692 + $0x171] sm:$0xff]
      %v3095 = vpack.c.bf16 %v3064, %v3063
      %v3096 = vpack.c.bf16 %v3066, %v3065
      %v3097 = vpack.c.bf16 %v3068, %v3067
      %v3098 = vpack.c.bf16 %v3070, %v3069
      %v3099 = vpack.c.bf16 %v3072, %v3071
      %v3100 = vpack.c.bf16 %v3074, %v3073
      %v3101 = vpack.c.bf16 %v3076, %v3075
      %v3102 = vpack.c.bf16 %v3078, %v3077
      %v3103 = vpack.c.bf16 %v3080, %v3079
      %v3104 = vpack.c.bf16 %v3082, %v3081
      %v3105 = vpack.c.bf16 %v3084, %v3083
      %v3106 = vpack.c.bf16 %v3086, %v3085
      %v3107 = vpack.c.bf16 %v3088, %v3087
      %v3108 = vpack.c.bf16 %v3090, %v3089
      %v3109 = vpack.c.bf16 %v3092, %v3091
      %v3110 = vpack.c.bf16 %v3094, %v3093
      %s3111 = scalar_lea.vmem %s3, 448
      %v3112 = vld [vmem:[%s3111] sm:$0xf]
      %v3113 = vld [vmem:[%s3111 + $0x4] sm:$0xf]
      %v3114 = vld [vmem:[%s3111 + $0x8] sm:$0xf]
      %v3115 = vld [vmem:[%s3111 + $0xc] sm:$0xf]
      %v3116 = vld [vmem:[%s3111 + $0x10] sm:$0xf]
      %v3117 = vld [vmem:[%s3111 + $0x14] sm:$0xf]
      %v3118 = vld [vmem:[%s3111 + $0x18] sm:$0xf]
      %v3119 = vld [vmem:[%s3111 + $0x1c] sm:$0xf]
      %v3120 = vld [vmem:[%s3111 + $0x20] sm:$0xf]
      %v3121 = vld [vmem:[%s3111 + $0x24] sm:$0xf]
      %v3122 = vld [vmem:[%s3111 + $0x28] sm:$0xf]
      %v3123 = vld [vmem:[%s3111 + $0x2c] sm:$0xf]
      %v3124 = vld [vmem:[%s3111 + $0x30] sm:$0xf]
      %v3125 = vld [vmem:[%s3111 + $0x34] sm:$0xf]
      %v3126 = vld [vmem:[%s3111 + $0x38] sm:$0xf]
      %v3127 = vld [vmem:[%s3111 + $0x3c] sm:$0xf]
      %v3144 = vunpack.c.l.b16 %v3112
      %v3145 = vunpack.c.l.b16 %v3113
      %v3146 = vunpack.c.l.b16 %v3114
      %v3147 = vunpack.c.l.b16 %v3115
      %v3148 = vunpack.c.l.b16 %v3116
      %v3149 = vunpack.c.l.b16 %v3117
      %v3150 = vunpack.c.l.b16 %v3118
      %v3151 = vunpack.c.l.b16 %v3119
      %v3152 = vunpack.c.l.b16 %v3120
      %v3153 = vunpack.c.l.b16 %v3121
      %v3154 = vunpack.c.l.b16 %v3122
      %v3155 = vunpack.c.l.b16 %v3123
      %v3156 = vunpack.c.l.b16 %v3124
      %v3157 = vunpack.c.l.b16 %v3125
      %v3158 = vunpack.c.l.b16 %v3126
      %v3159 = vunpack.c.l.b16 %v3127
      %v3160 = vpack.c.b16 %v3145, %v3144
      %v3161 = vpack.c.b16 %v3147, %v3146
      %v3162 = vpack.c.b16 %v3149, %v3148
      %v3163 = vpack.c.b16 %v3151, %v3150
      %v3164 = vpack.c.b16 %v3153, %v3152
      %v3165 = vpack.c.b16 %v3155, %v3154
      %v3166 = vpack.c.b16 %v3157, %v3156
      %v3167 = vpack.c.b16 %v3159, %v3158
      %3176 = vmatprep.subr.bf16.mxu0 0
      %3177 = vmatpush1.bf16.msra.mxu0 %v3167
      %3178 = vmatprep.subr.bf16.mxu0 0
      %3179 = vmatpush1.bf16.msra.mxu0 %v3166
      %3180 = vmatprep.subr.bf16.mxu0 0
      %3181 = vmatpush1.bf16.msra.mxu0 %v3165
      %3182 = vmatprep.subr.bf16.mxu0 0
      %3183 = vmatpush1.bf16.msra.mxu0 %v3164
      %3184 = vmatprep.subr.bf16.mxu0 0
      %3185 = vmatpush1.bf16.msra.mxu0 %v3163
      %3186 = vmatprep.subr.bf16.mxu0 0
      %3187 = vmatpush1.bf16.msra.mxu0 %v3162
      %3188 = vmatprep.subr.bf16.mxu0 0
      %3189 = vmatpush1.bf16.msra.mxu0 %v3161
      %3190 = vmatprep.subr.bf16.mxu0 0
      %3191 = vmatpush1.bf16.msra.mxu0 %v3160
      %3192 = vmatprep.subr.bf16.mxu0 0
      %3193 = vmatpush2.bf16.msra.mxu0 0
      %3194 = vmatprep.subr.bf16.mxu0 0
      %3195 = vmatpush2.bf16.msra.mxu0 0
      %3196 = vmatprep.subr.bf16.mxu0 0
      %3197 = vmatpush2.bf16.msra.mxu0 0
      %3198 = vmatprep.subr.bf16.mxu0 0
      %3199 = vmatpush2.bf16.msra.mxu0 0
      %3200 = vmatprep.subr.bf16.mxu0 0
      %3201 = vmatpush2.bf16.msra.mxu0 0
      %3202 = vmatprep.subr.bf16.mxu0 0
      %3203 = vmatpush2.bf16.msra.mxu0 0
      %3204 = vmatprep.subr.bf16.mxu0 0
      %3205 = vmatpush2.bf16.msra.mxu0 0
      %3206 = vmatprep.subr.bf16.mxu0 0
      %3207 = vmatpush2.bf16.msra.mxu0 0
      %3208 = vmatprep.mubr.bf16.mxu0 0
      %3209 = vmatmul.mubr.bf16.gmra.mxu0 %v3095
      %v3210 = vpop.f32.mrf.mxu0
      %v3211 = vadd.f32 0.0, %v3210
      %v3212 = vpop.f32.mrf.mxu0
      %v3213 = vpop.f32.mrf.mxu0
      %v3214 = vadd.f32 0.0, %v3213
      %v3215 = vpop.f32.mrf.mxu0
      %3216 = vmatprep.mubr.bf16.mxu0 0
      %3217 = vmatmul.mubr.bf16.gmra.mxu0 %v3096
      %v3218 = vpop.f32.mrf.mxu0
      %v3219 = vadd.f32 0.0, %v3218
      %v3220 = vpop.f32.mrf.mxu0
      %v3221 = vpop.f32.mrf.mxu0
      %v3222 = vadd.f32 0.0, %v3221
      %v3223 = vpop.f32.mrf.mxu0
      %3224 = vmatprep.mubr.bf16.mxu0 0
      %3225 = vmatmul.mubr.bf16.gmra.mxu0 %v3097
      %v3226 = vpop.f32.mrf.mxu0
      %v3227 = vadd.f32 0.0, %v3226
      %v3228 = vpop.f32.mrf.mxu0
      %v3229 = vpop.f32.mrf.mxu0
      %v3230 = vadd.f32 0.0, %v3229
      %v3231 = vpop.f32.mrf.mxu0
      %3232 = vmatprep.mubr.bf16.mxu0 0
      %3233 = vmatmul.mubr.bf16.gmra.mxu0 %v3098
      %v3234 = vpop.f32.mrf.mxu0
      %v3235 = vadd.f32 0.0, %v3234
      %v3236 = vpop.f32.mrf.mxu0
      %v3237 = vpop.f32.mrf.mxu0
      %v3238 = vadd.f32 0.0, %v3237
      %v3239 = vpop.f32.mrf.mxu0
      %3240 = vmatprep.mubr.bf16.mxu0 0
      %3241 = vmatmul.mubr.bf16.gmra.mxu0 %v3099
      %v3242 = vpop.f32.mrf.mxu0
      %v3243 = vadd.f32 0.0, %v3242
      %v3244 = vpop.f32.mrf.mxu0
      %v3245 = vpop.f32.mrf.mxu0
      %v3246 = vadd.f32 0.0, %v3245
      %v3247 = vpop.f32.mrf.mxu0
      %3248 = vmatprep.mubr.bf16.mxu0 0
      %3249 = vmatmul.mubr.bf16.gmra.mxu0 %v3100
      %v3250 = vpop.f32.mrf.mxu0
      %v3251 = vadd.f32 0.0, %v3250
      %v3252 = vpop.f32.mrf.mxu0
      %v3253 = vpop.f32.mrf.mxu0
      %v3254 = vadd.f32 0.0, %v3253
      %v3255 = vpop.f32.mrf.mxu0
      %3256 = vmatprep.mubr.bf16.mxu0 0
      %3257 = vmatmul.mubr.bf16.gmra.mxu0 %v3101
      %v3258 = vpop.f32.mrf.mxu0
      %v3259 = vadd.f32 0.0, %v3258
      %v3260 = vpop.f32.mrf.mxu0
      %v3261 = vpop.f32.mrf.mxu0
      %v3262 = vadd.f32 0.0, %v3261
      %v3263 = vpop.f32.mrf.mxu0
      %3264 = vmatprep.mubr.bf16.mxu0 0
      %3265 = vmatmul.mubr.bf16.gmra.mxu0 %v3102
      %v3266 = vpop.f32.mrf.mxu0
      %v3267 = vadd.f32 0.0, %v3266
      %v3268 = vpop.f32.mrf.mxu0
      %v3269 = vpop.f32.mrf.mxu0
      %v3270 = vadd.f32 0.0, %v3269
      %v3271 = vpop.f32.mrf.mxu0
      %3272 = vmatprep.mubr.bf16.mxu0 0
      %3273 = vmatmul.mubr.bf16.gmra.mxu0 %v3103
      %v3274 = vpop.f32.mrf.mxu0
      %v3275 = vadd.f32 0.0, %v3274
      %v3276 = vpop.f32.mrf.mxu0
      %v3277 = vpop.f32.mrf.mxu0
      %v3278 = vadd.f32 0.0, %v3277
      %v3279 = vpop.f32.mrf.mxu0
      %3280 = vmatprep.mubr.bf16.mxu0 0
      %3281 = vmatmul.mubr.bf16.gmra.mxu0 %v3104
      %v3282 = vpop.f32.mrf.mxu0
      %v3283 = vadd.f32 0.0, %v3282
      %v3284 = vpop.f32.mrf.mxu0
      %v3285 = vpop.f32.mrf.mxu0
      %v3286 = vadd.f32 0.0, %v3285
      %v3287 = vpop.f32.mrf.mxu0
      %3288 = vmatprep.mubr.bf16.mxu0 0
      %3289 = vmatmul.mubr.bf16.gmra.mxu0 %v3105
      %v3290 = vpop.f32.mrf.mxu0
      %v3291 = vadd.f32 0.0, %v3290
      %v3292 = vpop.f32.mrf.mxu0
      %v3293 = vpop.f32.mrf.mxu0
      %v3294 = vadd.f32 0.0, %v3293
      %v3295 = vpop.f32.mrf.mxu0
      %3296 = vmatprep.mubr.bf16.mxu0 0
      %3297 = vmatmul.mubr.bf16.gmra.mxu0 %v3106
      %v3298 = vpop.f32.mrf.mxu0
      %v3299 = vadd.f32 0.0, %v3298
      %v3300 = vpop.f32.mrf.mxu0
      %v3301 = vpop.f32.mrf.mxu0
      %v3302 = vadd.f32 0.0, %v3301
      %v3303 = vpop.f32.mrf.mxu0
      %3304 = vmatprep.mubr.bf16.mxu0 0
      %3305 = vmatmul.mubr.bf16.gmra.mxu0 %v3107
      %v3306 = vpop.f32.mrf.mxu0
      %v3307 = vadd.f32 0.0, %v3306
      %v3308 = vpop.f32.mrf.mxu0
      %v3309 = vpop.f32.mrf.mxu0
      %v3310 = vadd.f32 0.0, %v3309
      %v3311 = vpop.f32.mrf.mxu0
      %3312 = vmatprep.mubr.bf16.mxu0 0
      %3313 = vmatmul.mubr.bf16.gmra.mxu0 %v3108
      %v3314 = vpop.f32.mrf.mxu0
      %v3315 = vadd.f32 0.0, %v3314
      %v3316 = vpop.f32.mrf.mxu0
      %v3317 = vpop.f32.mrf.mxu0
      %v3318 = vadd.f32 0.0, %v3317
      %v3319 = vpop.f32.mrf.mxu0
      %3320 = vmatprep.mubr.bf16.mxu0 0
      %3321 = vmatmul.mubr.bf16.gmra.mxu0 %v3109
      %v3322 = vpop.f32.mrf.mxu0
      %v3323 = vadd.f32 0.0, %v3322
      %v3324 = vpop.f32.mrf.mxu0
      %v3325 = vpop.f32.mrf.mxu0
      %v3326 = vadd.f32 0.0, %v3325
      %v3327 = vpop.f32.mrf.mxu0
      %3328 = vmatprep.mubr.bf16.mxu0 0
      %3329 = vmatmul.mubr.bf16.gmra.mxu0 %v3110
      %v3330 = vpop.f32.mrf.mxu0
      %v3331 = vadd.f32 0.0, %v3330
      %v3332 = vpop.f32.mrf.mxu0
      %v3333 = vpop.f32.mrf.mxu0
      %v3334 = vadd.f32 0.0, %v3333
      %v3335 = vpop.f32.mrf.mxu0
      %3336 = vdwg.mxu0
      %v3337 = vld [vmem:[#allocation3] sm:$0xff]
      %v3338 = vld [vmem:[#allocation3 + $0x8] sm:$0xff]
      %v3339 = vld [vmem:[#allocation3 + $0x10] sm:$0xff]
      %v3340 = vld [vmem:[#allocation3 + $0x18] sm:$0xff]
      %v3341 = vld [vmem:[#allocation3 + $0x20] sm:$0xff]
      %v3342 = vld [vmem:[#allocation3 + $0x28] sm:$0xff]
      %v3343 = vld [vmem:[#allocation3 + $0x30] sm:$0xff]
      %v3344 = vld [vmem:[#allocation3 + $0x38] sm:$0xff]
      %v3345 = vld [vmem:[#allocation3 + $0x40] sm:$0xff]
      %v3346 = vld [vmem:[#allocation3 + $0x48] sm:$0xff]
      %v3347 = vld [vmem:[#allocation3 + $0x50] sm:$0xff]
      %v3348 = vld [vmem:[#allocation3 + $0x58] sm:$0xff]
      %v3349 = vld [vmem:[#allocation3 + $0x60] sm:$0xff]
      %v3350 = vld [vmem:[#allocation3 + $0x68] sm:$0xff]
      %v3351 = vld [vmem:[#allocation3 + $0x70] sm:$0xff]
      %v3352 = vld [vmem:[#allocation3 + $0x78] sm:$0xff]
      %v3353 = vld [vmem:[#allocation3 + $0x80] sm:$0xff]
      %v3354 = vld [vmem:[#allocation3 + $0x88] sm:$0xff]
      %v3355 = vld [vmem:[#allocation3 + $0x90] sm:$0xff]
      %v3356 = vld [vmem:[#allocation3 + $0x98] sm:$0xff]
      %v3357 = vld [vmem:[#allocation3 + $0xa0] sm:$0xff]
      %v3358 = vld [vmem:[#allocation3 + $0xa8] sm:$0xff]
      %v3359 = vld [vmem:[#allocation3 + $0xb0] sm:$0xff]
      %v3360 = vld [vmem:[#allocation3 + $0xb8] sm:$0xff]
      %v3361 = vld [vmem:[#allocation3 + $0xc0] sm:$0xff]
      %v3362 = vld [vmem:[#allocation3 + $0xc8] sm:$0xff]
      %v3363 = vld [vmem:[#allocation3 + $0xd0] sm:$0xff]
      %v3364 = vld [vmem:[#allocation3 + $0xd8] sm:$0xff]
      %v3365 = vld [vmem:[#allocation3 + $0xe0] sm:$0xff]
      %v3366 = vld [vmem:[#allocation3 + $0xe8] sm:$0xff]
      %v3367 = vld [vmem:[#allocation3 + $0xf0] sm:$0xff]
      %v3368 = vld [vmem:[#allocation3 + $0xf8] sm:$0xff]
      %v3369 = vadd.f32 %v3337, %v3211
      %v3370 = vadd.f32 %v3338, %v3214
      %v3371 = vadd.f32 %v3339, %v3219
      %v3372 = vadd.f32 %v3340, %v3222
      %v3373 = vadd.f32 %v3341, %v3227
      %v3374 = vadd.f32 %v3342, %v3230
      %v3375 = vadd.f32 %v3343, %v3235
      %v3376 = vadd.f32 %v3344, %v3238
      %v3377 = vadd.f32 %v3345, %v3243
      %v3378 = vadd.f32 %v3346, %v3246
      %v3379 = vadd.f32 %v3347, %v3251
      %v3380 = vadd.f32 %v3348, %v3254
      %v3381 = vadd.f32 %v3349, %v3259
      %v3382 = vadd.f32 %v3350, %v3262
      %v3383 = vadd.f32 %v3351, %v3267
      %v3384 = vadd.f32 %v3352, %v3270
      %v3385 = vadd.f32 %v3353, %v3275
      %v3386 = vadd.f32 %v3354, %v3278
      %v3387 = vadd.f32 %v3355, %v3283
      %v3388 = vadd.f32 %v3356, %v3286
      %v3389 = vadd.f32 %v3357, %v3291
      %v3390 = vadd.f32 %v3358, %v3294
      %v3391 = vadd.f32 %v3359, %v3299
      %v3392 = vadd.f32 %v3360, %v3302
      %v3393 = vadd.f32 %v3361, %v3307
      %v3394 = vadd.f32 %v3362, %v3310
      %v3395 = vadd.f32 %v3363, %v3315
      %v3396 = vadd.f32 %v3364, %v3318
      %v3397 = vadd.f32 %v3365, %v3323
      %v3398 = vadd.f32 %v3366, %v3326
      %v3399 = vadd.f32 %v3367, %v3331
      %v3400 = vadd.f32 %v3368, %v3334
      %3401 = vst [vmem:[#allocation3] sm:$0xff] %v3369
      %3402 = vst [vmem:[#allocation3 + $0x8] sm:$0xff] %v3370
      %3403 = vst [vmem:[#allocation3 + $0x10] sm:$0xff] %v3371
      %3404 = vst [vmem:[#allocation3 + $0x18] sm:$0xff] %v3372
      %3405 = vst [vmem:[#allocation3 + $0x20] sm:$0xff] %v3373
      %3406 = vst [vmem:[#allocation3 + $0x28] sm:$0xff] %v3374
      %3407 = vst [vmem:[#allocation3 + $0x30] sm:$0xff] %v3375
      %3408 = vst [vmem:[#allocation3 + $0x38] sm:$0xff] %v3376
      %3409 = vst [vmem:[#allocation3 + $0x40] sm:$0xff] %v3377
      %3410 = vst [vmem:[#allocation3 + $0x48] sm:$0xff] %v3378
      %3411 = vst [vmem:[#allocation3 + $0x50] sm:$0xff] %v3379
      %3412 = vst [vmem:[#allocation3 + $0x58] sm:$0xff] %v3380
      %3413 = vst [vmem:[#allocation3 + $0x60] sm:$0xff] %v3381
      %3414 = vst [vmem:[#allocation3 + $0x68] sm:$0xff] %v3382
      %3415 = vst [vmem:[#allocation3 + $0x70] sm:$0xff] %v3383
      %3416 = vst [vmem:[#allocation3 + $0x78] sm:$0xff] %v3384
      %3417 = vst [vmem:[#allocation3 + $0x80] sm:$0xff] %v3385
      %3418 = vst [vmem:[#allocation3 + $0x88] sm:$0xff] %v3386
      %3419 = vst [vmem:[#allocation3 + $0x90] sm:$0xff] %v3387
      %3420 = vst [vmem:[#allocation3 + $0x98] sm:$0xff] %v3388
      %3421 = vst [vmem:[#allocation3 + $0xa0] sm:$0xff] %v3389
      %3422 = vst [vmem:[#allocation3 + $0xa8] sm:$0xff] %v3390
      %3423 = vst [vmem:[#allocation3 + $0xb0] sm:$0xff] %v3391
      %3424 = vst [vmem:[#allocation3 + $0xb8] sm:$0xff] %v3392
      %3425 = vst [vmem:[#allocation3 + $0xc0] sm:$0xff] %v3393
      %3426 = vst [vmem:[#allocation3 + $0xc8] sm:$0xff] %v3394
      %3427 = vst [vmem:[#allocation3 + $0xd0] sm:$0xff] %v3395
      %3428 = vst [vmem:[#allocation3 + $0xd8] sm:$0xff] %v3396
      %3429 = vst [vmem:[#allocation3 + $0xe0] sm:$0xff] %v3397
      %3430 = vst [vmem:[#allocation3 + $0xe8] sm:$0xff] %v3398
      %3431 = vst [vmem:[#allocation3 + $0xf0] sm:$0xff] %v3399
      %3432 = vst [vmem:[#allocation3 + $0xf8] sm:$0xff] %v3400
      %v3433 = vld [vmem:[%s2692 + $0x2] sm:$0xff]
      %v3434 = vld [vmem:[%s2692 + $0xa] sm:$0xff]
      %v3435 = vld [vmem:[%s2692 + $0x1a] sm:$0xff]
      %v3436 = vld [vmem:[%s2692 + $0x22] sm:$0xff]
      %v3437 = vld [vmem:[%s2692 + $0x32] sm:$0xff]
      %v3438 = vld [vmem:[%s2692 + $0x3a] sm:$0xff]
      %v3439 = vld [vmem:[%s2692 + $0x4a] sm:$0xff]
      %v3440 = vld [vmem:[%s2692 + $0x52] sm:$0xff]
      %v3441 = vld [vmem:[%s2692 + $0x62] sm:$0xff]
      %v3442 = vld [vmem:[%s2692 + $0x6a] sm:$0xff]
      %v3443 = vld [vmem:[%s2692 + $0x7a] sm:$0xff]
      %v3444 = vld [vmem:[%s2692 + $0x82] sm:$0xff]
      %v3445 = vld [vmem:[%s2692 + $0x92] sm:$0xff]
      %v3446 = vld [vmem:[%s2692 + $0x9a] sm:$0xff]
      %v3447 = vld [vmem:[%s2692 + $0xaa] sm:$0xff]
      %v3448 = vld [vmem:[%s2692 + $0xb2] sm:$0xff]
      %v3449 = vld [vmem:[%s2692 + $0xc2] sm:$0xff]
      %v3450 = vld [vmem:[%s2692 + $0xca] sm:$0xff]
      %v3451 = vld [vmem:[%s2692 + $0xda] sm:$0xff]
      %v3452 = vld [vmem:[%s2692 + $0xe2] sm:$0xff]
      %v3453 = vld [vmem:[%s2692 + $0xf2] sm:$0xff]
      %v3454 = vld [vmem:[%s2692 + $0xfa] sm:$0xff]
      %v3455 = vld [vmem:[%s2692 + $0x10a] sm:$0xff]
      %v3456 = vld [vmem:[%s2692 + $0x112] sm:$0xff]
      %v3457 = vld [vmem:[%s2692 + $0x122] sm:$0xff]
      %v3458 = vld [vmem:[%s2692 + $0x12a] sm:$0xff]
      %v3459 = vld [vmem:[%s2692 + $0x13a] sm:$0xff]
      %v3460 = vld [vmem:[%s2692 + $0x142] sm:$0xff]
      %v3461 = vld [vmem:[%s2692 + $0x152] sm:$0xff]
      %v3462 = vld [vmem:[%s2692 + $0x15a] sm:$0xff]
      %v3463 = vld [vmem:[%s2692 + $0x16a] sm:$0xff]
      %v3464 = vld [vmem:[%s2692 + $0x172] sm:$0xff]
      %v3465 = vpack.c.bf16 %v3434, %v3433
      %v3466 = vpack.c.bf16 %v3436, %v3435
      %v3467 = vpack.c.bf16 %v3438, %v3437
      %v3468 = vpack.c.bf16 %v3440, %v3439
      %v3469 = vpack.c.bf16 %v3442, %v3441
      %v3470 = vpack.c.bf16 %v3444, %v3443
      %v3471 = vpack.c.bf16 %v3446, %v3445
      %v3472 = vpack.c.bf16 %v3448, %v3447
      %v3473 = vpack.c.bf16 %v3450, %v3449
      %v3474 = vpack.c.bf16 %v3452, %v3451
      %v3475 = vpack.c.bf16 %v3454, %v3453
      %v3476 = vpack.c.bf16 %v3456, %v3455
      %v3477 = vpack.c.bf16 %v3458, %v3457
      %v3478 = vpack.c.bf16 %v3460, %v3459
      %v3479 = vpack.c.bf16 %v3462, %v3461
      %v3480 = vpack.c.bf16 %v3464, %v3463
      %s3481 = scalar_lea.vmem %s3, 512
      %v3482 = vld [vmem:[%s3481] sm:$0xf]
      %v3483 = vld [vmem:[%s3481 + $0x4] sm:$0xf]
      %v3484 = vld [vmem:[%s3481 + $0x8] sm:$0xf]
      %v3485 = vld [vmem:[%s3481 + $0xc] sm:$0xf]
      %v3486 = vld [vmem:[%s3481 + $0x10] sm:$0xf]
      %v3487 = vld [vmem:[%s3481 + $0x14] sm:$0xf]
      %v3488 = vld [vmem:[%s3481 + $0x18] sm:$0xf]
      %v3489 = vld [vmem:[%s3481 + $0x1c] sm:$0xf]
      %v3490 = vld [vmem:[%s3481 + $0x20] sm:$0xf]
      %v3491 = vld [vmem:[%s3481 + $0x24] sm:$0xf]
      %v3492 = vld [vmem:[%s3481 + $0x28] sm:$0xf]
      %v3493 = vld [vmem:[%s3481 + $0x2c] sm:$0xf]
      %v3494 = vld [vmem:[%s3481 + $0x30] sm:$0xf]
      %v3495 = vld [vmem:[%s3481 + $0x34] sm:$0xf]
      %v3496 = vld [vmem:[%s3481 + $0x38] sm:$0xf]
      %v3497 = vld [vmem:[%s3481 + $0x3c] sm:$0xf]
      %v3514 = vunpack.c.l.b16 %v3482
      %v3515 = vunpack.c.l.b16 %v3483
      %v3516 = vunpack.c.l.b16 %v3484
      %v3517 = vunpack.c.l.b16 %v3485
      %v3518 = vunpack.c.l.b16 %v3486
      %v3519 = vunpack.c.l.b16 %v3487
      %v3520 = vunpack.c.l.b16 %v3488
      %v3521 = vunpack.c.l.b16 %v3489
      %v3522 = vunpack.c.l.b16 %v3490
      %v3523 = vunpack.c.l.b16 %v3491
      %v3524 = vunpack.c.l.b16 %v3492
      %v3525 = vunpack.c.l.b16 %v3493
      %v3526 = vunpack.c.l.b16 %v3494
      %v3527 = vunpack.c.l.b16 %v3495
      %v3528 = vunpack.c.l.b16 %v3496
      %v3529 = vunpack.c.l.b16 %v3497
      %v3530 = vpack.c.b16 %v3515, %v3514
      %v3531 = vpack.c.b16 %v3517, %v3516
      %v3532 = vpack.c.b16 %v3519, %v3518
      %v3533 = vpack.c.b16 %v3521, %v3520
      %v3534 = vpack.c.b16 %v3523, %v3522
      %v3535 = vpack.c.b16 %v3525, %v3524
      %v3536 = vpack.c.b16 %v3527, %v3526
      %v3537 = vpack.c.b16 %v3529, %v3528
      %3546 = vmatprep.subr.bf16.mxu0 0
      %3547 = vmatpush1.bf16.msra.mxu0 %v3537
      %3548 = vmatprep.subr.bf16.mxu0 0
      %3549 = vmatpush1.bf16.msra.mxu0 %v3536
      %3550 = vmatprep.subr.bf16.mxu0 0
      %3551 = vmatpush1.bf16.msra.mxu0 %v3535
      %3552 = vmatprep.subr.bf16.mxu0 0
      %3553 = vmatpush1.bf16.msra.mxu0 %v3534
      %3554 = vmatprep.subr.bf16.mxu0 0
      %3555 = vmatpush1.bf16.msra.mxu0 %v3533
      %3556 = vmatprep.subr.bf16.mxu0 0
      %3557 = vmatpush1.bf16.msra.mxu0 %v3532
      %3558 = vmatprep.subr.bf16.mxu0 0
      %3559 = vmatpush1.bf16.msra.mxu0 %v3531
      %3560 = vmatprep.subr.bf16.mxu0 0
      %3561 = vmatpush1.bf16.msra.mxu0 %v3530
      %3562 = vmatprep.subr.bf16.mxu0 0
      %3563 = vmatpush2.bf16.msra.mxu0 0
      %3564 = vmatprep.subr.bf16.mxu0 0
      %3565 = vmatpush2.bf16.msra.mxu0 0
      %3566 = vmatprep.subr.bf16.mxu0 0
      %3567 = vmatpush2.bf16.msra.mxu0 0
      %3568 = vmatprep.subr.bf16.mxu0 0
      %3569 = vmatpush2.bf16.msra.mxu0 0
      %3570 = vmatprep.subr.bf16.mxu0 0
      %3571 = vmatpush2.bf16.msra.mxu0 0
      %3572 = vmatprep.subr.bf16.mxu0 0
      %3573 = vmatpush2.bf16.msra.mxu0 0
      %3574 = vmatprep.subr.bf16.mxu0 0
      %3575 = vmatpush2.bf16.msra.mxu0 0
      %3576 = vmatprep.subr.bf16.mxu0 0
      %3577 = vmatpush2.bf16.msra.mxu0 0
      %3578 = vmatprep.mubr.bf16.mxu0 0
      %3579 = vmatmul.mubr.bf16.gmra.mxu0 %v3465
      %v3580 = vpop.f32.mrf.mxu0
      %v3581 = vadd.f32 0.0, %v3580
      %v3582 = vpop.f32.mrf.mxu0
      %v3583 = vpop.f32.mrf.mxu0
      %v3584 = vadd.f32 0.0, %v3583
      %v3585 = vpop.f32.mrf.mxu0
      %3586 = vmatprep.mubr.bf16.mxu0 0
      %3587 = vmatmul.mubr.bf16.gmra.mxu0 %v3466
      %v3588 = vpop.f32.mrf.mxu0
      %v3589 = vadd.f32 0.0, %v3588
      %v3590 = vpop.f32.mrf.mxu0
      %v3591 = vpop.f32.mrf.mxu0
      %v3592 = vadd.f32 0.0, %v3591
      %v3593 = vpop.f32.mrf.mxu0
      %3594 = vmatprep.mubr.bf16.mxu0 0
      %3595 = vmatmul.mubr.bf16.gmra.mxu0 %v3467
      %v3596 = vpop.f32.mrf.mxu0
      %v3597 = vadd.f32 0.0, %v3596
      %v3598 = vpop.f32.mrf.mxu0
      %v3599 = vpop.f32.mrf.mxu0
      %v3600 = vadd.f32 0.0, %v3599
      %v3601 = vpop.f32.mrf.mxu0
      %3602 = vmatprep.mubr.bf16.mxu0 0
      %3603 = vmatmul.mubr.bf16.gmra.mxu0 %v3468
      %v3604 = vpop.f32.mrf.mxu0
      %v3605 = vadd.f32 0.0, %v3604
      %v3606 = vpop.f32.mrf.mxu0
      %v3607 = vpop.f32.mrf.mxu0
      %v3608 = vadd.f32 0.0, %v3607
      %v3609 = vpop.f32.mrf.mxu0
      %3610 = vmatprep.mubr.bf16.mxu0 0
      %3611 = vmatmul.mubr.bf16.gmra.mxu0 %v3469
      %v3612 = vpop.f32.mrf.mxu0
      %v3613 = vadd.f32 0.0, %v3612
      %v3614 = vpop.f32.mrf.mxu0
      %v3615 = vpop.f32.mrf.mxu0
      %v3616 = vadd.f32 0.0, %v3615
      %v3617 = vpop.f32.mrf.mxu0
      %3618 = vmatprep.mubr.bf16.mxu0 0
      %3619 = vmatmul.mubr.bf16.gmra.mxu0 %v3470
      %v3620 = vpop.f32.mrf.mxu0
      %v3621 = vadd.f32 0.0, %v3620
      %v3622 = vpop.f32.mrf.mxu0
      %v3623 = vpop.f32.mrf.mxu0
      %v3624 = vadd.f32 0.0, %v3623
      %v3625 = vpop.f32.mrf.mxu0
      %3626 = vmatprep.mubr.bf16.mxu0 0
      %3627 = vmatmul.mubr.bf16.gmra.mxu0 %v3471
      %v3628 = vpop.f32.mrf.mxu0
      %v3629 = vadd.f32 0.0, %v3628
      %v3630 = vpop.f32.mrf.mxu0
      %v3631 = vpop.f32.mrf.mxu0
      %v3632 = vadd.f32 0.0, %v3631
      %v3633 = vpop.f32.mrf.mxu0
      %3634 = vmatprep.mubr.bf16.mxu0 0
      %3635 = vmatmul.mubr.bf16.gmra.mxu0 %v3472
      %v3636 = vpop.f32.mrf.mxu0
      %v3637 = vadd.f32 0.0, %v3636
      %v3638 = vpop.f32.mrf.mxu0
      %v3639 = vpop.f32.mrf.mxu0
      %v3640 = vadd.f32 0.0, %v3639
      %v3641 = vpop.f32.mrf.mxu0
      %3642 = vmatprep.mubr.bf16.mxu0 0
      %3643 = vmatmul.mubr.bf16.gmra.mxu0 %v3473
      %v3644 = vpop.f32.mrf.mxu0
      %v3645 = vadd.f32 0.0, %v3644
      %v3646 = vpop.f32.mrf.mxu0
      %v3647 = vpop.f32.mrf.mxu0
      %v3648 = vadd.f32 0.0, %v3647
      %v3649 = vpop.f32.mrf.mxu0
      %3650 = vmatprep.mubr.bf16.mxu0 0
      %3651 = vmatmul.mubr.bf16.gmra.mxu0 %v3474
      %v3652 = vpop.f32.mrf.mxu0
      %v3653 = vadd.f32 0.0, %v3652
      %v3654 = vpop.f32.mrf.mxu0
      %v3655 = vpop.f32.mrf.mxu0
      %v3656 = vadd.f32 0.0, %v3655
      %v3657 = vpop.f32.mrf.mxu0
      %3658 = vmatprep.mubr.bf16.mxu0 0
      %3659 = vmatmul.mubr.bf16.gmra.mxu0 %v3475
      %v3660 = vpop.f32.mrf.mxu0
      %v3661 = vadd.f32 0.0, %v3660
      %v3662 = vpop.f32.mrf.mxu0
      %v3663 = vpop.f32.mrf.mxu0
      %v3664 = vadd.f32 0.0, %v3663
      %v3665 = vpop.f32.mrf.mxu0
      %3666 = vmatprep.mubr.bf16.mxu0 0
      %3667 = vmatmul.mubr.bf16.gmra.mxu0 %v3476
      %v3668 = vpop.f32.mrf.mxu0
      %v3669 = vadd.f32 0.0, %v3668
      %v3670 = vpop.f32.mrf.mxu0
      %v3671 = vpop.f32.mrf.mxu0
      %v3672 = vadd.f32 0.0, %v3671
      %v3673 = vpop.f32.mrf.mxu0
      %3674 = vmatprep.mubr.bf16.mxu0 0
      %3675 = vmatmul.mubr.bf16.gmra.mxu0 %v3477
      %v3676 = vpop.f32.mrf.mxu0
      %v3677 = vadd.f32 0.0, %v3676
      %v3678 = vpop.f32.mrf.mxu0
      %v3679 = vpop.f32.mrf.mxu0
      %v3680 = vadd.f32 0.0, %v3679
      %v3681 = vpop.f32.mrf.mxu0
      %3682 = vmatprep.mubr.bf16.mxu0 0
      %3683 = vmatmul.mubr.bf16.gmra.mxu0 %v3478
      %v3684 = vpop.f32.mrf.mxu0
      %v3685 = vadd.f32 0.0, %v3684
      %v3686 = vpop.f32.mrf.mxu0
      %v3687 = vpop.f32.mrf.mxu0
      %v3688 = vadd.f32 0.0, %v3687
      %v3689 = vpop.f32.mrf.mxu0
      %3690 = vmatprep.mubr.bf16.mxu0 0
      %3691 = vmatmul.mubr.bf16.gmra.mxu0 %v3479
      %v3692 = vpop.f32.mrf.mxu0
      %v3693 = vadd.f32 0.0, %v3692
      %v3694 = vpop.f32.mrf.mxu0
      %v3695 = vpop.f32.mrf.mxu0
      %v3696 = vadd.f32 0.0, %v3695
      %v3697 = vpop.f32.mrf.mxu0
      %3698 = vmatprep.mubr.bf16.mxu0 0
      %3699 = vmatmul.mubr.bf16.gmra.mxu0 %v3480
      %v3700 = vpop.f32.mrf.mxu0
      %v3701 = vadd.f32 0.0, %v3700
      %v3702 = vpop.f32.mrf.mxu0
      %v3703 = vpop.f32.mrf.mxu0
      %v3704 = vadd.f32 0.0, %v3703
      %v3705 = vpop.f32.mrf.mxu0
      %3706 = vdwg.mxu0
      %v3707 = vld [vmem:[#allocation3] sm:$0xff]
      %v3708 = vld [vmem:[#allocation3 + $0x8] sm:$0xff]
      %v3709 = vld [vmem:[#allocation3 + $0x10] sm:$0xff]
      %v3710 = vld [vmem:[#allocation3 + $0x18] sm:$0xff]
      %v3711 = vld [vmem:[#allocation3 + $0x20] sm:$0xff]
      %v3712 = vld [vmem:[#allocation3 + $0x28] sm:$0xff]
      %v3713 = vld [vmem:[#allocation3 + $0x30] sm:$0xff]
      %v3714 = vld [vmem:[#allocation3 + $0x38] sm:$0xff]
      %v3715 = vld [vmem:[#allocation3 + $0x40] sm:$0xff]
      %v3716 = vld [vmem:[#allocation3 + $0x48] sm:$0xff]
      %v3717 = vld [vmem:[#allocation3 + $0x50] sm:$0xff]
      %v3718 = vld [vmem:[#allocation3 + $0x58] sm:$0xff]
      %v3719 = vld [vmem:[#allocation3 + $0x60] sm:$0xff]
      %v3720 = vld [vmem:[#allocation3 + $0x68] sm:$0xff]
      %v3721 = vld [vmem:[#allocation3 + $0x70] sm:$0xff]
      %v3722 = vld [vmem:[#allocation3 + $0x78] sm:$0xff]
      %v3723 = vld [vmem:[#allocation3 + $0x80] sm:$0xff]
      %v3724 = vld [vmem:[#allocation3 + $0x88] sm:$0xff]
      %v3725 = vld [vmem:[#allocation3 + $0x90] sm:$0xff]
      %v3726 = vld [vmem:[#allocation3 + $0x98] sm:$0xff]
      %v3727 = vld [vmem:[#allocation3 + $0xa0] sm:$0xff]
      %v3728 = vld [vmem:[#allocation3 + $0xa8] sm:$0xff]
      %v3729 = vld [vmem:[#allocation3 + $0xb0] sm:$0xff]
      %v3730 = vld [vmem:[#allocation3 + $0xb8] sm:$0xff]
      %v3731 = vld [vmem:[#allocation3 + $0xc0] sm:$0xff]
      %v3732 = vld [vmem:[#allocation3 + $0xc8] sm:$0xff]
      %v3733 = vld [vmem:[#allocation3 + $0xd0] sm:$0xff]
      %v3734 = vld [vmem:[#allocation3 + $0xd8] sm:$0xff]
      %v3735 = vld [vmem:[#allocation3 + $0xe0] sm:$0xff]
      %v3736 = vld [vmem:[#allocation3 + $0xe8] sm:$0xff]
      %v3737 = vld [vmem:[#allocation3 + $0xf0] sm:$0xff]
      %v3738 = vld [vmem:[#allocation3 + $0xf8] sm:$0xff]
      %v3739 = vadd.f32 %v3707, %v3581
      %v3740 = vadd.f32 %v3708, %v3584
      %v3741 = vadd.f32 %v3709, %v3589
      %v3742 = vadd.f32 %v3710, %v3592
      %v3743 = vadd.f32 %v3711, %v3597
      %v3744 = vadd.f32 %v3712, %v3600
      %v3745 = vadd.f32 %v3713, %v3605
      %v3746 = vadd.f32 %v3714, %v3608
      %v3747 = vadd.f32 %v3715, %v3613
      %v3748 = vadd.f32 %v3716, %v3616
      %v3749 = vadd.f32 %v3717, %v3621
      %v3750 = vadd.f32 %v3718, %v3624
      %v3751 = vadd.f32 %v3719, %v3629
      %v3752 = vadd.f32 %v3720, %v3632
      %v3753 = vadd.f32 %v3721, %v3637
      %v3754 = vadd.f32 %v3722, %v3640
      %v3755 = vadd.f32 %v3723, %v3645
      %v3756 = vadd.f32 %v3724, %v3648
      %v3757 = vadd.f32 %v3725, %v3653
      %v3758 = vadd.f32 %v3726, %v3656
      %v3759 = vadd.f32 %v3727, %v3661
      %v3760 = vadd.f32 %v3728, %v3664
      %v3761 = vadd.f32 %v3729, %v3669
      %v3762 = vadd.f32 %v3730, %v3672
      %v3763 = vadd.f32 %v3731, %v3677
      %v3764 = vadd.f32 %v3732, %v3680
      %v3765 = vadd.f32 %v3733, %v3685
      %v3766 = vadd.f32 %v3734, %v3688
      %v3767 = vadd.f32 %v3735, %v3693
      %v3768 = vadd.f32 %v3736, %v3696
      %v3769 = vadd.f32 %v3737, %v3701
      %v3770 = vadd.f32 %v3738, %v3704
      %3771 = vst [vmem:[#allocation3] sm:$0xff] %v3739
      %3772 = vst [vmem:[#allocation3 + $0x8] sm:$0xff] %v3740
      %3773 = vst [vmem:[#allocation3 + $0x10] sm:$0xff] %v3741
      %3774 = vst [vmem:[#allocation3 + $0x18] sm:$0xff] %v3742
      %3775 = vst [vmem:[#allocation3 + $0x20] sm:$0xff] %v3743
      %3776 = vst [vmem:[#allocation3 + $0x28] sm:$0xff] %v3744
      %3777 = vst [vmem:[#allocation3 + $0x30] sm:$0xff] %v3745
      %3778 = vst [vmem:[#allocation3 + $0x38] sm:$0xff] %v3746
      %3779 = vst [vmem:[#allocation3 + $0x40] sm:$0xff] %v3747
      %3780 = vst [vmem:[#allocation3 + $0x48] sm:$0xff] %v3748
      %3781 = vst [vmem:[#allocation3 + $0x50] sm:$0xff] %v3749
      %3782 = vst [vmem:[#allocation3 + $0x58] sm:$0xff] %v3750
      %3783 = vst [vmem:[#allocation3 + $0x60] sm:$0xff] %v3751
      %3784 = vst [vmem:[#allocation3 + $0x68] sm:$0xff] %v3752
      %3785 = vst [vmem:[#allocation3 + $0x70] sm:$0xff] %v3753
      %3786 = vst [vmem:[#allocation3 + $0x78] sm:$0xff] %v3754
      %3787 = vst [vmem:[#allocation3 + $0x80] sm:$0xff] %v3755
      %3788 = vst [vmem:[#allocation3 + $0x88] sm:$0xff] %v3756
      %3789 = vst [vmem:[#allocation3 + $0x90] sm:$0xff] %v3757
      %3790 = vst [vmem:[#allocation3 + $0x98] sm:$0xff] %v3758
      %3791 = vst [vmem:[#allocation3 + $0xa0] sm:$0xff] %v3759
      %3792 = vst [vmem:[#allocation3 + $0xa8] sm:$0xff] %v3760
      %3793 = vst [vmem:[#allocation3 + $0xb0] sm:$0xff] %v3761
      %3794 = vst [vmem:[#allocation3 + $0xb8] sm:$0xff] %v3762
      %3795 = vst [vmem:[#allocation3 + $0xc0] sm:$0xff] %v3763
      %3796 = vst [vmem:[#allocation3 + $0xc8] sm:$0xff] %v3764
      %3797 = vst [vmem:[#allocation3 + $0xd0] sm:$0xff] %v3765
      %3798 = vst [vmem:[#allocation3 + $0xd8] sm:$0xff] %v3766
      %3799 = vst [vmem:[#allocation3 + $0xe0] sm:$0xff] %v3767
      %3800 = vst [vmem:[#allocation3 + $0xe8] sm:$0xff] %v3768
      %3801 = vst [vmem:[#allocation3 + $0xf0] sm:$0xff] %v3769
      %3802 = vst [vmem:[#allocation3 + $0xf8] sm:$0xff] %v3770
      %v3803 = vld [vmem:[#allocation3] sm:$0xff]
      %v3804 = vld [vmem:[#allocation3 + $0x8] sm:$0xff]
      %v3805 = vld [vmem:[#allocation3 + $0x10] sm:$0xff]
      %v3806 = vld [vmem:[#allocation3 + $0x18] sm:$0xff]
      %v3807 = vld [vmem:[#allocation3 + $0x20] sm:$0xff]
      %v3808 = vld [vmem:[#allocation3 + $0x28] sm:$0xff]
      %v3809 = vld [vmem:[#allocation3 + $0x30] sm:$0xff]
      %v3810 = vld [vmem:[#allocation3 + $0x38] sm:$0xff]
      %v3811 = vld [vmem:[#allocation3 + $0x40] sm:$0xff]
      %v3812 = vld [vmem:[#allocation3 + $0x48] sm:$0xff]
      %v3813 = vld [vmem:[#allocation3 + $0x50] sm:$0xff]
      %v3814 = vld [vmem:[#allocation3 + $0x58] sm:$0xff]
      %v3815 = vld [vmem:[#allocation3 + $0x60] sm:$0xff]
      %v3816 = vld [vmem:[#allocation3 + $0x68] sm:$0xff]
      %v3817 = vld [vmem:[#allocation3 + $0x70] sm:$0xff]
      %v3818 = vld [vmem:[#allocation3 + $0x78] sm:$0xff]
      %v3819 = vld [vmem:[#allocation3 + $0x80] sm:$0xff]
      %v3820 = vld [vmem:[#allocation3 + $0x88] sm:$0xff]
      %v3821 = vld [vmem:[#allocation3 + $0x90] sm:$0xff]
      %v3822 = vld [vmem:[#allocation3 + $0x98] sm:$0xff]
      %v3823 = vld [vmem:[#allocation3 + $0xa0] sm:$0xff]
      %v3824 = vld [vmem:[#allocation3 + $0xa8] sm:$0xff]
      %v3825 = vld [vmem:[#allocation3 + $0xb0] sm:$0xff]
      %v3826 = vld [vmem:[#allocation3 + $0xb8] sm:$0xff]
      %v3827 = vld [vmem:[#allocation3 + $0xc0] sm:$0xff]
      %v3828 = vld [vmem:[#allocation3 + $0xc8] sm:$0xff]
      %v3829 = vld [vmem:[#allocation3 + $0xd0] sm:$0xff]
      %v3830 = vld [vmem:[#allocation3 + $0xd8] sm:$0xff]
      %v3831 = vld [vmem:[#allocation3 + $0xe0] sm:$0xff]
      %v3832 = vld [vmem:[#allocation3 + $0xe8] sm:$0xff]
      %v3833 = vld [vmem:[#allocation3 + $0xf0] sm:$0xff]
      %v3834 = vld [vmem:[#allocation3 + $0xf8] sm:$0xff]
      %v3835 = vpack.c.bf16 %v3804, %v3803
      %v3836 = vpack.c.bf16 %v3806, %v3805
      %v3837 = vpack.c.bf16 %v3808, %v3807
      %v3838 = vpack.c.bf16 %v3810, %v3809
      %v3839 = vpack.c.bf16 %v3812, %v3811
      %v3840 = vpack.c.bf16 %v3814, %v3813
      %v3841 = vpack.c.bf16 %v3816, %v3815
      %v3842 = vpack.c.bf16 %v3818, %v3817
      %v3843 = vpack.c.bf16 %v3820, %v3819
      %v3844 = vpack.c.bf16 %v3822, %v3821
      %v3845 = vpack.c.bf16 %v3824, %v3823
      %v3846 = vpack.c.bf16 %v3826, %v3825
      %v3847 = vpack.c.bf16 %v3828, %v3827
      %v3848 = vpack.c.bf16 %v3830, %v3829
      %v3849 = vpack.c.bf16 %v3832, %v3831
      %v3850 = vpack.c.bf16 %v3834, %v3833
      %v3867 = vunpack.c.l.b16 %v3835
      %v3868 = vunpack.c.h.b16 %v3835
      %v3869 = vunpack.c.l.b16 %v3836
      %v3870 = vunpack.c.h.b16 %v3836
      %v3871 = vunpack.c.l.b16 %v3837
      %v3872 = vunpack.c.h.b16 %v3837
      %v3873 = vunpack.c.l.b16 %v3838
      %v3874 = vunpack.c.h.b16 %v3838
      %v3875 = vunpack.c.l.b16 %v3839
      %v3876 = vunpack.c.h.b16 %v3839
      %v3877 = vunpack.c.l.b16 %v3840
      %v3878 = vunpack.c.h.b16 %v3840
      %v3879 = vunpack.c.l.b16 %v3841
      %v3880 = vunpack.c.h.b16 %v3841
      %v3881 = vunpack.c.l.b16 %v3842
      %v3882 = vunpack.c.h.b16 %v3842
      %v3883 = vunpack.c.l.b16 %v3843
      %v3884 = vunpack.c.h.b16 %v3843
      %v3885 = vunpack.c.l.b16 %v3844
      %v3886 = vunpack.c.h.b16 %v3844
      %v3887 = vunpack.c.l.b16 %v3845
      %v3888 = vunpack.c.h.b16 %v3845
      %v3889 = vunpack.c.l.b16 %v3846
      %v3890 = vunpack.c.h.b16 %v3846
      %v3891 = vunpack.c.l.b16 %v3847
      %v3892 = vunpack.c.h.b16 %v3847
      %v3893 = vunpack.c.l.b16 %v3848
      %v3894 = vunpack.c.h.b16 %v3848
      %v3895 = vunpack.c.l.b16 %v3849
      %v3896 = vunpack.c.h.b16 %v3849
      %v3897 = vunpack.c.l.b16 %v3850
      %v3898 = vunpack.c.h.b16 %v3850
      %v3899 = vpack.c.b16 %v3867, %v3867
      %v3900 = vpack.c.b16 %v3868, %v3868
      %v3901 = vpack.c.b16 %v3869, %v3869
      %v3902 = vpack.c.b16 %v3870, %v3870
      %v3903 = vpack.c.b16 %v3871, %v3871
      %v3904 = vpack.c.b16 %v3872, %v3872
      %v3905 = vpack.c.b16 %v3873, %v3873
      %v3906 = vpack.c.b16 %v3874, %v3874
      %v3907 = vpack.c.b16 %v3875, %v3875
      %v3908 = vpack.c.b16 %v3876, %v3876
      %v3909 = vpack.c.b16 %v3877, %v3877
      %v3910 = vpack.c.b16 %v3878, %v3878
      %v3911 = vpack.c.b16 %v3879, %v3879
      %v3912 = vpack.c.b16 %v3880, %v3880
      %v3913 = vpack.c.b16 %v3881, %v3881
      %v3914 = vpack.c.b16 %v3882, %v3882
      %v3915 = vpack.c.b16 %v3883, %v3883
      %v3916 = vpack.c.b16 %v3884, %v3884
      %v3917 = vpack.c.b16 %v3885, %v3885
      %v3918 = vpack.c.b16 %v3886, %v3886
      %v3919 = vpack.c.b16 %v3887, %v3887
      %v3920 = vpack.c.b16 %v3888, %v3888
      %v3921 = vpack.c.b16 %v3889, %v3889
      %v3922 = vpack.c.b16 %v3890, %v3890
      %v3923 = vpack.c.b16 %v3891, %v3891
      %v3924 = vpack.c.b16 %v3892, %v3892
      %v3925 = vpack.c.b16 %v3893, %v3893
      %v3926 = vpack.c.b16 %v3894, %v3894
      %v3927 = vpack.c.b16 %v3895, %v3895
      %v3928 = vpack.c.b16 %v3896, %v3896
      %v3929 = vpack.c.b16 %v3897, %v3897
      %v3930 = vpack.c.b16 %v3898, %v3898
      %3963 = vst [vmem:[%s255] sm:$0xf] %v3899
      %3964 = vst [vmem:[%s255 + $0x4] sm:$0xf] %v3900
      %3965 = vst [vmem:[%s255 + $0x8] sm:$0xf] %v3901
      %3966 = vst [vmem:[%s255 + $0xc] sm:$0xf] %v3902
      %3967 = vst [vmem:[%s255 + $0x10] sm:$0xf] %v3903
      %3968 = vst [vmem:[%s255 + $0x14] sm:$0xf] %v3904
      %3969 = vst [vmem:[%s255 + $0x18] sm:$0xf] %v3905
      %3970 = vst [vmem:[%s255 + $0x1c] sm:$0xf] %v3906
      %3971 = vst [vmem:[%s255 + $0x20] sm:$0xf] %v3907
      %3972 = vst [vmem:[%s255 + $0x24] sm:$0xf] %v3908
      %3973 = vst [vmem:[%s255 + $0x28] sm:$0xf] %v3909
      %3974 = vst [vmem:[%s255 + $0x2c] sm:$0xf] %v3910
      %3975 = vst [vmem:[%s255 + $0x30] sm:$0xf] %v3911
      %3976 = vst [vmem:[%s255 + $0x34] sm:$0xf] %v3912
      %3977 = vst [vmem:[%s255 + $0x38] sm:$0xf] %v3913
      %3978 = vst [vmem:[%s255 + $0x3c] sm:$0xf] %v3914
      %3979 = vst [vmem:[%s255 + $0x40] sm:$0xf] %v3915
      %3980 = vst [vmem:[%s255 + $0x44] sm:$0xf] %v3916
      %3981 = vst [vmem:[%s255 + $0x48] sm:$0xf] %v3917
      %3982 = vst [vmem:[%s255 + $0x4c] sm:$0xf] %v3918
      %3983 = vst [vmem:[%s255 + $0x50] sm:$0xf] %v3919
      %3984 = vst [vmem:[%s255 + $0x54] sm:$0xf] %v3920
      %3985 = vst [vmem:[%s255 + $0x58] sm:$0xf] %v3921
      %3986 = vst [vmem:[%s255 + $0x5c] sm:$0xf] %v3922
      %3987 = vst [vmem:[%s255 + $0x60] sm:$0xf] %v3923
      %3988 = vst [vmem:[%s255 + $0x64] sm:$0xf] %v3924
      %3989 = vst [vmem:[%s255 + $0x68] sm:$0xf] %v3925
      %3990 = vst [vmem:[%s255 + $0x6c] sm:$0xf] %v3926
      %3991 = vst [vmem:[%s255 + $0x70] sm:$0xf] %v3927
      %3992 = vst [vmem:[%s255 + $0x74] sm:$0xf] %v3928
      %3993 = vst [vmem:[%s255 + $0x78] sm:$0xf] %v3929
      %3994 = vst [vmem:[%s255 + $0x7c] sm:$0xf] %v3930
      %v3995 = vld [vmem:[#allocation4] sm:$0x1]
      %v3996 = vadd.f32 %v3803, %v3804
      %v3997 = vadd.f32 %v3996, %v3805
      %v3998 = vadd.f32 %v3997, %v3806
      %v3999 = vadd.f32 %v3998, %v3807
      %v4000 = vadd.f32 %v3999, %v3808
      %v4001 = vadd.f32 %v4000, %v3809
      %v4002 = vadd.f32 %v4001, %v3810
      %v4003 = vadd.f32 %v4002, %v3811
      %v4004 = vadd.f32 %v4003, %v3812
      %v4005 = vadd.f32 %v4004, %v3813
      %v4006 = vadd.f32 %v4005, %v3814
      %v4007 = vadd.f32 %v4006, %v3815
      %v4008 = vadd.f32 %v4007, %v3816
      %v4009 = vadd.f32 %v4008, %v3817
      %v4010 = vadd.f32 %v4009, %v3818
      %v4011 = vadd.f32 %v4010, %v3819
      %v4012 = vadd.f32 %v4011, %v3820
      %v4013 = vadd.f32 %v4012, %v3821
      %v4014 = vadd.f32 %v4013, %v3822
      %v4015 = vadd.f32 %v4014, %v3823
      %v4016 = vadd.f32 %v4015, %v3824
      %v4017 = vadd.f32 %v4016, %v3825
      %v4018 = vadd.f32 %v4017, %v3826
      %v4019 = vadd.f32 %v4018, %v3827
      %v4020 = vadd.f32 %v4019, %v3828
      %v4021 = vadd.f32 %v4020, %v3829
      %v4022 = vadd.f32 %v4021, %v3830
      %v4023 = vadd.f32 %v4022, %v3831
      %v4024 = vadd.f32 %v4023, %v3832
      %v4025 = vadd.f32 %v4024, %v3833
      %v4026 = vadd.f32 %v4025, %v3834
      %v4027 = vrot.slane %v4026, 4
      %v4028 = vadd.f32 %v4026, %v4027
      %v4029 = vrot.slane %v4028, 2
      %v4030 = vadd.f32 %v4028, %v4029
      %v4031 = vrot.slane %v4030, 1
      %v4032 = vadd.f32 %v4030, %v4031
      %v4033 = vadd.f32 %v3995, %v4032
      %4034 = vst [vmem:[#allocation4] sm:$0x1] %v4033
      %v4035 = vld [vmem:[#allocation5] sm:$0x1]
      %v4036 = vmul.f32 %v3803, %v3803
      %v4037 = vmul.f32 %v3804, %v3804
      %v4038 = vmul.f32 %v3805, %v3805
      %v4039 = vmul.f32 %v3806, %v3806
      %v4040 = vmul.f32 %v3807, %v3807
      %v4041 = vmul.f32 %v3808, %v3808
      %v4042 = vmul.f32 %v3809, %v3809
      %v4043 = vmul.f32 %v3810, %v3810
      %v4044 = vmul.f32 %v3811, %v3811
      %v4045 = vmul.f32 %v3812, %v3812
      %v4046 = vmul.f32 %v3813, %v3813
      %v4047 = vmul.f32 %v3814, %v3814
      %v4048 = vmul.f32 %v3815, %v3815
      %v4049 = vmul.f32 %v3816, %v3816
      %v4050 = vmul.f32 %v3817, %v3817
      %v4051 = vmul.f32 %v3818, %v3818
      %v4052 = vmul.f32 %v3819, %v3819
      %v4053 = vmul.f32 %v3820, %v3820
      %v4054 = vmul.f32 %v3821, %v3821
      %v4055 = vmul.f32 %v3822, %v3822
      %v4056 = vmul.f32 %v3823, %v3823
      %v4057 = vmul.f32 %v3824, %v3824
      %v4058 = vmul.f32 %v3825, %v3825
      %v4059 = vmul.f32 %v3826, %v3826
      %v4060 = vmul.f32 %v3827, %v3827
      %v4061 = vmul.f32 %v3828, %v3828
      %v4062 = vmul.f32 %v3829, %v3829
      %v4063 = vmul.f32 %v3830, %v3830
      %v4064 = vmul.f32 %v3831, %v3831
      %v4065 = vmul.f32 %v3832, %v3832
      %v4066 = vmul.f32 %v3833, %v3833
      %v4067 = vmul.f32 %v3834, %v3834
      %v4068 = vadd.f32 %v4036, %v4037
      %v4069 = vadd.f32 %v4068, %v4038
      %v4070 = vadd.f32 %v4069, %v4039
      %v4071 = vadd.f32 %v4070, %v4040
      %v4072 = vadd.f32 %v4071, %v4041
      %v4073 = vadd.f32 %v4072, %v4042
      %v4074 = vadd.f32 %v4073, %v4043
      %v4075 = vadd.f32 %v4074, %v4044
      %v4076 = vadd.f32 %v4075, %v4045
      %v4077 = vadd.f32 %v4076, %v4046
      %v4078 = vadd.f32 %v4077, %v4047
      %v4079 = vadd.f32 %v4078, %v4048
      %v4080 = vadd.f32 %v4079, %v4049
      %v4081 = vadd.f32 %v4080, %v4050
      %v4082 = vadd.f32 %v4081, %v4051
      %v4083 = vadd.f32 %v4082, %v4052
      %v4084 = vadd.f32 %v4083, %v4053
      %v4085 = vadd.f32 %v4084, %v4054
      %v4086 = vadd.f32 %v4085, %v4055
      %v4087 = vadd.f32 %v4086, %v4056
      %v4088 = vadd.f32 %v4087, %v4057
      %v4089 = vadd.f32 %v4088, %v4058
      %v4090 = vadd.f32 %v4089, %v4059
      %v4091 = vadd.f32 %v4090, %v4060
      %v4092 = vadd.f32 %v4091, %v4061
      %v4093 = vadd.f32 %v4092, %v4062
      %v4094 = vadd.f32 %v4093, %v4063
      %v4095 = vadd.f32 %v4094, %v4064
      %v4096 = vadd.f32 %v4095, %v4065
      %v4097 = vadd.f32 %v4096, %v4066
      %v4098 = vadd.f32 %v4097, %v4067
      %v4099 = vrot.slane %v4098, 4
      %v4100 = vadd.f32 %v4098, %v4099
      %v4101 = vrot.slane %v4100, 2
      %v4102 = vadd.f32 %v4100, %v4101
      %v4103 = vrot.slane %v4102, 1
      %v4104 = vadd.f32 %v4102, %v4103
      %v4105 = vadd.f32 %v4035, %v4104
      %4106 = vst [vmem:[#allocation5] sm:$0x1] %v4105
      // Predicated region
      $region41: #{conv_block_forward.4} parent=35 // pred_check
        %p4107 = pneg %p262
      $region42: #{conv_block_forward.4} parent=35 // pred_check_branch
        %4109 = sbr.rel (%p4107) target = $region44
      $region43: #{conv_block_forward.4} parent=35 // pred_region
        %v4110 = vld [vmem:[#allocation4] sm:$0x1]
        %4111 = vst [vmem:[%s260] sm:$0x1] %v4110
        %v4112 = vld [vmem:[#allocation5] sm:$0x1]
        %4113 = vst [vmem:[%s260 + $0x1] sm:$0x1] %v4112
      $region44: #{conv_block_forward.4} parent=35 // pred_fallthru
        _
      %s4114 = smul.u32 16, %s22
      %p4115 = scmp.lt.s32.totalorder %s21, 1
      %s4116 = scalar_select %p4115, %s21, 1
      %p4117 = scmp.lt.s32.totalorder %s4114, 15
      %s4118 = scalar_select %p4117, %s4114, 15
      %s4119 = smul.addr %s4118, 2
      %s4120 = smul.addr %s4116, 32
      %s4121 = sadd.s32 %s4119, %s4120
      %s4122 = smul.addr %s4121, 4
      %s4123 = scalar_lea.vmem %s4, %s4122
      %p4124 = scmp.lt.s32.totalorder %s21, 1
      %s4125 = scalar_select %p4124, %s21, 1
      %s4126 = smul.addr %s4125, 2
      %s4127 = scalar_lea.vmem %s5, %s4126
      // Predicated region
      $region45: #{conv_block_forward.4} parent=35 // pred_check
        %p4128 = pneg %p138
      $region46: #{conv_block_forward.4} parent=35 // pred_check_branch
        %4130 = sbr.rel (%p4128) target = $region48
      $region47: #{conv_block_forward.4} parent=35 // pred_region
        %s4131 = smul.u32 16, %s22
      $region48: #{conv_block_forward.4} parent=35 // pred_fallthru
        _
      // Predicated region
      $region49: #{conv_block_forward.4} parent=35 // pred_check
        %p4132 = pneg %p164
      $region50: #{conv_block_forward.4} parent=35 // pred_check_branch
        %4134 = sbr.rel (%p4132) target = $region52
      $region51: #{conv_block_forward.4} parent=35 // pred_region
        _
      $region52: #{conv_block_forward.4} parent=35 // pred_fallthru
        _
    $region36: #{conv_block_forward.4} parent=5 // pred_fallthru
      _
    %p4135 = scmp.le.s32.totalorder 2, %s12
    // Predicated region
    $region53: #{conv_block_forward.4} parent=5 // pred_check
      %p4136 = pneg %p4135
    $region54: #{conv_block_forward.4} parent=5 // pred_check_branch
      %4138 = sbr.rel (%p4136) target = $region56
    $region55: #{conv_block_forward.4} parent=5 // pred_region
      %s4139 = ssub.s32 %s12, 2
      // Predicated region
      $region57: #{conv_block_forward.4} parent=55 // pred_check
        %p4140 = pneg %p144
      $region58: #{conv_block_forward.4} parent=55 // pred_check_branch
        %4142 = sbr.rel (%p4140) target = $region60
      $region59: #{conv_block_forward.4} parent=55 // pred_region
        %s4143 = smul.u32 16, %s24
        %p4144 = scmp.lt.s32.totalorder %s23, 1
        %s4145 = scalar_select %p4144, %s23, 1
        %p4146 = scmp.lt.s32.totalorder %s4143, 15
        %s4147 = scalar_select %p4146, %s4143, 15
        %s4148 = smul.addr %s4147, 2
        %s4149 = smul.addr %s4145, 32
        %s4150 = sadd.s32 %s4148, %s4149
        %s4151 = smul.addr %s4150, 4
        %s4152 = scalar_lea.vmem %s4, %s4151
      $region60: #{conv_block_forward.4} parent=55 // pred_fallthru
        _
      // Predicated region
      $region61: #{conv_block_forward.4} parent=55 // pred_check
        %p4153 = pneg %p170
      $region62: #{conv_block_forward.4} parent=55 // pred_check_branch
        %4155 = sbr.rel (%p4153) target = $region64
      $region63: #{conv_block_forward.4} parent=55 // pred_region
        %p4156 = scmp.lt.s32.totalorder %s23, 1
        %s4157 = scalar_select %p4156, %s23, 1
        %s4158 = smul.addr %s4157, 2
        %s4159 = scalar_lea.vmem %s5, %s4158
      $region64: #{conv_block_forward.4} parent=55 // pred_fallthru
        _
    $region56: #{conv_block_forward.4} parent=5 // pred_fallthru
      _
  $region6: #{conv_block_forward.4} parent=0 // loop_footer
    %s16 = sadd.s32 1, %s12
  $region7: #{conv_block_forward.4} parent=0 // loop_footer_branch
    %11 = sbr.rel target = $region3
  $region8: #{conv_block_forward.4} parent=0 // loop_exit
    _

</llo_original>
